<compile_context>
chip_gen: v6e
topology: v6e:2x2x1
jax: 0.10.0
libtpu: 0.0.40
codegen_flags: <defaults>
</compile_context>

<pallas_src>
import jax
import jax.numpy as jnp
from jax import lax
from jax.experimental import pallas as pl
from jax.experimental.pallas import tpu as pltpu

NUM_CLASSES = 40        # CelebA attribute count
LRELU_SLOPE = 0.01      # nn.LeakyReLU default
BN_EPS = 1e-5           # nn.BatchNorm default


# ---------------------------------------------------------------------------
# Pallas kernels
# ---------------------------------------------------------------------------
def _conv_bn_lrelu_kernel(w_ref, p_ref, b_ref, g_ref, beta_ref, o_ref):
    """o = LeakyReLU(BN(W @ P + b)); W:(C_out,K), P:(K,M), per-channel params (C_out,1)."""
    z = jnp.dot(w_ref[...], p_ref[...], preferred_element_type=jnp.float32)
    z = z + b_ref[...]                                       # (C_out,1) broadcast over M
    mean = jnp.mean(z, axis=1, keepdims=True)                # batch stats over N*Ho*Wo
    var = jnp.mean(jnp.square(z - mean), axis=1, keepdims=True)
    scale = g_ref[...] * lax.rsqrt(var + BN_EPS)
    y = (z - mean) * scale + beta_ref[...]
    o_ref[...] = jnp.where(y >= 0.0, y, LRELU_SLOPE * y)


def _fc_stage_kernel(x_ref, w1_ref, b1_ref, g1_ref, be1_ref,
                     w2_ref, b2_ref, g2_ref, be2_ref,
                     w3_ref, b3_ref, o_ref):
    """Whole FC stack fused: Linear->BN->LReLU ->Linear->BN->LReLU ->Linear->Sigmoid."""

    def bn_lrelu(z, g_ref, be_ref):
        mean = jnp.mean(z, axis=0, keepdims=True)            # stats over the batch axis
        var = jnp.mean(jnp.square(z - mean), axis=0, keepdims=True)
        y = (z - mean) * (g_ref[...] * lax.rsqrt(var + BN_EPS)) + be_ref[...]
        return jnp.where(y >= 0.0, y, LRELU_SLOPE * y)

    h = x_ref[...]
    z1 = jnp.dot(h, w1_ref[...], preferred_element_type=jnp.float32) + b1_ref[...]
    h1 = bn_lrelu(z1, g1_ref, be1_ref)
    z2 = jnp.dot(h1, w2_ref[...], preferred_element_type=jnp.float32) + b2_ref[...]
    h2 = bn_lrelu(z2, g2_ref, be2_ref)
    z3 = jnp.dot(h2, w3_ref[...], preferred_element_type=jnp.float32) + b3_ref[...]
    o_ref[...] = 1.0 / (1.0 + jnp.exp(-z3))                  # sigmoid


def _full_spec(shape):
    """Full-array block (exempt from the (8,128) divisibility rule)."""
    return pl.BlockSpec(shape, lambda i: (0,) * len(shape))


# ---------------------------------------------------------------------------
# JAX glue (channel-major layout throughout the conv stage)
# ---------------------------------------------------------------------------
# TODO(synk): im2col patch extraction and the 2x2 max-pool stay as tiny jnp glue
# (pure strided reshuffles with no MXU/VPU work and no clean BlockSpec form).
def _im2col_T(x_c, k):
    """x_c:(C,N,H,W) -> patches^T (C*k*k, N*Ho*Wo); feature order (C, kh, kw)."""
    c, n, h, w = x_c.shape
    ho, wo = h - k + 1, w - k + 1
    cols = [x_c[:, :, di:di + ho, dj:dj + wo]
            for di in range(k) for dj in range(k)]           # each (C, N, Ho, Wo)
    p = jnp.stack(cols, axis=1)                              # (C, k*k, N, Ho, Wo)
    return p.reshape(c * k * k, n * ho * wo), (n, ho, wo)


def maxpool2x2(x_c):
    """2x2/2 max-pool on (C, N, H, W)."""
    c, n, h, w = x_c.shape
    return jnp.max(x_c.reshape(c, n, h // 2, 2, w // 2, 2), axis=(3, 5))


# ---------------------------------------------------------------------------
# Layer wrappers
# ---------------------------------------------------------------------------
def conv_bn_lrelu(x_c, w, b, gamma, beta):
    """Fused Conv2d(valid) + BatchNorm2d(train stats) + LeakyReLU; in/out (C,N,H,W)."""
    cout, cin, k, _ = w.shape
    patches, (n, ho, wo) = _im2col_T(x_c.astype(jnp.float32), k)  # (K, M) lane-dense
    kdim, m = patches.shape
    out = pl.pallas_call(
        _conv_bn_lrelu_kernel,
        out_shape=jax.ShapeDtypeStruct((cout, m), jnp.float32),
        grid=(1,),
        in_specs=[
            _full_spec((cout, kdim)),
            _full_spec((kdim, m)),
            _full_spec((cout, 1)),
            _full_spec((cout, 1)),
            _full_spec((cout, 1)),
        ],
        out_specs=_full_spec((cout, m)),
        compiler_params=pltpu.CompilerParams(dimension_semantics=("arbitrary",)),
    )(
        w.reshape(cout, kdim).astype(jnp.float32),
        patches,
        b.reshape(cout, 1).astype(jnp.float32),
        gamma.reshape(cout, 1).astype(jnp.float32),
        beta.reshape(cout, 1).astype(jnp.float32),
    )
    return out.reshape(cout, n, ho, wo)


def fc_stage(x, p):
    """Single fused kernel for the whole FC stack; x:(N, 2704) -> (N, 40)."""
    n = x.shape[0]
    f32 = jnp.float32
    args = (
        x.astype(f32),
        p["fc1_w"].T.astype(f32), p["fc1_b"].reshape(1, -1).astype(f32),
        p["bn3_g"].reshape(1, -1).astype(f32), p["bn3_b"].reshape(1, -1).astype(f32),
        p["fc2_w"].T.astype(f32), p["fc2_b"].reshape(1, -1).astype(f32),
        p["bn4_g"].reshape(1, -1).astype(f32), p["bn4_b"].reshape(1, -1).astype(f32),
        p["fc3_w"].T.astype(f32), p["fc3_b"].reshape(1, -1).astype(f32),
    )
    return pl.pallas_call(
        _fc_stage_kernel,
        out_shape=jax.ShapeDtypeStruct((n, NUM_CLASSES), jnp.float32),
        grid=(1,),
        in_specs=[_full_spec(a.shape) for a in args],
        out_specs=_full_spec((n, NUM_CLASSES)),
        compiler_params=pltpu.CompilerParams(dimension_semantics=("arbitrary",)),
    )(*args)


# ---------------------------------------------------------------------------
# Net forward
# ---------------------------------------------------------------------------
def net_forward(x, p):
    # to channel-major (C, N, H, W) once; stays that way through the conv stage
    h = jnp.transpose(x.astype(jnp.float32), (1, 0, 2, 3))                    # (3,N,64,64)
    h = conv_bn_lrelu(h, p["conv1_w"], p["conv1_b"], p["bn1_g"], p["bn1_b"])  # (6,N,60,60)
    h = maxpool2x2(h)                                                         # (6,N,30,30)
    h = conv_bn_lrelu(h, p["conv2_w"], p["conv2_b"], p["bn2_g"], p["bn2_b"])  # (16,N,26,26)
    h = maxpool2x2(h)                                                         # (16,N,13,13)
    n = h.shape[1]
    feat = jnp.transpose(h, (1, 0, 2, 3)).reshape(n, 16 * 13 * 13)            # PyTorch view order
    return fc_stage(feat, p)                                                  # (N, 40)


def init_params(key):
    ks = jax.random.split(key, 12)

    def w(k, shape, scale=0.05):
        return scale * jax.random.normal(k, shape, jnp.float32)

    return {
        "conv1_w": w(ks[0], (6, 3, 5, 5)),
        "conv1_b": w(ks[1], (6,)),
        "bn1_g": 1.0 + 0.1 * jax.random.normal(ks[2], (6,), jnp.float32),
        "bn1_b": w(ks[2], (6,)),
        "conv2_w": w(ks[3], (16, 6, 5, 5)),
        "conv2_b": w(ks[4], (16,)),
        "bn2_g": 1.0 + 0.1 * jax.random.normal(ks[5], (16,), jnp.float32),
        "bn2_b": w(ks[5], (16,)),
        "fc1_w": w(ks[6], (120, 16 * 13 * 13)),
        "fc1_b": w(ks[7], (120,)),
        "bn3_g": 1.0 + 0.1 * jax.random.normal(ks[8], (120,), jnp.float32),
        "bn3_b": w(ks[8], (120,)),
        "fc2_w": w(ks[9], (84, 120)),
        "fc2_b": w(ks[10], (84,)),
        "bn4_g": 1.0 + 0.1 * jax.random.normal(ks[11], (84,), jnp.float32),
        "bn4_b": w(ks[11], (84,)),
        "fc3_w": w(ks[0], (NUM_CLASSES, 84)),
        "fc3_b": w(ks[1], (NUM_CLASSES,)),
    }


if __name__ == "__main__":
    key = jax.random.PRNGKey(0)
    k_param, k_x = jax.random.split(key)
    params = init_params(k_param)
    # batch=2; 3x64x64 is required by the 16*13*13 flatten in the module.
    x = jax.random.normal(k_x, (2, 3, 64, 64), jnp.float32)

    out = jax.jit(net_forward)(x, params)
    out = jax.block_until_ready(out)

    assert out.shape == (2, NUM_CLASSES), out.shape
    assert bool(jnp.all(jnp.isfinite(out)))
    assert bool(jnp.all((out >= 0.0) & (out <= 1.0)))  # sigmoid output range
    print("KERNEL_OK")
</pallas_src>

<mosaic_0001>
module attributes {stable_mosaic.version = 11 : i64} {
  func.func @_conv_bn_lrelu_kernel(%arg0: i32, %arg1: memref<6x75xf32, #tpu.memory_space<vmem>>, %arg2: memref<75x7200xf32, #tpu.memory_space<vmem>>, %arg3: memref<6x1xf32, #tpu.memory_space<vmem>>, %arg4: memref<6x1xf32, #tpu.memory_space<vmem>>, %arg5: memref<6x1xf32, #tpu.memory_space<vmem>>, %arg6: memref<6x7200xf32, #tpu.memory_space<vmem>>) attributes {dimension_semantics = [#tpu.dimension_semantics<arbitrary>], iteration_bounds = array<i64: 1>, scalar_prefetch = 0 : i64, scratch_operands = 0 : i64, tpu.core_type = #tpu.core_type<tc>, window_params = [{pipeline_mode = #tpu.pipeline_mode<synchronous>, transform_indices = @transform_0, window_bounds = array<i64: 6, 75>}, {pipeline_mode = #tpu.pipeline_mode<synchronous>, transform_indices = @transform_1, window_bounds = array<i64: 75, 7200>}, {pipeline_mode = #tpu.pipeline_mode<synchronous>, transform_indices = @transform_2, window_bounds = array<i64: 6, 1>}, {pipeline_mode = #tpu.pipeline_mode<synchronous>, transform_indices = @transform_3, window_bounds = array<i64: 6, 1>}, {pipeline_mode = #tpu.pipeline_mode<synchronous>, transform_indices = @transform_4, window_bounds = array<i64: 6, 1>}, {pipeline_mode = #tpu.pipeline_mode<synchronous>, transform_indices = @transform_5, window_bounds = array<i64: 6, 7200>}]} {
    %c0 = arith.constant 0 : index
    %c0_0 = arith.constant 0 : index
    %0 = vector.load %arg1[%c0, %c0_0] : memref<6x75xf32, #tpu.memory_space<vmem>>, vector<6x75xf32>
    %c0_1 = arith.constant 0 : index
    %c0_2 = arith.constant 0 : index
    %1 = vector.load %arg2[%c0_1, %c0_2] : memref<75x7200xf32, #tpu.memory_space<vmem>>, vector<75x7200xf32>
    %cst = arith.constant dense<0.000000e+00> : vector<6x7200xf32>
    %2 = tpu.matmul %0, %1, %cst {dimension_numbers = #tpu.dot_dimension_numbers<[1], [0], [0], [1], [0, 0, 1, 1], [], []>} : vector<6x75xf32>, vector<75x7200xf32>, vector<6x7200xf32> -> vector<6x7200xf32>
    %c0_3 = arith.constant 0 : index
    %c0_4 = arith.constant 0 : index
    %3 = vector.load %arg3[%c0_3, %c0_4] : memref<6x1xf32, #tpu.memory_space<vmem>>, vector<6x1xf32>
    %4 = vector.broadcast %3 : vector<6x1xf32> to vector<6x7200xf32>
    %5 = arith.addf %2, %4 : vector<6x7200xf32>
    %cst_5 = arith.constant dense<0.000000e+00> : vector<6xf32>
    %6 = vector.multi_reduction <add>, %5, %cst_5 [1] : vector<6x7200xf32> to vector<6xf32>
    %7 = vector.shape_cast %6 : vector<6xf32> to vector<6x1xf32>
    %cst_6 = arith.constant 7.200000e+03 : f32
    %8 = vector.broadcast %cst_6 : f32 to vector<6x1xf32>
    %9 = arith.divf %7, %8 : vector<6x1xf32>
    %10 = vector.broadcast %9 : vector<6x1xf32> to vector<6x7200xf32>
    %11 = arith.subf %5, %10 : vector<6x7200xf32>
    %12 = arith.mulf %11, %11 : vector<6x7200xf32>
    %cst_7 = arith.constant dense<0.000000e+00> : vector<6xf32>
    %13 = vector.multi_reduction <add>, %12, %cst_7 [1] : vector<6x7200xf32> to vector<6xf32>
    %14 = vector.shape_cast %13 : vector<6xf32> to vector<6x1xf32>
    %cst_8 = arith.constant 7.200000e+03 : f32
    %15 = vector.broadcast %cst_8 : f32 to vector<6x1xf32>
    %16 = arith.divf %14, %15 : vector<6x1xf32>
    %c0_9 = arith.constant 0 : index
    %c0_10 = arith.constant 0 : index
    %17 = vector.load %arg4[%c0_9, %c0_10] : memref<6x1xf32, #tpu.memory_space<vmem>>, vector<6x1xf32>
    %cst_11 = arith.constant 9.99999974E-6 : f32
    %18 = vector.broadcast %cst_11 : f32 to vector<6x1xf32>
    %19 = arith.addf %16, %18 : vector<6x1xf32>
    %20 = math.rsqrt %19 : vector<6x1xf32>
    %21 = arith.mulf %17, %20 : vector<6x1xf32>
    %22 = vector.broadcast %9 : vector<6x1xf32> to vector<6x7200xf32>
    %23 = arith.subf %5, %22 : vector<6x7200xf32>
    %24 = vector.broadcast %21 : vector<6x1xf32> to vector<6x7200xf32>
    %25 = arith.mulf %23, %24 : vector<6x7200xf32>
    %c0_12 = arith.constant 0 : index
    %c0_13 = arith.constant 0 : index
    %26 = vector.load %arg5[%c0_12, %c0_13] : memref<6x1xf32, #tpu.memory_space<vmem>>, vector<6x1xf32>
    %27 = vector.broadcast %26 : vector<6x1xf32> to vector<6x7200xf32>
    %28 = arith.addf %25, %27 : vector<6x7200xf32>
    %cst_14 = arith.constant 0.000000e+00 : f32
    %29 = vector.broadcast %cst_14 : f32 to vector<6x7200xf32>
    %30 = arith.cmpf oge, %28, %29 : vector<6x7200xf32>
    %cst_15 = arith.constant 0.00999999977 : f32
    %31 = vector.broadcast %cst_15 : f32 to vector<6x7200xf32>
    %32 = arith.mulf %31, %28 : vector<6x7200xf32>
    %33 = arith.select %30, %28, %32 : vector<6x7200xi1>, vector<6x7200xf32>
    %c0_16 = arith.constant 0 : index
    %c0_17 = arith.constant 0 : index
    %34 = vector.load %arg6[%c0_16, %c0_17] : memref<6x7200xf32, #tpu.memory_space<vmem>>, vector<6x7200xf32>
    tpu.vector_store %arg6[%c0_16, %c0_17], %33 {strides = array<i32>} : memref<6x7200xf32, #tpu.memory_space<vmem>>, vector<6x7200xf32>,
    return
  }
  func.func @transform_0(%arg0: i32) -> (i32, i32) {
    %c0_i32 = arith.constant 0 : i32
    %c0_i32_0 = arith.constant 0 : i32
    %c0_i32_1 = arith.constant 0 : i32
    return %c0_i32, %c0_i32_0 : i32, i32
  }
  func.func @transform_1(%arg0: i32) -> (i32, i32) {
    %c0_i32 = arith.constant 0 : i32
    %c0_i32_0 = arith.constant 0 : i32
    %c0_i32_1 = arith.constant 0 : i32
    return %c0_i32, %c0_i32_0 : i32, i32
  }
  func.func @transform_2(%arg0: i32) -> (i32, i32) {
    %c0_i32 = arith.constant 0 : i32
    %c0_i32_0 = arith.constant 0 : i32
    %c0_i32_1 = arith.constant 0 : i32
    return %c0_i32, %c0_i32_0 : i32, i32
  }
  func.func @transform_3(%arg0: i32) -> (i32, i32) {
    %c0_i32 = arith.constant 0 : i32
    %c0_i32_0 = arith.constant 0 : i32
    %c0_i32_1 = arith.constant 0 : i32
    return %c0_i32, %c0_i32_0 : i32, i32
  }
  func.func @transform_4(%arg0: i32) -> (i32, i32) {
    %c0_i32 = arith.constant 0 : i32
    %c0_i32_0 = arith.constant 0 : i32
    %c0_i32_1 = arith.constant 0 : i32
    return %c0_i32, %c0_i32_0 : i32, i32
  }
  func.func @transform_5(%arg0: i32) -> (i32, i32) {
    %c0_i32 = arith.constant 0 : i32
    %c0_i32_0 = arith.constant 0 : i32
    %c0_i32_1 = arith.constant 0 : i32
    return %c0_i32, %c0_i32_0 : i32, i32
  }
}

module attributes {stable_mosaic.version = 11 : i64} {
  func.func @_conv_bn_lrelu_kernel(%arg0: i32, %arg1: memref<16x150xf32, #tpu.memory_space<vmem>>, %arg2: memref<150x1352xf32, #tpu.memory_space<vmem>>, %arg3: memref<16x1xf32, #tpu.memory_space<vmem>>, %arg4: memref<16x1xf32, #tpu.memory_space<vmem>>, %arg5: memref<16x1xf32, #tpu.memory_space<vmem>>, %arg6: memref<16x1352xf32, #tpu.memory_space<vmem>>) attributes {dimension_semantics = [#tpu.dimension_semantics<arbitrary>], iteration_bounds = array<i64: 1>, scalar_prefetch = 0 : i64, scratch_operands = 0 : i64, tpu.core_type = #tpu.core_type<tc>, window_params = [{pipeline_mode = #tpu.pipeline_mode<synchronous>, transform_indices = @transform_0, window_bounds = array<i64: 16, 150>}, {pipeline_mode = #tpu.pipeline_mode<synchronous>, transform_indices = @transform_1, window_bounds = array<i64: 150, 1352>}, {pipeline_mode = #tpu.pipeline_mode<synchronous>, transform_indices = @transform_2, window_bounds = array<i64: 16, 1>}, {pipeline_mode = #tpu.pipeline_mode<synchronous>, transform_indices = @transform_3, window_bounds = array<i64: 16, 1>}, {pipeline_mode = #tpu.pipeline_mode<synchronous>, transform_indices = @transform_4, window_bounds = array<i64: 16, 1>}, {pipeline_mode = #tpu.pipeline_mode<synchronous>, transform_indices = @transform_5, window_bounds = array<i64: 16, 1352>}]} {
    %c0 = arith.constant 0 : index
    %c0_0 = arith.constant 0 : index
    %0 = vector.load %arg1[%c0, %c0_0] : memref<16x150xf32, #tpu.memory_space<vmem>>, vector<16x150xf32>
    %c0_1 = arith.constant 0 : index
    %c0_2 = arith.constant 0 : index
    %1 = vector.load %arg2[%c0_1, %c0_2] : memref<150x1352xf32, #tpu.memory_space<vmem>>, vector<150x1352xf32>
    %cst = arith.constant dense<0.000000e+00> : vector<16x1352xf32>
    %2 = tpu.matmul %0, %1, %cst {dimension_numbers = #tpu.dot_dimension_numbers<[1], [0], [0], [1], [0, 0, 1, 1], [], []>} : vector<16x150xf32>, vector<150x1352xf32>, vector<16x1352xf32> -> vector<16x1352xf32>
    %c0_3 = arith.constant 0 : index
    %c0_4 = arith.constant 0 : index
    %3 = vector.load %arg3[%c0_3, %c0_4] : memref<16x1xf32, #tpu.memory_space<vmem>>, vector<16x1xf32>
    %4 = vector.broadcast %3 : vector<16x1xf32> to vector<16x1352xf32>
    %5 = arith.addf %2, %4 : vector<16x1352xf32>
    %cst_5 = arith.constant dense<0.000000e+00> : vector<16xf32>
    %6 = vector.multi_reduction <add>, %5, %cst_5 [1] : vector<16x1352xf32> to vector<16xf32>
    %7 = vector.shape_cast %6 : vector<16xf32> to vector<16x1xf32>
    %cst_6 = arith.constant 1.352000e+03 : f32
    %8 = vector.broadcast %cst_6 : f32 to vector<16x1xf32>
    %9 = arith.divf %7, %8 : vector<16x1xf32>
    %10 = vector.broadcast %9 : vector<16x1xf32> to vector<16x1352xf32>
    %11 = arith.subf %5, %10 : vector<16x1352xf32>
    %12 = arith.mulf %11, %11 : vector<16x1352xf32>
    %cst_7 = arith.constant dense<0.000000e+00> : vector<16xf32>
    %13 = vector.multi_reduction <add>, %12, %cst_7 [1] : vector<16x1352xf32> to vector<16xf32>
    %14 = vector.shape_cast %13 : vector<16xf32> to vector<16x1xf32>
    %cst_8 = arith.constant 1.352000e+03 : f32
    %15 = vector.broadcast %cst_8 : f32 to vector<16x1xf32>
    %16 = arith.divf %14, %15 : vector<16x1xf32>
    %c0_9 = arith.constant 0 : index
    %c0_10 = arith.constant 0 : index
    %17 = vector.load %arg4[%c0_9, %c0_10] : memref<16x1xf32, #tpu.memory_space<vmem>>, vector<16x1xf32>
    %cst_11 = arith.constant 9.99999974E-6 : f32
    %18 = vector.broadcast %cst_11 : f32 to vector<16x1xf32>
    %19 = arith.addf %16, %18 : vector<16x1xf32>
    %20 = math.rsqrt %19 : vector<16x1xf32>
    %21 = arith.mulf %17, %20 : vector<16x1xf32>
    %22 = vector.broadcast %9 : vector<16x1xf32> to vector<16x1352xf32>
    %23 = arith.subf %5, %22 : vector<16x1352xf32>
    %24 = vector.broadcast %21 : vector<16x1xf32> to vector<16x1352xf32>
    %25 = arith.mulf %23, %24 : vector<16x1352xf32>
    %c0_12 = arith.constant 0 : index
    %c0_13 = arith.constant 0 : index
    %26 = vector.load %arg5[%c0_12, %c0_13] : memref<16x1xf32, #tpu.memory_space<vmem>>, vector<16x1xf32>
    %27 = vector.broadcast %26 : vector<16x1xf32> to vector<16x1352xf32>
    %28 = arith.addf %25, %27 : vector<16x1352xf32>
    %cst_14 = arith.constant 0.000000e+00 : f32
    %29 = vector.broadcast %cst_14 : f32 to vector<16x1352xf32>
    %30 = arith.cmpf oge, %28, %29 : vector<16x1352xf32>
    %cst_15 = arith.constant 0.00999999977 : f32
    %31 = vector.broadcast %cst_15 : f32 to vector<16x1352xf32>
    %32 = arith.mulf %31, %28 : vector<16x1352xf32>
    %33 = arith.select %30, %28, %32 : vector<16x1352xi1>, vector<16x1352xf32>
    %c0_16 = arith.constant 0 : index
    %c0_17 = arith.constant 0 : index
    %34 = vector.load %arg6[%c0_16, %c0_17] : memref<16x1352xf32, #tpu.memory_space<vmem>>, vector<16x1352xf32>
    tpu.vector_store %arg6[%c0_16, %c0_17], %33 {strides = array<i32>} : memref<16x1352xf32, #tpu.memory_space<vmem>>, vector<16x1352xf32>,
    return
  }
  func.func @transform_0(%arg0: i32) -> (i32, i32) {
    %c0_i32 = arith.constant 0 : i32
    %c0_i32_0 = arith.constant 0 : i32
    %c0_i32_1 = arith.constant 0 : i32
    return %c0_i32, %c0_i32_0 : i32, i32
  }
  func.func @transform_1(%arg0: i32) -> (i32, i32) {
    %c0_i32 = arith.constant 0 : i32
    %c0_i32_0 = arith.constant 0 : i32
    %c0_i32_1 = arith.constant 0 : i32
    return %c0_i32, %c0_i32_0 : i32, i32
  }
  func.func @transform_2(%arg0: i32) -> (i32, i32) {
    %c0_i32 = arith.constant 0 : i32
    %c0_i32_0 = arith.constant 0 : i32
    %c0_i32_1 = arith.constant 0 : i32
    return %c0_i32, %c0_i32_0 : i32, i32
  }
  func.func @transform_3(%arg0: i32) -> (i32, i32) {
    %c0_i32 = arith.constant 0 : i32
    %c0_i32_0 = arith.constant 0 : i32
    %c0_i32_1 = arith.constant 0 : i32
    return %c0_i32, %c0_i32_0 : i32, i32
  }
  func.func @transform_4(%arg0: i32) -> (i32, i32) {
    %c0_i32 = arith.constant 0 : i32
    %c0_i32_0 = arith.constant 0 : i32
    %c0_i32_1 = arith.constant 0 : i32
    return %c0_i32, %c0_i32_0 : i32, i32
  }
  func.func @transform_5(%arg0: i32) -> (i32, i32) {
    %c0_i32 = arith.constant 0 : i32
    %c0_i32_0 = arith.constant 0 : i32
    %c0_i32_1 = arith.constant 0 : i32
    return %c0_i32, %c0_i32_0 : i32, i32
  }
}

module attributes {stable_mosaic.version = 11 : i64} {
  func.func @_fc_stage_kernel(%arg0: i32, %arg1: memref<2x2704xf32, #tpu.memory_space<vmem>>, %arg2: memref<2704x120xf32, #tpu.memory_space<vmem>>, %arg3: memref<1x120xf32, #tpu.memory_space<vmem>>, %arg4: memref<1x120xf32, #tpu.memory_space<vmem>>, %arg5: memref<1x120xf32, #tpu.memory_space<vmem>>, %arg6: memref<120x84xf32, #tpu.memory_space<vmem>>, %arg7: memref<1x84xf32, #tpu.memory_space<vmem>>, %arg8: memref<1x84xf32, #tpu.memory_space<vmem>>, %arg9: memref<1x84xf32, #tpu.memory_space<vmem>>, %arg10: memref<84x40xf32, #tpu.memory_space<vmem>>, %arg11: memref<1x40xf32, #tpu.memory_space<vmem>>, %arg12: memref<2x40xf32, #tpu.memory_space<vmem>>) attributes {dimension_semantics = [#tpu.dimension_semantics<arbitrary>], iteration_bounds = array<i64: 1>, scalar_prefetch = 0 : i64, scratch_operands = 0 : i64, tpu.core_type = #tpu.core_type<tc>, window_params = [{pipeline_mode = #tpu.pipeline_mode<synchronous>, transform_indices = @transform_0, window_bounds = array<i64: 2, 2704>}, {pipeline_mode = #tpu.pipeline_mode<synchronous>, transform_indices = @transform_1, window_bounds = array<i64: 2704, 120>}, {pipeline_mode = #tpu.pipeline_mode<synchronous>, transform_indices = @transform_2, window_bounds = array<i64: 1, 120>}, {pipeline_mode = #tpu.pipeline_mode<synchronous>, transform_indices = @transform_3, window_bounds = array<i64: 1, 120>}, {pipeline_mode = #tpu.pipeline_mode<synchronous>, transform_indices = @transform_4, window_bounds = array<i64: 1, 120>}, {pipeline_mode = #tpu.pipeline_mode<synchronous>, transform_indices = @transform_5, window_bounds = array<i64: 120, 84>}, {pipeline_mode = #tpu.pipeline_mode<synchronous>, transform_indices = @transform_6, window_bounds = array<i64: 1, 84>}, {pipeline_mode = #tpu.pipeline_mode<synchronous>, transform_indices = @transform_7, window_bounds = array<i64: 1, 84>}, {pipeline_mode = #tpu.pipeline_mode<synchronous>, transform_indices = @transform_8, window_bounds = array<i64: 1, 84>}, {pipeline_mode = #tpu.pipeline_mode<synchronous>, transform_indices = @transform_9, window_bounds = array<i64: 84, 40>}, {pipeline_mode = #tpu.pipeline_mode<synchronous>, transform_indices = @transform_10, window_bounds = array<i64: 1, 40>}, {pipeline_mode = #tpu.pipeline_mode<synchronous>, transform_indices = @transform_11, window_bounds = array<i64: 2, 40>}]} {
    %c0 = arith.constant 0 : index
    %c0_0 = arith.constant 0 : index
    %0 = vector.load %arg1[%c0, %c0_0] : memref<2x2704xf32, #tpu.memory_space<vmem>>, vector<2x2704xf32>
    %c0_1 = arith.constant 0 : index
    %c0_2 = arith.constant 0 : index
    %1 = vector.load %arg2[%c0_1, %c0_2] : memref<2704x120xf32, #tpu.memory_space<vmem>>, vector<2704x120xf32>
    %cst = arith.constant dense<0.000000e+00> : vector<2x120xf32>
    %2 = tpu.matmul %0, %1, %cst {dimension_numbers = #tpu.dot_dimension_numbers<[1], [0], [0], [1], [0, 0, 1, 1], [], []>} : vector<2x2704xf32>, vector<2704x120xf32>, vector<2x120xf32> -> vector<2x120xf32>
    %c0_3 = arith.constant 0 : index
    %c0_4 = arith.constant 0 : index
    %3 = vector.load %arg3[%c0_3, %c0_4] : memref<1x120xf32, #tpu.memory_space<vmem>>, vector<1x120xf32>
    %4 = vector.broadcast %3 : vector<1x120xf32> to vector<2x120xf32>
    %5 = arith.addf %2, %4 : vector<2x120xf32>
    %cst_5 = arith.constant dense<0.000000e+00> : vector<120xf32>
    %6 = vector.multi_reduction <add>, %5, %cst_5 [0] : vector<2x120xf32> to vector<120xf32>
    %7 = vector.shape_cast %6 : vector<120xf32> to vector<1x120xf32>
    %cst_6 = arith.constant 2.000000e+00 : f32
    %8 = vector.broadcast %cst_6 : f32 to vector<1x120xf32>
    %9 = arith.divf %7, %8 : vector<1x120xf32>
    %10 = vector.broadcast %9 : vector<1x120xf32> to vector<2x120xf32>
    %11 = arith.subf %5, %10 : vector<2x120xf32>
    %12 = arith.mulf %11, %11 : vector<2x120xf32>
    %cst_7 = arith.constant dense<0.000000e+00> : vector<120xf32>
    %13 = vector.multi_reduction <add>, %12, %cst_7 [0] : vector<2x120xf32> to vector<120xf32>
    %14 = vector.shape_cast %13 : vector<120xf32> to vector<1x120xf32>
    %cst_8 = arith.constant 2.000000e+00 : f32
    %15 = vector.broadcast %cst_8 : f32 to vector<1x120xf32>
    %16 = arith.divf %14, %15 : vector<1x120xf32>
    %17 = vector.broadcast %9 : vector<1x120xf32> to vector<2x120xf32>
    %18 = arith.subf %5, %17 : vector<2x120xf32>
    %c0_9 = arith.constant 0 : index
    %c0_10 = arith.constant 0 : index
    %19 = vector.load %arg4[%c0_9, %c0_10] : memref<1x120xf32, #tpu.memory_space<vmem>>, vector<1x120xf32>
    %cst_11 = arith.constant 9.99999974E-6 : f32
    %20 = vector.broadcast %cst_11 : f32 to vector<1x120xf32>
    %21 = arith.addf %16, %20 : vector<1x120xf32>
    %22 = math.rsqrt %21 : vector<1x120xf32>
    %23 = arith.mulf %19, %22 : vector<1x120xf32>
    %24 = vector.broadcast %23 : vector<1x120xf32> to vector<2x120xf32>
    %25 = arith.mulf %18, %24 : vector<2x120xf32>
    %c0_12 = arith.constant 0 : index
    %c0_13 = arith.constant 0 : index
    %26 = vector.load %arg5[%c0_12, %c0_13] : memref<1x120xf32, #tpu.memory_space<vmem>>, vector<1x120xf32>
    %27 = vector.broadcast %26 : vector<1x120xf32> to vector<2x120xf32>
    %28 = arith.addf %25, %27 : vector<2x120xf32>
    %cst_14 = arith.constant 0.000000e+00 : f32
    %29 = vector.broadcast %cst_14 : f32 to vector<2x120xf32>
    %30 = arith.cmpf oge, %28, %29 : vector<2x120xf32>
    %cst_15 = arith.constant 0.00999999977 : f32
    %31 = vector.broadcast %cst_15 : f32 to vector<2x120xf32>
    %32 = arith.mulf %31, %28 : vector<2x120xf32>
    %33 = arith.select %30, %28, %32 : vector<2x120xi1>, vector<2x120xf32>
    %c0_16 = arith.constant 0 : index
    %c0_17 = arith.constant 0 : index
    %34 = vector.load %arg6[%c0_16, %c0_17] : memref<120x84xf32, #tpu.memory_space<vmem>>, vector<120x84xf32>
    %cst_18 = arith.constant dense<0.000000e+00> : vector<2x84xf32>
    %35 = tpu.matmul %33, %34, %cst_18 {dimension_numbers = #tpu.dot_dimension_numbers<[1], [0], [0], [1], [0, 0, 1, 1], [], []>} : vector<2x120xf32>, vector<120x84xf32>, vector<2x84xf32> -> vector<2x84xf32>
    %c0_19 = arith.constant 0 : index
    %c0_20 = arith.constant 0 : index
    %36 = vector.load %arg7[%c0_19, %c0_20] : memref<1x84xf32, #tpu.memory_space<vmem>>, vector<1x84xf32>
    %37 = vector.broadcast %36 : vector<1x84xf32> to vector<2x84xf32>
    %38 = arith.addf %35, %37 : vector<2x84xf32>
    %cst_21 = arith.constant dense<0.000000e+00> : vector<84xf32>
    %39 = vector.multi_reduction <add>, %38, %cst_21 [0] : vector<2x84xf32> to vector<84xf32>
    %40 = vector.shape_cast %39 : vector<84xf32> to vector<1x84xf32>
    %cst_22 = arith.constant 2.000000e+00 : f32
    %41 = vector.broadcast %cst_22 : f32 to vector<1x84xf32>
    %42 = arith.divf %40, %41 : vector<1x84xf32>
    %43 = vector.broadcast %42 : vector<1x84xf32> to vector<2x84xf32>
    %44 = arith.subf %38, %43 : vector<2x84xf32>
    %45 = arith.mulf %44, %44 : vector<2x84xf32>
    %cst_23 = arith.constant dense<0.000000e+00> : vector<84xf32>
    %46 = vector.multi_reduction <add>, %45, %cst_23 [0] : vector<2x84xf32> to vector<84xf32>
    %47 = vector.shape_cast %46 : vector<84xf32> to vector<1x84xf32>
    %cst_24 = arith.constant 2.000000e+00 : f32
    %48 = vector.broadcast %cst_24 : f32 to vector<1x84xf32>
    %49 = arith.divf %47, %48 : vector<1x84xf32>
    %50 = vector.broadcast %42 : vector<1x84xf32> to vector<2x84xf32>
    %51 = arith.subf %38, %50 : vector<2x84xf32>
    %c0_25 = arith.constant 0 : index
    %c0_26 = arith.constant 0 : index
    %52 = vector.load %arg8[%c0_25, %c0_26] : memref<1x84xf32, #tpu.memory_space<vmem>>, vector<1x84xf32>
    %cst_27 = arith.constant 9.99999974E-6 : f32
    %53 = vector.broadcast %cst_27 : f32 to vector<1x84xf32>
    %54 = arith.addf %49, %53 : vector<1x84xf32>
    %55 = math.rsqrt %54 : vector<1x84xf32>
    %56 = arith.mulf %52, %55 : vector<1x84xf32>
    %57 = vector.broadcast %56 : vector<1x84xf32> to vector<2x84xf32>
    %58 = arith.mulf %51, %57 : vector<2x84xf32>
    %c0_28 = arith.constant 0 : index
    %c0_29 = arith.constant 0 : index
    %59 = vector.load %arg9[%c0_28, %c0_29] : memref<1x84xf32, #tpu.memory_space<vmem>>, vector<1x84xf32>
    %60 = vector.broadcast %59 : vector<1x84xf32> to vector<2x84xf32>
    %61 = arith.addf %58, %60 : vector<2x84xf32>
    %cst_30 = arith.constant 0.000000e+00 : f32
    %62 = vector.broadcast %cst_30 : f32 to vector<2x84xf32>
    %63 = arith.cmpf oge, %61, %62 : vector<2x84xf32>
    %cst_31 = arith.constant 0.00999999977 : f32
    %64 = vector.broadcast %cst_31 : f32 to vector<2x84xf32>
    %65 = arith.mulf %64, %61 : vector<2x84xf32>
    %66 = arith.select %63, %61, %65 : vector<2x84xi1>, vector<2x84xf32>
    %c0_32 = arith.constant 0 : index
    %c0_33 = arith.constant 0 : index
    %67 = vector.load %arg10[%c0_32, %c0_33] : memref<84x40xf32, #tpu.memory_space<vmem>>, vector<84x40xf32>
    %cst_34 = arith.constant dense<0.000000e+00> : vector<2x40xf32>
    %68 = tpu.matmul %66, %67, %cst_34 {dimension_numbers = #tpu.dot_dimension_numbers<[1], [0], [0], [1], [0, 0, 1, 1], [], []>} : vector<2x84xf32>, vector<84x40xf32>, vector<2x40xf32> -> vector<2x40xf32>
    %c0_35 = arith.constant 0 : index
    %c0_36 = arith.constant 0 : index
    %69 = vector.load %arg11[%c0_35, %c0_36] : memref<1x40xf32, #tpu.memory_space<vmem>>, vector<1x40xf32>
    %70 = vector.broadcast %69 : vector<1x40xf32> to vector<2x40xf32>
    %71 = arith.addf %68, %70 : vector<2x40xf32>
    %cst_37 = arith.constant 0.000000e+00 : f32
    %72 = vector.broadcast %cst_37 : f32 to vector<2x40xf32>
    %73 = arith.subf %72, %71 : vector<2x40xf32>
    %74 = math.exp %73 : vector<2x40xf32>
    %cst_38 = arith.constant 1.000000e+00 : f32
    %75 = vector.broadcast %cst_38 : f32 to vector<2x40xf32>
    %76 = arith.addf %75, %74 : vector<2x40xf32>
    %cst_39 = arith.constant 1.000000e+00 : f32
    %77 = vector.broadcast %cst_39 : f32 to vector<2x40xf32>
    %78 = arith.divf %77, %76 : vector<2x40xf32>
    %c0_40 = arith.constant 0 : index
    %c0_41 = arith.constant 0 : index
    %79 = vector.load %arg12[%c0_40, %c0_41] : memref<2x40xf32, #tpu.memory_space<vmem>>, vector<2x40xf32>
    tpu.vector_store %arg12[%c0_40, %c0_41], %78 {strides = array<i32>} : memref<2x40xf32, #tpu.memory_space<vmem>>, vector<2x40xf32>,
    return
  }
  func.func @transform_0(%arg0: i32) -> (i32, i32) {
    %c0_i32 = arith.constant 0 : i32
    %c0_i32_0 = arith.constant 0 : i32
    %c0_i32_1 = arith.constant 0 : i32
    return %c0_i32, %c0_i32_0 : i32, i32
  }
  func.func @transform_1(%arg0: i32) -> (i32, i32) {
    %c0_i32 = arith.constant 0 : i32
    %c0_i32_0 = arith.constant 0 : i32
    %c0_i32_1 = arith.constant 0 : i32
    return %c0_i32, %c0_i32_0 : i32, i32
  }
  func.func @transform_2(%arg0: i32) -> (i32, i32) {
    %c0_i32 = arith.constant 0 : i32
    %c0_i32_0 = arith.constant 0 : i32
    %c0_i32_1 = arith.constant 0 : i32
    return %c0_i32, %c0_i32_0 : i32, i32
  }
  func.func @transform_3(%arg0: i32) -> (i32, i32) {
    %c0_i32 = arith.constant 0 : i32
    %c0_i32_0 = arith.constant 0 : i32
    %c0_i32_1 = arith.constant 0 : i32
    return %c0_i32, %c0_i32_0 : i32, i32
  }
  func.func @transform_4(%arg0: i32) -> (i32, i32) {
    %c0_i32 = arith.constant 0 : i32
    %c0_i32_0 = arith.constant 0 : i32
    %c0_i32_1 = arith.constant 0 : i32
    return %c0_i32, %c0_i32_0 : i32, i32
  }
  func.func @transform_5(%arg0: i32) -> (i32, i32) {
    %c0_i32 = arith.constant 0 : i32
    %c0_i32_0 = arith.constant 0 : i32
    %c0_i32_1 = arith.constant 0 : i32
    return %c0_i32, %c0_i32_0 : i32, i32
  }
  func.func @transform_6(%arg0: i32) -> (i32, i32) {
    %c0_i32 = arith.constant 0 : i32
    %c0_i32_0 = arith.constant 0 : i32
    %c0_i32_1 = arith.constant 0 : i32
    return %c0_i32, %c0_i32_0 : i32, i32
  }
  func.func @transform_7(%arg0: i32) -> (i32, i32) {
    %c0_i32 = arith.constant 0 : i32
    %c0_i32_0 = arith.constant 0 : i32
    %c0_i32_1 = arith.constant 0 : i32
    return %c0_i32, %c0_i32_0 : i32, i32
  }
  func.func @transform_8(%arg0: i32) -> (i32, i32) {
    %c0_i32 = arith.constant 0 : i32
    %c0_i32_0 = arith.constant 0 : i32
    %c0_i32_1 = arith.constant 0 : i32
    return %c0_i32, %c0_i32_0 : i32, i32
  }
  func.func @transform_9(%arg0: i32) -> (i32, i32) {
    %c0_i32 = arith.constant 0 : i32
    %c0_i32_0 = arith.constant 0 : i32
    %c0_i32_1 = arith.constant 0 : i32
    return %c0_i32, %c0_i32_0 : i32, i32
  }
  func.func @transform_10(%arg0: i32) -> (i32, i32) {
    %c0_i32 = arith.constant 0 : i32
    %c0_i32_0 = arith.constant 0 : i32
    %c0_i32_1 = arith.constant 0 : i32
    return %c0_i32, %c0_i32_0 : i32, i32
  }
  func.func @transform_11(%arg0: i32) -> (i32, i32) {
    %c0_i32 = arith.constant 0 : i32
    %c0_i32_0 = arith.constant 0 : i32
    %c0_i32_1 = arith.constant 0 : i32
    return %c0_i32, %c0_i32_0 : i32, i32
  }
}

</mosaic_0001>

<llo_original>
// kernel: net_forward.3
$region0: #{net_forward.3}
  #allocation0 [shape = 'u32[]', space=smem, size = 0x4, offset = 0x4, fixed_abs, tag = 'smem constant byte address 0x4 - core index']
  #allocation1 [shape = 'u32[144,128]{1,0:T(1,128)}', space=vmem, size = 0x12000, scoped, tag = 'internal scratch']
  %s0 = inlined_call_operand.vmem [shape: f32[6,75], index: 0, kind: input, shape index: {}]
  %s1 = inlined_call_operand.vmem [shape: f32[75,7200], index: 1, kind: input, shape index: {}]
  %s2 = inlined_call_operand.vmem [shape: f32[6,1], index: 2, kind: input, shape index: {}]
  %s3 = inlined_call_operand.vmem [shape: f32[6,1], index: 3, kind: input, shape index: {}]
  %s4 = inlined_call_operand.vmem [shape: f32[6,1], index: 4, kind: input, shape index: {}]
  %s5 = inlined_call_operand.vmem [shape: f32[6,7200], index: 5, kind: output, shape index: {}]
  %s6 = sld [smem:[#allocation0]]
  $region30: #{net_forward.3} parent=0
    _
  %s8 = ssub.s32 1, %s6
  %s9 = scalar_select 0, %s8, %s6
  // Predicated region
  $region2: #{net_forward.3} parent=0 // pred_check
    _
  $region3: #{net_forward.3} parent=0 // pred_check_branch
    %11 = sbr.rel (0) target = $region5
  $region4: #{net_forward.3} parent=0 // pred_region
    _
  $region5: #{net_forward.3} parent=0 // pred_fallthru
    _
  // Predicated region
  $region6: #{net_forward.3} parent=0 // pred_check
    _
  $region7: #{net_forward.3} parent=0 // pred_check_branch
    %13 = sbr.rel (0) target = $region9
  $region8: #{net_forward.3} parent=0 // pred_region
    _
  $region9: #{net_forward.3} parent=0 // pred_fallthru
    _
  // Predicated region
  $region10: #{net_forward.3} parent=0 // pred_check
    _
  $region11: #{net_forward.3} parent=0 // pred_check_branch
    %15 = sbr.rel (0) target = $region13
  $region12: #{net_forward.3} parent=0 // pred_region
    _
  $region13: #{net_forward.3} parent=0 // pred_fallthru
    _
  // Predicated region
  $region14: #{net_forward.3} parent=0 // pred_check
    _
  $region15: #{net_forward.3} parent=0 // pred_check_branch
    %17 = sbr.rel (0) target = $region17
  $region16: #{net_forward.3} parent=0 // pred_region
    _
  $region17: #{net_forward.3} parent=0 // pred_fallthru
    _
  // Predicated region
  $region18: #{net_forward.3} parent=0 // pred_check
    _
  $region19: #{net_forward.3} parent=0 // pred_check_branch
    %19 = sbr.rel (0) target = $region21
  $region20: #{net_forward.3} parent=0 // pred_region
    _
  $region21: #{net_forward.3} parent=0 // pred_fallthru
    _
  %v20 = vld [vmem:[%s0] sm:$0x3f]
  %v21 = vld [vmem:[%s1] sm:$0xff]
  %v22 = vld [vmem:[%s1 + $0x8] sm:$0xff]
  %v23 = vld [vmem:[%s1 + $0x10] sm:$0xff]
  %v24 = vld [vmem:[%s1 + $0x18] sm:$0xff]
  %v25 = vld [vmem:[%s1 + $0x20] sm:$0xff]
  %v26 = vld [vmem:[%s1 + $0x28] sm:$0xff]
  %v27 = vld [vmem:[%s1 + $0x30] sm:$0xff]
  %v28 = vld [vmem:[%s1 + $0x38] sm:$0xff]
  %v29 = vld [vmem:[%s1 + $0x40] sm:$0xff]
  %v30 = vld [vmem:[%s1 + $0x48] sm:$0xff]
  %v31 = vld [vmem:[%s1 + $0x50] sm:$0xff]
  %v32 = vld [vmem:[%s1 + $0x58] sm:$0xff]
  %v33 = vld [vmem:[%s1 + $0x60] sm:$0xff]
  %v34 = vld [vmem:[%s1 + $0x68] sm:$0xff]
  %v35 = vld [vmem:[%s1 + $0x70] sm:$0xff]
  %v36 = vld [vmem:[%s1 + $0x78] sm:$0xff]
  %v37 = vld [vmem:[%s1 + $0x80] sm:$0xff]
  %v38 = vld [vmem:[%s1 + $0x88] sm:$0xff]
  %v39 = vld [vmem:[%s1 + $0x90] sm:$0xff]
  %v40 = vld [vmem:[%s1 + $0x98] sm:$0xff]
  %v41 = vld [vmem:[%s1 + $0xa0] sm:$0xff]
  %v42 = vld [vmem:[%s1 + $0xa8] sm:$0xff]
  %v43 = vld [vmem:[%s1 + $0xb0] sm:$0xff]
  %v44 = vld [vmem:[%s1 + $0xb8] sm:$0xff]
  %v45 = vld [vmem:[%s1 + $0xc0] sm:$0xff]
  %v46 = vld [vmem:[%s1 + $0xc8] sm:$0xff]
  %v47 = vld [vmem:[%s1 + $0xd0] sm:$0xff]
  %v48 = vld [vmem:[%s1 + $0xd8] sm:$0xff]
  %v49 = vld [vmem:[%s1 + $0xe0] sm:$0xff]
  %v50 = vld [vmem:[%s1 + $0xe8] sm:$0xff]
  %v51 = vld [vmem:[%s1 + $0xf0] sm:$0xff]
  %v52 = vld [vmem:[%s1 + $0xf8] sm:$0xff]
  %v53 = vld [vmem:[%s1 + $0x100] sm:$0xff]
  %v54 = vld [vmem:[%s1 + $0x108] sm:$0xff]
  %v55 = vld [vmem:[%s1 + $0x110] sm:$0xff]
  %v56 = vld [vmem:[%s1 + $0x118] sm:$0xff]
  %v57 = vld [vmem:[%s1 + $0x120] sm:$0xff]
  %v58 = vld [vmem:[%s1 + $0x128] sm:$0xff]
  %v59 = vld [vmem:[%s1 + $0x130] sm:$0xff]
  %v60 = vld [vmem:[%s1 + $0x138] sm:$0xff]
  %v61 = vld [vmem:[%s1 + $0x140] sm:$0xff]
  %v62 = vld [vmem:[%s1 + $0x148] sm:$0xff]
  %v63 = vld [vmem:[%s1 + $0x150] sm:$0xff]
  %v64 = vld [vmem:[%s1 + $0x158] sm:$0xff]
  %v65 = vld [vmem:[%s1 + $0x160] sm:$0xff]
  %v66 = vld [vmem:[%s1 + $0x168] sm:$0xff]
  %v67 = vld [vmem:[%s1 + $0x170] sm:$0xff]
  %v68 = vld [vmem:[%s1 + $0x178] sm:$0xff]
  %v69 = vld [vmem:[%s1 + $0x180] sm:$0xff]
  %v70 = vld [vmem:[%s1 + $0x188] sm:$0xff]
  %v71 = vld [vmem:[%s1 + $0x190] sm:$0xff]
  %v72 = vld [vmem:[%s1 + $0x198] sm:$0xff]
  %v73 = vld [vmem:[%s1 + $0x1a0] sm:$0xff]
  %v74 = vld [vmem:[%s1 + $0x1a8] sm:$0xff]
  %v75 = vld [vmem:[%s1 + $0x1b0] sm:$0xff]
  %v76 = vld [vmem:[%s1 + $0x1b8] sm:$0xff]
  %v77 = vld [vmem:[%s1 + $0x1c0] sm:$0xff]
  %v78 = vld [vmem:[%s1 + $0x1c8] sm:$0xff]
  %v79 = vld [vmem:[%s1 + $0x1d0] sm:$0xff]
  %v80 = vld [vmem:[%s1 + $0x1d8] sm:$0xff]
  %v81 = vld [vmem:[%s1 + $0x1e0] sm:$0xff]
  %v82 = vld [vmem:[%s1 + $0x1e8] sm:$0xff]
  %v83 = vld [vmem:[%s1 + $0x1f0] sm:$0xff]
  %v84 = vld [vmem:[%s1 + $0x1f8] sm:$0xff]
  %v85 = vld [vmem:[%s1 + $0x200] sm:$0xff]
  %v86 = vld [vmem:[%s1 + $0x208] sm:$0xff]
  %v87 = vld [vmem:[%s1 + $0x210] sm:$0xff]
  %v88 = vld [vmem:[%s1 + $0x218] sm:$0xff]
  %v89 = vld [vmem:[%s1 + $0x220] sm:$0xff]
  %v90 = vld [vmem:[%s1 + $0x228] sm:$0xff]
  %v91 = vld [vmem:[%s1 + $0x230] sm:$0xff]
  %v92 = vld [vmem:[%s1 + $0x238] sm:$0xff]
  %v93 = vld [vmem:[%s1 + $0x240] sm:$0xff]
  %v94 = vld [vmem:[%s1 + $0x248] sm:$0xff]
  %v95 = vld [vmem:[%s1 + $0x250] sm:$0xff]
  %v96 = vld [vmem:[%s1 + $0x258] sm:$0xff]
  %v97 = vld [vmem:[%s1 + $0x260] sm:$0xff]
  %v98 = vld [vmem:[%s1 + $0x268] sm:$0xff]
  %v99 = vld [vmem:[%s1 + $0x270] sm:$0xff]
  %v100 = vld [vmem:[%s1 + $0x278] sm:$0xff]
  %v101 = vld [vmem:[%s1 + $0x280] sm:$0xff]
  %v102 = vld [vmem:[%s1 + $0x288] sm:$0xff]
  %v103 = vld [vmem:[%s1 + $0x290] sm:$0xff]
  %v104 = vld [vmem:[%s1 + $0x298] sm:$0xff]
  %v105 = vld [vmem:[%s1 + $0x2a0] sm:$0xff]
  %v106 = vld [vmem:[%s1 + $0x2a8] sm:$0xff]
  %v107 = vld [vmem:[%s1 + $0x2b0] sm:$0xff]
  %v108 = vld [vmem:[%s1 + $0x2b8] sm:$0xff]
  %v109 = vld [vmem:[%s1 + $0x2c0] sm:$0xff]
  %v110 = vld [vmem:[%s1 + $0x2c8] sm:$0xff]
  %v111 = vld [vmem:[%s1 + $0x2d0] sm:$0xff]
  %v112 = vld [vmem:[%s1 + $0x2d8] sm:$0xff]
  %v113 = vld [vmem:[%s1 + $0x2e0] sm:$0xff]
  %v114 = vld [vmem:[%s1 + $0x2e8] sm:$0xff]
  %v115 = vld [vmem:[%s1 + $0x2f0] sm:$0xff]
  %v116 = vld [vmem:[%s1 + $0x2f8] sm:$0xff]
  %v117 = vld [vmem:[%s1 + $0x300] sm:$0xff]
  %v118 = vld [vmem:[%s1 + $0x308] sm:$0xff]
  %v119 = vld [vmem:[%s1 + $0x310] sm:$0xff]
  %v120 = vld [vmem:[%s1 + $0x318] sm:$0xff]
  %v121 = vld [vmem:[%s1 + $0x320] sm:$0xff]
  %v122 = vld [vmem:[%s1 + $0x328] sm:$0xff]
  %v123 = vld [vmem:[%s1 + $0x330] sm:$0xff]
  %v124 = vld [vmem:[%s1 + $0x338] sm:$0xff]
  %v125 = vld [vmem:[%s1 + $0x340] sm:$0xff]
  %v126 = vld [vmem:[%s1 + $0x348] sm:$0xff]
  %v127 = vld [vmem:[%s1 + $0x350] sm:$0xff]
  %v128 = vld [vmem:[%s1 + $0x358] sm:$0xff]
  %v129 = vld [vmem:[%s1 + $0x360] sm:$0xff]
  %v130 = vld [vmem:[%s1 + $0x368] sm:$0xff]
  %v131 = vld [vmem:[%s1 + $0x370] sm:$0xff]
  %v132 = vld [vmem:[%s1 + $0x378] sm:$0xff]
  %v133 = vld [vmem:[%s1 + $0x380] sm:$0xff]
  %v134 = vld [vmem:[%s1 + $0x388] sm:$0xff]
  %v135 = vld [vmem:[%s1 + $0x390] sm:$0xff]
  %v136 = vld [vmem:[%s1 + $0x398] sm:$0xff]
  %v137 = vld [vmem:[%s1 + $0x3a0] sm:$0xff]
  %v138 = vld [vmem:[%s1 + $0x3a8] sm:$0xff]
  %v139 = vld [vmem:[%s1 + $0x3b0] sm:$0xff]
  %v140 = vld [vmem:[%s1 + $0x3b8] sm:$0xff]
  %v141 = vld [vmem:[%s1 + $0x3c0] sm:$0xff]
  %v142 = vld [vmem:[%s1 + $0x3c8] sm:$0xff]
  %v143 = vld [vmem:[%s1 + $0x3d0] sm:$0xff]
  %v144 = vld [vmem:[%s1 + $0x3d8] sm:$0xff]
  %v145 = vld [vmem:[%s1 + $0x3e0] sm:$0xff]
  %v146 = vld [vmem:[%s1 + $0x3e8] sm:$0xff]
  %v147 = vld [vmem:[%s1 + $0x3f0] sm:$0xff]
  %v148 = vld [vmem:[%s1 + $0x3f8] sm:$0xff]
  %v149 = vld [vmem:[%s1 + $0x400] sm:$0xff]
  %v150 = vld [vmem:[%s1 + $0x408] sm:$0xff]
  %v151 = vld [vmem:[%s1 + $0x410] sm:$0xff]
  %v152 = vld [vmem:[%s1 + $0x418] sm:$0xff]
  %v153 = vld [vmem:[%s1 + $0x420] sm:$0xff]
  %v154 = vld [vmem:[%s1 + $0x428] sm:$0xff]
  %v155 = vld [vmem:[%s1 + $0x430] sm:$0xff]
  %v156 = vld [vmem:[%s1 + $0x438] sm:$0xff]
  %v157 = vld [vmem:[%s1 + $0x440] sm:$0xff]
  %v158 = vld [vmem:[%s1 + $0x448] sm:$0xff]
  %v159 = vld [vmem:[%s1 + $0x450] sm:$0xff]
  %v160 = vld [vmem:[%s1 + $0x458] sm:$0xff]
  %v161 = vld [vmem:[%s1 + $0x460] sm:$0xff]
  %v162 = vld [vmem:[%s1 + $0x468] sm:$0xff]
  %v163 = vld [vmem:[%s1 + $0x470] sm:$0xff]
  %v164 = vld [vmem:[%s1 + $0x478] sm:$0xff]
  %v165 = vld [vmem:[%s1 + $0x480] sm:$0xff]
  %v166 = vld [vmem:[%s1 + $0x488] sm:$0xff]
  %v167 = vld [vmem:[%s1 + $0x490] sm:$0xff]
  %v168 = vld [vmem:[%s1 + $0x498] sm:$0xff]
  %v169 = vld [vmem:[%s1 + $0x4a0] sm:$0xff]
  %v170 = vld [vmem:[%s1 + $0x4a8] sm:$0xff]
  %v171 = vld [vmem:[%s1 + $0x4b0] sm:$0xff]
  %v172 = vld [vmem:[%s1 + $0x4b8] sm:$0xff]
  %v173 = vld [vmem:[%s1 + $0x4c0] sm:$0xff]
  %v174 = vld [vmem:[%s1 + $0x4c8] sm:$0xff]
  %v175 = vld [vmem:[%s1 + $0x4d0] sm:$0xff]
  %v176 = vld [vmem:[%s1 + $0x4d8] sm:$0xff]
  %v177 = vld [vmem:[%s1 + $0x4e0] sm:$0xff]
  %v178 = vld [vmem:[%s1 + $0x4e8] sm:$0xff]
  %v179 = vld [vmem:[%s1 + $0x4f0] sm:$0xff]
  %v180 = vld [vmem:[%s1 + $0x4f8] sm:$0xff]
  %v181 = vld [vmem:[%s1 + $0x500] sm:$0xff]
  %v182 = vld [vmem:[%s1 + $0x508] sm:$0xff]
  %v183 = vld [vmem:[%s1 + $0x510] sm:$0xff]
  %v184 = vld [vmem:[%s1 + $0x518] sm:$0xff]
  %v185 = vld [vmem:[%s1 + $0x520] sm:$0xff]
  %v186 = vld [vmem:[%s1 + $0x528] sm:$0xff]
  %v187 = vld [vmem:[%s1 + $0x530] sm:$0xff]
  %v188 = vld [vmem:[%s1 + $0x538] sm:$0xff]
  %v189 = vld [vmem:[%s1 + $0x540] sm:$0xff]
  %v190 = vld [vmem:[%s1 + $0x548] sm:$0xff]
  %v191 = vld [vmem:[%s1 + $0x550] sm:$0xff]
  %v192 = vld [vmem:[%s1 + $0x558] sm:$0xff]
  %v193 = vld [vmem:[%s1 + $0x560] sm:$0xff]
  %v194 = vld [vmem:[%s1 + $0x568] sm:$0xff]
  %v195 = vld [vmem:[%s1 + $0x570] sm:$0xff]
  %v196 = vld [vmem:[%s1 + $0x578] sm:$0xff]
  %v197 = vld [vmem:[%s1 + $0x580] sm:$0xff]
  %v198 = vld [vmem:[%s1 + $0x588] sm:$0xff]
  %v199 = vld [vmem:[%s1 + $0x590] sm:$0xff]
  %v200 = vld [vmem:[%s1 + $0x598] sm:$0xff]
  %v201 = vld [vmem:[%s1 + $0x5a0] sm:$0xff]
  %v202 = vld [vmem:[%s1 + $0x5a8] sm:$0xff]
  %v203 = vld [vmem:[%s1 + $0x5b0] sm:$0xff]
  %v204 = vld [vmem:[%s1 + $0x5b8] sm:$0xff]
  %v205 = vld [vmem:[%s1 + $0x5c0] sm:$0xff]
  %v206 = vld [vmem:[%s1 + $0x5c8] sm:$0xff]
  %v207 = vld [vmem:[%s1 + $0x5d0] sm:$0xff]
  %v208 = vld [vmem:[%s1 + $0x5d8] sm:$0xff]
  %v209 = vld [vmem:[%s1 + $0x5e0] sm:$0xff]
  %v210 = vld [vmem:[%s1 + $0x5e8] sm:$0xff]
  %v211 = vld [vmem:[%s1 + $0x5f0] sm:$0xff]
  %v212 = vld [vmem:[%s1 + $0x5f8] sm:$0xff]
  %v213 = vld [vmem:[%s1 + $0x600] sm:$0xff]
  %v214 = vld [vmem:[%s1 + $0x608] sm:$0xff]
  %v215 = vld [vmem:[%s1 + $0x610] sm:$0xff]
  %v216 = vld [vmem:[%s1 + $0x618] sm:$0xff]
  %v217 = vld [vmem:[%s1 + $0x620] sm:$0xff]
  %v218 = vld [vmem:[%s1 + $0x628] sm:$0xff]
  %v219 = vld [vmem:[%s1 + $0x630] sm:$0xff]
  %v220 = vld [vmem:[%s1 + $0x638] sm:$0xff]
  %v221 = vld [vmem:[%s1 + $0x640] sm:$0xff]
  %v222 = vld [vmem:[%s1 + $0x648] sm:$0xff]
  %v223 = vld [vmem:[%s1 + $0x650] sm:$0xff]
  %v224 = vld [vmem:[%s1 + $0x658] sm:$0xff]
  %v225 = vld [vmem:[%s1 + $0x660] sm:$0xff]
  %v226 = vld [vmem:[%s1 + $0x668] sm:$0xff]
  %v227 = vld [vmem:[%s1 + $0x670] sm:$0xff]
  %v228 = vld [vmem:[%s1 + $0x678] sm:$0xff]
  %v229 = vld [vmem:[%s1 + $0x680] sm:$0xff]
  %v230 = vld [vmem:[%s1 + $0x688] sm:$0xff]
  %v231 = vld [vmem:[%s1 + $0x690] sm:$0xff]
  %v232 = vld [vmem:[%s1 + $0x698] sm:$0xff]
  %v233 = vld [vmem:[%s1 + $0x6a0] sm:$0xff]
  %v234 = vld [vmem:[%s1 + $0x6a8] sm:$0xff]
  %v235 = vld [vmem:[%s1 + $0x6b0] sm:$0xff]
  %v236 = vld [vmem:[%s1 + $0x6b8] sm:$0xff]
  %v237 = vld [vmem:[%s1 + $0x6c0] sm:$0xff]
  %v238 = vld [vmem:[%s1 + $0x6c8] sm:$0xff]
  %v239 = vld [vmem:[%s1 + $0x6d0] sm:$0xff]
  %v240 = vld [vmem:[%s1 + $0x6d8] sm:$0xff]
  %v241 = vld [vmem:[%s1 + $0x6e0] sm:$0xff]
  %v242 = vld [vmem:[%s1 + $0x6e8] sm:$0xff]
  %v243 = vld [vmem:[%s1 + $0x6f0] sm:$0xff]
  %v244 = vld [vmem:[%s1 + $0x6f8] sm:$0xff]
  %v245 = vld [vmem:[%s1 + $0x700] sm:$0xff]
  %v246 = vld [vmem:[%s1 + $0x708] sm:$0xff]
  %v247 = vld [vmem:[%s1 + $0x710] sm:$0xff]
  %v248 = vld [vmem:[%s1 + $0x718] sm:$0xff]
  %v249 = vld [vmem:[%s1 + $0x720] sm:$0xff]
  %v250 = vld [vmem:[%s1 + $0x728] sm:$0xff]
  %v251 = vld [vmem:[%s1 + $0x730] sm:$0xff]
  %v252 = vld [vmem:[%s1 + $0x738] sm:$0xff]
  %v253 = vld [vmem:[%s1 + $0x740] sm:$0xff]
  %v254 = vld [vmem:[%s1 + $0x748] sm:$0xff]
  %v255 = vld [vmem:[%s1 + $0x750] sm:$0xff]
  %v256 = vld [vmem:[%s1 + $0x758] sm:$0xff]
  %v257 = vld [vmem:[%s1 + $0x760] sm:$0xff]
  %v258 = vld [vmem:[%s1 + $0x768] sm:$0xff]
  %v259 = vld [vmem:[%s1 + $0x770] sm:$0xff]
  %v260 = vld [vmem:[%s1 + $0x778] sm:$0xff]
  %v261 = vld [vmem:[%s1 + $0x780] sm:$0xff]
  %v262 = vld [vmem:[%s1 + $0x788] sm:$0xff]
  %v263 = vld [vmem:[%s1 + $0x790] sm:$0xff]
  %v264 = vld [vmem:[%s1 + $0x798] sm:$0xff]
  %v265 = vld [vmem:[%s1 + $0x7a0] sm:$0xff]
  %v266 = vld [vmem:[%s1 + $0x7a8] sm:$0xff]
  %v267 = vld [vmem:[%s1 + $0x7b0] sm:$0xff]
  %v268 = vld [vmem:[%s1 + $0x7b8] sm:$0xff]
  %v269 = vld [vmem:[%s1 + $0x7c0] sm:$0xff]
  %v270 = vld [vmem:[%s1 + $0x7c8] sm:$0xff]
  %v271 = vld [vmem:[%s1 + $0x7d0] sm:$0xff]
  %v272 = vld [vmem:[%s1 + $0x7d8] sm:$0xff]
  %v273 = vld [vmem:[%s1 + $0x7e0] sm:$0xff]
  %v274 = vld [vmem:[%s1 + $0x7e8] sm:$0xff]
  %v275 = vld [vmem:[%s1 + $0x7f0] sm:$0xff]
  %v276 = vld [vmem:[%s1 + $0x7f8] sm:$0xff]
  %v277 = vld [vmem:[%s1 + $0x800] sm:$0xff]
  %v278 = vld [vmem:[%s1 + $0x808] sm:$0xff]
  %v279 = vld [vmem:[%s1 + $0x810] sm:$0xff]
  %v280 = vld [vmem:[%s1 + $0x818] sm:$0xff]
  %v281 = vld [vmem:[%s1 + $0x820] sm:$0xff]
  %v282 = vld [vmem:[%s1 + $0x828] sm:$0xff]
  %v283 = vld [vmem:[%s1 + $0x830] sm:$0xff]
  %v284 = vld [vmem:[%s1 + $0x838] sm:$0xff]
  %v285 = vld [vmem:[%s1 + $0x840] sm:$0xff]
  %v286 = vld [vmem:[%s1 + $0x848] sm:$0xff]
  %v287 = vld [vmem:[%s1 + $0x850] sm:$0xff]
  %v288 = vld [vmem:[%s1 + $0x858] sm:$0xff]
  %v289 = vld [vmem:[%s1 + $0x860] sm:$0xff]
  %v290 = vld [vmem:[%s1 + $0x868] sm:$0xff]
  %v291 = vld [vmem:[%s1 + $0x870] sm:$0xff]
  %v292 = vld [vmem:[%s1 + $0x878] sm:$0xff]
  %v293 = vld [vmem:[%s1 + $0x880] sm:$0xff]
  %v294 = vld [vmem:[%s1 + $0x888] sm:$0xff]
  %v295 = vld [vmem:[%s1 + $0x890] sm:$0xff]
  %v296 = vld [vmem:[%s1 + $0x898] sm:$0xff]
  %v297 = vld [vmem:[%s1 + $0x8a0] sm:$0xff]
  %v298 = vld [vmem:[%s1 + $0x8a8] sm:$0xff]
  %v299 = vld [vmem:[%s1 + $0x8b0] sm:$0xff]
  %v300 = vld [vmem:[%s1 + $0x8b8] sm:$0xff]
  %v301 = vld [vmem:[%s1 + $0x8c0] sm:$0xff]
  %v302 = vld [vmem:[%s1 + $0x8c8] sm:$0xff]
  %v303 = vld [vmem:[%s1 + $0x8d0] sm:$0xff]
  %v304 = vld [vmem:[%s1 + $0x8d8] sm:$0xff]
  %v305 = vld [vmem:[%s1 + $0x8e0] sm:$0xff]
  %v306 = vld [vmem:[%s1 + $0x8e8] sm:$0xff]
  %v307 = vld [vmem:[%s1 + $0x8f0] sm:$0xff]
  %v308 = vld [vmem:[%s1 + $0x8f8] sm:$0xff]
  %v309 = vld [vmem:[%s1 + $0x900] sm:$0xff]
  %v310 = vld [vmem:[%s1 + $0x908] sm:$0xff]
  %v311 = vld [vmem:[%s1 + $0x910] sm:$0xff]
  %v312 = vld [vmem:[%s1 + $0x918] sm:$0xff]
  %v313 = vld [vmem:[%s1 + $0x920] sm:$0xff]
  %v314 = vld [vmem:[%s1 + $0x928] sm:$0xff]
  %v315 = vld [vmem:[%s1 + $0x930] sm:$0xff]
  %v316 = vld [vmem:[%s1 + $0x938] sm:$0xff]
  %v317 = vld [vmem:[%s1 + $0x940] sm:$0xff]
  %v318 = vld [vmem:[%s1 + $0x948] sm:$0xff]
  %v319 = vld [vmem:[%s1 + $0x950] sm:$0xff]
  %v320 = vld [vmem:[%s1 + $0x958] sm:$0xff]
  %v321 = vld [vmem:[%s1 + $0x960] sm:$0xff]
  %v322 = vld [vmem:[%s1 + $0x968] sm:$0xff]
  %v323 = vld [vmem:[%s1 + $0x970] sm:$0xff]
  %v324 = vld [vmem:[%s1 + $0x978] sm:$0xff]
  %v325 = vld [vmem:[%s1 + $0x980] sm:$0xff]
  %v326 = vld [vmem:[%s1 + $0x988] sm:$0xff]
  %v327 = vld [vmem:[%s1 + $0x990] sm:$0xff]
  %v328 = vld [vmem:[%s1 + $0x998] sm:$0xff]
  %v329 = vld [vmem:[%s1 + $0x9a0] sm:$0xff]
  %v330 = vld [vmem:[%s1 + $0x9a8] sm:$0xff]
  %v331 = vld [vmem:[%s1 + $0x9b0] sm:$0xff]
  %v332 = vld [vmem:[%s1 + $0x9b8] sm:$0xff]
  %v333 = vld [vmem:[%s1 + $0x9c0] sm:$0xff]
  %v334 = vld [vmem:[%s1 + $0x9c8] sm:$0xff]
  %v335 = vld [vmem:[%s1 + $0x9d0] sm:$0xff]
  %v336 = vld [vmem:[%s1 + $0x9d8] sm:$0xff]
  %v337 = vld [vmem:[%s1 + $0x9e0] sm:$0xff]
  %v338 = vld [vmem:[%s1 + $0x9e8] sm:$0xff]
  %v339 = vld [vmem:[%s1 + $0x9f0] sm:$0xff]
  %v340 = vld [vmem:[%s1 + $0x9f8] sm:$0xff]
  %v341 = vld [vmem:[%s1 + $0xa00] sm:$0xff]
  %v342 = vld [vmem:[%s1 + $0xa08] sm:$0xff]
  %v343 = vld [vmem:[%s1 + $0xa10] sm:$0xff]
  %v344 = vld [vmem:[%s1 + $0xa18] sm:$0xff]
  %v345 = vld [vmem:[%s1 + $0xa20] sm:$0xff]
  %v346 = vld [vmem:[%s1 + $0xa28] sm:$0xff]
  %v347 = vld [vmem:[%s1 + $0xa30] sm:$0xff]
  %v348 = vld [vmem:[%s1 + $0xa38] sm:$0xff]
  %v349 = vld [vmem:[%s1 + $0xa40] sm:$0xff]
  %v350 = vld [vmem:[%s1 + $0xa48] sm:$0xff]
  %v351 = vld [vmem:[%s1 + $0xa50] sm:$0xff]
  %v352 = vld [vmem:[%s1 + $0xa58] sm:$0xff]
  %v353 = vld [vmem:[%s1 + $0xa60] sm:$0xff]
  %v354 = vld [vmem:[%s1 + $0xa68] sm:$0xff]
  %v355 = vld [vmem:[%s1 + $0xa70] sm:$0xff]
  %v356 = vld [vmem:[%s1 + $0xa78] sm:$0xff]
  %v357 = vld [vmem:[%s1 + $0xa80] sm:$0xff]
  %v358 = vld [vmem:[%s1 + $0xa88] sm:$0xff]
  %v359 = vld [vmem:[%s1 + $0xa90] sm:$0xff]
  %v360 = vld [vmem:[%s1 + $0xa98] sm:$0xff]
  %v361 = vld [vmem:[%s1 + $0xaa0] sm:$0xff]
  %v362 = vld [vmem:[%s1 + $0xaa8] sm:$0xff]
  %v363 = vld [vmem:[%s1 + $0xab0] sm:$0xff]
  %v364 = vld [vmem:[%s1 + $0xab8] sm:$0xff]
  %v365 = vld [vmem:[%s1 + $0xac0] sm:$0xff]
  %v366 = vld [vmem:[%s1 + $0xac8] sm:$0xff]
  %v367 = vld [vmem:[%s1 + $0xad0] sm:$0xff]
  %v368 = vld [vmem:[%s1 + $0xad8] sm:$0xff]
  %v369 = vld [vmem:[%s1 + $0xae0] sm:$0xff]
  %v370 = vld [vmem:[%s1 + $0xae8] sm:$0xff]
  %v371 = vld [vmem:[%s1 + $0xaf0] sm:$0xff]
  %v372 = vld [vmem:[%s1 + $0xaf8] sm:$0xff]
  %v373 = vld [vmem:[%s1 + $0xb00] sm:$0xff]
  %v374 = vld [vmem:[%s1 + $0xb08] sm:$0xff]
  %v375 = vld [vmem:[%s1 + $0xb10] sm:$0xff]
  %v376 = vld [vmem:[%s1 + $0xb18] sm:$0xff]
  %v377 = vld [vmem:[%s1 + $0xb20] sm:$0xff]
  %v378 = vld [vmem:[%s1 + $0xb28] sm:$0xff]
  %v379 = vld [vmem:[%s1 + $0xb30] sm:$0xff]
  %v380 = vld [vmem:[%s1 + $0xb38] sm:$0xff]
  %v381 = vld [vmem:[%s1 + $0xb40] sm:$0xff]
  %v382 = vld [vmem:[%s1 + $0xb48] sm:$0xff]
  %v383 = vld [vmem:[%s1 + $0xb50] sm:$0xff]
  %v384 = vld [vmem:[%s1 + $0xb58] sm:$0xff]
  %v385 = vld [vmem:[%s1 + $0xb60] sm:$0xff]
  %v386 = vld [vmem:[%s1 + $0xb68] sm:$0xff]
  %v387 = vld [vmem:[%s1 + $0xb70] sm:$0xff]
  %v388 = vld [vmem:[%s1 + $0xb78] sm:$0xff]
  %v389 = vld [vmem:[%s1 + $0xb80] sm:$0xff]
  %v390 = vld [vmem:[%s1 + $0xb88] sm:$0xff]
  %v391 = vld [vmem:[%s1 + $0xb90] sm:$0xff]
  %v392 = vld [vmem:[%s1 + $0xb98] sm:$0xff]
  %v393 = vld [vmem:[%s1 + $0xba0] sm:$0xff]
  %v394 = vld [vmem:[%s1 + $0xba8] sm:$0xff]
  %v395 = vld [vmem:[%s1 + $0xbb0] sm:$0xff]
  %v396 = vld [vmem:[%s1 + $0xbb8] sm:$0xff]
  %v397 = vld [vmem:[%s1 + $0xbc0] sm:$0xff]
  %v398 = vld [vmem:[%s1 + $0xbc8] sm:$0xff]
  %v399 = vld [vmem:[%s1 + $0xbd0] sm:$0xff]
  %v400 = vld [vmem:[%s1 + $0xbd8] sm:$0xff]
  %v401 = vld [vmem:[%s1 + $0xbe0] sm:$0xff]
  %v402 = vld [vmem:[%s1 + $0xbe8] sm:$0xff]
  %v403 = vld [vmem:[%s1 + $0xbf0] sm:$0xff]
  %v404 = vld [vmem:[%s1 + $0xbf8] sm:$0xff]
  %v405 = vld [vmem:[%s1 + $0xc00] sm:$0xff]
  %v406 = vld [vmem:[%s1 + $0xc08] sm:$0xff]
  %v407 = vld [vmem:[%s1 + $0xc10] sm:$0xff]
  %v408 = vld [vmem:[%s1 + $0xc18] sm:$0xff]
  %v409 = vld [vmem:[%s1 + $0xc20] sm:$0xff]
  %v410 = vld [vmem:[%s1 + $0xc28] sm:$0xff]
  %v411 = vld [vmem:[%s1 + $0xc30] sm:$0xff]
  %v412 = vld [vmem:[%s1 + $0xc38] sm:$0xff]
  %v413 = vld [vmem:[%s1 + $0xc40] sm:$0xff]
  %v414 = vld [vmem:[%s1 + $0xc48] sm:$0xff]
  %v415 = vld [vmem:[%s1 + $0xc50] sm:$0xff]
  %v416 = vld [vmem:[%s1 + $0xc58] sm:$0xff]
  %v417 = vld [vmem:[%s1 + $0xc60] sm:$0xff]
  %v418 = vld [vmem:[%s1 + $0xc68] sm:$0xff]
  %v419 = vld [vmem:[%s1 + $0xc70] sm:$0xff]
  %v420 = vld [vmem:[%s1 + $0xc78] sm:$0xff]
  %v421 = vld [vmem:[%s1 + $0xc80] sm:$0xff]
  %v422 = vld [vmem:[%s1 + $0xc88] sm:$0xff]
  %v423 = vld [vmem:[%s1 + $0xc90] sm:$0xff]
  %v424 = vld [vmem:[%s1 + $0xc98] sm:$0xff]
  %v425 = vld [vmem:[%s1 + $0xca0] sm:$0xff]
  %v426 = vld [vmem:[%s1 + $0xca8] sm:$0xff]
  %v427 = vld [vmem:[%s1 + $0xcb0] sm:$0xff]
  %v428 = vld [vmem:[%s1 + $0xcb8] sm:$0xff]
  %v429 = vld [vmem:[%s1 + $0xcc0] sm:$0xff]
  %v430 = vld [vmem:[%s1 + $0xcc8] sm:$0xff]
  %v431 = vld [vmem:[%s1 + $0xcd0] sm:$0xff]
  %v432 = vld [vmem:[%s1 + $0xcd8] sm:$0xff]
  %v433 = vld [vmem:[%s1 + $0xce0] sm:$0xff]
  %v434 = vld [vmem:[%s1 + $0xce8] sm:$0xff]
  %v435 = vld [vmem:[%s1 + $0xcf0] sm:$0xff]
  %v436 = vld [vmem:[%s1 + $0xcf8] sm:$0xff]
  %v437 = vld [vmem:[%s1 + $0xd00] sm:$0xff]
  %v438 = vld [vmem:[%s1 + $0xd08] sm:$0xff]
  %v439 = vld [vmem:[%s1 + $0xd10] sm:$0xff]
  %v440 = vld [vmem:[%s1 + $0xd18] sm:$0xff]
  %v441 = vld [vmem:[%s1 + $0xd20] sm:$0xff]
  %v442 = vld [vmem:[%s1 + $0xd28] sm:$0xff]
  %v443 = vld [vmem:[%s1 + $0xd30] sm:$0xff]
  %v444 = vld [vmem:[%s1 + $0xd38] sm:$0xff]
  %v445 = vld [vmem:[%s1 + $0xd40] sm:$0xff]
  %v446 = vld [vmem:[%s1 + $0xd48] sm:$0xff]
  %v447 = vld [vmem:[%s1 + $0xd50] sm:$0xff]
  %v448 = vld [vmem:[%s1 + $0xd58] sm:$0xff]
  %v449 = vld [vmem:[%s1 + $0xd60] sm:$0xff]
  %v450 = vld [vmem:[%s1 + $0xd68] sm:$0xff]
  %v451 = vld [vmem:[%s1 + $0xd70] sm:$0xff]
  %v452 = vld [vmem:[%s1 + $0xd78] sm:$0xff]
  %v453 = vld [vmem:[%s1 + $0xd80] sm:$0xff]
  %v454 = vld [vmem:[%s1 + $0xd88] sm:$0xff]
  %v455 = vld [vmem:[%s1 + $0xd90] sm:$0xff]
  %v456 = vld [vmem:[%s1 + $0xd98] sm:$0xff]
  %v457 = vld [vmem:[%s1 + $0xda0] sm:$0xff]
  %v458 = vld [vmem:[%s1 + $0xda8] sm:$0xff]
  %v459 = vld [vmem:[%s1 + $0xdb0] sm:$0xff]
  %v460 = vld [vmem:[%s1 + $0xdb8] sm:$0xff]
  %v461 = vld [vmem:[%s1 + $0xdc0] sm:$0xff]
  %v462 = vld [vmem:[%s1 + $0xdc8] sm:$0xff]
  %v463 = vld [vmem:[%s1 + $0xdd0] sm:$0xff]
  %v464 = vld [vmem:[%s1 + $0xdd8] sm:$0xff]
  %v465 = vld [vmem:[%s1 + $0xde0] sm:$0xff]
  %v466 = vld [vmem:[%s1 + $0xde8] sm:$0xff]
  %v467 = vld [vmem:[%s1 + $0xdf0] sm:$0xff]
  %v468 = vld [vmem:[%s1 + $0xdf8] sm:$0xff]
  %v469 = vld [vmem:[%s1 + $0xe00] sm:$0xff]
  %v470 = vld [vmem:[%s1 + $0xe08] sm:$0xff]
  %v471 = vld [vmem:[%s1 + $0xe10] sm:$0xff]
  %v472 = vld [vmem:[%s1 + $0xe18] sm:$0xff]
  %v473 = vld [vmem:[%s1 + $0xe20] sm:$0xff]
  %v474 = vld [vmem:[%s1 + $0xe28] sm:$0xff]
  %v475 = vld [vmem:[%s1 + $0xe30] sm:$0xff]
  %v476 = vld [vmem:[%s1 + $0xe38] sm:$0xff]
  %v477 = vld [vmem:[%s1 + $0xe40] sm:$0xff]
  %v478 = vld [vmem:[%s1 + $0xe48] sm:$0xff]
  %v479 = vld [vmem:[%s1 + $0xe50] sm:$0xff]
  %v480 = vld [vmem:[%s1 + $0xe58] sm:$0xff]
  %v481 = vld [vmem:[%s1 + $0xe60] sm:$0xff]
  %v482 = vld [vmem:[%s1 + $0xe68] sm:$0xff]
  %v483 = vld [vmem:[%s1 + $0xe70] sm:$0xff]
  %v484 = vld [vmem:[%s1 + $0xe78] sm:$0xff]
  %v485 = vld [vmem:[%s1 + $0xe80] sm:$0xff]
  %v486 = vld [vmem:[%s1 + $0xe88] sm:$0xff]
  %v487 = vld [vmem:[%s1 + $0xe90] sm:$0xff]
  %v488 = vld [vmem:[%s1 + $0xe98] sm:$0xff]
  %v489 = vld [vmem:[%s1 + $0xea0] sm:$0xff]
  %v490 = vld [vmem:[%s1 + $0xea8] sm:$0xff]
  %v491 = vld [vmem:[%s1 + $0xeb0] sm:$0xff]
  %v492 = vld [vmem:[%s1 + $0xeb8] sm:$0xff]
  %v493 = vld [vmem:[%s1 + $0xec0] sm:$0xff]
  %v494 = vld [vmem:[%s1 + $0xec8] sm:$0xff]
  %v495 = vld [vmem:[%s1 + $0xed0] sm:$0xff]
  %v496 = vld [vmem:[%s1 + $0xed8] sm:$0xff]
  %v497 = vld [vmem:[%s1 + $0xee0] sm:$0xff]
  %v498 = vld [vmem:[%s1 + $0xee8] sm:$0xff]
  %v499 = vld [vmem:[%s1 + $0xef0] sm:$0xff]
  %v500 = vld [vmem:[%s1 + $0xef8] sm:$0xff]
  %v501 = vld [vmem:[%s1 + $0xf00] sm:$0xff]
  %v502 = vld [vmem:[%s1 + $0xf08] sm:$0xff]
  %v503 = vld [vmem:[%s1 + $0xf10] sm:$0xff]
  %v504 = vld [vmem:[%s1 + $0xf18] sm:$0xff]
  %v505 = vld [vmem:[%s1 + $0xf20] sm:$0xff]
  %v506 = vld [vmem:[%s1 + $0xf28] sm:$0xff]
  %v507 = vld [vmem:[%s1 + $0xf30] sm:$0xff]
  %v508 = vld [vmem:[%s1 + $0xf38] sm:$0xff]
  %v509 = vld [vmem:[%s1 + $0xf40] sm:$0xff]
  %v510 = vld [vmem:[%s1 + $0xf48] sm:$0xff]
  %v511 = vld [vmem:[%s1 + $0xf50] sm:$0xff]
  %v512 = vld [vmem:[%s1 + $0xf58] sm:$0xff]
  %v513 = vld [vmem:[%s1 + $0xf60] sm:$0xff]
  %v514 = vld [vmem:[%s1 + $0xf68] sm:$0xff]
  %v515 = vld [vmem:[%s1 + $0xf70] sm:$0xff]
  %v516 = vld [vmem:[%s1 + $0xf78] sm:$0xff]
  %v517 = vld [vmem:[%s1 + $0xf80] sm:$0xff]
  %v518 = vld [vmem:[%s1 + $0xf88] sm:$0xff]
  %v519 = vld [vmem:[%s1 + $0xf90] sm:$0xff]
  %v520 = vld [vmem:[%s1 + $0xf98] sm:$0xff]
  %v521 = vld [vmem:[%s1 + $0xfa0] sm:$0xff]
  %v522 = vld [vmem:[%s1 + $0xfa8] sm:$0xff]
  %v523 = vld [vmem:[%s1 + $0xfb0] sm:$0xff]
  %v524 = vld [vmem:[%s1 + $0xfb8] sm:$0xff]
  %v525 = vld [vmem:[%s1 + $0xfc0] sm:$0xff]
  %v526 = vld [vmem:[%s1 + $0xfc8] sm:$0xff]
  %v527 = vld [vmem:[%s1 + $0xfd0] sm:$0xff]
  %v528 = vld [vmem:[%s1 + $0xfd8] sm:$0xff]
  %v529 = vld [vmem:[%s1 + $0xfe0] sm:$0xff]
  %v530 = vld [vmem:[%s1 + $0xfe8] sm:$0xff]
  %v531 = vld [vmem:[%s1 + $0xff0] sm:$0xff]
  %v532 = vld [vmem:[%s1 + $0xff8] sm:$0xff]
  %v533 = vld [vmem:[%s1 + $0x1000] sm:$0xff]
  %v534 = vld [vmem:[%s1 + $0x1008] sm:$0x7]
  %v535 = vld [vmem:[%s1 + $0x1010] sm:$0x7]
  %v536 = vld [vmem:[%s1 + $0x1018] sm:$0x7]
  %v537 = vld [vmem:[%s1 + $0x1020] sm:$0x7]
  %v538 = vld [vmem:[%s1 + $0x1028] sm:$0x7]
  %v539 = vld [vmem:[%s1 + $0x1030] sm:$0x7]
  %v540 = vld [vmem:[%s1 + $0x1038] sm:$0x7]
  %v541 = vld [vmem:[%s1 + $0x1040] sm:$0x7]
  %v542 = vld [vmem:[%s1 + $0x1048] sm:$0x7]
  %v543 = vld [vmem:[%s1 + $0x1050] sm:$0x7]
  %v544 = vld [vmem:[%s1 + $0x1058] sm:$0x7]
  %v545 = vld [vmem:[%s1 + $0x1060] sm:$0x7]
  %v546 = vld [vmem:[%s1 + $0x1068] sm:$0x7]
  %v547 = vld [vmem:[%s1 + $0x1070] sm:$0x7]
  %v548 = vld [vmem:[%s1 + $0x1078] sm:$0x7]
  %v549 = vld [vmem:[%s1 + $0x1080] sm:$0x7]
  %v550 = vld [vmem:[%s1 + $0x1088] sm:$0x7]
  %v551 = vld [vmem:[%s1 + $0x1090] sm:$0x7]
  %v552 = vld [vmem:[%s1 + $0x1098] sm:$0x7]
  %v553 = vld [vmem:[%s1 + $0x10a0] sm:$0x7]
  %v554 = vld [vmem:[%s1 + $0x10a8] sm:$0x7]
  %v555 = vld [vmem:[%s1 + $0x10b0] sm:$0x7]
  %v556 = vld [vmem:[%s1 + $0x10b8] sm:$0x7]
  %v557 = vld [vmem:[%s1 + $0x10c0] sm:$0x7]
  %v558 = vld [vmem:[%s1 + $0x10c8] sm:$0x7]
  %v559 = vld [vmem:[%s1 + $0x10d0] sm:$0x7]
  %v560 = vld [vmem:[%s1 + $0x10d8] sm:$0x7]
  %v561 = vld [vmem:[%s1 + $0x10e0] sm:$0x7]
  %v562 = vld [vmem:[%s1 + $0x10e8] sm:$0x7]
  %v563 = vld [vmem:[%s1 + $0x10f0] sm:$0x7]
  %v564 = vld [vmem:[%s1 + $0x10f8] sm:$0x7]
  %v565 = vld [vmem:[%s1 + $0x1100] sm:$0x7]
  %v566 = vld [vmem:[%s1 + $0x1108] sm:$0x7]
  %v567 = vld [vmem:[%s1 + $0x1110] sm:$0x7]
  %v568 = vld [vmem:[%s1 + $0x1118] sm:$0x7]
  %v569 = vld [vmem:[%s1 + $0x1120] sm:$0x7]
  %v570 = vld [vmem:[%s1 + $0x1128] sm:$0x7]
  %v571 = vld [vmem:[%s1 + $0x1130] sm:$0x7]
  %v572 = vld [vmem:[%s1 + $0x1138] sm:$0x7]
  %v573 = vld [vmem:[%s1 + $0x1140] sm:$0x7]
  %v574 = vld [vmem:[%s1 + $0x1148] sm:$0x7]
  %v575 = vld [vmem:[%s1 + $0x1150] sm:$0x7]
  %v576 = vld [vmem:[%s1 + $0x1158] sm:$0x7]
  %v577 = vld [vmem:[%s1 + $0x1160] sm:$0x7]
  %v578 = vld [vmem:[%s1 + $0x1168] sm:$0x7]
  %v579 = vld [vmem:[%s1 + $0x1170] sm:$0x7]
  %v580 = vld [vmem:[%s1 + $0x1178] sm:$0x7]
  %v581 = vld [vmem:[%s1 + $0x1180] sm:$0x7]
  %v582 = vld [vmem:[%s1 + $0x1188] sm:$0x7]
  %v583 = vld [vmem:[%s1 + $0x1190] sm:$0x7]
  %v584 = vld [vmem:[%s1 + $0x1198] sm:$0x7]
  %v585 = vld [vmem:[%s1 + $0x11a0] sm:$0x7]
  %v586 = vld [vmem:[%s1 + $0x11a8] sm:$0x7]
  %v587 = vld [vmem:[%s1 + $0x11b0] sm:$0x7]
  %v588 = vld [vmem:[%s1 + $0x11b8] sm:$0x7]
  %v589 = vld [vmem:[%s1 + $0x11c0] sm:$0x7]
  %v590 = vld [vmem:[%s1 + $0x11c8] sm:$0x7]
  %v591 = vld [vmem:[%s2] sm:$0x3f]
  %593 = vset.pattern.permute.xlu0 0
  %594 = vperm.xlu0 %593, %v591
  %v595 = vpop.permute.xlu0 %594
  %vm597 = vcmask 613376
  %v599 = vsel %vm597, %v20, 0
  %vm601 = vcmask 1042432
  %v603 = vsel %vm601, %v534, 0
  %v606 = vsel %vm601, %v535, 0
  %v609 = vsel %vm601, %v536, 0
  %v612 = vsel %vm601, %v537, 0
  %v615 = vsel %vm601, %v538, 0
  %v618 = vsel %vm601, %v539, 0
  %v621 = vsel %vm601, %v540, 0
  %v624 = vsel %vm601, %v541, 0
  %v627 = vsel %vm601, %v542, 0
  %v630 = vsel %vm601, %v543, 0
  %v633 = vsel %vm601, %v544, 0
  %v636 = vsel %vm601, %v545, 0
  %v639 = vsel %vm601, %v546, 0
  %v642 = vsel %vm601, %v547, 0
  %v645 = vsel %vm601, %v548, 0
  %v648 = vsel %vm601, %v549, 0
  %v651 = vsel %vm601, %v550, 0
  %v654 = vsel %vm601, %v551, 0
  %v657 = vsel %vm601, %v552, 0
  %v660 = vsel %vm601, %v553, 0
  %v663 = vsel %vm601, %v554, 0
  %v666 = vsel %vm601, %v555, 0
  %v669 = vsel %vm601, %v556, 0
  %v672 = vsel %vm601, %v557, 0
  %v675 = vsel %vm601, %v558, 0
  %v678 = vsel %vm601, %v559, 0
  %v681 = vsel %vm601, %v560, 0
  %v684 = vsel %vm601, %v561, 0
  %v687 = vsel %vm601, %v562, 0
  %v690 = vsel %vm601, %v563, 0
  %v693 = vsel %vm601, %v564, 0
  %v696 = vsel %vm601, %v565, 0
  %v699 = vsel %vm601, %v566, 0
  %v702 = vsel %vm601, %v567, 0
  %v705 = vsel %vm601, %v568, 0
  %v708 = vsel %vm601, %v569, 0
  %v711 = vsel %vm601, %v570, 0
  %v714 = vsel %vm601, %v571, 0
  %v717 = vsel %vm601, %v572, 0
  %v720 = vsel %vm601, %v573, 0
  %v723 = vsel %vm601, %v574, 0
  %v726 = vsel %vm601, %v575, 0
  %v729 = vsel %vm601, %v576, 0
  %v732 = vsel %vm601, %v577, 0
  %v735 = vsel %vm601, %v578, 0
  %v738 = vsel %vm601, %v579, 0
  %v741 = vsel %vm601, %v580, 0
  %v744 = vsel %vm601, %v581, 0
  %v747 = vsel %vm601, %v582, 0
  %v750 = vsel %vm601, %v583, 0
  %v753 = vsel %vm601, %v584, 0
  %v756 = vsel %vm601, %v585, 0
  %v759 = vsel %vm601, %v586, 0
  %v762 = vsel %vm601, %v587, 0
  %v765 = vsel %vm601, %v588, 0
  %v768 = vsel %vm601, %v589, 0
  %v771 = vsel %vm601, %v590, 0
  %773 = vmatprep.subr.mxu0 0.0
  %774 = vmatpush1.msra.mxu0 0.0
  %775 = vmatprep.subr.mxu0 0.0
  %776 = vmatpush1.msra.mxu0 0.0
  %777 = vmatprep.subr.mxu0 0.0
  %778 = vmatpush1.msra.mxu0 0.0
  %779 = vmatprep.subr.mxu0 0.0
  %780 = vmatpush1.msra.mxu0 0.0
  %781 = vmatprep.subr.mxu0 0.0
  %782 = vmatpush1.msra.mxu0 0.0
  %783 = vmatprep.subr.mxu0 0.0
  %784 = vmatpush1.msra.mxu0 0.0
  %785 = vmatprep.subr.mxu0 %v606
  %786 = vmatpush1.msra.mxu0 %v603
  %787 = vmatprep.subr.mxu0 %v478
  %788 = vmatpush1.msra.mxu0 %v477
  %789 = vmatprep.subr.mxu0 %v421
  %790 = vmatpush1.msra.mxu0 %v420
  %791 = vmatprep.subr.mxu0 %v364
  %792 = vmatpush1.msra.mxu0 %v363
  %793 = vmatprep.subr.mxu0 %v307
  %794 = vmatpush1.msra.mxu0 %v306
  %795 = vmatprep.subr.mxu0 %v250
  %796 = vmatpush1.msra.mxu0 %v249
  %797 = vmatprep.subr.mxu0 %v193
  %798 = vmatpush1.msra.mxu0 %v192
  %799 = vmatprep.subr.mxu0 %v136
  %800 = vmatpush1.msra.mxu0 %v135
  %801 = vmatprep.subr.mxu0 %v79
  %802 = vmatpush1.msra.mxu0 %v78
  %803 = vmatprep.subr.mxu0 %v22
  %804 = vmatpush1.msra.mxu0 %v21
  %805 = vmatprep.subr.mxu0 0.0
  %806 = vmatpush2.msra.mxu0 0.0
  %807 = vmatprep.subr.mxu0 0.0
  %808 = vmatpush2.msra.mxu0 0.0
  %809 = vmatprep.subr.mxu0 0.0
  %810 = vmatpush2.msra.mxu0 0.0
  %811 = vmatprep.subr.mxu0 0.0
  %812 = vmatpush2.msra.mxu0 0.0
  %813 = vmatprep.subr.mxu0 0.0
  %814 = vmatpush2.msra.mxu0 0.0
  %815 = vmatprep.subr.mxu0 0.0
  %816 = vmatpush2.msra.mxu0 0.0
  %817 = vmatprep.subr.mxu0 0.0
  %818 = vmatpush2.msra.mxu0 0.0
  %819 = vmatprep.subr.mxu0 0.0
  %820 = vmatpush2.msra.mxu0 0.0
  %821 = vmatprep.subr.mxu0 0.0
  %822 = vmatpush2.msra.mxu0 0.0
  %823 = vmatprep.subr.mxu0 0.0
  %824 = vmatpush2.msra.mxu0 0.0
  %825 = vmatprep.subr.mxu0 0.0
  %826 = vmatpush2.msra.mxu0 0.0
  %827 = vmatprep.subr.mxu0 0.0
  %828 = vmatpush2.msra.mxu0 0.0
  %829 = vmatprep.subr.mxu0 0.0
  %830 = vmatpush2.msra.mxu0 0.0
  %831 = vmatprep.subr.mxu0 0.0
  %832 = vmatpush2.msra.mxu0 0.0
  %833 = vmatprep.subr.mxu0 0.0
  %834 = vmatpush2.msra.mxu0 0.0
  %835 = vmatprep.subr.mxu0 0.0
  %836 = vmatpush2.msra.mxu0 0.0
  %837 = vmatprep.mubr.f32.mxu0 0.0
  %838 = vmatmul.mubr.f32.gmra.mxu0 %v599
  %v839 = vpop.f32.mrf.mxu0
  %v840 = vadd.f32 %v595, %v839
  %v841 = vpop.f32.mrf.mxu0
  %v842 = vadd.f32 %v595, %v841
  %843 = vdwg.mxu0
  %844 = vmatprep.subr.mxu0 0.0
  %845 = vmatpush1.msra.mxu0 0.0
  %846 = vmatprep.subr.mxu0 0.0
  %847 = vmatpush1.msra.mxu0 0.0
  %848 = vmatprep.subr.mxu0 0.0
  %849 = vmatpush1.msra.mxu0 0.0
  %850 = vmatprep.subr.mxu0 0.0
  %851 = vmatpush1.msra.mxu0 0.0
  %852 = vmatprep.subr.mxu0 0.0
  %853 = vmatpush1.msra.mxu0 0.0
  %854 = vmatprep.subr.mxu0 0.0
  %855 = vmatpush1.msra.mxu0 0.0
  %856 = vmatprep.subr.mxu0 %v612
  %857 = vmatpush1.msra.mxu0 %v609
  %858 = vmatprep.subr.mxu0 %v480
  %859 = vmatpush1.msra.mxu0 %v479
  %860 = vmatprep.subr.mxu0 %v423
  %861 = vmatpush1.msra.mxu0 %v422
  %862 = vmatprep.subr.mxu0 %v366
  %863 = vmatpush1.msra.mxu0 %v365
  %864 = vmatprep.subr.mxu0 %v309
  %865 = vmatpush1.msra.mxu0 %v308
  %866 = vmatprep.subr.mxu0 %v252
  %867 = vmatpush1.msra.mxu0 %v251
  %868 = vmatprep.subr.mxu0 %v195
  %869 = vmatpush1.msra.mxu0 %v194
  %870 = vmatprep.subr.mxu0 %v138
  %871 = vmatpush1.msra.mxu0 %v137
  %872 = vmatprep.subr.mxu0 %v81
  %873 = vmatpush1.msra.mxu0 %v80
  %874 = vmatprep.subr.mxu0 %v24
  %875 = vmatpush1.msra.mxu0 %v23
  %876 = vmatprep.subr.mxu0 0.0
  %877 = vmatpush2.msra.mxu0 0.0
  %878 = vmatprep.subr.mxu0 0.0
  %879 = vmatpush2.msra.mxu0 0.0
  %880 = vmatprep.subr.mxu0 0.0
  %881 = vmatpush2.msra.mxu0 0.0
  %882 = vmatprep.subr.mxu0 0.0
  %883 = vmatpush2.msra.mxu0 0.0
  %884 = vmatprep.subr.mxu0 0.0
  %885 = vmatpush2.msra.mxu0 0.0
  %886 = vmatprep.subr.mxu0 0.0
  %887 = vmatpush2.msra.mxu0 0.0
  %888 = vmatprep.subr.mxu0 0.0
  %889 = vmatpush2.msra.mxu0 0.0
  %890 = vmatprep.subr.mxu0 0.0
  %891 = vmatpush2.msra.mxu0 0.0
  %892 = vmatprep.subr.mxu0 0.0
  %893 = vmatpush2.msra.mxu0 0.0
  %894 = vmatprep.subr.mxu0 0.0
  %895 = vmatpush2.msra.mxu0 0.0
  %896 = vmatprep.subr.mxu0 0.0
  %897 = vmatpush2.msra.mxu0 0.0
  %898 = vmatprep.subr.mxu0 0.0
  %899 = vmatpush2.msra.mxu0 0.0
  %900 = vmatprep.subr.mxu0 0.0
  %901 = vmatpush2.msra.mxu0 0.0
  %902 = vmatprep.subr.mxu0 0.0
  %903 = vmatpush2.msra.mxu0 0.0
  %904 = vmatprep.subr.mxu0 0.0
  %905 = vmatpush2.msra.mxu0 0.0
  %906 = vmatprep.subr.mxu0 0.0
  %907 = vmatpush2.msra.mxu0 0.0
  %908 = vmatprep.mubr.f32.mxu0 0.0
  %909 = vmatmul.mubr.f32.gmra.mxu0 %v599
  %v910 = vpop.f32.mrf.mxu0
  %v911 = vadd.f32 %v595, %v910
  %v912 = vpop.f32.mrf.mxu0
  %v913 = vadd.f32 %v595, %v912
  %914 = vdwg.mxu0
  %915 = vmatprep.subr.mxu0 0.0
  %916 = vmatpush1.msra.mxu0 0.0
  %917 = vmatprep.subr.mxu0 0.0
  %918 = vmatpush1.msra.mxu0 0.0
  %919 = vmatprep.subr.mxu0 0.0
  %920 = vmatpush1.msra.mxu0 0.0
  %921 = vmatprep.subr.mxu0 0.0
  %922 = vmatpush1.msra.mxu0 0.0
  %923 = vmatprep.subr.mxu0 0.0
  %924 = vmatpush1.msra.mxu0 0.0
  %925 = vmatprep.subr.mxu0 0.0
  %926 = vmatpush1.msra.mxu0 0.0
  %927 = vmatprep.subr.mxu0 %v618
  %928 = vmatpush1.msra.mxu0 %v615
  %929 = vmatprep.subr.mxu0 %v482
  %930 = vmatpush1.msra.mxu0 %v481
  %931 = vmatprep.subr.mxu0 %v425
  %932 = vmatpush1.msra.mxu0 %v424
  %933 = vmatprep.subr.mxu0 %v368
  %934 = vmatpush1.msra.mxu0 %v367
  %935 = vmatprep.subr.mxu0 %v311
  %936 = vmatpush1.msra.mxu0 %v310
  %937 = vmatprep.subr.mxu0 %v254
  %938 = vmatpush1.msra.mxu0 %v253
  %939 = vmatprep.subr.mxu0 %v197
  %940 = vmatpush1.msra.mxu0 %v196
  %941 = vmatprep.subr.mxu0 %v140
  %942 = vmatpush1.msra.mxu0 %v139
  %943 = vmatprep.subr.mxu0 %v83
  %944 = vmatpush1.msra.mxu0 %v82
  %945 = vmatprep.subr.mxu0 %v26
  %946 = vmatpush1.msra.mxu0 %v25
  %947 = vmatprep.subr.mxu0 0.0
  %948 = vmatpush2.msra.mxu0 0.0
  %949 = vmatprep.subr.mxu0 0.0
  %950 = vmatpush2.msra.mxu0 0.0
  %951 = vmatprep.subr.mxu0 0.0
  %952 = vmatpush2.msra.mxu0 0.0
  %953 = vmatprep.subr.mxu0 0.0
  %954 = vmatpush2.msra.mxu0 0.0
  %955 = vmatprep.subr.mxu0 0.0
  %956 = vmatpush2.msra.mxu0 0.0
  %957 = vmatprep.subr.mxu0 0.0
  %958 = vmatpush2.msra.mxu0 0.0
  %959 = vmatprep.subr.mxu0 0.0
  %960 = vmatpush2.msra.mxu0 0.0
  %961 = vmatprep.subr.mxu0 0.0
  %962 = vmatpush2.msra.mxu0 0.0
  %963 = vmatprep.subr.mxu0 0.0
  %964 = vmatpush2.msra.mxu0 0.0
  %965 = vmatprep.subr.mxu0 0.0
  %966 = vmatpush2.msra.mxu0 0.0
  %967 = vmatprep.subr.mxu0 0.0
  %968 = vmatpush2.msra.mxu0 0.0
  %969 = vmatprep.subr.mxu0 0.0
  %970 = vmatpush2.msra.mxu0 0.0
  %971 = vmatprep.subr.mxu0 0.0
  %972 = vmatpush2.msra.mxu0 0.0
  %973 = vmatprep.subr.mxu0 0.0
  %974 = vmatpush2.msra.mxu0 0.0
  %975 = vmatprep.subr.mxu0 0.0
  %976 = vmatpush2.msra.mxu0 0.0
  %977 = vmatprep.subr.mxu0 0.0
  %978 = vmatpush2.msra.mxu0 0.0
  %979 = vmatprep.mubr.f32.mxu0 0.0
  %980 = vmatmul.mubr.f32.gmra.mxu0 %v599
  %v981 = vpop.f32.mrf.mxu0
  %v982 = vadd.f32 %v595, %v981
  %v983 = vpop.f32.mrf.mxu0
  %v984 = vadd.f32 %v595, %v983
  %985 = vdwg.mxu0
  %986 = vmatprep.subr.mxu0 0.0
  %987 = vmatpush1.msra.mxu0 0.0
  %988 = vmatprep.subr.mxu0 0.0
  %989 = vmatpush1.msra.mxu0 0.0
  %990 = vmatprep.subr.mxu0 0.0
  %991 = vmatpush1.msra.mxu0 0.0
  %992 = vmatprep.subr.mxu0 0.0
  %993 = vmatpush1.msra.mxu0 0.0
  %994 = vmatprep.subr.mxu0 0.0
  %995 = vmatpush1.msra.mxu0 0.0
  %996 = vmatprep.subr.mxu0 0.0
  %997 = vmatpush1.msra.mxu0 0.0
  %998 = vmatprep.subr.mxu0 %v624
  %999 = vmatpush1.msra.mxu0 %v621
  %1000 = vmatprep.subr.mxu0 %v484
  %1001 = vmatpush1.msra.mxu0 %v483
  %1002 = vmatprep.subr.mxu0 %v427
  %1003 = vmatpush1.msra.mxu0 %v426
  %1004 = vmatprep.subr.mxu0 %v370
  %1005 = vmatpush1.msra.mxu0 %v369
  %1006 = vmatprep.subr.mxu0 %v313
  %1007 = vmatpush1.msra.mxu0 %v312
  %1008 = vmatprep.subr.mxu0 %v256
  %1009 = vmatpush1.msra.mxu0 %v255
  %1010 = vmatprep.subr.mxu0 %v199
  %1011 = vmatpush1.msra.mxu0 %v198
  %1012 = vmatprep.subr.mxu0 %v142
  %1013 = vmatpush1.msra.mxu0 %v141
  %1014 = vmatprep.subr.mxu0 %v85
  %1015 = vmatpush1.msra.mxu0 %v84
  %1016 = vmatprep.subr.mxu0 %v28
  %1017 = vmatpush1.msra.mxu0 %v27
  %1018 = vmatprep.subr.mxu0 0.0
  %1019 = vmatpush2.msra.mxu0 0.0
  %1020 = vmatprep.subr.mxu0 0.0
  %1021 = vmatpush2.msra.mxu0 0.0
  %1022 = vmatprep.subr.mxu0 0.0
  %1023 = vmatpush2.msra.mxu0 0.0
  %1024 = vmatprep.subr.mxu0 0.0
  %1025 = vmatpush2.msra.mxu0 0.0
  %1026 = vmatprep.subr.mxu0 0.0
  %1027 = vmatpush2.msra.mxu0 0.0
  %1028 = vmatprep.subr.mxu0 0.0
  %1029 = vmatpush2.msra.mxu0 0.0
  %1030 = vmatprep.subr.mxu0 0.0
  %1031 = vmatpush2.msra.mxu0 0.0
  %1032 = vmatprep.subr.mxu0 0.0
  %1033 = vmatpush2.msra.mxu0 0.0
  %1034 = vmatprep.subr.mxu0 0.0
  %1035 = vmatpush2.msra.mxu0 0.0
  %1036 = vmatprep.subr.mxu0 0.0
  %1037 = vmatpush2.msra.mxu0 0.0
  %1038 = vmatprep.subr.mxu0 0.0
  %1039 = vmatpush2.msra.mxu0 0.0
  %1040 = vmatprep.subr.mxu0 0.0
  %1041 = vmatpush2.msra.mxu0 0.0
  %1042 = vmatprep.subr.mxu0 0.0
  %1043 = vmatpush2.msra.mxu0 0.0
  %1044 = vmatprep.subr.mxu0 0.0
  %1045 = vmatpush2.msra.mxu0 0.0
  %1046 = vmatprep.subr.mxu0 0.0
  %1047 = vmatpush2.msra.mxu0 0.0
  %1048 = vmatprep.subr.mxu0 0.0
  %1049 = vmatpush2.msra.mxu0 0.0
  %1050 = vmatprep.mubr.f32.mxu0 0.0
  %1051 = vmatmul.mubr.f32.gmra.mxu0 %v599
  %v1052 = vpop.f32.mrf.mxu0
  %v1053 = vadd.f32 %v595, %v1052
  %v1054 = vpop.f32.mrf.mxu0
  %v1055 = vadd.f32 %v595, %v1054
  %1056 = vdwg.mxu0
  %1057 = vmatprep.subr.mxu0 0.0
  %1058 = vmatpush1.msra.mxu0 0.0
  %1059 = vmatprep.subr.mxu0 0.0
  %1060 = vmatpush1.msra.mxu0 0.0
  %1061 = vmatprep.subr.mxu0 0.0
  %1062 = vmatpush1.msra.mxu0 0.0
  %1063 = vmatprep.subr.mxu0 0.0
  %1064 = vmatpush1.msra.mxu0 0.0
  %1065 = vmatprep.subr.mxu0 0.0
  %1066 = vmatpush1.msra.mxu0 0.0
  %1067 = vmatprep.subr.mxu0 0.0
  %1068 = vmatpush1.msra.mxu0 0.0
  %1069 = vmatprep.subr.mxu0 %v630
  %1070 = vmatpush1.msra.mxu0 %v627
  %1071 = vmatprep.subr.mxu0 %v486
  %1072 = vmatpush1.msra.mxu0 %v485
  %1073 = vmatprep.subr.mxu0 %v429
  %1074 = vmatpush1.msra.mxu0 %v428
  %1075 = vmatprep.subr.mxu0 %v372
  %1076 = vmatpush1.msra.mxu0 %v371
  %1077 = vmatprep.subr.mxu0 %v315
  %1078 = vmatpush1.msra.mxu0 %v314
  %1079 = vmatprep.subr.mxu0 %v258
  %1080 = vmatpush1.msra.mxu0 %v257
  %1081 = vmatprep.subr.mxu0 %v201
  %1082 = vmatpush1.msra.mxu0 %v200
  %1083 = vmatprep.subr.mxu0 %v144
  %1084 = vmatpush1.msra.mxu0 %v143
  %1085 = vmatprep.subr.mxu0 %v87
  %1086 = vmatpush1.msra.mxu0 %v86
  %1087 = vmatprep.subr.mxu0 %v30
  %1088 = vmatpush1.msra.mxu0 %v29
  %1089 = vmatprep.subr.mxu0 0.0
  %1090 = vmatpush2.msra.mxu0 0.0
  %1091 = vmatprep.subr.mxu0 0.0
  %1092 = vmatpush2.msra.mxu0 0.0
  %1093 = vmatprep.subr.mxu0 0.0
  %1094 = vmatpush2.msra.mxu0 0.0
  %1095 = vmatprep.subr.mxu0 0.0
  %1096 = vmatpush2.msra.mxu0 0.0
  %1097 = vmatprep.subr.mxu0 0.0
  %1098 = vmatpush2.msra.mxu0 0.0
  %1099 = vmatprep.subr.mxu0 0.0
  %1100 = vmatpush2.msra.mxu0 0.0
  %1101 = vmatprep.subr.mxu0 0.0
  %1102 = vmatpush2.msra.mxu0 0.0
  %1103 = vmatprep.subr.mxu0 0.0
  %1104 = vmatpush2.msra.mxu0 0.0
  %1105 = vmatprep.subr.mxu0 0.0
  %1106 = vmatpush2.msra.mxu0 0.0
  %1107 = vmatprep.subr.mxu0 0.0
  %1108 = vmatpush2.msra.mxu0 0.0
  %1109 = vmatprep.subr.mxu0 0.0
  %1110 = vmatpush2.msra.mxu0 0.0
  %1111 = vmatprep.subr.mxu0 0.0
  %1112 = vmatpush2.msra.mxu0 0.0
  %1113 = vmatprep.subr.mxu0 0.0
  %1114 = vmatpush2.msra.mxu0 0.0
  %1115 = vmatprep.subr.mxu0 0.0
  %1116 = vmatpush2.msra.mxu0 0.0
  %1117 = vmatprep.subr.mxu0 0.0
  %1118 = vmatpush2.msra.mxu0 0.0
  %1119 = vmatprep.subr.mxu0 0.0
  %1120 = vmatpush2.msra.mxu0 0.0
  %1121 = vmatprep.mubr.f32.mxu0 0.0
  %1122 = vmatmul.mubr.f32.gmra.mxu0 %v599
  %v1123 = vpop.f32.mrf.mxu0
  %v1124 = vadd.f32 %v595, %v1123
  %v1125 = vpop.f32.mrf.mxu0
  %v1126 = vadd.f32 %v595, %v1125
  %1127 = vdwg.mxu0
  %1128 = vmatprep.subr.mxu0 0.0
  %1129 = vmatpush1.msra.mxu0 0.0
  %1130 = vmatprep.subr.mxu0 0.0
  %1131 = vmatpush1.msra.mxu0 0.0
  %1132 = vmatprep.subr.mxu0 0.0
  %1133 = vmatpush1.msra.mxu0 0.0
  %1134 = vmatprep.subr.mxu0 0.0
  %1135 = vmatpush1.msra.mxu0 0.0
  %1136 = vmatprep.subr.mxu0 0.0
  %1137 = vmatpush1.msra.mxu0 0.0
  %1138 = vmatprep.subr.mxu0 0.0
  %1139 = vmatpush1.msra.mxu0 0.0
  %1140 = vmatprep.subr.mxu0 %v636
  %1141 = vmatpush1.msra.mxu0 %v633
  %1142 = vmatprep.subr.mxu0 %v488
  %1143 = vmatpush1.msra.mxu0 %v487
  %1144 = vmatprep.subr.mxu0 %v431
  %1145 = vmatpush1.msra.mxu0 %v430
  %1146 = vmatprep.subr.mxu0 %v374
  %1147 = vmatpush1.msra.mxu0 %v373
  %1148 = vmatprep.subr.mxu0 %v317
  %1149 = vmatpush1.msra.mxu0 %v316
  %1150 = vmatprep.subr.mxu0 %v260
  %1151 = vmatpush1.msra.mxu0 %v259
  %1152 = vmatprep.subr.mxu0 %v203
  %1153 = vmatpush1.msra.mxu0 %v202
  %1154 = vmatprep.subr.mxu0 %v146
  %1155 = vmatpush1.msra.mxu0 %v145
  %1156 = vmatprep.subr.mxu0 %v89
  %1157 = vmatpush1.msra.mxu0 %v88
  %1158 = vmatprep.subr.mxu0 %v32
  %1159 = vmatpush1.msra.mxu0 %v31
  %1160 = vmatprep.subr.mxu0 0.0
  %1161 = vmatpush2.msra.mxu0 0.0
  %1162 = vmatprep.subr.mxu0 0.0
  %1163 = vmatpush2.msra.mxu0 0.0
  %1164 = vmatprep.subr.mxu0 0.0
  %1165 = vmatpush2.msra.mxu0 0.0
  %1166 = vmatprep.subr.mxu0 0.0
  %1167 = vmatpush2.msra.mxu0 0.0
  %1168 = vmatprep.subr.mxu0 0.0
  %1169 = vmatpush2.msra.mxu0 0.0
  %1170 = vmatprep.subr.mxu0 0.0
  %1171 = vmatpush2.msra.mxu0 0.0
  %1172 = vmatprep.subr.mxu0 0.0
  %1173 = vmatpush2.msra.mxu0 0.0
  %1174 = vmatprep.subr.mxu0 0.0
  %1175 = vmatpush2.msra.mxu0 0.0
  %1176 = vmatprep.subr.mxu0 0.0
  %1177 = vmatpush2.msra.mxu0 0.0
  %1178 = vmatprep.subr.mxu0 0.0
  %1179 = vmatpush2.msra.mxu0 0.0
  %1180 = vmatprep.subr.mxu0 0.0
  %1181 = vmatpush2.msra.mxu0 0.0
  %1182 = vmatprep.subr.mxu0 0.0
  %1183 = vmatpush2.msra.mxu0 0.0
  %1184 = vmatprep.subr.mxu0 0.0
  %1185 = vmatpush2.msra.mxu0 0.0
  %1186 = vmatprep.subr.mxu0 0.0
  %1187 = vmatpush2.msra.mxu0 0.0
  %1188 = vmatprep.subr.mxu0 0.0
  %1189 = vmatpush2.msra.mxu0 0.0
  %1190 = vmatprep.subr.mxu0 0.0
  %1191 = vmatpush2.msra.mxu0 0.0
  %1192 = vmatprep.mubr.f32.mxu0 0.0
  %1193 = vmatmul.mubr.f32.gmra.mxu0 %v599
  %v1194 = vpop.f32.mrf.mxu0
  %v1195 = vadd.f32 %v595, %v1194
  %v1196 = vpop.f32.mrf.mxu0
  %v1197 = vadd.f32 %v595, %v1196
  %1198 = vdwg.mxu0
  %1199 = vmatprep.subr.mxu0 0.0
  %1200 = vmatpush1.msra.mxu0 0.0
  %1201 = vmatprep.subr.mxu0 0.0
  %1202 = vmatpush1.msra.mxu0 0.0
  %1203 = vmatprep.subr.mxu0 0.0
  %1204 = vmatpush1.msra.mxu0 0.0
  %1205 = vmatprep.subr.mxu0 0.0
  %1206 = vmatpush1.msra.mxu0 0.0
  %1207 = vmatprep.subr.mxu0 0.0
  %1208 = vmatpush1.msra.mxu0 0.0
  %1209 = vmatprep.subr.mxu0 0.0
  %1210 = vmatpush1.msra.mxu0 0.0
  %1211 = vmatprep.subr.mxu0 %v642
  %1212 = vmatpush1.msra.mxu0 %v639
  %1213 = vmatprep.subr.mxu0 %v490
  %1214 = vmatpush1.msra.mxu0 %v489
  %1215 = vmatprep.subr.mxu0 %v433
  %1216 = vmatpush1.msra.mxu0 %v432
  %1217 = vmatprep.subr.mxu0 %v376
  %1218 = vmatpush1.msra.mxu0 %v375
  %1219 = vmatprep.subr.mxu0 %v319
  %1220 = vmatpush1.msra.mxu0 %v318
  %1221 = vmatprep.subr.mxu0 %v262
  %1222 = vmatpush1.msra.mxu0 %v261
  %1223 = vmatprep.subr.mxu0 %v205
  %1224 = vmatpush1.msra.mxu0 %v204
  %1225 = vmatprep.subr.mxu0 %v148
  %1226 = vmatpush1.msra.mxu0 %v147
  %1227 = vmatprep.subr.mxu0 %v91
  %1228 = vmatpush1.msra.mxu0 %v90
  %1229 = vmatprep.subr.mxu0 %v34
  %1230 = vmatpush1.msra.mxu0 %v33
  %1231 = vmatprep.subr.mxu0 0.0
  %1232 = vmatpush2.msra.mxu0 0.0
  %1233 = vmatprep.subr.mxu0 0.0
  %1234 = vmatpush2.msra.mxu0 0.0
  %1235 = vmatprep.subr.mxu0 0.0
  %1236 = vmatpush2.msra.mxu0 0.0
  %1237 = vmatprep.subr.mxu0 0.0
  %1238 = vmatpush2.msra.mxu0 0.0
  %1239 = vmatprep.subr.mxu0 0.0
  %1240 = vmatpush2.msra.mxu0 0.0
  %1241 = vmatprep.subr.mxu0 0.0
  %1242 = vmatpush2.msra.mxu0 0.0
  %1243 = vmatprep.subr.mxu0 0.0
  %1244 = vmatpush2.msra.mxu0 0.0
  %1245 = vmatprep.subr.mxu0 0.0
  %1246 = vmatpush2.msra.mxu0 0.0
  %1247 = vmatprep.subr.mxu0 0.0
  %1248 = vmatpush2.msra.mxu0 0.0
  %1249 = vmatprep.subr.mxu0 0.0
  %1250 = vmatpush2.msra.mxu0 0.0
  %1251 = vmatprep.subr.mxu0 0.0
  %1252 = vmatpush2.msra.mxu0 0.0
  %1253 = vmatprep.subr.mxu0 0.0
  %1254 = vmatpush2.msra.mxu0 0.0
  %1255 = vmatprep.subr.mxu0 0.0
  %1256 = vmatpush2.msra.mxu0 0.0
  %1257 = vmatprep.subr.mxu0 0.0
  %1258 = vmatpush2.msra.mxu0 0.0
  %1259 = vmatprep.subr.mxu0 0.0
  %1260 = vmatpush2.msra.mxu0 0.0
  %1261 = vmatprep.subr.mxu0 0.0
  %1262 = vmatpush2.msra.mxu0 0.0
  %1263 = vmatprep.mubr.f32.mxu0 0.0
  %1264 = vmatmul.mubr.f32.gmra.mxu0 %v599
  %v1265 = vpop.f32.mrf.mxu0
  %v1266 = vadd.f32 %v595, %v1265
  %v1267 = vpop.f32.mrf.mxu0
  %v1268 = vadd.f32 %v595, %v1267
  %1269 = vdwg.mxu0
  %1270 = vmatprep.subr.mxu0 0.0
  %1271 = vmatpush1.msra.mxu0 0.0
  %1272 = vmatprep.subr.mxu0 0.0
  %1273 = vmatpush1.msra.mxu0 0.0
  %1274 = vmatprep.subr.mxu0 0.0
  %1275 = vmatpush1.msra.mxu0 0.0
  %1276 = vmatprep.subr.mxu0 0.0
  %1277 = vmatpush1.msra.mxu0 0.0
  %1278 = vmatprep.subr.mxu0 0.0
  %1279 = vmatpush1.msra.mxu0 0.0
  %1280 = vmatprep.subr.mxu0 0.0
  %1281 = vmatpush1.msra.mxu0 0.0
  %1282 = vmatprep.subr.mxu0 %v648
  %1283 = vmatpush1.msra.mxu0 %v645
  %1284 = vmatprep.subr.mxu0 %v492
  %1285 = vmatpush1.msra.mxu0 %v491
  %1286 = vmatprep.subr.mxu0 %v435
  %1287 = vmatpush1.msra.mxu0 %v434
  %1288 = vmatprep.subr.mxu0 %v378
  %1289 = vmatpush1.msra.mxu0 %v377
  %1290 = vmatprep.subr.mxu0 %v321
  %1291 = vmatpush1.msra.mxu0 %v320
  %1292 = vmatprep.subr.mxu0 %v264
  %1293 = vmatpush1.msra.mxu0 %v263
  %1294 = vmatprep.subr.mxu0 %v207
  %1295 = vmatpush1.msra.mxu0 %v206
  %1296 = vmatprep.subr.mxu0 %v150
  %1297 = vmatpush1.msra.mxu0 %v149
  %1298 = vmatprep.subr.mxu0 %v93
  %1299 = vmatpush1.msra.mxu0 %v92
  %1300 = vmatprep.subr.mxu0 %v36
  %1301 = vmatpush1.msra.mxu0 %v35
  %1302 = vmatprep.subr.mxu0 0.0
  %1303 = vmatpush2.msra.mxu0 0.0
  %1304 = vmatprep.subr.mxu0 0.0
  %1305 = vmatpush2.msra.mxu0 0.0
  %1306 = vmatprep.subr.mxu0 0.0
  %1307 = vmatpush2.msra.mxu0 0.0
  %1308 = vmatprep.subr.mxu0 0.0
  %1309 = vmatpush2.msra.mxu0 0.0
  %1310 = vmatprep.subr.mxu0 0.0
  %1311 = vmatpush2.msra.mxu0 0.0
  %1312 = vmatprep.subr.mxu0 0.0
  %1313 = vmatpush2.msra.mxu0 0.0
  %1314 = vmatprep.subr.mxu0 0.0
  %1315 = vmatpush2.msra.mxu0 0.0
  %1316 = vmatprep.subr.mxu0 0.0
  %1317 = vmatpush2.msra.mxu0 0.0
  %1318 = vmatprep.subr.mxu0 0.0
  %1319 = vmatpush2.msra.mxu0 0.0
  %1320 = vmatprep.subr.mxu0 0.0
  %1321 = vmatpush2.msra.mxu0 0.0
  %1322 = vmatprep.subr.mxu0 0.0
  %1323 = vmatpush2.msra.mxu0 0.0
  %1324 = vmatprep.subr.mxu0 0.0
  %1325 = vmatpush2.msra.mxu0 0.0
  %1326 = vmatprep.subr.mxu0 0.0
  %1327 = vmatpush2.msra.mxu0 0.0
  %1328 = vmatprep.subr.mxu0 0.0
  %1329 = vmatpush2.msra.mxu0 0.0
  %1330 = vmatprep.subr.mxu0 0.0
  %1331 = vmatpush2.msra.mxu0 0.0
  %1332 = vmatprep.subr.mxu0 0.0
  %1333 = vmatpush2.msra.mxu0 0.0
  %1334 = vmatprep.mubr.f32.mxu0 0.0
  %1335 = vmatmul.mubr.f32.gmra.mxu0 %v599
  %v1336 = vpop.f32.mrf.mxu0
  %v1337 = vadd.f32 %v595, %v1336
  %v1338 = vpop.f32.mrf.mxu0
  %v1339 = vadd.f32 %v595, %v1338
  %1340 = vdwg.mxu0
  %1341 = vmatprep.subr.mxu0 0.0
  %1342 = vmatpush1.msra.mxu0 0.0
  %1343 = vmatprep.subr.mxu0 0.0
  %1344 = vmatpush1.msra.mxu0 0.0
  %1345 = vmatprep.subr.mxu0 0.0
  %1346 = vmatpush1.msra.mxu0 0.0
  %1347 = vmatprep.subr.mxu0 0.0
  %1348 = vmatpush1.msra.mxu0 0.0
  %1349 = vmatprep.subr.mxu0 0.0
  %1350 = vmatpush1.msra.mxu0 0.0
  %1351 = vmatprep.subr.mxu0 0.0
  %1352 = vmatpush1.msra.mxu0 0.0
  %1353 = vmatprep.subr.mxu0 %v654
  %1354 = vmatpush1.msra.mxu0 %v651
  %1355 = vmatprep.subr.mxu0 %v494
  %1356 = vmatpush1.msra.mxu0 %v493
  %1357 = vmatprep.subr.mxu0 %v437
  %1358 = vmatpush1.msra.mxu0 %v436
  %1359 = vmatprep.subr.mxu0 %v380
  %1360 = vmatpush1.msra.mxu0 %v379
  %1361 = vmatprep.subr.mxu0 %v323
  %1362 = vmatpush1.msra.mxu0 %v322
  %1363 = vmatprep.subr.mxu0 %v266
  %1364 = vmatpush1.msra.mxu0 %v265
  %1365 = vmatprep.subr.mxu0 %v209
  %1366 = vmatpush1.msra.mxu0 %v208
  %1367 = vmatprep.subr.mxu0 %v152
  %1368 = vmatpush1.msra.mxu0 %v151
  %1369 = vmatprep.subr.mxu0 %v95
  %1370 = vmatpush1.msra.mxu0 %v94
  %1371 = vmatprep.subr.mxu0 %v38
  %1372 = vmatpush1.msra.mxu0 %v37
  %1373 = vmatprep.subr.mxu0 0.0
  %1374 = vmatpush2.msra.mxu0 0.0
  %1375 = vmatprep.subr.mxu0 0.0
  %1376 = vmatpush2.msra.mxu0 0.0
  %1377 = vmatprep.subr.mxu0 0.0
  %1378 = vmatpush2.msra.mxu0 0.0
  %1379 = vmatprep.subr.mxu0 0.0
  %1380 = vmatpush2.msra.mxu0 0.0
  %1381 = vmatprep.subr.mxu0 0.0
  %1382 = vmatpush2.msra.mxu0 0.0
  %1383 = vmatprep.subr.mxu0 0.0
  %1384 = vmatpush2.msra.mxu0 0.0
  %1385 = vmatprep.subr.mxu0 0.0
  %1386 = vmatpush2.msra.mxu0 0.0
  %1387 = vmatprep.subr.mxu0 0.0
  %1388 = vmatpush2.msra.mxu0 0.0
  %1389 = vmatprep.subr.mxu0 0.0
  %1390 = vmatpush2.msra.mxu0 0.0
  %1391 = vmatprep.subr.mxu0 0.0
  %1392 = vmatpush2.msra.mxu0 0.0
  %1393 = vmatprep.subr.mxu0 0.0
  %1394 = vmatpush2.msra.mxu0 0.0
  %1395 = vmatprep.subr.mxu0 0.0
  %1396 = vmatpush2.msra.mxu0 0.0
  %1397 = vmatprep.subr.mxu0 0.0
  %1398 = vmatpush2.msra.mxu0 0.0
  %1399 = vmatprep.subr.mxu0 0.0
  %1400 = vmatpush2.msra.mxu0 0.0
  %1401 = vmatprep.subr.mxu0 0.0
  %1402 = vmatpush2.msra.mxu0 0.0
  %1403 = vmatprep.subr.mxu0 0.0
  %1404 = vmatpush2.msra.mxu0 0.0
  %1405 = vmatprep.mubr.f32.mxu0 0.0
  %1406 = vmatmul.mubr.f32.gmra.mxu0 %v599
  %v1407 = vpop.f32.mrf.mxu0
  %v1408 = vadd.f32 %v595, %v1407
  %v1409 = vpop.f32.mrf.mxu0
  %v1410 = vadd.f32 %v595, %v1409
  %1411 = vdwg.mxu0
  %1412 = vmatprep.subr.mxu0 0.0
  %1413 = vmatpush1.msra.mxu0 0.0
  %1414 = vmatprep.subr.mxu0 0.0
  %1415 = vmatpush1.msra.mxu0 0.0
  %1416 = vmatprep.subr.mxu0 0.0
  %1417 = vmatpush1.msra.mxu0 0.0
  %1418 = vmatprep.subr.mxu0 0.0
  %1419 = vmatpush1.msra.mxu0 0.0
  %1420 = vmatprep.subr.mxu0 0.0
  %1421 = vmatpush1.msra.mxu0 0.0
  %1422 = vmatprep.subr.mxu0 0.0
  %1423 = vmatpush1.msra.mxu0 0.0
  %1424 = vmatprep.subr.mxu0 %v660
  %1425 = vmatpush1.msra.mxu0 %v657
  %1426 = vmatprep.subr.mxu0 %v496
  %1427 = vmatpush1.msra.mxu0 %v495
  %1428 = vmatprep.subr.mxu0 %v439
  %1429 = vmatpush1.msra.mxu0 %v438
  %1430 = vmatprep.subr.mxu0 %v382
  %1431 = vmatpush1.msra.mxu0 %v381
  %1432 = vmatprep.subr.mxu0 %v325
  %1433 = vmatpush1.msra.mxu0 %v324
  %1434 = vmatprep.subr.mxu0 %v268
  %1435 = vmatpush1.msra.mxu0 %v267
  %1436 = vmatprep.subr.mxu0 %v211
  %1437 = vmatpush1.msra.mxu0 %v210
  %1438 = vmatprep.subr.mxu0 %v154
  %1439 = vmatpush1.msra.mxu0 %v153
  %1440 = vmatprep.subr.mxu0 %v97
  %1441 = vmatpush1.msra.mxu0 %v96
  %1442 = vmatprep.subr.mxu0 %v40
  %1443 = vmatpush1.msra.mxu0 %v39
  %1444 = vmatprep.subr.mxu0 0.0
  %1445 = vmatpush2.msra.mxu0 0.0
  %1446 = vmatprep.subr.mxu0 0.0
  %1447 = vmatpush2.msra.mxu0 0.0
  %1448 = vmatprep.subr.mxu0 0.0
  %1449 = vmatpush2.msra.mxu0 0.0
  %1450 = vmatprep.subr.mxu0 0.0
  %1451 = vmatpush2.msra.mxu0 0.0
  %1452 = vmatprep.subr.mxu0 0.0
  %1453 = vmatpush2.msra.mxu0 0.0
  %1454 = vmatprep.subr.mxu0 0.0
  %1455 = vmatpush2.msra.mxu0 0.0
  %1456 = vmatprep.subr.mxu0 0.0
  %1457 = vmatpush2.msra.mxu0 0.0
  %1458 = vmatprep.subr.mxu0 0.0
  %1459 = vmatpush2.msra.mxu0 0.0
  %1460 = vmatprep.subr.mxu0 0.0
  %1461 = vmatpush2.msra.mxu0 0.0
  %1462 = vmatprep.subr.mxu0 0.0
  %1463 = vmatpush2.msra.mxu0 0.0
  %1464 = vmatprep.subr.mxu0 0.0
  %1465 = vmatpush2.msra.mxu0 0.0
  %1466 = vmatprep.subr.mxu0 0.0
  %1467 = vmatpush2.msra.mxu0 0.0
  %1468 = vmatprep.subr.mxu0 0.0
  %1469 = vmatpush2.msra.mxu0 0.0
  %1470 = vmatprep.subr.mxu0 0.0
  %1471 = vmatpush2.msra.mxu0 0.0
  %1472 = vmatprep.subr.mxu0 0.0
  %1473 = vmatpush2.msra.mxu0 0.0
  %1474 = vmatprep.subr.mxu0 0.0
  %1475 = vmatpush2.msra.mxu0 0.0
  %1476 = vmatprep.mubr.f32.mxu0 0.0
  %1477 = vmatmul.mubr.f32.gmra.mxu0 %v599
  %v1478 = vpop.f32.mrf.mxu0
  %v1479 = vadd.f32 %v595, %v1478
  %v1480 = vpop.f32.mrf.mxu0
  %v1481 = vadd.f32 %v595, %v1480
  %1482 = vdwg.mxu0
  %1483 = vmatprep.subr.mxu0 0.0
  %1484 = vmatpush1.msra.mxu0 0.0
  %1485 = vmatprep.subr.mxu0 0.0
  %1486 = vmatpush1.msra.mxu0 0.0
  %1487 = vmatprep.subr.mxu0 0.0
  %1488 = vmatpush1.msra.mxu0 0.0
  %1489 = vmatprep.subr.mxu0 0.0
  %1490 = vmatpush1.msra.mxu0 0.0
  %1491 = vmatprep.subr.mxu0 0.0
  %1492 = vmatpush1.msra.mxu0 0.0
  %1493 = vmatprep.subr.mxu0 0.0
  %1494 = vmatpush1.msra.mxu0 0.0
  %1495 = vmatprep.subr.mxu0 %v666
  %1496 = vmatpush1.msra.mxu0 %v663
  %1497 = vmatprep.subr.mxu0 %v498
  %1498 = vmatpush1.msra.mxu0 %v497
  %1499 = vmatprep.subr.mxu0 %v441
  %1500 = vmatpush1.msra.mxu0 %v440
  %1501 = vmatprep.subr.mxu0 %v384
  %1502 = vmatpush1.msra.mxu0 %v383
  %1503 = vmatprep.subr.mxu0 %v327
  %1504 = vmatpush1.msra.mxu0 %v326
  %1505 = vmatprep.subr.mxu0 %v270
  %1506 = vmatpush1.msra.mxu0 %v269
  %1507 = vmatprep.subr.mxu0 %v213
  %1508 = vmatpush1.msra.mxu0 %v212
  %1509 = vmatprep.subr.mxu0 %v156
  %1510 = vmatpush1.msra.mxu0 %v155
  %1511 = vmatprep.subr.mxu0 %v99
  %1512 = vmatpush1.msra.mxu0 %v98
  %1513 = vmatprep.subr.mxu0 %v42
  %1514 = vmatpush1.msra.mxu0 %v41
  %1515 = vmatprep.subr.mxu0 0.0
  %1516 = vmatpush2.msra.mxu0 0.0
  %1517 = vmatprep.subr.mxu0 0.0
  %1518 = vmatpush2.msra.mxu0 0.0
  %1519 = vmatprep.subr.mxu0 0.0
  %1520 = vmatpush2.msra.mxu0 0.0
  %1521 = vmatprep.subr.mxu0 0.0
  %1522 = vmatpush2.msra.mxu0 0.0
  %1523 = vmatprep.subr.mxu0 0.0
  %1524 = vmatpush2.msra.mxu0 0.0
  %1525 = vmatprep.subr.mxu0 0.0
  %1526 = vmatpush2.msra.mxu0 0.0
  %1527 = vmatprep.subr.mxu0 0.0
  %1528 = vmatpush2.msra.mxu0 0.0
  %1529 = vmatprep.subr.mxu0 0.0
  %1530 = vmatpush2.msra.mxu0 0.0
  %1531 = vmatprep.subr.mxu0 0.0
  %1532 = vmatpush2.msra.mxu0 0.0
  %1533 = vmatprep.subr.mxu0 0.0
  %1534 = vmatpush2.msra.mxu0 0.0
  %1535 = vmatprep.subr.mxu0 0.0
  %1536 = vmatpush2.msra.mxu0 0.0
  %1537 = vmatprep.subr.mxu0 0.0
  %1538 = vmatpush2.msra.mxu0 0.0
  %1539 = vmatprep.subr.mxu0 0.0
  %1540 = vmatpush2.msra.mxu0 0.0
  %1541 = vmatprep.subr.mxu0 0.0
  %1542 = vmatpush2.msra.mxu0 0.0
  %1543 = vmatprep.subr.mxu0 0.0
  %1544 = vmatpush2.msra.mxu0 0.0
  %1545 = vmatprep.subr.mxu0 0.0
  %1546 = vmatpush2.msra.mxu0 0.0
  %1547 = vmatprep.mubr.f32.mxu0 0.0
  %1548 = vmatmul.mubr.f32.gmra.mxu0 %v599
  %v1549 = vpop.f32.mrf.mxu0
  %v1550 = vadd.f32 %v595, %v1549
  %v1551 = vpop.f32.mrf.mxu0
  %v1552 = vadd.f32 %v595, %v1551
  %1553 = vdwg.mxu0
  %1554 = vmatprep.subr.mxu0 0.0
  %1555 = vmatpush1.msra.mxu0 0.0
  %1556 = vmatprep.subr.mxu0 0.0
  %1557 = vmatpush1.msra.mxu0 0.0
  %1558 = vmatprep.subr.mxu0 0.0
  %1559 = vmatpush1.msra.mxu0 0.0
  %1560 = vmatprep.subr.mxu0 0.0
  %1561 = vmatpush1.msra.mxu0 0.0
  %1562 = vmatprep.subr.mxu0 0.0
  %1563 = vmatpush1.msra.mxu0 0.0
  %1564 = vmatprep.subr.mxu0 0.0
  %1565 = vmatpush1.msra.mxu0 0.0
  %1566 = vmatprep.subr.mxu0 %v672
  %1567 = vmatpush1.msra.mxu0 %v669
  %1568 = vmatprep.subr.mxu0 %v500
  %1569 = vmatpush1.msra.mxu0 %v499
  %1570 = vmatprep.subr.mxu0 %v443
  %1571 = vmatpush1.msra.mxu0 %v442
  %1572 = vmatprep.subr.mxu0 %v386
  %1573 = vmatpush1.msra.mxu0 %v385
  %1574 = vmatprep.subr.mxu0 %v329
  %1575 = vmatpush1.msra.mxu0 %v328
  %1576 = vmatprep.subr.mxu0 %v272
  %1577 = vmatpush1.msra.mxu0 %v271
  %1578 = vmatprep.subr.mxu0 %v215
  %1579 = vmatpush1.msra.mxu0 %v214
  %1580 = vmatprep.subr.mxu0 %v158
  %1581 = vmatpush1.msra.mxu0 %v157
  %1582 = vmatprep.subr.mxu0 %v101
  %1583 = vmatpush1.msra.mxu0 %v100
  %1584 = vmatprep.subr.mxu0 %v44
  %1585 = vmatpush1.msra.mxu0 %v43
  %1586 = vmatprep.subr.mxu0 0.0
  %1587 = vmatpush2.msra.mxu0 0.0
  %1588 = vmatprep.subr.mxu0 0.0
  %1589 = vmatpush2.msra.mxu0 0.0
  %1590 = vmatprep.subr.mxu0 0.0
  %1591 = vmatpush2.msra.mxu0 0.0
  %1592 = vmatprep.subr.mxu0 0.0
  %1593 = vmatpush2.msra.mxu0 0.0
  %1594 = vmatprep.subr.mxu0 0.0
  %1595 = vmatpush2.msra.mxu0 0.0
  %1596 = vmatprep.subr.mxu0 0.0
  %1597 = vmatpush2.msra.mxu0 0.0
  %1598 = vmatprep.subr.mxu0 0.0
  %1599 = vmatpush2.msra.mxu0 0.0
  %1600 = vmatprep.subr.mxu0 0.0
  %1601 = vmatpush2.msra.mxu0 0.0
  %1602 = vmatprep.subr.mxu0 0.0
  %1603 = vmatpush2.msra.mxu0 0.0
  %1604 = vmatprep.subr.mxu0 0.0
  %1605 = vmatpush2.msra.mxu0 0.0
  %1606 = vmatprep.subr.mxu0 0.0
  %1607 = vmatpush2.msra.mxu0 0.0
  %1608 = vmatprep.subr.mxu0 0.0
  %1609 = vmatpush2.msra.mxu0 0.0
  %1610 = vmatprep.subr.mxu0 0.0
  %1611 = vmatpush2.msra.mxu0 0.0
  %1612 = vmatprep.subr.mxu0 0.0
  %1613 = vmatpush2.msra.mxu0 0.0
  %1614 = vmatprep.subr.mxu0 0.0
  %1615 = vmatpush2.msra.mxu0 0.0
  %1616 = vmatprep.subr.mxu0 0.0
  %1617 = vmatpush2.msra.mxu0 0.0
  %1618 = vmatprep.mubr.f32.mxu0 0.0
  %1619 = vmatmul.mubr.f32.gmra.mxu0 %v599
  %v1620 = vpop.f32.mrf.mxu0
  %v1621 = vadd.f32 %v595, %v1620
  %v1622 = vpop.f32.mrf.mxu0
  %v1623 = vadd.f32 %v595, %v1622
  %1624 = vdwg.mxu0
  %1625 = vmatprep.subr.mxu0 0.0
  %1626 = vmatpush1.msra.mxu0 0.0
  %1627 = vmatprep.subr.mxu0 0.0
  %1628 = vmatpush1.msra.mxu0 0.0
  %1629 = vmatprep.subr.mxu0 0.0
  %1630 = vmatpush1.msra.mxu0 0.0
  %1631 = vmatprep.subr.mxu0 0.0
  %1632 = vmatpush1.msra.mxu0 0.0
  %1633 = vmatprep.subr.mxu0 0.0
  %1634 = vmatpush1.msra.mxu0 0.0
  %1635 = vmatprep.subr.mxu0 0.0
  %1636 = vmatpush1.msra.mxu0 0.0
  %1637 = vmatprep.subr.mxu0 %v678
  %1638 = vmatpush1.msra.mxu0 %v675
  %1639 = vmatprep.subr.mxu0 %v502
  %1640 = vmatpush1.msra.mxu0 %v501
  %1641 = vmatprep.subr.mxu0 %v445
  %1642 = vmatpush1.msra.mxu0 %v444
  %1643 = vmatprep.subr.mxu0 %v388
  %1644 = vmatpush1.msra.mxu0 %v387
  %1645 = vmatprep.subr.mxu0 %v331
  %1646 = vmatpush1.msra.mxu0 %v330
  %1647 = vmatprep.subr.mxu0 %v274
  %1648 = vmatpush1.msra.mxu0 %v273
  %1649 = vmatprep.subr.mxu0 %v217
  %1650 = vmatpush1.msra.mxu0 %v216
  %1651 = vmatprep.subr.mxu0 %v160
  %1652 = vmatpush1.msra.mxu0 %v159
  %1653 = vmatprep.subr.mxu0 %v103
  %1654 = vmatpush1.msra.mxu0 %v102
  %1655 = vmatprep.subr.mxu0 %v46
  %1656 = vmatpush1.msra.mxu0 %v45
  %1657 = vmatprep.subr.mxu0 0.0
  %1658 = vmatpush2.msra.mxu0 0.0
  %1659 = vmatprep.subr.mxu0 0.0
  %1660 = vmatpush2.msra.mxu0 0.0
  %1661 = vmatprep.subr.mxu0 0.0
  %1662 = vmatpush2.msra.mxu0 0.0
  %1663 = vmatprep.subr.mxu0 0.0
  %1664 = vmatpush2.msra.mxu0 0.0
  %1665 = vmatprep.subr.mxu0 0.0
  %1666 = vmatpush2.msra.mxu0 0.0
  %1667 = vmatprep.subr.mxu0 0.0
  %1668 = vmatpush2.msra.mxu0 0.0
  %1669 = vmatprep.subr.mxu0 0.0
  %1670 = vmatpush2.msra.mxu0 0.0
  %1671 = vmatprep.subr.mxu0 0.0
  %1672 = vmatpush2.msra.mxu0 0.0
  %1673 = vmatprep.subr.mxu0 0.0
  %1674 = vmatpush2.msra.mxu0 0.0
  %1675 = vmatprep.subr.mxu0 0.0
  %1676 = vmatpush2.msra.mxu0 0.0
  %1677 = vmatprep.subr.mxu0 0.0
  %1678 = vmatpush2.msra.mxu0 0.0
  %1679 = vmatprep.subr.mxu0 0.0
  %1680 = vmatpush2.msra.mxu0 0.0
  %1681 = vmatprep.subr.mxu0 0.0
  %1682 = vmatpush2.msra.mxu0 0.0
  %1683 = vmatprep.subr.mxu0 0.0
  %1684 = vmatpush2.msra.mxu0 0.0
  %1685 = vmatprep.subr.mxu0 0.0
  %1686 = vmatpush2.msra.mxu0 0.0
  %1687 = vmatprep.subr.mxu0 0.0
  %1688 = vmatpush2.msra.mxu0 0.0
  %1689 = vmatprep.mubr.f32.mxu0 0.0
  %1690 = vmatmul.mubr.f32.gmra.mxu0 %v599
  %v1691 = vpop.f32.mrf.mxu0
  %v1692 = vadd.f32 %v595, %v1691
  %v1693 = vpop.f32.mrf.mxu0
  %v1694 = vadd.f32 %v595, %v1693
  %1695 = vdwg.mxu0
  %1696 = vmatprep.subr.mxu0 0.0
  %1697 = vmatpush1.msra.mxu0 0.0
  %1698 = vmatprep.subr.mxu0 0.0
  %1699 = vmatpush1.msra.mxu0 0.0
  %1700 = vmatprep.subr.mxu0 0.0
  %1701 = vmatpush1.msra.mxu0 0.0
  %1702 = vmatprep.subr.mxu0 0.0
  %1703 = vmatpush1.msra.mxu0 0.0
  %1704 = vmatprep.subr.mxu0 0.0
  %1705 = vmatpush1.msra.mxu0 0.0
  %1706 = vmatprep.subr.mxu0 0.0
  %1707 = vmatpush1.msra.mxu0 0.0
  %1708 = vmatprep.subr.mxu0 %v684
  %1709 = vmatpush1.msra.mxu0 %v681
  %1710 = vmatprep.subr.mxu0 %v504
  %1711 = vmatpush1.msra.mxu0 %v503
  %1712 = vmatprep.subr.mxu0 %v447
  %1713 = vmatpush1.msra.mxu0 %v446
  %1714 = vmatprep.subr.mxu0 %v390
  %1715 = vmatpush1.msra.mxu0 %v389
  %1716 = vmatprep.subr.mxu0 %v333
  %1717 = vmatpush1.msra.mxu0 %v332
  %1718 = vmatprep.subr.mxu0 %v276
  %1719 = vmatpush1.msra.mxu0 %v275
  %1720 = vmatprep.subr.mxu0 %v219
  %1721 = vmatpush1.msra.mxu0 %v218
  %1722 = vmatprep.subr.mxu0 %v162
  %1723 = vmatpush1.msra.mxu0 %v161
  %1724 = vmatprep.subr.mxu0 %v105
  %1725 = vmatpush1.msra.mxu0 %v104
  %1726 = vmatprep.subr.mxu0 %v48
  %1727 = vmatpush1.msra.mxu0 %v47
  %1728 = vmatprep.subr.mxu0 0.0
  %1729 = vmatpush2.msra.mxu0 0.0
  %1730 = vmatprep.subr.mxu0 0.0
  %1731 = vmatpush2.msra.mxu0 0.0
  %1732 = vmatprep.subr.mxu0 0.0
  %1733 = vmatpush2.msra.mxu0 0.0
  %1734 = vmatprep.subr.mxu0 0.0
  %1735 = vmatpush2.msra.mxu0 0.0
  %1736 = vmatprep.subr.mxu0 0.0
  %1737 = vmatpush2.msra.mxu0 0.0
  %1738 = vmatprep.subr.mxu0 0.0
  %1739 = vmatpush2.msra.mxu0 0.0
  %1740 = vmatprep.subr.mxu0 0.0
  %1741 = vmatpush2.msra.mxu0 0.0
  %1742 = vmatprep.subr.mxu0 0.0
  %1743 = vmatpush2.msra.mxu0 0.0
  %1744 = vmatprep.subr.mxu0 0.0
  %1745 = vmatpush2.msra.mxu0 0.0
  %1746 = vmatprep.subr.mxu0 0.0
  %1747 = vmatpush2.msra.mxu0 0.0
  %1748 = vmatprep.subr.mxu0 0.0
  %1749 = vmatpush2.msra.mxu0 0.0
  %1750 = vmatprep.subr.mxu0 0.0
  %1751 = vmatpush2.msra.mxu0 0.0
  %1752 = vmatprep.subr.mxu0 0.0
  %1753 = vmatpush2.msra.mxu0 0.0
  %1754 = vmatprep.subr.mxu0 0.0
  %1755 = vmatpush2.msra.mxu0 0.0
  %1756 = vmatprep.subr.mxu0 0.0
  %1757 = vmatpush2.msra.mxu0 0.0
  %1758 = vmatprep.subr.mxu0 0.0
  %1759 = vmatpush2.msra.mxu0 0.0
  %1760 = vmatprep.mubr.f32.mxu0 0.0
  %1761 = vmatmul.mubr.f32.gmra.mxu0 %v599
  %v1762 = vpop.f32.mrf.mxu0
  %v1763 = vadd.f32 %v595, %v1762
  %v1764 = vpop.f32.mrf.mxu0
  %v1765 = vadd.f32 %v595, %v1764
  %1766 = vdwg.mxu0
  %1767 = vmatprep.subr.mxu0 0.0
  %1768 = vmatpush1.msra.mxu0 0.0
  %1769 = vmatprep.subr.mxu0 0.0
  %1770 = vmatpush1.msra.mxu0 0.0
  %1771 = vmatprep.subr.mxu0 0.0
  %1772 = vmatpush1.msra.mxu0 0.0
  %1773 = vmatprep.subr.mxu0 0.0
  %1774 = vmatpush1.msra.mxu0 0.0
  %1775 = vmatprep.subr.mxu0 0.0
  %1776 = vmatpush1.msra.mxu0 0.0
  %1777 = vmatprep.subr.mxu0 0.0
  %1778 = vmatpush1.msra.mxu0 0.0
  %1779 = vmatprep.subr.mxu0 %v690
  %1780 = vmatpush1.msra.mxu0 %v687
  %1781 = vmatprep.subr.mxu0 %v506
  %1782 = vmatpush1.msra.mxu0 %v505
  %1783 = vmatprep.subr.mxu0 %v449
  %1784 = vmatpush1.msra.mxu0 %v448
  %1785 = vmatprep.subr.mxu0 %v392
  %1786 = vmatpush1.msra.mxu0 %v391
  %1787 = vmatprep.subr.mxu0 %v335
  %1788 = vmatpush1.msra.mxu0 %v334
  %1789 = vmatprep.subr.mxu0 %v278
  %1790 = vmatpush1.msra.mxu0 %v277
  %1791 = vmatprep.subr.mxu0 %v221
  %1792 = vmatpush1.msra.mxu0 %v220
  %1793 = vmatprep.subr.mxu0 %v164
  %1794 = vmatpush1.msra.mxu0 %v163
  %1795 = vmatprep.subr.mxu0 %v107
  %1796 = vmatpush1.msra.mxu0 %v106
  %1797 = vmatprep.subr.mxu0 %v50
  %1798 = vmatpush1.msra.mxu0 %v49
  %1799 = vmatprep.subr.mxu0 0.0
  %1800 = vmatpush2.msra.mxu0 0.0
  %1801 = vmatprep.subr.mxu0 0.0
  %1802 = vmatpush2.msra.mxu0 0.0
  %1803 = vmatprep.subr.mxu0 0.0
  %1804 = vmatpush2.msra.mxu0 0.0
  %1805 = vmatprep.subr.mxu0 0.0
  %1806 = vmatpush2.msra.mxu0 0.0
  %1807 = vmatprep.subr.mxu0 0.0
  %1808 = vmatpush2.msra.mxu0 0.0
  %1809 = vmatprep.subr.mxu0 0.0
  %1810 = vmatpush2.msra.mxu0 0.0
  %1811 = vmatprep.subr.mxu0 0.0
  %1812 = vmatpush2.msra.mxu0 0.0
  %1813 = vmatprep.subr.mxu0 0.0
  %1814 = vmatpush2.msra.mxu0 0.0
  %1815 = vmatprep.subr.mxu0 0.0
  %1816 = vmatpush2.msra.mxu0 0.0
  %1817 = vmatprep.subr.mxu0 0.0
  %1818 = vmatpush2.msra.mxu0 0.0
  %1819 = vmatprep.subr.mxu0 0.0
  %1820 = vmatpush2.msra.mxu0 0.0
  %1821 = vmatprep.subr.mxu0 0.0
  %1822 = vmatpush2.msra.mxu0 0.0
  %1823 = vmatprep.subr.mxu0 0.0
  %1824 = vmatpush2.msra.mxu0 0.0
  %1825 = vmatprep.subr.mxu0 0.0
  %1826 = vmatpush2.msra.mxu0 0.0
  %1827 = vmatprep.subr.mxu0 0.0
  %1828 = vmatpush2.msra.mxu0 0.0
  %1829 = vmatprep.subr.mxu0 0.0
  %1830 = vmatpush2.msra.mxu0 0.0
  %1831 = vmatprep.mubr.f32.mxu0 0.0
  %1832 = vmatmul.mubr.f32.gmra.mxu0 %v599
  %v1833 = vpop.f32.mrf.mxu0
  %v1834 = vadd.f32 %v595, %v1833
  %v1835 = vpop.f32.mrf.mxu0
  %v1836 = vadd.f32 %v595, %v1835
  %1837 = vdwg.mxu0
  %1838 = vmatprep.subr.mxu0 0.0
  %1839 = vmatpush1.msra.mxu0 0.0
  %1840 = vmatprep.subr.mxu0 0.0
  %1841 = vmatpush1.msra.mxu0 0.0
  %1842 = vmatprep.subr.mxu0 0.0
  %1843 = vmatpush1.msra.mxu0 0.0
  %1844 = vmatprep.subr.mxu0 0.0
  %1845 = vmatpush1.msra.mxu0 0.0
  %1846 = vmatprep.subr.mxu0 0.0
  %1847 = vmatpush1.msra.mxu0 0.0
  %1848 = vmatprep.subr.mxu0 0.0
  %1849 = vmatpush1.msra.mxu0 0.0
  %1850 = vmatprep.subr.mxu0 %v696
  %1851 = vmatpush1.msra.mxu0 %v693
  %1852 = vmatprep.subr.mxu0 %v508
  %1853 = vmatpush1.msra.mxu0 %v507
  %1854 = vmatprep.subr.mxu0 %v451
  %1855 = vmatpush1.msra.mxu0 %v450
  %1856 = vmatprep.subr.mxu0 %v394
  %1857 = vmatpush1.msra.mxu0 %v393
  %1858 = vmatprep.subr.mxu0 %v337
  %1859 = vmatpush1.msra.mxu0 %v336
  %1860 = vmatprep.subr.mxu0 %v280
  %1861 = vmatpush1.msra.mxu0 %v279
  %1862 = vmatprep.subr.mxu0 %v223
  %1863 = vmatpush1.msra.mxu0 %v222
  %1864 = vmatprep.subr.mxu0 %v166
  %1865 = vmatpush1.msra.mxu0 %v165
  %1866 = vmatprep.subr.mxu0 %v109
  %1867 = vmatpush1.msra.mxu0 %v108
  %1868 = vmatprep.subr.mxu0 %v52
  %1869 = vmatpush1.msra.mxu0 %v51
  %1870 = vmatprep.subr.mxu0 0.0
  %1871 = vmatpush2.msra.mxu0 0.0
  %1872 = vmatprep.subr.mxu0 0.0
  %1873 = vmatpush2.msra.mxu0 0.0
  %1874 = vmatprep.subr.mxu0 0.0
  %1875 = vmatpush2.msra.mxu0 0.0
  %1876 = vmatprep.subr.mxu0 0.0
  %1877 = vmatpush2.msra.mxu0 0.0
  %1878 = vmatprep.subr.mxu0 0.0
  %1879 = vmatpush2.msra.mxu0 0.0
  %1880 = vmatprep.subr.mxu0 0.0
  %1881 = vmatpush2.msra.mxu0 0.0
  %1882 = vmatprep.subr.mxu0 0.0
  %1883 = vmatpush2.msra.mxu0 0.0
  %1884 = vmatprep.subr.mxu0 0.0
  %1885 = vmatpush2.msra.mxu0 0.0
  %1886 = vmatprep.subr.mxu0 0.0
  %1887 = vmatpush2.msra.mxu0 0.0
  %1888 = vmatprep.subr.mxu0 0.0
  %1889 = vmatpush2.msra.mxu0 0.0
  %1890 = vmatprep.subr.mxu0 0.0
  %1891 = vmatpush2.msra.mxu0 0.0
  %1892 = vmatprep.subr.mxu0 0.0
  %1893 = vmatpush2.msra.mxu0 0.0
  %1894 = vmatprep.subr.mxu0 0.0
  %1895 = vmatpush2.msra.mxu0 0.0
  %1896 = vmatprep.subr.mxu0 0.0
  %1897 = vmatpush2.msra.mxu0 0.0
  %1898 = vmatprep.subr.mxu0 0.0
  %1899 = vmatpush2.msra.mxu0 0.0
  %1900 = vmatprep.subr.mxu0 0.0
  %1901 = vmatpush2.msra.mxu0 0.0
  %1902 = vmatprep.mubr.f32.mxu0 0.0
  %1903 = vmatmul.mubr.f32.gmra.mxu0 %v599
  %v1904 = vpop.f32.mrf.mxu0
  %v1905 = vadd.f32 %v595, %v1904
  %v1906 = vpop.f32.mrf.mxu0
  %v1907 = vadd.f32 %v595, %v1906
  %1908 = vdwg.mxu0
  %1909 = vmatprep.subr.mxu0 0.0
  %1910 = vmatpush1.msra.mxu0 0.0
  %1911 = vmatprep.subr.mxu0 0.0
  %1912 = vmatpush1.msra.mxu0 0.0
  %1913 = vmatprep.subr.mxu0 0.0
  %1914 = vmatpush1.msra.mxu0 0.0
  %1915 = vmatprep.subr.mxu0 0.0
  %1916 = vmatpush1.msra.mxu0 0.0
  %1917 = vmatprep.subr.mxu0 0.0
  %1918 = vmatpush1.msra.mxu0 0.0
  %1919 = vmatprep.subr.mxu0 0.0
  %1920 = vmatpush1.msra.mxu0 0.0
  %1921 = vmatprep.subr.mxu0 %v702
  %1922 = vmatpush1.msra.mxu0 %v699
  %1923 = vmatprep.subr.mxu0 %v510
  %1924 = vmatpush1.msra.mxu0 %v509
  %1925 = vmatprep.subr.mxu0 %v453
  %1926 = vmatpush1.msra.mxu0 %v452
  %1927 = vmatprep.subr.mxu0 %v396
  %1928 = vmatpush1.msra.mxu0 %v395
  %1929 = vmatprep.subr.mxu0 %v339
  %1930 = vmatpush1.msra.mxu0 %v338
  %1931 = vmatprep.subr.mxu0 %v282
  %1932 = vmatpush1.msra.mxu0 %v281
  %1933 = vmatprep.subr.mxu0 %v225
  %1934 = vmatpush1.msra.mxu0 %v224
  %1935 = vmatprep.subr.mxu0 %v168
  %1936 = vmatpush1.msra.mxu0 %v167
  %1937 = vmatprep.subr.mxu0 %v111
  %1938 = vmatpush1.msra.mxu0 %v110
  %1939 = vmatprep.subr.mxu0 %v54
  %1940 = vmatpush1.msra.mxu0 %v53
  %1941 = vmatprep.subr.mxu0 0.0
  %1942 = vmatpush2.msra.mxu0 0.0
  %1943 = vmatprep.subr.mxu0 0.0
  %1944 = vmatpush2.msra.mxu0 0.0
  %1945 = vmatprep.subr.mxu0 0.0
  %1946 = vmatpush2.msra.mxu0 0.0
  %1947 = vmatprep.subr.mxu0 0.0
  %1948 = vmatpush2.msra.mxu0 0.0
  %1949 = vmatprep.subr.mxu0 0.0
  %1950 = vmatpush2.msra.mxu0 0.0
  %1951 = vmatprep.subr.mxu0 0.0
  %1952 = vmatpush2.msra.mxu0 0.0
  %1953 = vmatprep.subr.mxu0 0.0
  %1954 = vmatpush2.msra.mxu0 0.0
  %1955 = vmatprep.subr.mxu0 0.0
  %1956 = vmatpush2.msra.mxu0 0.0
  %1957 = vmatprep.subr.mxu0 0.0
  %1958 = vmatpush2.msra.mxu0 0.0
  %1959 = vmatprep.subr.mxu0 0.0
  %1960 = vmatpush2.msra.mxu0 0.0
  %1961 = vmatprep.subr.mxu0 0.0
  %1962 = vmatpush2.msra.mxu0 0.0
  %1963 = vmatprep.subr.mxu0 0.0
  %1964 = vmatpush2.msra.mxu0 0.0
  %1965 = vmatprep.subr.mxu0 0.0
  %1966 = vmatpush2.msra.mxu0 0.0
  %1967 = vmatprep.subr.mxu0 0.0
  %1968 = vmatpush2.msra.mxu0 0.0
  %1969 = vmatprep.subr.mxu0 0.0
  %1970 = vmatpush2.msra.mxu0 0.0
  %1971 = vmatprep.subr.mxu0 0.0
  %1972 = vmatpush2.msra.mxu0 0.0
  %1973 = vmatprep.mubr.f32.mxu0 0.0
  %1974 = vmatmul.mubr.f32.gmra.mxu0 %v599
  %v1975 = vpop.f32.mrf.mxu0
  %v1976 = vadd.f32 %v595, %v1975
  %v1977 = vpop.f32.mrf.mxu0
  %v1978 = vadd.f32 %v595, %v1977
  %1979 = vdwg.mxu0
  %1980 = vmatprep.subr.mxu0 0.0
  %1981 = vmatpush1.msra.mxu0 0.0
  %1982 = vmatprep.subr.mxu0 0.0
  %1983 = vmatpush1.msra.mxu0 0.0
  %1984 = vmatprep.subr.mxu0 0.0
  %1985 = vmatpush1.msra.mxu0 0.0
  %1986 = vmatprep.subr.mxu0 0.0
  %1987 = vmatpush1.msra.mxu0 0.0
  %1988 = vmatprep.subr.mxu0 0.0
  %1989 = vmatpush1.msra.mxu0 0.0
  %1990 = vmatprep.subr.mxu0 0.0
  %1991 = vmatpush1.msra.mxu0 0.0
  %1992 = vmatprep.subr.mxu0 %v708
  %1993 = vmatpush1.msra.mxu0 %v705
  %1994 = vmatprep.subr.mxu0 %v512
  %1995 = vmatpush1.msra.mxu0 %v511
  %1996 = vmatprep.subr.mxu0 %v455
  %1997 = vmatpush1.msra.mxu0 %v454
  %1998 = vmatprep.subr.mxu0 %v398
  %1999 = vmatpush1.msra.mxu0 %v397
  %2000 = vmatprep.subr.mxu0 %v341
  %2001 = vmatpush1.msra.mxu0 %v340
  %2002 = vmatprep.subr.mxu0 %v284
  %2003 = vmatpush1.msra.mxu0 %v283
  %2004 = vmatprep.subr.mxu0 %v227
  %2005 = vmatpush1.msra.mxu0 %v226
  %2006 = vmatprep.subr.mxu0 %v170
  %2007 = vmatpush1.msra.mxu0 %v169
  %2008 = vmatprep.subr.mxu0 %v113
  %2009 = vmatpush1.msra.mxu0 %v112
  %2010 = vmatprep.subr.mxu0 %v56
  %2011 = vmatpush1.msra.mxu0 %v55
  %2012 = vmatprep.subr.mxu0 0.0
  %2013 = vmatpush2.msra.mxu0 0.0
  %2014 = vmatprep.subr.mxu0 0.0
  %2015 = vmatpush2.msra.mxu0 0.0
  %2016 = vmatprep.subr.mxu0 0.0
  %2017 = vmatpush2.msra.mxu0 0.0
  %2018 = vmatprep.subr.mxu0 0.0
  %2019 = vmatpush2.msra.mxu0 0.0
  %2020 = vmatprep.subr.mxu0 0.0
  %2021 = vmatpush2.msra.mxu0 0.0
  %2022 = vmatprep.subr.mxu0 0.0
  %2023 = vmatpush2.msra.mxu0 0.0
  %2024 = vmatprep.subr.mxu0 0.0
  %2025 = vmatpush2.msra.mxu0 0.0
  %2026 = vmatprep.subr.mxu0 0.0
  %2027 = vmatpush2.msra.mxu0 0.0
  %2028 = vmatprep.subr.mxu0 0.0
  %2029 = vmatpush2.msra.mxu0 0.0
  %2030 = vmatprep.subr.mxu0 0.0
  %2031 = vmatpush2.msra.mxu0 0.0
  %2032 = vmatprep.subr.mxu0 0.0
  %2033 = vmatpush2.msra.mxu0 0.0
  %2034 = vmatprep.subr.mxu0 0.0
  %2035 = vmatpush2.msra.mxu0 0.0
  %2036 = vmatprep.subr.mxu0 0.0
  %2037 = vmatpush2.msra.mxu0 0.0
  %2038 = vmatprep.subr.mxu0 0.0
  %2039 = vmatpush2.msra.mxu0 0.0
  %2040 = vmatprep.subr.mxu0 0.0
  %2041 = vmatpush2.msra.mxu0 0.0
  %2042 = vmatprep.subr.mxu0 0.0
  %2043 = vmatpush2.msra.mxu0 0.0
  %2044 = vmatprep.mubr.f32.mxu0 0.0
  %2045 = vmatmul.mubr.f32.gmra.mxu0 %v599
  %v2046 = vpop.f32.mrf.mxu0
  %v2047 = vadd.f32 %v595, %v2046
  %v2048 = vpop.f32.mrf.mxu0
  %v2049 = vadd.f32 %v595, %v2048
  %2050 = vdwg.mxu0
  %2051 = vmatprep.subr.mxu0 0.0
  %2052 = vmatpush1.msra.mxu0 0.0
  %2053 = vmatprep.subr.mxu0 0.0
  %2054 = vmatpush1.msra.mxu0 0.0
  %2055 = vmatprep.subr.mxu0 0.0
  %2056 = vmatpush1.msra.mxu0 0.0
  %2057 = vmatprep.subr.mxu0 0.0
  %2058 = vmatpush1.msra.mxu0 0.0
  %2059 = vmatprep.subr.mxu0 0.0
  %2060 = vmatpush1.msra.mxu0 0.0
  %2061 = vmatprep.subr.mxu0 0.0
  %2062 = vmatpush1.msra.mxu0 0.0
  %2063 = vmatprep.subr.mxu0 %v714
  %2064 = vmatpush1.msra.mxu0 %v711
  %2065 = vmatprep.subr.mxu0 %v514
  %2066 = vmatpush1.msra.mxu0 %v513
  %2067 = vmatprep.subr.mxu0 %v457
  %2068 = vmatpush1.msra.mxu0 %v456
  %2069 = vmatprep.subr.mxu0 %v400
  %2070 = vmatpush1.msra.mxu0 %v399
  %2071 = vmatprep.subr.mxu0 %v343
  %2072 = vmatpush1.msra.mxu0 %v342
  %2073 = vmatprep.subr.mxu0 %v286
  %2074 = vmatpush1.msra.mxu0 %v285
  %2075 = vmatprep.subr.mxu0 %v229
  %2076 = vmatpush1.msra.mxu0 %v228
  %2077 = vmatprep.subr.mxu0 %v172
  %2078 = vmatpush1.msra.mxu0 %v171
  %2079 = vmatprep.subr.mxu0 %v115
  %2080 = vmatpush1.msra.mxu0 %v114
  %2081 = vmatprep.subr.mxu0 %v58
  %2082 = vmatpush1.msra.mxu0 %v57
  %2083 = vmatprep.subr.mxu0 0.0
  %2084 = vmatpush2.msra.mxu0 0.0
  %2085 = vmatprep.subr.mxu0 0.0
  %2086 = vmatpush2.msra.mxu0 0.0
  %2087 = vmatprep.subr.mxu0 0.0
  %2088 = vmatpush2.msra.mxu0 0.0
  %2089 = vmatprep.subr.mxu0 0.0
  %2090 = vmatpush2.msra.mxu0 0.0
  %2091 = vmatprep.subr.mxu0 0.0
  %2092 = vmatpush2.msra.mxu0 0.0
  %2093 = vmatprep.subr.mxu0 0.0
  %2094 = vmatpush2.msra.mxu0 0.0
  %2095 = vmatprep.subr.mxu0 0.0
  %2096 = vmatpush2.msra.mxu0 0.0
  %2097 = vmatprep.subr.mxu0 0.0
  %2098 = vmatpush2.msra.mxu0 0.0
  %2099 = vmatprep.subr.mxu0 0.0
  %2100 = vmatpush2.msra.mxu0 0.0
  %2101 = vmatprep.subr.mxu0 0.0
  %2102 = vmatpush2.msra.mxu0 0.0
  %2103 = vmatprep.subr.mxu0 0.0
  %2104 = vmatpush2.msra.mxu0 0.0
  %2105 = vmatprep.subr.mxu0 0.0
  %2106 = vmatpush2.msra.mxu0 0.0
  %2107 = vmatprep.subr.mxu0 0.0
  %2108 = vmatpush2.msra.mxu0 0.0
  %2109 = vmatprep.subr.mxu0 0.0
  %2110 = vmatpush2.msra.mxu0 0.0
  %2111 = vmatprep.subr.mxu0 0.0
  %2112 = vmatpush2.msra.mxu0 0.0
  %2113 = vmatprep.subr.mxu0 0.0
  %2114 = vmatpush2.msra.mxu0 0.0
  %2115 = vmatprep.mubr.f32.mxu0 0.0
  %2116 = vmatmul.mubr.f32.gmra.mxu0 %v599
  %v2117 = vpop.f32.mrf.mxu0
  %v2118 = vadd.f32 %v595, %v2117
  %v2119 = vpop.f32.mrf.mxu0
  %v2120 = vadd.f32 %v595, %v2119
  %2121 = vdwg.mxu0
  %2122 = vmatprep.subr.mxu0 0.0
  %2123 = vmatpush1.msra.mxu0 0.0
  %2124 = vmatprep.subr.mxu0 0.0
  %2125 = vmatpush1.msra.mxu0 0.0
  %2126 = vmatprep.subr.mxu0 0.0
  %2127 = vmatpush1.msra.mxu0 0.0
  %2128 = vmatprep.subr.mxu0 0.0
  %2129 = vmatpush1.msra.mxu0 0.0
  %2130 = vmatprep.subr.mxu0 0.0
  %2131 = vmatpush1.msra.mxu0 0.0
  %2132 = vmatprep.subr.mxu0 0.0
  %2133 = vmatpush1.msra.mxu0 0.0
  %2134 = vmatprep.subr.mxu0 %v720
  %2135 = vmatpush1.msra.mxu0 %v717
  %2136 = vmatprep.subr.mxu0 %v516
  %2137 = vmatpush1.msra.mxu0 %v515
  %2138 = vmatprep.subr.mxu0 %v459
  %2139 = vmatpush1.msra.mxu0 %v458
  %2140 = vmatprep.subr.mxu0 %v402
  %2141 = vmatpush1.msra.mxu0 %v401
  %2142 = vmatprep.subr.mxu0 %v345
  %2143 = vmatpush1.msra.mxu0 %v344
  %2144 = vmatprep.subr.mxu0 %v288
  %2145 = vmatpush1.msra.mxu0 %v287
  %2146 = vmatprep.subr.mxu0 %v231
  %2147 = vmatpush1.msra.mxu0 %v230
  %2148 = vmatprep.subr.mxu0 %v174
  %2149 = vmatpush1.msra.mxu0 %v173
  %2150 = vmatprep.subr.mxu0 %v117
  %2151 = vmatpush1.msra.mxu0 %v116
  %2152 = vmatprep.subr.mxu0 %v60
  %2153 = vmatpush1.msra.mxu0 %v59
  %2154 = vmatprep.subr.mxu0 0.0
  %2155 = vmatpush2.msra.mxu0 0.0
  %2156 = vmatprep.subr.mxu0 0.0
  %2157 = vmatpush2.msra.mxu0 0.0
  %2158 = vmatprep.subr.mxu0 0.0
  %2159 = vmatpush2.msra.mxu0 0.0
  %2160 = vmatprep.subr.mxu0 0.0
  %2161 = vmatpush2.msra.mxu0 0.0
  %2162 = vmatprep.subr.mxu0 0.0
  %2163 = vmatpush2.msra.mxu0 0.0
  %2164 = vmatprep.subr.mxu0 0.0
  %2165 = vmatpush2.msra.mxu0 0.0
  %2166 = vmatprep.subr.mxu0 0.0
  %2167 = vmatpush2.msra.mxu0 0.0
  %2168 = vmatprep.subr.mxu0 0.0
  %2169 = vmatpush2.msra.mxu0 0.0
  %2170 = vmatprep.subr.mxu0 0.0
  %2171 = vmatpush2.msra.mxu0 0.0
  %2172 = vmatprep.subr.mxu0 0.0
  %2173 = vmatpush2.msra.mxu0 0.0
  %2174 = vmatprep.subr.mxu0 0.0
  %2175 = vmatpush2.msra.mxu0 0.0
  %2176 = vmatprep.subr.mxu0 0.0
  %2177 = vmatpush2.msra.mxu0 0.0
  %2178 = vmatprep.subr.mxu0 0.0
  %2179 = vmatpush2.msra.mxu0 0.0
  %2180 = vmatprep.subr.mxu0 0.0
  %2181 = vmatpush2.msra.mxu0 0.0
  %2182 = vmatprep.subr.mxu0 0.0
  %2183 = vmatpush2.msra.mxu0 0.0
  %2184 = vmatprep.subr.mxu0 0.0
  %2185 = vmatpush2.msra.mxu0 0.0
  %2186 = vmatprep.mubr.f32.mxu0 0.0
  %2187 = vmatmul.mubr.f32.gmra.mxu0 %v599
  %v2188 = vpop.f32.mrf.mxu0
  %v2189 = vadd.f32 %v595, %v2188
  %v2190 = vpop.f32.mrf.mxu0
  %v2191 = vadd.f32 %v595, %v2190
  %2192 = vdwg.mxu0
  %2193 = vmatprep.subr.mxu0 0.0
  %2194 = vmatpush1.msra.mxu0 0.0
  %2195 = vmatprep.subr.mxu0 0.0
  %2196 = vmatpush1.msra.mxu0 0.0
  %2197 = vmatprep.subr.mxu0 0.0
  %2198 = vmatpush1.msra.mxu0 0.0
  %2199 = vmatprep.subr.mxu0 0.0
  %2200 = vmatpush1.msra.mxu0 0.0
  %2201 = vmatprep.subr.mxu0 0.0
  %2202 = vmatpush1.msra.mxu0 0.0
  %2203 = vmatprep.subr.mxu0 0.0
  %2204 = vmatpush1.msra.mxu0 0.0
  %2205 = vmatprep.subr.mxu0 %v726
  %2206 = vmatpush1.msra.mxu0 %v723
  %2207 = vmatprep.subr.mxu0 %v518
  %2208 = vmatpush1.msra.mxu0 %v517
  %2209 = vmatprep.subr.mxu0 %v461
  %2210 = vmatpush1.msra.mxu0 %v460
  %2211 = vmatprep.subr.mxu0 %v404
  %2212 = vmatpush1.msra.mxu0 %v403
  %2213 = vmatprep.subr.mxu0 %v347
  %2214 = vmatpush1.msra.mxu0 %v346
  %2215 = vmatprep.subr.mxu0 %v290
  %2216 = vmatpush1.msra.mxu0 %v289
  %2217 = vmatprep.subr.mxu0 %v233
  %2218 = vmatpush1.msra.mxu0 %v232
  %2219 = vmatprep.subr.mxu0 %v176
  %2220 = vmatpush1.msra.mxu0 %v175
  %2221 = vmatprep.subr.mxu0 %v119
  %2222 = vmatpush1.msra.mxu0 %v118
  %2223 = vmatprep.subr.mxu0 %v62
  %2224 = vmatpush1.msra.mxu0 %v61
  %2225 = vmatprep.subr.mxu0 0.0
  %2226 = vmatpush2.msra.mxu0 0.0
  %2227 = vmatprep.subr.mxu0 0.0
  %2228 = vmatpush2.msra.mxu0 0.0
  %2229 = vmatprep.subr.mxu0 0.0
  %2230 = vmatpush2.msra.mxu0 0.0
  %2231 = vmatprep.subr.mxu0 0.0
  %2232 = vmatpush2.msra.mxu0 0.0
  %2233 = vmatprep.subr.mxu0 0.0
  %2234 = vmatpush2.msra.mxu0 0.0
  %2235 = vmatprep.subr.mxu0 0.0
  %2236 = vmatpush2.msra.mxu0 0.0
  %2237 = vmatprep.subr.mxu0 0.0
  %2238 = vmatpush2.msra.mxu0 0.0
  %2239 = vmatprep.subr.mxu0 0.0
  %2240 = vmatpush2.msra.mxu0 0.0
  %2241 = vmatprep.subr.mxu0 0.0
  %2242 = vmatpush2.msra.mxu0 0.0
  %2243 = vmatprep.subr.mxu0 0.0
  %2244 = vmatpush2.msra.mxu0 0.0
  %2245 = vmatprep.subr.mxu0 0.0
  %2246 = vmatpush2.msra.mxu0 0.0
  %2247 = vmatprep.subr.mxu0 0.0
  %2248 = vmatpush2.msra.mxu0 0.0
  %2249 = vmatprep.subr.mxu0 0.0
  %2250 = vmatpush2.msra.mxu0 0.0
  %2251 = vmatprep.subr.mxu0 0.0
  %2252 = vmatpush2.msra.mxu0 0.0
  %2253 = vmatprep.subr.mxu0 0.0
  %2254 = vmatpush2.msra.mxu0 0.0
  %2255 = vmatprep.subr.mxu0 0.0
  %2256 = vmatpush2.msra.mxu0 0.0
  %2257 = vmatprep.mubr.f32.mxu0 0.0
  %2258 = vmatmul.mubr.f32.gmra.mxu0 %v599
  %v2259 = vpop.f32.mrf.mxu0
  %v2260 = vadd.f32 %v595, %v2259
  %v2261 = vpop.f32.mrf.mxu0
  %v2262 = vadd.f32 %v595, %v2261
  %2263 = vdwg.mxu0
  %2264 = vmatprep.subr.mxu0 0.0
  %2265 = vmatpush1.msra.mxu0 0.0
  %2266 = vmatprep.subr.mxu0 0.0
  %2267 = vmatpush1.msra.mxu0 0.0
  %2268 = vmatprep.subr.mxu0 0.0
  %2269 = vmatpush1.msra.mxu0 0.0
  %2270 = vmatprep.subr.mxu0 0.0
  %2271 = vmatpush1.msra.mxu0 0.0
  %2272 = vmatprep.subr.mxu0 0.0
  %2273 = vmatpush1.msra.mxu0 0.0
  %2274 = vmatprep.subr.mxu0 0.0
  %2275 = vmatpush1.msra.mxu0 0.0
  %2276 = vmatprep.subr.mxu0 %v732
  %2277 = vmatpush1.msra.mxu0 %v729
  %2278 = vmatprep.subr.mxu0 %v520
  %2279 = vmatpush1.msra.mxu0 %v519
  %2280 = vmatprep.subr.mxu0 %v463
  %2281 = vmatpush1.msra.mxu0 %v462
  %2282 = vmatprep.subr.mxu0 %v406
  %2283 = vmatpush1.msra.mxu0 %v405
  %2284 = vmatprep.subr.mxu0 %v349
  %2285 = vmatpush1.msra.mxu0 %v348
  %2286 = vmatprep.subr.mxu0 %v292
  %2287 = vmatpush1.msra.mxu0 %v291
  %2288 = vmatprep.subr.mxu0 %v235
  %2289 = vmatpush1.msra.mxu0 %v234
  %2290 = vmatprep.subr.mxu0 %v178
  %2291 = vmatpush1.msra.mxu0 %v177
  %2292 = vmatprep.subr.mxu0 %v121
  %2293 = vmatpush1.msra.mxu0 %v120
  %2294 = vmatprep.subr.mxu0 %v64
  %2295 = vmatpush1.msra.mxu0 %v63
  %2296 = vmatprep.subr.mxu0 0.0
  %2297 = vmatpush2.msra.mxu0 0.0
  %2298 = vmatprep.subr.mxu0 0.0
  %2299 = vmatpush2.msra.mxu0 0.0
  %2300 = vmatprep.subr.mxu0 0.0
  %2301 = vmatpush2.msra.mxu0 0.0
  %2302 = vmatprep.subr.mxu0 0.0
  %2303 = vmatpush2.msra.mxu0 0.0
  %2304 = vmatprep.subr.mxu0 0.0
  %2305 = vmatpush2.msra.mxu0 0.0
  %2306 = vmatprep.subr.mxu0 0.0
  %2307 = vmatpush2.msra.mxu0 0.0
  %2308 = vmatprep.subr.mxu0 0.0
  %2309 = vmatpush2.msra.mxu0 0.0
  %2310 = vmatprep.subr.mxu0 0.0
  %2311 = vmatpush2.msra.mxu0 0.0
  %2312 = vmatprep.subr.mxu0 0.0
  %2313 = vmatpush2.msra.mxu0 0.0
  %2314 = vmatprep.subr.mxu0 0.0
  %2315 = vmatpush2.msra.mxu0 0.0
  %2316 = vmatprep.subr.mxu0 0.0
  %2317 = vmatpush2.msra.mxu0 0.0
  %2318 = vmatprep.subr.mxu0 0.0
  %2319 = vmatpush2.msra.mxu0 0.0
  %2320 = vmatprep.subr.mxu0 0.0
  %2321 = vmatpush2.msra.mxu0 0.0
  %2322 = vmatprep.subr.mxu0 0.0
  %2323 = vmatpush2.msra.mxu0 0.0
  %2324 = vmatprep.subr.mxu0 0.0
  %2325 = vmatpush2.msra.mxu0 0.0
  %2326 = vmatprep.subr.mxu0 0.0
  %2327 = vmatpush2.msra.mxu0 0.0
  %2328 = vmatprep.mubr.f32.mxu0 0.0
  %2329 = vmatmul.mubr.f32.gmra.mxu0 %v599
  %v2330 = vpop.f32.mrf.mxu0
  %v2331 = vadd.f32 %v595, %v2330
  %v2332 = vpop.f32.mrf.mxu0
  %v2333 = vadd.f32 %v595, %v2332
  %2334 = vdwg.mxu0
  %2335 = vmatprep.subr.mxu0 0.0
  %2336 = vmatpush1.msra.mxu0 0.0
  %2337 = vmatprep.subr.mxu0 0.0
  %2338 = vmatpush1.msra.mxu0 0.0
  %2339 = vmatprep.subr.mxu0 0.0
  %2340 = vmatpush1.msra.mxu0 0.0
  %2341 = vmatprep.subr.mxu0 0.0
  %2342 = vmatpush1.msra.mxu0 0.0
  %2343 = vmatprep.subr.mxu0 0.0
  %2344 = vmatpush1.msra.mxu0 0.0
  %2345 = vmatprep.subr.mxu0 0.0
  %2346 = vmatpush1.msra.mxu0 0.0
  %2347 = vmatprep.subr.mxu0 %v738
  %2348 = vmatpush1.msra.mxu0 %v735
  %2349 = vmatprep.subr.mxu0 %v522
  %2350 = vmatpush1.msra.mxu0 %v521
  %2351 = vmatprep.subr.mxu0 %v465
  %2352 = vmatpush1.msra.mxu0 %v464
  %2353 = vmatprep.subr.mxu0 %v408
  %2354 = vmatpush1.msra.mxu0 %v407
  %2355 = vmatprep.subr.mxu0 %v351
  %2356 = vmatpush1.msra.mxu0 %v350
  %2357 = vmatprep.subr.mxu0 %v294
  %2358 = vmatpush1.msra.mxu0 %v293
  %2359 = vmatprep.subr.mxu0 %v237
  %2360 = vmatpush1.msra.mxu0 %v236
  %2361 = vmatprep.subr.mxu0 %v180
  %2362 = vmatpush1.msra.mxu0 %v179
  %2363 = vmatprep.subr.mxu0 %v123
  %2364 = vmatpush1.msra.mxu0 %v122
  %2365 = vmatprep.subr.mxu0 %v66
  %2366 = vmatpush1.msra.mxu0 %v65
  %2367 = vmatprep.subr.mxu0 0.0
  %2368 = vmatpush2.msra.mxu0 0.0
  %2369 = vmatprep.subr.mxu0 0.0
  %2370 = vmatpush2.msra.mxu0 0.0
  %2371 = vmatprep.subr.mxu0 0.0
  %2372 = vmatpush2.msra.mxu0 0.0
  %2373 = vmatprep.subr.mxu0 0.0
  %2374 = vmatpush2.msra.mxu0 0.0
  %2375 = vmatprep.subr.mxu0 0.0
  %2376 = vmatpush2.msra.mxu0 0.0
  %2377 = vmatprep.subr.mxu0 0.0
  %2378 = vmatpush2.msra.mxu0 0.0
  %2379 = vmatprep.subr.mxu0 0.0
  %2380 = vmatpush2.msra.mxu0 0.0
  %2381 = vmatprep.subr.mxu0 0.0
  %2382 = vmatpush2.msra.mxu0 0.0
  %2383 = vmatprep.subr.mxu0 0.0
  %2384 = vmatpush2.msra.mxu0 0.0
  %2385 = vmatprep.subr.mxu0 0.0
  %2386 = vmatpush2.msra.mxu0 0.0
  %2387 = vmatprep.subr.mxu0 0.0
  %2388 = vmatpush2.msra.mxu0 0.0
  %2389 = vmatprep.subr.mxu0 0.0
  %2390 = vmatpush2.msra.mxu0 0.0
  %2391 = vmatprep.subr.mxu0 0.0
  %2392 = vmatpush2.msra.mxu0 0.0
  %2393 = vmatprep.subr.mxu0 0.0
  %2394 = vmatpush2.msra.mxu0 0.0
  %2395 = vmatprep.subr.mxu0 0.0
  %2396 = vmatpush2.msra.mxu0 0.0
  %2397 = vmatprep.subr.mxu0 0.0
  %2398 = vmatpush2.msra.mxu0 0.0
  %2399 = vmatprep.mubr.f32.mxu0 0.0
  %2400 = vmatmul.mubr.f32.gmra.mxu0 %v599
  %v2401 = vpop.f32.mrf.mxu0
  %v2402 = vadd.f32 %v595, %v2401
  %v2403 = vpop.f32.mrf.mxu0
  %v2404 = vadd.f32 %v595, %v2403
  %2405 = vdwg.mxu0
  %2406 = vmatprep.subr.mxu0 0.0
  %2407 = vmatpush1.msra.mxu0 0.0
  %2408 = vmatprep.subr.mxu0 0.0
  %2409 = vmatpush1.msra.mxu0 0.0
  %2410 = vmatprep.subr.mxu0 0.0
  %2411 = vmatpush1.msra.mxu0 0.0
  %2412 = vmatprep.subr.mxu0 0.0
  %2413 = vmatpush1.msra.mxu0 0.0
  %2414 = vmatprep.subr.mxu0 0.0
  %2415 = vmatpush1.msra.mxu0 0.0
  %2416 = vmatprep.subr.mxu0 0.0
  %2417 = vmatpush1.msra.mxu0 0.0
  %2418 = vmatprep.subr.mxu0 %v744
  %2419 = vmatpush1.msra.mxu0 %v741
  %2420 = vmatprep.subr.mxu0 %v524
  %2421 = vmatpush1.msra.mxu0 %v523
  %2422 = vmatprep.subr.mxu0 %v467
  %2423 = vmatpush1.msra.mxu0 %v466
  %2424 = vmatprep.subr.mxu0 %v410
  %2425 = vmatpush1.msra.mxu0 %v409
  %2426 = vmatprep.subr.mxu0 %v353
  %2427 = vmatpush1.msra.mxu0 %v352
  %2428 = vmatprep.subr.mxu0 %v296
  %2429 = vmatpush1.msra.mxu0 %v295
  %2430 = vmatprep.subr.mxu0 %v239
  %2431 = vmatpush1.msra.mxu0 %v238
  %2432 = vmatprep.subr.mxu0 %v182
  %2433 = vmatpush1.msra.mxu0 %v181
  %2434 = vmatprep.subr.mxu0 %v125
  %2435 = vmatpush1.msra.mxu0 %v124
  %2436 = vmatprep.subr.mxu0 %v68
  %2437 = vmatpush1.msra.mxu0 %v67
  %2438 = vmatprep.subr.mxu0 0.0
  %2439 = vmatpush2.msra.mxu0 0.0
  %2440 = vmatprep.subr.mxu0 0.0
  %2441 = vmatpush2.msra.mxu0 0.0
  %2442 = vmatprep.subr.mxu0 0.0
  %2443 = vmatpush2.msra.mxu0 0.0
  %2444 = vmatprep.subr.mxu0 0.0
  %2445 = vmatpush2.msra.mxu0 0.0
  %2446 = vmatprep.subr.mxu0 0.0
  %2447 = vmatpush2.msra.mxu0 0.0
  %2448 = vmatprep.subr.mxu0 0.0
  %2449 = vmatpush2.msra.mxu0 0.0
  %2450 = vmatprep.subr.mxu0 0.0
  %2451 = vmatpush2.msra.mxu0 0.0
  %2452 = vmatprep.subr.mxu0 0.0
  %2453 = vmatpush2.msra.mxu0 0.0
  %2454 = vmatprep.subr.mxu0 0.0
  %2455 = vmatpush2.msra.mxu0 0.0
  %2456 = vmatprep.subr.mxu0 0.0
  %2457 = vmatpush2.msra.mxu0 0.0
  %2458 = vmatprep.subr.mxu0 0.0
  %2459 = vmatpush2.msra.mxu0 0.0
  %2460 = vmatprep.subr.mxu0 0.0
  %2461 = vmatpush2.msra.mxu0 0.0
  %2462 = vmatprep.subr.mxu0 0.0
  %2463 = vmatpush2.msra.mxu0 0.0
  %2464 = vmatprep.subr.mxu0 0.0
  %2465 = vmatpush2.msra.mxu0 0.0
  %2466 = vmatprep.subr.mxu0 0.0
  %2467 = vmatpush2.msra.mxu0 0.0
  %2468 = vmatprep.subr.mxu0 0.0
  %2469 = vmatpush2.msra.mxu0 0.0
  %2470 = vmatprep.mubr.f32.mxu0 0.0
  %2471 = vmatmul.mubr.f32.gmra.mxu0 %v599
  %v2472 = vpop.f32.mrf.mxu0
  %v2473 = vadd.f32 %v595, %v2472
  %v2474 = vpop.f32.mrf.mxu0
  %v2475 = vadd.f32 %v595, %v2474
  %2476 = vdwg.mxu0
  %2477 = vmatprep.subr.mxu0 0.0
  %2478 = vmatpush1.msra.mxu0 0.0
  %2479 = vmatprep.subr.mxu0 0.0
  %2480 = vmatpush1.msra.mxu0 0.0
  %2481 = vmatprep.subr.mxu0 0.0
  %2482 = vmatpush1.msra.mxu0 0.0
  %2483 = vmatprep.subr.mxu0 0.0
  %2484 = vmatpush1.msra.mxu0 0.0
  %2485 = vmatprep.subr.mxu0 0.0
  %2486 = vmatpush1.msra.mxu0 0.0
  %2487 = vmatprep.subr.mxu0 0.0
  %2488 = vmatpush1.msra.mxu0 0.0
  %2489 = vmatprep.subr.mxu0 %v750
  %2490 = vmatpush1.msra.mxu0 %v747
  %2491 = vmatprep.subr.mxu0 %v526
  %2492 = vmatpush1.msra.mxu0 %v525
  %2493 = vmatprep.subr.mxu0 %v469
  %2494 = vmatpush1.msra.mxu0 %v468
  %2495 = vmatprep.subr.mxu0 %v412
  %2496 = vmatpush1.msra.mxu0 %v411
  %2497 = vmatprep.subr.mxu0 %v355
  %2498 = vmatpush1.msra.mxu0 %v354
  %2499 = vmatprep.subr.mxu0 %v298
  %2500 = vmatpush1.msra.mxu0 %v297
  %2501 = vmatprep.subr.mxu0 %v241
  %2502 = vmatpush1.msra.mxu0 %v240
  %2503 = vmatprep.subr.mxu0 %v184
  %2504 = vmatpush1.msra.mxu0 %v183
  %2505 = vmatprep.subr.mxu0 %v127
  %2506 = vmatpush1.msra.mxu0 %v126
  %2507 = vmatprep.subr.mxu0 %v70
  %2508 = vmatpush1.msra.mxu0 %v69
  %2509 = vmatprep.subr.mxu0 0.0
  %2510 = vmatpush2.msra.mxu0 0.0
  %2511 = vmatprep.subr.mxu0 0.0
  %2512 = vmatpush2.msra.mxu0 0.0
  %2513 = vmatprep.subr.mxu0 0.0
  %2514 = vmatpush2.msra.mxu0 0.0
  %2515 = vmatprep.subr.mxu0 0.0
  %2516 = vmatpush2.msra.mxu0 0.0
  %2517 = vmatprep.subr.mxu0 0.0
  %2518 = vmatpush2.msra.mxu0 0.0
  %2519 = vmatprep.subr.mxu0 0.0
  %2520 = vmatpush2.msra.mxu0 0.0
  %2521 = vmatprep.subr.mxu0 0.0
  %2522 = vmatpush2.msra.mxu0 0.0
  %2523 = vmatprep.subr.mxu0 0.0
  %2524 = vmatpush2.msra.mxu0 0.0
  %2525 = vmatprep.subr.mxu0 0.0
  %2526 = vmatpush2.msra.mxu0 0.0
  %2527 = vmatprep.subr.mxu0 0.0
  %2528 = vmatpush2.msra.mxu0 0.0
  %2529 = vmatprep.subr.mxu0 0.0
  %2530 = vmatpush2.msra.mxu0 0.0
  %2531 = vmatprep.subr.mxu0 0.0
  %2532 = vmatpush2.msra.mxu0 0.0
  %2533 = vmatprep.subr.mxu0 0.0
  %2534 = vmatpush2.msra.mxu0 0.0
  %2535 = vmatprep.subr.mxu0 0.0
  %2536 = vmatpush2.msra.mxu0 0.0
  %2537 = vmatprep.subr.mxu0 0.0
  %2538 = vmatpush2.msra.mxu0 0.0
  %2539 = vmatprep.subr.mxu0 0.0
  %2540 = vmatpush2.msra.mxu0 0.0
  %2541 = vmatprep.mubr.f32.mxu0 0.0
  %2542 = vmatmul.mubr.f32.gmra.mxu0 %v599
  %v2543 = vpop.f32.mrf.mxu0
  %v2544 = vadd.f32 %v595, %v2543
  %v2545 = vpop.f32.mrf.mxu0
  %v2546 = vadd.f32 %v595, %v2545
  %2547 = vdwg.mxu0
  %2548 = vmatprep.subr.mxu0 0.0
  %2549 = vmatpush1.msra.mxu0 0.0
  %2550 = vmatprep.subr.mxu0 0.0
  %2551 = vmatpush1.msra.mxu0 0.0
  %2552 = vmatprep.subr.mxu0 0.0
  %2553 = vmatpush1.msra.mxu0 0.0
  %2554 = vmatprep.subr.mxu0 0.0
  %2555 = vmatpush1.msra.mxu0 0.0
  %2556 = vmatprep.subr.mxu0 0.0
  %2557 = vmatpush1.msra.mxu0 0.0
  %2558 = vmatprep.subr.mxu0 0.0
  %2559 = vmatpush1.msra.mxu0 0.0
  %2560 = vmatprep.subr.mxu0 %v756
  %2561 = vmatpush1.msra.mxu0 %v753
  %2562 = vmatprep.subr.mxu0 %v528
  %2563 = vmatpush1.msra.mxu0 %v527
  %2564 = vmatprep.subr.mxu0 %v471
  %2565 = vmatpush1.msra.mxu0 %v470
  %2566 = vmatprep.subr.mxu0 %v414
  %2567 = vmatpush1.msra.mxu0 %v413
  %2568 = vmatprep.subr.mxu0 %v357
  %2569 = vmatpush1.msra.mxu0 %v356
  %2570 = vmatprep.subr.mxu0 %v300
  %2571 = vmatpush1.msra.mxu0 %v299
  %2572 = vmatprep.subr.mxu0 %v243
  %2573 = vmatpush1.msra.mxu0 %v242
  %2574 = vmatprep.subr.mxu0 %v186
  %2575 = vmatpush1.msra.mxu0 %v185
  %2576 = vmatprep.subr.mxu0 %v129
  %2577 = vmatpush1.msra.mxu0 %v128
  %2578 = vmatprep.subr.mxu0 %v72
  %2579 = vmatpush1.msra.mxu0 %v71
  %2580 = vmatprep.subr.mxu0 0.0
  %2581 = vmatpush2.msra.mxu0 0.0
  %2582 = vmatprep.subr.mxu0 0.0
  %2583 = vmatpush2.msra.mxu0 0.0
  %2584 = vmatprep.subr.mxu0 0.0
  %2585 = vmatpush2.msra.mxu0 0.0
  %2586 = vmatprep.subr.mxu0 0.0
  %2587 = vmatpush2.msra.mxu0 0.0
  %2588 = vmatprep.subr.mxu0 0.0
  %2589 = vmatpush2.msra.mxu0 0.0
  %2590 = vmatprep.subr.mxu0 0.0
  %2591 = vmatpush2.msra.mxu0 0.0
  %2592 = vmatprep.subr.mxu0 0.0
  %2593 = vmatpush2.msra.mxu0 0.0
  %2594 = vmatprep.subr.mxu0 0.0
  %2595 = vmatpush2.msra.mxu0 0.0
  %2596 = vmatprep.subr.mxu0 0.0
  %2597 = vmatpush2.msra.mxu0 0.0
  %2598 = vmatprep.subr.mxu0 0.0
  %2599 = vmatpush2.msra.mxu0 0.0
  %2600 = vmatprep.subr.mxu0 0.0
  %2601 = vmatpush2.msra.mxu0 0.0
  %2602 = vmatprep.subr.mxu0 0.0
  %2603 = vmatpush2.msra.mxu0 0.0
  %2604 = vmatprep.subr.mxu0 0.0
  %2605 = vmatpush2.msra.mxu0 0.0
  %2606 = vmatprep.subr.mxu0 0.0
  %2607 = vmatpush2.msra.mxu0 0.0
  %2608 = vmatprep.subr.mxu0 0.0
  %2609 = vmatpush2.msra.mxu0 0.0
  %2610 = vmatprep.subr.mxu0 0.0
  %2611 = vmatpush2.msra.mxu0 0.0
  %2612 = vmatprep.mubr.f32.mxu0 0.0
  %2613 = vmatmul.mubr.f32.gmra.mxu0 %v599
  %v2614 = vpop.f32.mrf.mxu0
  %v2615 = vadd.f32 %v595, %v2614
  %v2616 = vpop.f32.mrf.mxu0
  %v2617 = vadd.f32 %v595, %v2616
  %2618 = vdwg.mxu0
  %2619 = vmatprep.subr.mxu0 0.0
  %2620 = vmatpush1.msra.mxu0 0.0
  %2621 = vmatprep.subr.mxu0 0.0
  %2622 = vmatpush1.msra.mxu0 0.0
  %2623 = vmatprep.subr.mxu0 0.0
  %2624 = vmatpush1.msra.mxu0 0.0
  %2625 = vmatprep.subr.mxu0 0.0
  %2626 = vmatpush1.msra.mxu0 0.0
  %2627 = vmatprep.subr.mxu0 0.0
  %2628 = vmatpush1.msra.mxu0 0.0
  %2629 = vmatprep.subr.mxu0 0.0
  %2630 = vmatpush1.msra.mxu0 0.0
  %2631 = vmatprep.subr.mxu0 %v762
  %2632 = vmatpush1.msra.mxu0 %v759
  %2633 = vmatprep.subr.mxu0 %v530
  %2634 = vmatpush1.msra.mxu0 %v529
  %2635 = vmatprep.subr.mxu0 %v473
  %2636 = vmatpush1.msra.mxu0 %v472
  %2637 = vmatprep.subr.mxu0 %v416
  %2638 = vmatpush1.msra.mxu0 %v415
  %2639 = vmatprep.subr.mxu0 %v359
  %2640 = vmatpush1.msra.mxu0 %v358
  %2641 = vmatprep.subr.mxu0 %v302
  %2642 = vmatpush1.msra.mxu0 %v301
  %2643 = vmatprep.subr.mxu0 %v245
  %2644 = vmatpush1.msra.mxu0 %v244
  %2645 = vmatprep.subr.mxu0 %v188
  %2646 = vmatpush1.msra.mxu0 %v187
  %2647 = vmatprep.subr.mxu0 %v131
  %2648 = vmatpush1.msra.mxu0 %v130
  %2649 = vmatprep.subr.mxu0 %v74
  %2650 = vmatpush1.msra.mxu0 %v73
  %2651 = vmatprep.subr.mxu0 0.0
  %2652 = vmatpush2.msra.mxu0 0.0
  %2653 = vmatprep.subr.mxu0 0.0
  %2654 = vmatpush2.msra.mxu0 0.0
  %2655 = vmatprep.subr.mxu0 0.0
  %2656 = vmatpush2.msra.mxu0 0.0
  %2657 = vmatprep.subr.mxu0 0.0
  %2658 = vmatpush2.msra.mxu0 0.0
  %2659 = vmatprep.subr.mxu0 0.0
  %2660 = vmatpush2.msra.mxu0 0.0
  %2661 = vmatprep.subr.mxu0 0.0
  %2662 = vmatpush2.msra.mxu0 0.0
  %2663 = vmatprep.subr.mxu0 0.0
  %2664 = vmatpush2.msra.mxu0 0.0
  %2665 = vmatprep.subr.mxu0 0.0
  %2666 = vmatpush2.msra.mxu0 0.0
  %2667 = vmatprep.subr.mxu0 0.0
  %2668 = vmatpush2.msra.mxu0 0.0
  %2669 = vmatprep.subr.mxu0 0.0
  %2670 = vmatpush2.msra.mxu0 0.0
  %2671 = vmatprep.subr.mxu0 0.0
  %2672 = vmatpush2.msra.mxu0 0.0
  %2673 = vmatprep.subr.mxu0 0.0
  %2674 = vmatpush2.msra.mxu0 0.0
  %2675 = vmatprep.subr.mxu0 0.0
  %2676 = vmatpush2.msra.mxu0 0.0
  %2677 = vmatprep.subr.mxu0 0.0
  %2678 = vmatpush2.msra.mxu0 0.0
  %2679 = vmatprep.subr.mxu0 0.0
  %2680 = vmatpush2.msra.mxu0 0.0
  %2681 = vmatprep.subr.mxu0 0.0
  %2682 = vmatpush2.msra.mxu0 0.0
  %2683 = vmatprep.mubr.f32.mxu0 0.0
  %2684 = vmatmul.mubr.f32.gmra.mxu0 %v599
  %v2685 = vpop.f32.mrf.mxu0
  %v2686 = vadd.f32 %v595, %v2685
  %v2687 = vpop.f32.mrf.mxu0
  %v2688 = vadd.f32 %v595, %v2687
  %2689 = vdwg.mxu0
  %2690 = vmatprep.subr.mxu0 0.0
  %2691 = vmatpush1.msra.mxu0 0.0
  %2692 = vmatprep.subr.mxu0 0.0
  %2693 = vmatpush1.msra.mxu0 0.0
  %2694 = vmatprep.subr.mxu0 0.0
  %2695 = vmatpush1.msra.mxu0 0.0
  %2696 = vmatprep.subr.mxu0 0.0
  %2697 = vmatpush1.msra.mxu0 0.0
  %2698 = vmatprep.subr.mxu0 0.0
  %2699 = vmatpush1.msra.mxu0 0.0
  %2700 = vmatprep.subr.mxu0 0.0
  %2701 = vmatpush1.msra.mxu0 0.0
  %2702 = vmatprep.subr.mxu0 %v768
  %2703 = vmatpush1.msra.mxu0 %v765
  %2704 = vmatprep.subr.mxu0 %v532
  %2705 = vmatpush1.msra.mxu0 %v531
  %2706 = vmatprep.subr.mxu0 %v475
  %2707 = vmatpush1.msra.mxu0 %v474
  %2708 = vmatprep.subr.mxu0 %v418
  %2709 = vmatpush1.msra.mxu0 %v417
  %2710 = vmatprep.subr.mxu0 %v361
  %2711 = vmatpush1.msra.mxu0 %v360
  %2712 = vmatprep.subr.mxu0 %v304
  %2713 = vmatpush1.msra.mxu0 %v303
  %2714 = vmatprep.subr.mxu0 %v247
  %2715 = vmatpush1.msra.mxu0 %v246
  %2716 = vmatprep.subr.mxu0 %v190
  %2717 = vmatpush1.msra.mxu0 %v189
  %2718 = vmatprep.subr.mxu0 %v133
  %2719 = vmatpush1.msra.mxu0 %v132
  %2720 = vmatprep.subr.mxu0 %v76
  %2721 = vmatpush1.msra.mxu0 %v75
  %2722 = vmatprep.subr.mxu0 0.0
  %2723 = vmatpush2.msra.mxu0 0.0
  %2724 = vmatprep.subr.mxu0 0.0
  %2725 = vmatpush2.msra.mxu0 0.0
  %2726 = vmatprep.subr.mxu0 0.0
  %2727 = vmatpush2.msra.mxu0 0.0
  %2728 = vmatprep.subr.mxu0 0.0
  %2729 = vmatpush2.msra.mxu0 0.0
  %2730 = vmatprep.subr.mxu0 0.0
  %2731 = vmatpush2.msra.mxu0 0.0
  %2732 = vmatprep.subr.mxu0 0.0
  %2733 = vmatpush2.msra.mxu0 0.0
  %2734 = vmatprep.subr.mxu0 0.0
  %2735 = vmatpush2.msra.mxu0 0.0
  %2736 = vmatprep.subr.mxu0 0.0
  %2737 = vmatpush2.msra.mxu0 0.0
  %2738 = vmatprep.subr.mxu0 0.0
  %2739 = vmatpush2.msra.mxu0 0.0
  %2740 = vmatprep.subr.mxu0 0.0
  %2741 = vmatpush2.msra.mxu0 0.0
  %2742 = vmatprep.subr.mxu0 0.0
  %2743 = vmatpush2.msra.mxu0 0.0
  %2744 = vmatprep.subr.mxu0 0.0
  %2745 = vmatpush2.msra.mxu0 0.0
  %2746 = vmatprep.subr.mxu0 0.0
  %2747 = vmatpush2.msra.mxu0 0.0
  %2748 = vmatprep.subr.mxu0 0.0
  %2749 = vmatpush2.msra.mxu0 0.0
  %2750 = vmatprep.subr.mxu0 0.0
  %2751 = vmatpush2.msra.mxu0 0.0
  %2752 = vmatprep.subr.mxu0 0.0
  %2753 = vmatpush2.msra.mxu0 0.0
  %2754 = vmatprep.mubr.f32.mxu0 0.0
  %2755 = vmatmul.mubr.f32.gmra.mxu0 %v599
  %v2756 = vpop.f32.mrf.mxu0
  %v2757 = vadd.f32 %v595, %v2756
  %v2758 = vpop.f32.mrf.mxu0
  %v2759 = vadd.f32 %v595, %v2758
  %2760 = vdwg.mxu0
  %2761 = vmatprep.subr.mxu0 0.0
  %2762 = vmatpush1.msra.mxu0 0.0
  %2763 = vmatprep.subr.mxu0 0.0
  %2764 = vmatpush1.msra.mxu0 0.0
  %2765 = vmatprep.subr.mxu0 0.0
  %2766 = vmatpush1.msra.mxu0 0.0
  %2767 = vmatprep.subr.mxu0 0.0
  %2768 = vmatpush1.msra.mxu0 0.0
  %2769 = vmatprep.subr.mxu0 0.0
  %2770 = vmatpush1.msra.mxu0 0.0
  %2771 = vmatprep.subr.mxu0 0.0
  %2772 = vmatpush1.msra.mxu0 0.0
  %2773 = vmatprep.subr.mxu0 0.0
  %2774 = vmatpush1.msra.mxu0 %v771
  %2775 = vmatprep.subr.mxu0 0.0
  %2776 = vmatpush1.msra.mxu0 %v533
  %2777 = vmatprep.subr.mxu0 0.0
  %2778 = vmatpush1.msra.mxu0 %v476
  %2779 = vmatprep.subr.mxu0 0.0
  %2780 = vmatpush1.msra.mxu0 %v419
  %2781 = vmatprep.subr.mxu0 0.0
  %2782 = vmatpush1.msra.mxu0 %v362
  %2783 = vmatprep.subr.mxu0 0.0
  %2784 = vmatpush1.msra.mxu0 %v305
  %2785 = vmatprep.subr.mxu0 0.0
  %2786 = vmatpush1.msra.mxu0 %v248
  %2787 = vmatprep.subr.mxu0 0.0
  %2788 = vmatpush1.msra.mxu0 %v191
  %2789 = vmatprep.subr.mxu0 0.0
  %2790 = vmatpush1.msra.mxu0 %v134
  %2791 = vmatprep.subr.mxu0 0.0
  %2792 = vmatpush1.msra.mxu0 %v77
  %2793 = vmatprep.subr.mxu0 0.0
  %2794 = vmatpush2.msra.mxu0 0.0
  %2795 = vmatprep.subr.mxu0 0.0
  %2796 = vmatpush2.msra.mxu0 0.0
  %2797 = vmatprep.subr.mxu0 0.0
  %2798 = vmatpush2.msra.mxu0 0.0
  %2799 = vmatprep.subr.mxu0 0.0
  %2800 = vmatpush2.msra.mxu0 0.0
  %2801 = vmatprep.subr.mxu0 0.0
  %2802 = vmatpush2.msra.mxu0 0.0
  %2803 = vmatprep.subr.mxu0 0.0
  %2804 = vmatpush2.msra.mxu0 0.0
  %2805 = vmatprep.subr.mxu0 0.0
  %2806 = vmatpush2.msra.mxu0 0.0
  %2807 = vmatprep.subr.mxu0 0.0
  %2808 = vmatpush2.msra.mxu0 0.0
  %2809 = vmatprep.subr.mxu0 0.0
  %2810 = vmatpush2.msra.mxu0 0.0
  %2811 = vmatprep.subr.mxu0 0.0
  %2812 = vmatpush2.msra.mxu0 0.0
  %2813 = vmatprep.subr.mxu0 0.0
  %2814 = vmatpush2.msra.mxu0 0.0
  %2815 = vmatprep.subr.mxu0 0.0
  %2816 = vmatpush2.msra.mxu0 0.0
  %2817 = vmatprep.subr.mxu0 0.0
  %2818 = vmatpush2.msra.mxu0 0.0
  %2819 = vmatprep.subr.mxu0 0.0
  %2820 = vmatpush2.msra.mxu0 0.0
  %2821 = vmatprep.subr.mxu0 0.0
  %2822 = vmatpush2.msra.mxu0 0.0
  %2823 = vmatprep.subr.mxu0 0.0
  %2824 = vmatpush2.msra.mxu0 0.0
  %2825 = vmatprep.mubr.f32.mxu0 0.0
  %2826 = vmatmul.mubr.f32.gmra.mxu0 %v599
  %v2827 = vpop.f32.mrf.mxu0
  %v2828 = vadd.f32 %v595, %v2827
  %v2829 = vpop.f32.mrf.mxu0
  %2830 = vdwg.mxu0
  %vm2831 = vcmask 1045504
  %v2832 = vsel %vm2831, %v840, 0.0
  %v2833 = vsel %vm2831, %v842, 0.0
  %v2834 = vadd.f32 %v2832, %v2833
  %v2835 = vsel %vm2831, %v911, 0.0
  %v2836 = vadd.f32 %v2834, %v2835
  %v2837 = vsel %vm2831, %v913, 0.0
  %v2838 = vadd.f32 %v2836, %v2837
  %v2839 = vsel %vm2831, %v982, 0.0
  %v2840 = vadd.f32 %v2838, %v2839
  %v2841 = vsel %vm2831, %v984, 0.0
  %v2842 = vadd.f32 %v2840, %v2841
  %v2843 = vsel %vm2831, %v1053, 0.0
  %v2844 = vadd.f32 %v2842, %v2843
  %v2845 = vsel %vm2831, %v1055, 0.0
  %v2846 = vadd.f32 %v2844, %v2845
  %v2847 = vsel %vm2831, %v1124, 0.0
  %v2848 = vadd.f32 %v2846, %v2847
  %v2849 = vsel %vm2831, %v1126, 0.0
  %v2850 = vadd.f32 %v2848, %v2849
  %v2851 = vsel %vm2831, %v1195, 0.0
  %v2852 = vadd.f32 %v2850, %v2851
  %v2853 = vsel %vm2831, %v1197, 0.0
  %v2854 = vadd.f32 %v2852, %v2853
  %v2855 = vsel %vm2831, %v1266, 0.0
  %v2856 = vadd.f32 %v2854, %v2855
  %v2857 = vsel %vm2831, %v1268, 0.0
  %v2858 = vadd.f32 %v2856, %v2857
  %v2859 = vsel %vm2831, %v1337, 0.0
  %v2860 = vadd.f32 %v2858, %v2859
  %v2861 = vsel %vm2831, %v1339, 0.0
  %v2862 = vadd.f32 %v2860, %v2861
  %v2863 = vsel %vm2831, %v1408, 0.0
  %v2864 = vadd.f32 %v2862, %v2863
  %v2865 = vsel %vm2831, %v1410, 0.0
  %v2866 = vadd.f32 %v2864, %v2865
  %v2867 = vsel %vm2831, %v1479, 0.0
  %v2868 = vadd.f32 %v2866, %v2867
  %v2869 = vsel %vm2831, %v1481, 0.0
  %v2870 = vadd.f32 %v2868, %v2869
  %v2871 = vsel %vm2831, %v1550, 0.0
  %v2872 = vadd.f32 %v2870, %v2871
  %v2873 = vsel %vm2831, %v1552, 0.0
  %v2874 = vadd.f32 %v2872, %v2873
  %v2875 = vsel %vm2831, %v1621, 0.0
  %v2876 = vadd.f32 %v2874, %v2875
  %v2877 = vsel %vm2831, %v1623, 0.0
  %v2878 = vadd.f32 %v2876, %v2877
  %v2879 = vsel %vm2831, %v1692, 0.0
  %v2880 = vadd.f32 %v2878, %v2879
  %v2881 = vsel %vm2831, %v1694, 0.0
  %v2882 = vadd.f32 %v2880, %v2881
  %v2883 = vsel %vm2831, %v1763, 0.0
  %v2884 = vadd.f32 %v2882, %v2883
  %v2885 = vsel %vm2831, %v1765, 0.0
  %v2886 = vadd.f32 %v2884, %v2885
  %v2887 = vsel %vm2831, %v1834, 0.0
  %v2888 = vadd.f32 %v2886, %v2887
  %v2889 = vsel %vm2831, %v1836, 0.0
  %v2890 = vadd.f32 %v2888, %v2889
  %v2891 = vsel %vm2831, %v1905, 0.0
  %v2892 = vadd.f32 %v2890, %v2891
  %v2893 = vsel %vm2831, %v1907, 0.0
  %v2894 = vadd.f32 %v2892, %v2893
  %v2895 = vsel %vm2831, %v1976, 0.0
  %v2896 = vadd.f32 %v2894, %v2895
  %v2897 = vsel %vm2831, %v1978, 0.0
  %v2898 = vadd.f32 %v2896, %v2897
  %v2899 = vsel %vm2831, %v2047, 0.0
  %v2900 = vadd.f32 %v2898, %v2899
  %v2901 = vsel %vm2831, %v2049, 0.0
  %v2902 = vadd.f32 %v2900, %v2901
  %v2903 = vsel %vm2831, %v2118, 0.0
  %v2904 = vadd.f32 %v2902, %v2903
  %v2905 = vsel %vm2831, %v2120, 0.0
  %v2906 = vadd.f32 %v2904, %v2905
  %v2907 = vsel %vm2831, %v2189, 0.0
  %v2908 = vadd.f32 %v2906, %v2907
  %v2909 = vsel %vm2831, %v2191, 0.0
  %v2910 = vadd.f32 %v2908, %v2909
  %v2911 = vsel %vm2831, %v2260, 0.0
  %v2912 = vadd.f32 %v2910, %v2911
  %v2913 = vsel %vm2831, %v2262, 0.0
  %v2914 = vadd.f32 %v2912, %v2913
  %v2915 = vsel %vm2831, %v2331, 0.0
  %v2916 = vadd.f32 %v2914, %v2915
  %v2917 = vsel %vm2831, %v2333, 0.0
  %v2918 = vadd.f32 %v2916, %v2917
  %v2919 = vsel %vm2831, %v2402, 0.0
  %v2920 = vadd.f32 %v2918, %v2919
  %v2921 = vsel %vm2831, %v2404, 0.0
  %v2922 = vadd.f32 %v2920, %v2921
  %v2923 = vsel %vm2831, %v2473, 0.0
  %v2924 = vadd.f32 %v2922, %v2923
  %v2925 = vsel %vm2831, %v2475, 0.0
  %v2926 = vadd.f32 %v2924, %v2925
  %v2927 = vsel %vm2831, %v2544, 0.0
  %v2928 = vadd.f32 %v2926, %v2927
  %v2929 = vsel %vm2831, %v2546, 0.0
  %v2930 = vadd.f32 %v2928, %v2929
  %v2931 = vsel %vm2831, %v2615, 0.0
  %v2932 = vadd.f32 %v2930, %v2931
  %v2933 = vsel %vm2831, %v2617, 0.0
  %v2934 = vadd.f32 %v2932, %v2933
  %v2935 = vsel %vm2831, %v2686, 0.0
  %v2936 = vadd.f32 %v2934, %v2935
  %v2937 = vsel %vm2831, %v2688, 0.0
  %v2938 = vadd.f32 %v2936, %v2937
  %v2939 = vsel %vm2831, %v2757, 0.0
  %v2940 = vadd.f32 %v2938, %v2939
  %v2941 = vsel %vm2831, %v2759, 0.0
  %v2942 = vadd.f32 %v2940, %v2941
  %vm2943 = vcmask 259072
  %v2944 = vsel %vm2943, %v2828, 0.0
  %v2945 = vadd.f32 %v2942, %v2944
  %2946 = vadd.xlane.f32.xlu0 %v2945
  %v2947 = vpop.xlane.xlu0 %2946
  %v2948 = vrcp.pop 7200.0
  %v2949 = vmul.f32 %v2947, %v2948
  %v2950 = vsub.f32 %v840, %v2949
  %v2951 = vsub.f32 %v842, %v2949
  %v2952 = vsub.f32 %v911, %v2949
  %v2953 = vsub.f32 %v913, %v2949
  %v2954 = vsub.f32 %v982, %v2949
  %v2955 = vsub.f32 %v984, %v2949
  %v2956 = vsub.f32 %v1053, %v2949
  %v2957 = vsub.f32 %v1055, %v2949
  %v2958 = vsub.f32 %v1124, %v2949
  %v2959 = vsub.f32 %v1126, %v2949
  %v2960 = vsub.f32 %v1195, %v2949
  %v2961 = vsub.f32 %v1197, %v2949
  %v2962 = vsub.f32 %v1266, %v2949
  %v2963 = vsub.f32 %v1268, %v2949
  %v2964 = vsub.f32 %v1337, %v2949
  %v2965 = vsub.f32 %v1339, %v2949
  %v2966 = vsub.f32 %v1408, %v2949
  %v2967 = vsub.f32 %v1410, %v2949
  %v2968 = vsub.f32 %v1479, %v2949
  %v2969 = vsub.f32 %v1481, %v2949
  %v2970 = vsub.f32 %v1550, %v2949
  %v2971 = vsub.f32 %v1552, %v2949
  %v2972 = vsub.f32 %v1621, %v2949
  %v2973 = vsub.f32 %v1623, %v2949
  %v2974 = vsub.f32 %v1692, %v2949
  %v2975 = vsub.f32 %v1694, %v2949
  %v2976 = vsub.f32 %v1763, %v2949
  %v2977 = vsub.f32 %v1765, %v2949
  %v2978 = vsub.f32 %v1834, %v2949
  %v2979 = vsub.f32 %v1836, %v2949
  %v2980 = vsub.f32 %v1905, %v2949
  %v2981 = vsub.f32 %v1907, %v2949
  %v2982 = vsub.f32 %v1976, %v2949
  %v2983 = vsub.f32 %v1978, %v2949
  %v2984 = vsub.f32 %v2047, %v2949
  %v2985 = vsub.f32 %v2049, %v2949
  %v2986 = vsub.f32 %v2118, %v2949
  %v2987 = vsub.f32 %v2120, %v2949
  %v2988 = vsub.f32 %v2189, %v2949
  %v2989 = vsub.f32 %v2191, %v2949
  %v2990 = vsub.f32 %v2260, %v2949
  %v2991 = vsub.f32 %v2262, %v2949
  %v2992 = vsub.f32 %v2331, %v2949
  %v2993 = vsub.f32 %v2333, %v2949
  %v2994 = vsub.f32 %v2402, %v2949
  %v2995 = vsub.f32 %v2404, %v2949
  %v2996 = vsub.f32 %v2473, %v2949
  %v2997 = vsub.f32 %v2475, %v2949
  %v2998 = vsub.f32 %v2544, %v2949
  %v2999 = vsub.f32 %v2546, %v2949
  %v3000 = vsub.f32 %v2615, %v2949
  %v3001 = vsub.f32 %v2617, %v2949
  %v3002 = vsub.f32 %v2686, %v2949
  %v3003 = vsub.f32 %v2688, %v2949
  %v3004 = vsub.f32 %v2757, %v2949
  %v3005 = vsub.f32 %v2759, %v2949
  %v3006 = vsub.f32 %v2828, %v2949
  %v3007 = vmul.f32 %v2950, %v2950
  %v3008 = vmul.f32 %v2951, %v2951
  %v3009 = vmul.f32 %v2952, %v2952
  %v3010 = vmul.f32 %v2953, %v2953
  %v3011 = vmul.f32 %v2954, %v2954
  %v3012 = vmul.f32 %v2955, %v2955
  %v3013 = vmul.f32 %v2956, %v2956
  %v3014 = vmul.f32 %v2957, %v2957
  %v3015 = vmul.f32 %v2958, %v2958
  %v3016 = vmul.f32 %v2959, %v2959
  %v3017 = vmul.f32 %v2960, %v2960
  %v3018 = vmul.f32 %v2961, %v2961
  %v3019 = vmul.f32 %v2962, %v2962
  %v3020 = vmul.f32 %v2963, %v2963
  %v3021 = vmul.f32 %v2964, %v2964
  %v3022 = vmul.f32 %v2965, %v2965
  %v3023 = vmul.f32 %v2966, %v2966
  %v3024 = vmul.f32 %v2967, %v2967
  %v3025 = vmul.f32 %v2968, %v2968
  %v3026 = vmul.f32 %v2969, %v2969
  %v3027 = vmul.f32 %v2970, %v2970
  %v3028 = vmul.f32 %v2971, %v2971
  %v3029 = vmul.f32 %v2972, %v2972
  %v3030 = vmul.f32 %v2973, %v2973
  %v3031 = vmul.f32 %v2974, %v2974
  %v3032 = vmul.f32 %v2975, %v2975
  %v3033 = vmul.f32 %v2976, %v2976
  %v3034 = vmul.f32 %v2977, %v2977
  %v3035 = vmul.f32 %v2978, %v2978
  %v3036 = vmul.f32 %v2979, %v2979
  %v3037 = vmul.f32 %v2980, %v2980
  %v3038 = vmul.f32 %v2981, %v2981
  %v3039 = vmul.f32 %v2982, %v2982
  %v3040 = vmul.f32 %v2983, %v2983
  %v3041 = vmul.f32 %v2984, %v2984
  %v3042 = vmul.f32 %v2985, %v2985
  %v3043 = vmul.f32 %v2986, %v2986
  %v3044 = vmul.f32 %v2987, %v2987
  %v3045 = vmul.f32 %v2988, %v2988
  %v3046 = vmul.f32 %v2989, %v2989
  %v3047 = vmul.f32 %v2990, %v2990
  %v3048 = vmul.f32 %v2991, %v2991
  %v3049 = vmul.f32 %v2992, %v2992
  %v3050 = vmul.f32 %v2993, %v2993
  %v3051 = vmul.f32 %v2994, %v2994
  %v3052 = vmul.f32 %v2995, %v2995
  %v3053 = vmul.f32 %v2996, %v2996
  %v3054 = vmul.f32 %v2997, %v2997
  %v3055 = vmul.f32 %v2998, %v2998
  %v3056 = vmul.f32 %v2999, %v2999
  %v3057 = vmul.f32 %v3000, %v3000
  %v3058 = vmul.f32 %v3001, %v3001
  %v3059 = vmul.f32 %v3002, %v3002
  %v3060 = vmul.f32 %v3003, %v3003
  %v3061 = vmul.f32 %v3004, %v3004
  %v3062 = vmul.f32 %v3005, %v3005
  %v3063 = vmul.f32 %v3006, %v3006
  %v3064 = vsel %vm2831, %v3007, 0.0
  %v3065 = vsel %vm2831, %v3008, 0.0
  %v3066 = vadd.f32 %v3064, %v3065
  %v3067 = vsel %vm2831, %v3009, 0.0
  %v3068 = vadd.f32 %v3066, %v3067
  %v3069 = vsel %vm2831, %v3010, 0.0
  %v3070 = vadd.f32 %v3068, %v3069
  %v3071 = vsel %vm2831, %v3011, 0.0
  %v3072 = vadd.f32 %v3070, %v3071
  %v3073 = vsel %vm2831, %v3012, 0.0
  %v3074 = vadd.f32 %v3072, %v3073
  %v3075 = vsel %vm2831, %v3013, 0.0
  %v3076 = vadd.f32 %v3074, %v3075
  %v3077 = vsel %vm2831, %v3014, 0.0
  %v3078 = vadd.f32 %v3076, %v3077
  %v3079 = vsel %vm2831, %v3015, 0.0
  %v3080 = vadd.f32 %v3078, %v3079
  %v3081 = vsel %vm2831, %v3016, 0.0
  %v3082 = vadd.f32 %v3080, %v3081
  %v3083 = vsel %vm2831, %v3017, 0.0
  %v3084 = vadd.f32 %v3082, %v3083
  %v3085 = vsel %vm2831, %v3018, 0.0
  %v3086 = vadd.f32 %v3084, %v3085
  %v3087 = vsel %vm2831, %v3019, 0.0
  %v3088 = vadd.f32 %v3086, %v3087
  %v3089 = vsel %vm2831, %v3020, 0.0
  %v3090 = vadd.f32 %v3088, %v3089
  %v3091 = vsel %vm2831, %v3021, 0.0
  %v3092 = vadd.f32 %v3090, %v3091
  %v3093 = vsel %vm2831, %v3022, 0.0
  %v3094 = vadd.f32 %v3092, %v3093
  %v3095 = vsel %vm2831, %v3023, 0.0
  %v3096 = vadd.f32 %v3094, %v3095
  %v3097 = vsel %vm2831, %v3024, 0.0
  %v3098 = vadd.f32 %v3096, %v3097
  %v3099 = vsel %vm2831, %v3025, 0.0
  %v3100 = vadd.f32 %v3098, %v3099
  %v3101 = vsel %vm2831, %v3026, 0.0
  %v3102 = vadd.f32 %v3100, %v3101
  %v3103 = vsel %vm2831, %v3027, 0.0
  %v3104 = vadd.f32 %v3102, %v3103
  %v3105 = vsel %vm2831, %v3028, 0.0
  %v3106 = vadd.f32 %v3104, %v3105
  %v3107 = vsel %vm2831, %v3029, 0.0
  %v3108 = vadd.f32 %v3106, %v3107
  %v3109 = vsel %vm2831, %v3030, 0.0
  %v3110 = vadd.f32 %v3108, %v3109
  %v3111 = vsel %vm2831, %v3031, 0.0
  %v3112 = vadd.f32 %v3110, %v3111
  %v3113 = vsel %vm2831, %v3032, 0.0
  %v3114 = vadd.f32 %v3112, %v3113
  %v3115 = vsel %vm2831, %v3033, 0.0
  %v3116 = vadd.f32 %v3114, %v3115
  %v3117 = vsel %vm2831, %v3034, 0.0
  %v3118 = vadd.f32 %v3116, %v3117
  %v3119 = vsel %vm2831, %v3035, 0.0
  %v3120 = vadd.f32 %v3118, %v3119
  %v3121 = vsel %vm2831, %v3036, 0.0
  %v3122 = vadd.f32 %v3120, %v3121
  %v3123 = vsel %vm2831, %v3037, 0.0
  %v3124 = vadd.f32 %v3122, %v3123
  %v3125 = vsel %vm2831, %v3038, 0.0
  %v3126 = vadd.f32 %v3124, %v3125
  %v3127 = vsel %vm2831, %v3039, 0.0
  %v3128 = vadd.f32 %v3126, %v3127
  %v3129 = vsel %vm2831, %v3040, 0.0
  %v3130 = vadd.f32 %v3128, %v3129
  %v3131 = vsel %vm2831, %v3041, 0.0
  %v3132 = vadd.f32 %v3130, %v3131
  %v3133 = vsel %vm2831, %v3042, 0.0
  %v3134 = vadd.f32 %v3132, %v3133
  %v3135 = vsel %vm2831, %v3043, 0.0
  %v3136 = vadd.f32 %v3134, %v3135
  %v3137 = vsel %vm2831, %v3044, 0.0
  %v3138 = vadd.f32 %v3136, %v3137
  %v3139 = vsel %vm2831, %v3045, 0.0
  %v3140 = vadd.f32 %v3138, %v3139
  %v3141 = vsel %vm2831, %v3046, 0.0
  %v3142 = vadd.f32 %v3140, %v3141
  %v3143 = vsel %vm2831, %v3047, 0.0
  %v3144 = vadd.f32 %v3142, %v3143
  %v3145 = vsel %vm2831, %v3048, 0.0
  %v3146 = vadd.f32 %v3144, %v3145
  %v3147 = vsel %vm2831, %v3049, 0.0
  %v3148 = vadd.f32 %v3146, %v3147
  %v3149 = vsel %vm2831, %v3050, 0.0
  %v3150 = vadd.f32 %v3148, %v3149
  %v3151 = vsel %vm2831, %v3051, 0.0
  %v3152 = vadd.f32 %v3150, %v3151
  %v3153 = vsel %vm2831, %v3052, 0.0
  %v3154 = vadd.f32 %v3152, %v3153
  %v3155 = vsel %vm2831, %v3053, 0.0
  %v3156 = vadd.f32 %v3154, %v3155
  %v3157 = vsel %vm2831, %v3054, 0.0
  %v3158 = vadd.f32 %v3156, %v3157
  %v3159 = vsel %vm2831, %v3055, 0.0
  %v3160 = vadd.f32 %v3158, %v3159
  %v3161 = vsel %vm2831, %v3056, 0.0
  %v3162 = vadd.f32 %v3160, %v3161
  %v3163 = vsel %vm2831, %v3057, 0.0
  %v3164 = vadd.f32 %v3162, %v3163
  %v3165 = vsel %vm2831, %v3058, 0.0
  %v3166 = vadd.f32 %v3164, %v3165
  %v3167 = vsel %vm2831, %v3059, 0.0
  %v3168 = vadd.f32 %v3166, %v3167
  %v3169 = vsel %vm2831, %v3060, 0.0
  %v3170 = vadd.f32 %v3168, %v3169
  %v3171 = vsel %vm2831, %v3061, 0.0
  %v3172 = vadd.f32 %v3170, %v3171
  %v3173 = vsel %vm2831, %v3062, 0.0
  %v3174 = vadd.f32 %v3172, %v3173
  %v3175 = vsel %vm2943, %v3063, 0.0
  %v3176 = vadd.f32 %v3174, %v3175
  %3177 = vadd.xlane.f32.xlu0 %v3176
  %v3178 = vpop.xlane.xlu0 %3177
  %v3179 = vmul.f32 %v3178, %v2948
  %v3180 = vld [vmem:[%s3] sm:$0x3f]
  %v3181 = vadd.f32 %v3179, 1e-05
  %v3182 = vrsqrt.pop %v3181
  %v3183 = vmul.f32 %v3180, %v3182
  %3185 = vset.pattern.permute.xlu0 0
  %3186 = vperm.xlu0 %3185, %v3183
  %v3187 = vpop.permute.xlu0 %3186
  %v3189 = vmul.f32 %v2950, %v3187
  %v3190 = vmul.f32 %v2951, %v3187
  %v3191 = vmul.f32 %v2952, %v3187
  %v3192 = vmul.f32 %v2953, %v3187
  %v3193 = vmul.f32 %v2954, %v3187
  %v3194 = vmul.f32 %v2955, %v3187
  %v3195 = vmul.f32 %v2956, %v3187
  %v3196 = vmul.f32 %v2957, %v3187
  %v3197 = vmul.f32 %v2958, %v3187
  %v3198 = vmul.f32 %v2959, %v3187
  %v3199 = vmul.f32 %v2960, %v3187
  %v3200 = vmul.f32 %v2961, %v3187
  %v3201 = vmul.f32 %v2962, %v3187
  %v3202 = vmul.f32 %v2963, %v3187
  %v3203 = vmul.f32 %v2964, %v3187
  %v3204 = vmul.f32 %v2965, %v3187
  %v3205 = vmul.f32 %v2966, %v3187
  %v3206 = vmul.f32 %v2967, %v3187
  %v3207 = vmul.f32 %v2968, %v3187
  %v3208 = vmul.f32 %v2969, %v3187
  %v3209 = vmul.f32 %v2970, %v3187
  %v3210 = vmul.f32 %v2971, %v3187
  %v3211 = vmul.f32 %v2972, %v3187
  %v3212 = vmul.f32 %v2973, %v3187
  %v3213 = vmul.f32 %v2974, %v3187
  %v3214 = vmul.f32 %v2975, %v3187
  %v3215 = vmul.f32 %v2976, %v3187
  %v3216 = vmul.f32 %v2977, %v3187
  %v3217 = vmul.f32 %v2978, %v3187
  %v3218 = vmul.f32 %v2979, %v3187
  %v3219 = vmul.f32 %v2980, %v3187
  %v3220 = vmul.f32 %v2981, %v3187
  %v3221 = vmul.f32 %v2982, %v3187
  %v3222 = vmul.f32 %v2983, %v3187
  %v3223 = vmul.f32 %v2984, %v3187
  %v3224 = vmul.f32 %v2985, %v3187
  %v3225 = vmul.f32 %v2986, %v3187
  %v3226 = vmul.f32 %v2987, %v3187
  %v3227 = vmul.f32 %v2988, %v3187
  %v3228 = vmul.f32 %v2989, %v3187
  %v3229 = vmul.f32 %v2990, %v3187
  %v3230 = vmul.f32 %v2991, %v3187
  %v3231 = vmul.f32 %v2992, %v3187
  %v3232 = vmul.f32 %v2993, %v3187
  %v3233 = vmul.f32 %v2994, %v3187
  %v3234 = vmul.f32 %v2995, %v3187
  %v3235 = vmul.f32 %v2996, %v3187
  %v3236 = vmul.f32 %v2997, %v3187
  %v3237 = vmul.f32 %v2998, %v3187
  %v3238 = vmul.f32 %v2999, %v3187
  %v3239 = vmul.f32 %v3000, %v3187
  %v3240 = vmul.f32 %v3001, %v3187
  %v3241 = vmul.f32 %v3002, %v3187
  %v3242 = vmul.f32 %v3003, %v3187
  %v3243 = vmul.f32 %v3004, %v3187
  %v3244 = vmul.f32 %v3005, %v3187
  %v3245 = vmul.f32 %v3006, %v3187
  %v3246 = vld [vmem:[%s4] sm:$0x3f]
  %3248 = vset.pattern.permute.xlu0 0
  %3249 = vperm.xlu0 %3248, %v3246
  %v3250 = vpop.permute.xlu0 %3249
  %v3252 = vadd.f32 %v3189, %v3250
  %v3253 = vadd.f32 %v3190, %v3250
  %v3254 = vadd.f32 %v3191, %v3250
  %v3255 = vadd.f32 %v3192, %v3250
  %v3256 = vadd.f32 %v3193, %v3250
  %v3257 = vadd.f32 %v3194, %v3250
  %v3258 = vadd.f32 %v3195, %v3250
  %v3259 = vadd.f32 %v3196, %v3250
  %v3260 = vadd.f32 %v3197, %v3250
  %v3261 = vadd.f32 %v3198, %v3250
  %v3262 = vadd.f32 %v3199, %v3250
  %v3263 = vadd.f32 %v3200, %v3250
  %v3264 = vadd.f32 %v3201, %v3250
  %v3265 = vadd.f32 %v3202, %v3250
  %v3266 = vadd.f32 %v3203, %v3250
  %v3267 = vadd.f32 %v3204, %v3250
  %v3268 = vadd.f32 %v3205, %v3250
  %v3269 = vadd.f32 %v3206, %v3250
  %v3270 = vadd.f32 %v3207, %v3250
  %v3271 = vadd.f32 %v3208, %v3250
  %v3272 = vadd.f32 %v3209, %v3250
  %v3273 = vadd.f32 %v3210, %v3250
  %v3274 = vadd.f32 %v3211, %v3250
  %v3275 = vadd.f32 %v3212, %v3250
  %v3276 = vadd.f32 %v3213, %v3250
  %v3277 = vadd.f32 %v3214, %v3250
  %v3278 = vadd.f32 %v3215, %v3250
  %v3279 = vadd.f32 %v3216, %v3250
  %v3280 = vadd.f32 %v3217, %v3250
  %v3281 = vadd.f32 %v3218, %v3250
  %v3282 = vadd.f32 %v3219, %v3250
  %v3283 = vadd.f32 %v3220, %v3250
  %v3284 = vadd.f32 %v3221, %v3250
  %v3285 = vadd.f32 %v3222, %v3250
  %v3286 = vadd.f32 %v3223, %v3250
  %v3287 = vadd.f32 %v3224, %v3250
  %v3288 = vadd.f32 %v3225, %v3250
  %v3289 = vadd.f32 %v3226, %v3250
  %v3290 = vadd.f32 %v3227, %v3250
  %v3291 = vadd.f32 %v3228, %v3250
  %v3292 = vadd.f32 %v3229, %v3250
  %v3293 = vadd.f32 %v3230, %v3250
  %v3294 = vadd.f32 %v3231, %v3250
  %v3295 = vadd.f32 %v3232, %v3250
  %v3296 = vadd.f32 %v3233, %v3250
  %v3297 = vadd.f32 %v3234, %v3250
  %v3298 = vadd.f32 %v3235, %v3250
  %v3299 = vadd.f32 %v3236, %v3250
  %v3300 = vadd.f32 %v3237, %v3250
  %v3301 = vadd.f32 %v3238, %v3250
  %v3302 = vadd.f32 %v3239, %v3250
  %v3303 = vadd.f32 %v3240, %v3250
  %v3304 = vadd.f32 %v3241, %v3250
  %v3305 = vadd.f32 %v3242, %v3250
  %v3306 = vadd.f32 %v3243, %v3250
  %v3307 = vadd.f32 %v3244, %v3250
  %v3308 = vadd.f32 %v3245, %v3250
  %vm3309 = vcmp.ge.f32.partialorder %v3252, 0.0
  %vm3310 = vcmp.ge.f32.partialorder %v3253, 0.0
  %vm3311 = vcmp.ge.f32.partialorder %v3254, 0.0
  %vm3312 = vcmp.ge.f32.partialorder %v3255, 0.0
  %vm3313 = vcmp.ge.f32.partialorder %v3256, 0.0
  %vm3314 = vcmp.ge.f32.partialorder %v3257, 0.0
  %vm3315 = vcmp.ge.f32.partialorder %v3258, 0.0
  %vm3316 = vcmp.ge.f32.partialorder %v3259, 0.0
  %vm3317 = vcmp.ge.f32.partialorder %v3260, 0.0
  %vm3318 = vcmp.ge.f32.partialorder %v3261, 0.0
  %vm3319 = vcmp.ge.f32.partialorder %v3262, 0.0
  %vm3320 = vcmp.ge.f32.partialorder %v3263, 0.0
  %vm3321 = vcmp.ge.f32.partialorder %v3264, 0.0
  %vm3322 = vcmp.ge.f32.partialorder %v3265, 0.0
  %vm3323 = vcmp.ge.f32.partialorder %v3266, 0.0
  %vm3324 = vcmp.ge.f32.partialorder %v3267, 0.0
  %vm3325 = vcmp.ge.f32.partialorder %v3268, 0.0
  %vm3326 = vcmp.ge.f32.partialorder %v3269, 0.0
  %vm3327 = vcmp.ge.f32.partialorder %v3270, 0.0
  %vm3328 = vcmp.ge.f32.partialorder %v3271, 0.0
  %vm3329 = vcmp.ge.f32.partialorder %v3272, 0.0
  %vm3330 = vcmp.ge.f32.partialorder %v3273, 0.0
  %vm3331 = vcmp.ge.f32.partialorder %v3274, 0.0
  %vm3332 = vcmp.ge.f32.partialorder %v3275, 0.0
  %vm3333 = vcmp.ge.f32.partialorder %v3276, 0.0
  %vm3334 = vcmp.ge.f32.partialorder %v3277, 0.0
  %vm3335 = vcmp.ge.f32.partialorder %v3278, 0.0
  %vm3336 = vcmp.ge.f32.partialorder %v3279, 0.0
  %vm3337 = vcmp.ge.f32.partialorder %v3280, 0.0
  %vm3338 = vcmp.ge.f32.partialorder %v3281, 0.0
  %vm3339 = vcmp.ge.f32.partialorder %v3282, 0.0
  %vm3340 = vcmp.ge.f32.partialorder %v3283, 0.0
  %vm3341 = vcmp.ge.f32.partialorder %v3284, 0.0
  %vm3342 = vcmp.ge.f32.partialorder %v3285, 0.0
  %vm3343 = vcmp.ge.f32.partialorder %v3286, 0.0
  %vm3344 = vcmp.ge.f32.partialorder %v3287, 0.0
  %vm3345 = vcmp.ge.f32.partialorder %v3288, 0.0
  %vm3346 = vcmp.ge.f32.partialorder %v3289, 0.0
  %vm3347 = vcmp.ge.f32.partialorder %v3290, 0.0
  %vm3348 = vcmp.ge.f32.partialorder %v3291, 0.0
  %vm3349 = vcmp.ge.f32.partialorder %v3292, 0.0
  %vm3350 = vcmp.ge.f32.partialorder %v3293, 0.0
  %vm3351 = vcmp.ge.f32.partialorder %v3294, 0.0
  %vm3352 = vcmp.ge.f32.partialorder %v3295, 0.0
  %vm3353 = vcmp.ge.f32.partialorder %v3296, 0.0
  %vm3354 = vcmp.ge.f32.partialorder %v3297, 0.0
  %vm3355 = vcmp.ge.f32.partialorder %v3298, 0.0
  %vm3356 = vcmp.ge.f32.partialorder %v3299, 0.0
  %vm3357 = vcmp.ge.f32.partialorder %v3300, 0.0
  %vm3358 = vcmp.ge.f32.partialorder %v3301, 0.0
  %vm3359 = vcmp.ge.f32.partialorder %v3302, 0.0
  %vm3360 = vcmp.ge.f32.partialorder %v3303, 0.0
  %vm3361 = vcmp.ge.f32.partialorder %v3304, 0.0
  %vm3362 = vcmp.ge.f32.partialorder %v3305, 0.0
  %vm3363 = vcmp.ge.f32.partialorder %v3306, 0.0
  %vm3364 = vcmp.ge.f32.partialorder %v3307, 0.0
  %vm3365 = vcmp.ge.f32.partialorder %v3308, 0.0
  %v3366 = vmul.f32 %v3252, 0.01
  %v3367 = vmul.f32 %v3253, 0.01
  %v3368 = vmul.f32 %v3254, 0.01
  %v3369 = vmul.f32 %v3255, 0.01
  %v3370 = vmul.f32 %v3256, 0.01
  %v3371 = vmul.f32 %v3257, 0.01
  %v3372 = vmul.f32 %v3258, 0.01
  %v3373 = vmul.f32 %v3259, 0.01
  %v3374 = vmul.f32 %v3260, 0.01
  %v3375 = vmul.f32 %v3261, 0.01
  %v3376 = vmul.f32 %v3262, 0.01
  %v3377 = vmul.f32 %v3263, 0.01
  %v3378 = vmul.f32 %v3264, 0.01
  %v3379 = vmul.f32 %v3265, 0.01
  %v3380 = vmul.f32 %v3266, 0.01
  %v3381 = vmul.f32 %v3267, 0.01
  %v3382 = vmul.f32 %v3268, 0.01
  %v3383 = vmul.f32 %v3269, 0.01
  %v3384 = vmul.f32 %v3270, 0.01
  %v3385 = vmul.f32 %v3271, 0.01
  %v3386 = vmul.f32 %v3272, 0.01
  %v3387 = vmul.f32 %v3273, 0.01
  %v3388 = vmul.f32 %v3274, 0.01
  %v3389 = vmul.f32 %v3275, 0.01
  %v3390 = vmul.f32 %v3276, 0.01
  %v3391 = vmul.f32 %v3277, 0.01
  %v3392 = vmul.f32 %v3278, 0.01
  %v3393 = vmul.f32 %v3279, 0.01
  %v3394 = vmul.f32 %v3280, 0.01
  %v3395 = vmul.f32 %v3281, 0.01
  %v3396 = vmul.f32 %v3282, 0.01
  %v3397 = vmul.f32 %v3283, 0.01
  %v3398 = vmul.f32 %v3284, 0.01
  %v3399 = vmul.f32 %v3285, 0.01
  %v3400 = vmul.f32 %v3286, 0.01
  %v3401 = vmul.f32 %v3287, 0.01
  %v3402 = vmul.f32 %v3288, 0.01
  %v3403 = vmul.f32 %v3289, 0.01
  %v3404 = vmul.f32 %v3290, 0.01
  %v3405 = vmul.f32 %v3291, 0.01
  %v3406 = vmul.f32 %v3292, 0.01
  %v3407 = vmul.f32 %v3293, 0.01
  %v3408 = vmul.f32 %v3294, 0.01
  %v3409 = vmul.f32 %v3295, 0.01
  %v3410 = vmul.f32 %v3296, 0.01
  %v3411 = vmul.f32 %v3297, 0.01
  %v3412 = vmul.f32 %v3298, 0.01
  %v3413 = vmul.f32 %v3299, 0.01
  %v3414 = vmul.f32 %v3300, 0.01
  %v3415 = vmul.f32 %v3301, 0.01
  %v3416 = vmul.f32 %v3302, 0.01
  %v3417 = vmul.f32 %v3303, 0.01
  %v3418 = vmul.f32 %v3304, 0.01
  %v3419 = vmul.f32 %v3305, 0.01
  %v3420 = vmul.f32 %v3306, 0.01
  %v3421 = vmul.f32 %v3307, 0.01
  %v3422 = vmul.f32 %v3308, 0.01
  %v3423 = vsel %vm3309, %v3252, %v3366
  %v3424 = vsel %vm3310, %v3253, %v3367
  %v3425 = vsel %vm3311, %v3254, %v3368
  %v3426 = vsel %vm3312, %v3255, %v3369
  %v3427 = vsel %vm3313, %v3256, %v3370
  %v3428 = vsel %vm3314, %v3257, %v3371
  %v3429 = vsel %vm3315, %v3258, %v3372
  %v3430 = vsel %vm3316, %v3259, %v3373
  %v3431 = vsel %vm3317, %v3260, %v3374
  %v3432 = vsel %vm3318, %v3261, %v3375
  %v3433 = vsel %vm3319, %v3262, %v3376
  %v3434 = vsel %vm3320, %v3263, %v3377
  %v3435 = vsel %vm3321, %v3264, %v3378
  %v3436 = vsel %vm3322, %v3265, %v3379
  %v3437 = vsel %vm3323, %v3266, %v3380
  %v3438 = vsel %vm3324, %v3267, %v3381
  %v3439 = vsel %vm3325, %v3268, %v3382
  %v3440 = vsel %vm3326, %v3269, %v3383
  %v3441 = vsel %vm3327, %v3270, %v3384
  %v3442 = vsel %vm3328, %v3271, %v3385
  %v3443 = vsel %vm3329, %v3272, %v3386
  %v3444 = vsel %vm3330, %v3273, %v3387
  %v3445 = vsel %vm3331, %v3274, %v3388
  %v3446 = vsel %vm3332, %v3275, %v3389
  %v3447 = vsel %vm3333, %v3276, %v3390
  %v3448 = vsel %vm3334, %v3277, %v3391
  %v3449 = vsel %vm3335, %v3278, %v3392
  %v3450 = vsel %vm3336, %v3279, %v3393
  %v3451 = vsel %vm3337, %v3280, %v3394
  %v3452 = vsel %vm3338, %v3281, %v3395
  %v3453 = vsel %vm3339, %v3282, %v3396
  %v3454 = vsel %vm3340, %v3283, %v3397
  %v3455 = vsel %vm3341, %v3284, %v3398
  %v3456 = vsel %vm3342, %v3285, %v3399
  %v3457 = vsel %vm3343, %v3286, %v3400
  %v3458 = vsel %vm3344, %v3287, %v3401
  %v3459 = vsel %vm3345, %v3288, %v3402
  %v3460 = vsel %vm3346, %v3289, %v3403
  %v3461 = vsel %vm3347, %v3290, %v3404
  %v3462 = vsel %vm3348, %v3291, %v3405
  %v3463 = vsel %vm3349, %v3292, %v3406
  %v3464 = vsel %vm3350, %v3293, %v3407
  %v3465 = vsel %vm3351, %v3294, %v3408
  %v3466 = vsel %vm3352, %v3295, %v3409
  %v3467 = vsel %vm3353, %v3296, %v3410
  %v3468 = vsel %vm3354, %v3297, %v3411
  %v3469 = vsel %vm3355, %v3298, %v3412
  %v3470 = vsel %vm3356, %v3299, %v3413
  %v3471 = vsel %vm3357, %v3300, %v3414
  %v3472 = vsel %vm3358, %v3301, %v3415
  %v3473 = vsel %vm3359, %v3302, %v3416
  %v3474 = vsel %vm3360, %v3303, %v3417
  %v3475 = vsel %vm3361, %v3304, %v3418
  %v3476 = vsel %vm3362, %v3305, %v3419
  %v3477 = vsel %vm3363, %v3306, %v3420
  %v3478 = vsel %vm3364, %v3307, %v3421
  %v3479 = vsel %vm3365, %v3308, %v3422
  %3480 = vst [vmem:[%s5] sm:$0x3f] %v3423
  %3481 = vst [vmem:[%s5 + $0x8] sm:$0x3f] %v3424
  %3482 = vst [vmem:[%s5 + $0x10] sm:$0x3f] %v3425
  %3483 = vst [vmem:[%s5 + $0x18] sm:$0x3f] %v3426
  %3484 = vst [vmem:[%s5 + $0x20] sm:$0x3f] %v3427
  %3485 = vst [vmem:[%s5 + $0x28] sm:$0x3f] %v3428
  %3486 = vst [vmem:[%s5 + $0x30] sm:$0x3f] %v3429
  %3487 = vst [vmem:[%s5 + $0x38] sm:$0x3f] %v3430
  %3488 = vst [vmem:[%s5 + $0x40] sm:$0x3f] %v3431
  %3489 = vst [vmem:[%s5 + $0x48] sm:$0x3f] %v3432
  %3490 = vst [vmem:[%s5 + $0x50] sm:$0x3f] %v3433
  %3491 = vst [vmem:[%s5 + $0x58] sm:$0x3f] %v3434
  %3492 = vst [vmem:[%s5 + $0x60] sm:$0x3f] %v3435
  %3493 = vst [vmem:[%s5 + $0x68] sm:$0x3f] %v3436
  %3494 = vst [vmem:[%s5 + $0x70] sm:$0x3f] %v3437
  %3495 = vst [vmem:[%s5 + $0x78] sm:$0x3f] %v3438
  %3496 = vst [vmem:[%s5 + $0x80] sm:$0x3f] %v3439
  %3497 = vst [vmem:[%s5 + $0x88] sm:$0x3f] %v3440
  %3498 = vst [vmem:[%s5 + $0x90] sm:$0x3f] %v3441
  %3499 = vst [vmem:[%s5 + $0x98] sm:$0x3f] %v3442
  %3500 = vst [vmem:[%s5 + $0xa0] sm:$0x3f] %v3443
  %3501 = vst [vmem:[%s5 + $0xa8] sm:$0x3f] %v3444
  %3502 = vst [vmem:[%s5 + $0xb0] sm:$0x3f] %v3445
  %3503 = vst [vmem:[%s5 + $0xb8] sm:$0x3f] %v3446
  %3504 = vst [vmem:[%s5 + $0xc0] sm:$0x3f] %v3447
  %3505 = vst [vmem:[%s5 + $0xc8] sm:$0x3f] %v3448
  %3506 = vst [vmem:[%s5 + $0xd0] sm:$0x3f] %v3449
  %3507 = vst [vmem:[%s5 + $0xd8] sm:$0x3f] %v3450
  %3508 = vst [vmem:[%s5 + $0xe0] sm:$0x3f] %v3451
  %3509 = vst [vmem:[%s5 + $0xe8] sm:$0x3f] %v3452
  %3510 = vst [vmem:[%s5 + $0xf0] sm:$0x3f] %v3453
  %3511 = vst [vmem:[%s5 + $0xf8] sm:$0x3f] %v3454
  %3512 = vst [vmem:[%s5 + $0x100] sm:$0x3f] %v3455
  %3513 = vst [vmem:[%s5 + $0x108] sm:$0x3f] %v3456
  %3514 = vst [vmem:[%s5 + $0x110] sm:$0x3f] %v3457
  %3515 = vst [vmem:[%s5 + $0x118] sm:$0x3f] %v3458
  %3516 = vst [vmem:[%s5 + $0x120] sm:$0x3f] %v3459
  %3517 = vst [vmem:[%s5 + $0x128] sm:$0x3f] %v3460
  %3518 = vst [vmem:[%s5 + $0x130] sm:$0x3f] %v3461
  %3519 = vst [vmem:[%s5 + $0x138] sm:$0x3f] %v3462
  %3520 = vst [vmem:[%s5 + $0x140] sm:$0x3f] %v3463
  %3521 = vst [vmem:[%s5 + $0x148] sm:$0x3f] %v3464
  %3522 = vst [vmem:[%s5 + $0x150] sm:$0x3f] %v3465
  %3523 = vst [vmem:[%s5 + $0x158] sm:$0x3f] %v3466
  %3524 = vst [vmem:[%s5 + $0x160] sm:$0x3f] %v3467
  %3525 = vst [vmem:[%s5 + $0x168] sm:$0x3f] %v3468
  %3526 = vst [vmem:[%s5 + $0x170] sm:$0x3f] %v3469
  %3527 = vst [vmem:[%s5 + $0x178] sm:$0x3f] %v3470
  %3528 = vst [vmem:[%s5 + $0x180] sm:$0x3f] %v3471
  %3529 = vst [vmem:[%s5 + $0x188] sm:$0x3f] %v3472
  %3530 = vst [vmem:[%s5 + $0x190] sm:$0x3f] %v3473
  %3531 = vst [vmem:[%s5 + $0x198] sm:$0x3f] %v3474
  %3532 = vst [vmem:[%s5 + $0x1a0] sm:$0x3f] %v3475
  %3533 = vst [vmem:[%s5 + $0x1a8] sm:$0x3f] %v3476
  %3534 = vst [vmem:[%s5 + $0x1b0] sm:$0x3f] %v3477
  %3535 = vst [vmem:[%s5 + $0x1b8] sm:$0x3f] %v3478
  %3536 = vst.msk [vmem:[%s5 + $0x1c0] sm:$0x3f] %vm2943, %v3479
  // Predicated region
  $region22: #{net_forward.3} parent=0 // pred_check
    _
  $region23: #{net_forward.3} parent=0 // pred_check_branch
    %3538 = sbr.rel (0) target = $region25
  $region24: #{net_forward.3} parent=0 // pred_region
    _
  $region25: #{net_forward.3} parent=0 // pred_fallthru
    _
  // Predicated region
  $region26: #{net_forward.3} parent=0 // pred_check
    _
  $region27: #{net_forward.3} parent=0 // pred_check_branch
    %3540 = sbr.rel (0) target = $region29
  $region28: #{net_forward.3} parent=0 // pred_region
    _
  $region29: #{net_forward.3} parent=0 // pred_fallthru
    _

// kernel: net_forward.4
$region0: #{net_forward.4}
  #allocation0 [shape = 'u32[]', space=smem, size = 0x4, offset = 0x4, fixed_abs, tag = 'smem constant byte address 0x4 - core index']
  #allocation1 [shape = 'u32[144,128]{1,0:T(1,128)}', space=vmem, size = 0x12000, scoped, tag = 'internal scratch']
  %s0 = inlined_call_operand.vmem [shape: f32[16,150], index: 0, kind: input, shape index: {}]
  %s1 = inlined_call_operand.vmem [shape: f32[150,1352], index: 1, kind: input, shape index: {}]
  %s2 = inlined_call_operand.vmem [shape: f32[16,1], index: 2, kind: input, shape index: {}]
  %s3 = inlined_call_operand.vmem [shape: f32[16,1], index: 3, kind: input, shape index: {}]
  %s4 = inlined_call_operand.vmem [shape: f32[16,1], index: 4, kind: input, shape index: {}]
  %s5 = inlined_call_operand.vmem [shape: f32[16,1352], index: 5, kind: output, shape index: {}]
  %s6 = sld [smem:[#allocation0]]
  $region30: #{net_forward.4} parent=0
    _
  %s8 = ssub.s32 1, %s6
  %s9 = scalar_select 0, %s8, %s6
  // Predicated region
  $region2: #{net_forward.4} parent=0 // pred_check
    _
  $region3: #{net_forward.4} parent=0 // pred_check_branch
    %11 = sbr.rel (0) target = $region5
  $region4: #{net_forward.4} parent=0 // pred_region
    _
  $region5: #{net_forward.4} parent=0 // pred_fallthru
    _
  // Predicated region
  $region6: #{net_forward.4} parent=0 // pred_check
    _
  $region7: #{net_forward.4} parent=0 // pred_check_branch
    %13 = sbr.rel (0) target = $region9
  $region8: #{net_forward.4} parent=0 // pred_region
    _
  $region9: #{net_forward.4} parent=0 // pred_fallthru
    _
  // Predicated region
  $region10: #{net_forward.4} parent=0 // pred_check
    _
  $region11: #{net_forward.4} parent=0 // pred_check_branch
    %15 = sbr.rel (0) target = $region13
  $region12: #{net_forward.4} parent=0 // pred_region
    _
  $region13: #{net_forward.4} parent=0 // pred_fallthru
    _
  // Predicated region
  $region14: #{net_forward.4} parent=0 // pred_check
    _
  $region15: #{net_forward.4} parent=0 // pred_check_branch
    %17 = sbr.rel (0) target = $region17
  $region16: #{net_forward.4} parent=0 // pred_region
    _
  $region17: #{net_forward.4} parent=0 // pred_fallthru
    _
  // Predicated region
  $region18: #{net_forward.4} parent=0 // pred_check
    _
  $region19: #{net_forward.4} parent=0 // pred_check_branch
    %19 = sbr.rel (0) target = $region21
  $region20: #{net_forward.4} parent=0 // pred_region
    _
  $region21: #{net_forward.4} parent=0 // pred_fallthru
    _
  %v20 = vld [vmem:[%s0] sm:$0xff]
  %v21 = vld [vmem:[%s0 + $0x8] sm:$0xff]
  %v22 = vld [vmem:[%s0 + $0x10] sm:$0xff]
  %v23 = vld [vmem:[%s0 + $0x18] sm:$0xff]
  %v24 = vld [vmem:[%s1] sm:$0xff]
  %v25 = vld [vmem:[%s1 + $0x8] sm:$0xff]
  %v26 = vld [vmem:[%s1 + $0x10] sm:$0xff]
  %v27 = vld [vmem:[%s1 + $0x18] sm:$0xff]
  %v28 = vld [vmem:[%s1 + $0x20] sm:$0xff]
  %v29 = vld [vmem:[%s1 + $0x28] sm:$0xff]
  %v30 = vld [vmem:[%s1 + $0x30] sm:$0xff]
  %v31 = vld [vmem:[%s1 + $0x38] sm:$0xff]
  %v32 = vld [vmem:[%s1 + $0x40] sm:$0xff]
  %v33 = vld [vmem:[%s1 + $0x48] sm:$0xff]
  %v34 = vld [vmem:[%s1 + $0x50] sm:$0xff]
  %v35 = vld [vmem:[%s1 + $0x58] sm:$0xff]
  %v36 = vld [vmem:[%s1 + $0x60] sm:$0xff]
  %v37 = vld [vmem:[%s1 + $0x68] sm:$0xff]
  %v38 = vld [vmem:[%s1 + $0x70] sm:$0xff]
  %v39 = vld [vmem:[%s1 + $0x78] sm:$0xff]
  %v40 = vld [vmem:[%s1 + $0x80] sm:$0xff]
  %v41 = vld [vmem:[%s1 + $0x88] sm:$0xff]
  %v42 = vld [vmem:[%s1 + $0x90] sm:$0xff]
  %v43 = vld [vmem:[%s1 + $0x98] sm:$0xff]
  %v44 = vld [vmem:[%s1 + $0xa0] sm:$0xff]
  %v45 = vld [vmem:[%s1 + $0xa8] sm:$0xff]
  %v46 = vld [vmem:[%s1 + $0xb0] sm:$0xff]
  %v47 = vld [vmem:[%s1 + $0xb8] sm:$0xff]
  %v48 = vld [vmem:[%s1 + $0xc0] sm:$0xff]
  %v49 = vld [vmem:[%s1 + $0xc8] sm:$0xff]
  %v50 = vld [vmem:[%s1 + $0xd0] sm:$0xff]
  %v51 = vld [vmem:[%s1 + $0xd8] sm:$0xff]
  %v52 = vld [vmem:[%s1 + $0xe0] sm:$0xff]
  %v53 = vld [vmem:[%s1 + $0xe8] sm:$0xff]
  %v54 = vld [vmem:[%s1 + $0xf0] sm:$0xff]
  %v55 = vld [vmem:[%s1 + $0xf8] sm:$0xff]
  %v56 = vld [vmem:[%s1 + $0x100] sm:$0xff]
  %v57 = vld [vmem:[%s1 + $0x108] sm:$0xff]
  %v58 = vld [vmem:[%s1 + $0x110] sm:$0xff]
  %v59 = vld [vmem:[%s1 + $0x118] sm:$0xff]
  %v60 = vld [vmem:[%s1 + $0x120] sm:$0xff]
  %v61 = vld [vmem:[%s1 + $0x128] sm:$0xff]
  %v62 = vld [vmem:[%s1 + $0x130] sm:$0xff]
  %v63 = vld [vmem:[%s1 + $0x138] sm:$0xff]
  %v64 = vld [vmem:[%s1 + $0x140] sm:$0xff]
  %v65 = vld [vmem:[%s1 + $0x148] sm:$0xff]
  %v66 = vld [vmem:[%s1 + $0x150] sm:$0xff]
  %v67 = vld [vmem:[%s1 + $0x158] sm:$0xff]
  %v68 = vld [vmem:[%s1 + $0x160] sm:$0xff]
  %v69 = vld [vmem:[%s1 + $0x168] sm:$0xff]
  %v70 = vld [vmem:[%s1 + $0x170] sm:$0xff]
  %v71 = vld [vmem:[%s1 + $0x178] sm:$0xff]
  %v72 = vld [vmem:[%s1 + $0x180] sm:$0xff]
  %v73 = vld [vmem:[%s1 + $0x188] sm:$0xff]
  %v74 = vld [vmem:[%s1 + $0x190] sm:$0xff]
  %v75 = vld [vmem:[%s1 + $0x198] sm:$0xff]
  %v76 = vld [vmem:[%s1 + $0x1a0] sm:$0xff]
  %v77 = vld [vmem:[%s1 + $0x1a8] sm:$0xff]
  %v78 = vld [vmem:[%s1 + $0x1b0] sm:$0xff]
  %v79 = vld [vmem:[%s1 + $0x1b8] sm:$0xff]
  %v80 = vld [vmem:[%s1 + $0x1c0] sm:$0xff]
  %v81 = vld [vmem:[%s1 + $0x1c8] sm:$0xff]
  %v82 = vld [vmem:[%s1 + $0x1d0] sm:$0xff]
  %v83 = vld [vmem:[%s1 + $0x1d8] sm:$0xff]
  %v84 = vld [vmem:[%s1 + $0x1e0] sm:$0xff]
  %v85 = vld [vmem:[%s1 + $0x1e8] sm:$0xff]
  %v86 = vld [vmem:[%s1 + $0x1f0] sm:$0xff]
  %v87 = vld [vmem:[%s1 + $0x1f8] sm:$0xff]
  %v88 = vld [vmem:[%s1 + $0x200] sm:$0xff]
  %v89 = vld [vmem:[%s1 + $0x208] sm:$0xff]
  %v90 = vld [vmem:[%s1 + $0x210] sm:$0xff]
  %v91 = vld [vmem:[%s1 + $0x218] sm:$0xff]
  %v92 = vld [vmem:[%s1 + $0x220] sm:$0xff]
  %v93 = vld [vmem:[%s1 + $0x228] sm:$0xff]
  %v94 = vld [vmem:[%s1 + $0x230] sm:$0xff]
  %v95 = vld [vmem:[%s1 + $0x238] sm:$0xff]
  %v96 = vld [vmem:[%s1 + $0x240] sm:$0xff]
  %v97 = vld [vmem:[%s1 + $0x248] sm:$0xff]
  %v98 = vld [vmem:[%s1 + $0x250] sm:$0xff]
  %v99 = vld [vmem:[%s1 + $0x258] sm:$0xff]
  %v100 = vld [vmem:[%s1 + $0x260] sm:$0xff]
  %v101 = vld [vmem:[%s1 + $0x268] sm:$0xff]
  %v102 = vld [vmem:[%s1 + $0x270] sm:$0xff]
  %v103 = vld [vmem:[%s1 + $0x278] sm:$0xff]
  %v104 = vld [vmem:[%s1 + $0x280] sm:$0xff]
  %v105 = vld [vmem:[%s1 + $0x288] sm:$0xff]
  %v106 = vld [vmem:[%s1 + $0x290] sm:$0xff]
  %v107 = vld [vmem:[%s1 + $0x298] sm:$0xff]
  %v108 = vld [vmem:[%s1 + $0x2a0] sm:$0xff]
  %v109 = vld [vmem:[%s1 + $0x2a8] sm:$0xff]
  %v110 = vld [vmem:[%s1 + $0x2b0] sm:$0xff]
  %v111 = vld [vmem:[%s1 + $0x2b8] sm:$0xff]
  %v112 = vld [vmem:[%s1 + $0x2c0] sm:$0xff]
  %v113 = vld [vmem:[%s1 + $0x2c8] sm:$0xff]
  %v114 = vld [vmem:[%s1 + $0x2d0] sm:$0xff]
  %v115 = vld [vmem:[%s1 + $0x2d8] sm:$0xff]
  %v116 = vld [vmem:[%s1 + $0x2e0] sm:$0xff]
  %v117 = vld [vmem:[%s1 + $0x2e8] sm:$0xff]
  %v118 = vld [vmem:[%s1 + $0x2f0] sm:$0xff]
  %v119 = vld [vmem:[%s1 + $0x2f8] sm:$0xff]
  %v120 = vld [vmem:[%s1 + $0x300] sm:$0xff]
  %v121 = vld [vmem:[%s1 + $0x308] sm:$0xff]
  %v122 = vld [vmem:[%s1 + $0x310] sm:$0xff]
  %v123 = vld [vmem:[%s1 + $0x318] sm:$0xff]
  %v124 = vld [vmem:[%s1 + $0x320] sm:$0xff]
  %v125 = vld [vmem:[%s1 + $0x328] sm:$0xff]
  %v126 = vld [vmem:[%s1 + $0x330] sm:$0xff]
  %v127 = vld [vmem:[%s1 + $0x338] sm:$0xff]
  %v128 = vld [vmem:[%s1 + $0x340] sm:$0xff]
  %v129 = vld [vmem:[%s1 + $0x348] sm:$0xff]
  %v130 = vld [vmem:[%s1 + $0x350] sm:$0xff]
  %v131 = vld [vmem:[%s1 + $0x358] sm:$0xff]
  %v132 = vld [vmem:[%s1 + $0x360] sm:$0xff]
  %v133 = vld [vmem:[%s1 + $0x368] sm:$0xff]
  %v134 = vld [vmem:[%s1 + $0x370] sm:$0xff]
  %v135 = vld [vmem:[%s1 + $0x378] sm:$0xff]
  %v136 = vld [vmem:[%s1 + $0x380] sm:$0xff]
  %v137 = vld [vmem:[%s1 + $0x388] sm:$0xff]
  %v138 = vld [vmem:[%s1 + $0x390] sm:$0xff]
  %v139 = vld [vmem:[%s1 + $0x398] sm:$0xff]
  %v140 = vld [vmem:[%s1 + $0x3a0] sm:$0xff]
  %v141 = vld [vmem:[%s1 + $0x3a8] sm:$0xff]
  %v142 = vld [vmem:[%s1 + $0x3b0] sm:$0xff]
  %v143 = vld [vmem:[%s1 + $0x3b8] sm:$0xff]
  %v144 = vld [vmem:[%s1 + $0x3c0] sm:$0xff]
  %v145 = vld [vmem:[%s1 + $0x3c8] sm:$0xff]
  %v146 = vld [vmem:[%s1 + $0x3d0] sm:$0xff]
  %v147 = vld [vmem:[%s1 + $0x3d8] sm:$0xff]
  %v148 = vld [vmem:[%s1 + $0x3e0] sm:$0xff]
  %v149 = vld [vmem:[%s1 + $0x3e8] sm:$0xff]
  %v150 = vld [vmem:[%s1 + $0x3f0] sm:$0xff]
  %v151 = vld [vmem:[%s1 + $0x3f8] sm:$0xff]
  %v152 = vld [vmem:[%s1 + $0x400] sm:$0xff]
  %v153 = vld [vmem:[%s1 + $0x408] sm:$0xff]
  %v154 = vld [vmem:[%s1 + $0x410] sm:$0xff]
  %v155 = vld [vmem:[%s1 + $0x418] sm:$0xff]
  %v156 = vld [vmem:[%s1 + $0x420] sm:$0xff]
  %v157 = vld [vmem:[%s1 + $0x428] sm:$0xff]
  %v158 = vld [vmem:[%s1 + $0x430] sm:$0xff]
  %v159 = vld [vmem:[%s1 + $0x438] sm:$0xff]
  %v160 = vld [vmem:[%s1 + $0x440] sm:$0xff]
  %v161 = vld [vmem:[%s1 + $0x448] sm:$0xff]
  %v162 = vld [vmem:[%s1 + $0x450] sm:$0xff]
  %v163 = vld [vmem:[%s1 + $0x458] sm:$0xff]
  %v164 = vld [vmem:[%s1 + $0x460] sm:$0xff]
  %v165 = vld [vmem:[%s1 + $0x468] sm:$0xff]
  %v166 = vld [vmem:[%s1 + $0x470] sm:$0xff]
  %v167 = vld [vmem:[%s1 + $0x478] sm:$0xff]
  %v168 = vld [vmem:[%s1 + $0x480] sm:$0xff]
  %v169 = vld [vmem:[%s1 + $0x488] sm:$0xff]
  %v170 = vld [vmem:[%s1 + $0x490] sm:$0xff]
  %v171 = vld [vmem:[%s1 + $0x498] sm:$0xff]
  %v172 = vld [vmem:[%s1 + $0x4a0] sm:$0xff]
  %v173 = vld [vmem:[%s1 + $0x4a8] sm:$0xff]
  %v174 = vld [vmem:[%s1 + $0x4b0] sm:$0xff]
  %v175 = vld [vmem:[%s1 + $0x4b8] sm:$0xff]
  %v176 = vld [vmem:[%s1 + $0x4c0] sm:$0xff]
  %v177 = vld [vmem:[%s1 + $0x4c8] sm:$0xff]
  %v178 = vld [vmem:[%s1 + $0x4d0] sm:$0xff]
  %v179 = vld [vmem:[%s1 + $0x4d8] sm:$0xff]
  %v180 = vld [vmem:[%s1 + $0x4e0] sm:$0xff]
  %v181 = vld [vmem:[%s1 + $0x4e8] sm:$0xff]
  %v182 = vld [vmem:[%s1 + $0x4f0] sm:$0xff]
  %v183 = vld [vmem:[%s1 + $0x4f8] sm:$0xff]
  %v184 = vld [vmem:[%s1 + $0x500] sm:$0xff]
  %v185 = vld [vmem:[%s1 + $0x508] sm:$0xff]
  %v186 = vld [vmem:[%s1 + $0x510] sm:$0xff]
  %v187 = vld [vmem:[%s1 + $0x518] sm:$0xff]
  %v188 = vld [vmem:[%s1 + $0x520] sm:$0xff]
  %v189 = vld [vmem:[%s1 + $0x528] sm:$0xff]
  %v190 = vld [vmem:[%s1 + $0x530] sm:$0xff]
  %v191 = vld [vmem:[%s1 + $0x538] sm:$0xff]
  %v192 = vld [vmem:[%s1 + $0x540] sm:$0xff]
  %v193 = vld [vmem:[%s1 + $0x548] sm:$0xff]
  %v194 = vld [vmem:[%s1 + $0x550] sm:$0xff]
  %v195 = vld [vmem:[%s1 + $0x558] sm:$0xff]
  %v196 = vld [vmem:[%s1 + $0x560] sm:$0xff]
  %v197 = vld [vmem:[%s1 + $0x568] sm:$0xff]
  %v198 = vld [vmem:[%s1 + $0x570] sm:$0xff]
  %v199 = vld [vmem:[%s1 + $0x578] sm:$0xff]
  %v200 = vld [vmem:[%s1 + $0x580] sm:$0xff]
  %v201 = vld [vmem:[%s1 + $0x588] sm:$0xff]
  %v202 = vld [vmem:[%s1 + $0x590] sm:$0xff]
  %v203 = vld [vmem:[%s1 + $0x598] sm:$0xff]
  %v204 = vld [vmem:[%s1 + $0x5a0] sm:$0xff]
  %v205 = vld [vmem:[%s1 + $0x5a8] sm:$0xff]
  %v206 = vld [vmem:[%s1 + $0x5b0] sm:$0xff]
  %v207 = vld [vmem:[%s1 + $0x5b8] sm:$0xff]
  %v208 = vld [vmem:[%s1 + $0x5c0] sm:$0xff]
  %v209 = vld [vmem:[%s1 + $0x5c8] sm:$0xff]
  %v210 = vld [vmem:[%s1 + $0x5d0] sm:$0xff]
  %v211 = vld [vmem:[%s1 + $0x5d8] sm:$0xff]
  %v212 = vld [vmem:[%s1 + $0x5e0] sm:$0xff]
  %v213 = vld [vmem:[%s1 + $0x5e8] sm:$0xff]
  %v214 = vld [vmem:[%s1 + $0x5f0] sm:$0xff]
  %v215 = vld [vmem:[%s1 + $0x5f8] sm:$0xff]
  %v216 = vld [vmem:[%s1 + $0x600] sm:$0xff]
  %v217 = vld [vmem:[%s1 + $0x608] sm:$0xff]
  %v218 = vld [vmem:[%s1 + $0x610] sm:$0xff]
  %v219 = vld [vmem:[%s1 + $0x618] sm:$0xff]
  %v220 = vld [vmem:[%s1 + $0x620] sm:$0xff]
  %v221 = vld [vmem:[%s1 + $0x628] sm:$0xff]
  %v222 = vld [vmem:[%s1 + $0x630] sm:$0x3f]
  %v223 = vld [vmem:[%s1 + $0x638] sm:$0x3f]
  %v224 = vld [vmem:[%s1 + $0x640] sm:$0x3f]
  %v225 = vld [vmem:[%s1 + $0x648] sm:$0x3f]
  %v226 = vld [vmem:[%s1 + $0x650] sm:$0x3f]
  %v227 = vld [vmem:[%s1 + $0x658] sm:$0x3f]
  %v228 = vld [vmem:[%s1 + $0x660] sm:$0x3f]
  %v229 = vld [vmem:[%s1 + $0x668] sm:$0x3f]
  %v230 = vld [vmem:[%s1 + $0x670] sm:$0x3f]
  %v231 = vld [vmem:[%s1 + $0x678] sm:$0x3f]
  %v232 = vld [vmem:[%s1 + $0x680] sm:$0x3f]
  %v233 = vld [vmem:[%s2] sm:$0xff]
  %v234 = vld [vmem:[%s2 + $0x8] sm:$0xff]
  %236 = vset.pattern.permute.xlu0 0
  %237 = vperm.xlu0 %236, %v233
  %v238 = vpop.permute.xlu0 %237
  %241 = vset.pattern.permute.xlu0 0
  %242 = vperm.xlu0 %241, %v234
  %v243 = vpop.permute.xlu0 %242
  %vm245 = vcmask 179200
  %v247 = vsel %vm245, %v21, 0
  %v250 = vsel %vm245, %v23, 0
  %vm252 = vcmask 1045504
  %v254 = vsel %vm252, %v222, 0
  %v257 = vsel %vm252, %v223, 0
  %v260 = vsel %vm252, %v224, 0
  %v263 = vsel %vm252, %v225, 0
  %v266 = vsel %vm252, %v226, 0
  %v269 = vsel %vm252, %v227, 0
  %v272 = vsel %vm252, %v228, 0
  %v275 = vsel %vm252, %v229, 0
  %v278 = vsel %vm252, %v230, 0
  %v281 = vsel %vm252, %v231, 0
  %v284 = vsel %vm252, %v232, 0
  %286 = vmatprep.subr.mxu0 %v190
  %287 = vmatpush1.msra.mxu0 %v189
  %288 = vmatprep.subr.mxu0 %v179
  %289 = vmatpush1.msra.mxu0 %v178
  %290 = vmatprep.subr.mxu0 %v168
  %291 = vmatpush1.msra.mxu0 %v167
  %292 = vmatprep.subr.mxu0 %v157
  %293 = vmatpush1.msra.mxu0 %v156
  %294 = vmatprep.subr.mxu0 %v146
  %295 = vmatpush1.msra.mxu0 %v145
  %296 = vmatprep.subr.mxu0 %v135
  %297 = vmatpush1.msra.mxu0 %v134
  %298 = vmatprep.subr.mxu0 %v124
  %299 = vmatpush1.msra.mxu0 %v123
  %300 = vmatprep.subr.mxu0 %v113
  %301 = vmatpush1.msra.mxu0 %v112
  %302 = vmatprep.subr.mxu0 %v102
  %303 = vmatpush1.msra.mxu0 %v101
  %304 = vmatprep.subr.mxu0 %v91
  %305 = vmatpush1.msra.mxu0 %v90
  %306 = vmatprep.subr.mxu0 %v80
  %307 = vmatpush1.msra.mxu0 %v79
  %308 = vmatprep.subr.mxu0 %v69
  %309 = vmatpush1.msra.mxu0 %v68
  %310 = vmatprep.subr.mxu0 %v58
  %311 = vmatpush1.msra.mxu0 %v57
  %312 = vmatprep.subr.mxu0 %v47
  %313 = vmatpush1.msra.mxu0 %v46
  %314 = vmatprep.subr.mxu0 %v36
  %315 = vmatpush1.msra.mxu0 %v35
  %316 = vmatprep.subr.mxu0 %v25
  %317 = vmatpush1.msra.mxu0 %v24
  %318 = vmatprep.subr.mxu0 0.0
  %319 = vmatpush2.msra.mxu0 0.0
  %320 = vmatprep.subr.mxu0 0.0
  %321 = vmatpush2.msra.mxu0 0.0
  %322 = vmatprep.subr.mxu0 0.0
  %323 = vmatpush2.msra.mxu0 0.0
  %324 = vmatprep.subr.mxu0 0.0
  %325 = vmatpush2.msra.mxu0 0.0
  %326 = vmatprep.subr.mxu0 0.0
  %327 = vmatpush2.msra.mxu0 0.0
  %328 = vmatprep.subr.mxu0 0.0
  %329 = vmatpush2.msra.mxu0 0.0
  %330 = vmatprep.subr.mxu0 0.0
  %331 = vmatpush2.msra.mxu0 0.0
  %332 = vmatprep.subr.mxu0 0.0
  %333 = vmatpush2.msra.mxu0 0.0
  %334 = vmatprep.subr.mxu0 0.0
  %335 = vmatpush2.msra.mxu0 0.0
  %336 = vmatprep.subr.mxu0 0.0
  %337 = vmatpush2.msra.mxu0 0.0
  %338 = vmatprep.subr.mxu0 0.0
  %339 = vmatpush2.msra.mxu0 0.0
  %340 = vmatprep.subr.mxu0 0.0
  %341 = vmatpush2.msra.mxu0 0.0
  %342 = vmatprep.subr.mxu0 0.0
  %343 = vmatpush2.msra.mxu0 0.0
  %344 = vmatprep.subr.mxu0 %v257
  %345 = vmatpush2.msra.mxu0 %v254
  %346 = vmatprep.subr.mxu0 %v212
  %347 = vmatpush2.msra.mxu0 %v211
  %348 = vmatprep.subr.mxu0 %v201
  %349 = vmatpush2.msra.mxu0 %v200
  %350 = vmatprep.mubr.f32.mxu0 %v247
  %351 = vmatmul.mubr.f32.gmra.mxu0 %v20
  %v352 = vpop.f32.mrf.mxu0
  %v353 = vadd.f32 %v238, %v352
  %v354 = vpop.f32.mrf.mxu0
  %v355 = vadd.f32 %v238, %v354
  %356 = vmatprep.mubr.f32.mxu0 %v250
  %357 = vmatmul.mubr.f32.gmra.mxu0 %v22
  %v358 = vpop.f32.mrf.mxu0
  %v359 = vadd.f32 %v243, %v358
  %v360 = vpop.f32.mrf.mxu0
  %v361 = vadd.f32 %v243, %v360
  %362 = vdwg.mxu0
  %363 = vmatprep.subr.mxu0 %v192
  %364 = vmatpush1.msra.mxu0 %v191
  %365 = vmatprep.subr.mxu0 %v181
  %366 = vmatpush1.msra.mxu0 %v180
  %367 = vmatprep.subr.mxu0 %v170
  %368 = vmatpush1.msra.mxu0 %v169
  %369 = vmatprep.subr.mxu0 %v159
  %370 = vmatpush1.msra.mxu0 %v158
  %371 = vmatprep.subr.mxu0 %v148
  %372 = vmatpush1.msra.mxu0 %v147
  %373 = vmatprep.subr.mxu0 %v137
  %374 = vmatpush1.msra.mxu0 %v136
  %375 = vmatprep.subr.mxu0 %v126
  %376 = vmatpush1.msra.mxu0 %v125
  %377 = vmatprep.subr.mxu0 %v115
  %378 = vmatpush1.msra.mxu0 %v114
  %379 = vmatprep.subr.mxu0 %v104
  %380 = vmatpush1.msra.mxu0 %v103
  %381 = vmatprep.subr.mxu0 %v93
  %382 = vmatpush1.msra.mxu0 %v92
  %383 = vmatprep.subr.mxu0 %v82
  %384 = vmatpush1.msra.mxu0 %v81
  %385 = vmatprep.subr.mxu0 %v71
  %386 = vmatpush1.msra.mxu0 %v70
  %387 = vmatprep.subr.mxu0 %v60
  %388 = vmatpush1.msra.mxu0 %v59
  %389 = vmatprep.subr.mxu0 %v49
  %390 = vmatpush1.msra.mxu0 %v48
  %391 = vmatprep.subr.mxu0 %v38
  %392 = vmatpush1.msra.mxu0 %v37
  %393 = vmatprep.subr.mxu0 %v27
  %394 = vmatpush1.msra.mxu0 %v26
  %395 = vmatprep.subr.mxu0 0.0
  %396 = vmatpush2.msra.mxu0 0.0
  %397 = vmatprep.subr.mxu0 0.0
  %398 = vmatpush2.msra.mxu0 0.0
  %399 = vmatprep.subr.mxu0 0.0
  %400 = vmatpush2.msra.mxu0 0.0
  %401 = vmatprep.subr.mxu0 0.0
  %402 = vmatpush2.msra.mxu0 0.0
  %403 = vmatprep.subr.mxu0 0.0
  %404 = vmatpush2.msra.mxu0 0.0
  %405 = vmatprep.subr.mxu0 0.0
  %406 = vmatpush2.msra.mxu0 0.0
  %407 = vmatprep.subr.mxu0 0.0
  %408 = vmatpush2.msra.mxu0 0.0
  %409 = vmatprep.subr.mxu0 0.0
  %410 = vmatpush2.msra.mxu0 0.0
  %411 = vmatprep.subr.mxu0 0.0
  %412 = vmatpush2.msra.mxu0 0.0
  %413 = vmatprep.subr.mxu0 0.0
  %414 = vmatpush2.msra.mxu0 0.0
  %415 = vmatprep.subr.mxu0 0.0
  %416 = vmatpush2.msra.mxu0 0.0
  %417 = vmatprep.subr.mxu0 0.0
  %418 = vmatpush2.msra.mxu0 0.0
  %419 = vmatprep.subr.mxu0 0.0
  %420 = vmatpush2.msra.mxu0 0.0
  %421 = vmatprep.subr.mxu0 %v263
  %422 = vmatpush2.msra.mxu0 %v260
  %423 = vmatprep.subr.mxu0 %v214
  %424 = vmatpush2.msra.mxu0 %v213
  %425 = vmatprep.subr.mxu0 %v203
  %426 = vmatpush2.msra.mxu0 %v202
  %427 = vmatprep.mubr.f32.mxu0 %v247
  %428 = vmatmul.mubr.f32.gmra.mxu0 %v20
  %v429 = vpop.f32.mrf.mxu0
  %v430 = vadd.f32 %v238, %v429
  %v431 = vpop.f32.mrf.mxu0
  %v432 = vadd.f32 %v238, %v431
  %433 = vmatprep.mubr.f32.mxu0 %v250
  %434 = vmatmul.mubr.f32.gmra.mxu0 %v22
  %v435 = vpop.f32.mrf.mxu0
  %v436 = vadd.f32 %v243, %v435
  %v437 = vpop.f32.mrf.mxu0
  %v438 = vadd.f32 %v243, %v437
  %439 = vdwg.mxu0
  %440 = vmatprep.subr.mxu0 %v194
  %441 = vmatpush1.msra.mxu0 %v193
  %442 = vmatprep.subr.mxu0 %v183
  %443 = vmatpush1.msra.mxu0 %v182
  %444 = vmatprep.subr.mxu0 %v172
  %445 = vmatpush1.msra.mxu0 %v171
  %446 = vmatprep.subr.mxu0 %v161
  %447 = vmatpush1.msra.mxu0 %v160
  %448 = vmatprep.subr.mxu0 %v150
  %449 = vmatpush1.msra.mxu0 %v149
  %450 = vmatprep.subr.mxu0 %v139
  %451 = vmatpush1.msra.mxu0 %v138
  %452 = vmatprep.subr.mxu0 %v128
  %453 = vmatpush1.msra.mxu0 %v127
  %454 = vmatprep.subr.mxu0 %v117
  %455 = vmatpush1.msra.mxu0 %v116
  %456 = vmatprep.subr.mxu0 %v106
  %457 = vmatpush1.msra.mxu0 %v105
  %458 = vmatprep.subr.mxu0 %v95
  %459 = vmatpush1.msra.mxu0 %v94
  %460 = vmatprep.subr.mxu0 %v84
  %461 = vmatpush1.msra.mxu0 %v83
  %462 = vmatprep.subr.mxu0 %v73
  %463 = vmatpush1.msra.mxu0 %v72
  %464 = vmatprep.subr.mxu0 %v62
  %465 = vmatpush1.msra.mxu0 %v61
  %466 = vmatprep.subr.mxu0 %v51
  %467 = vmatpush1.msra.mxu0 %v50
  %468 = vmatprep.subr.mxu0 %v40
  %469 = vmatpush1.msra.mxu0 %v39
  %470 = vmatprep.subr.mxu0 %v29
  %471 = vmatpush1.msra.mxu0 %v28
  %472 = vmatprep.subr.mxu0 0.0
  %473 = vmatpush2.msra.mxu0 0.0
  %474 = vmatprep.subr.mxu0 0.0
  %475 = vmatpush2.msra.mxu0 0.0
  %476 = vmatprep.subr.mxu0 0.0
  %477 = vmatpush2.msra.mxu0 0.0
  %478 = vmatprep.subr.mxu0 0.0
  %479 = vmatpush2.msra.mxu0 0.0
  %480 = vmatprep.subr.mxu0 0.0
  %481 = vmatpush2.msra.mxu0 0.0
  %482 = vmatprep.subr.mxu0 0.0
  %483 = vmatpush2.msra.mxu0 0.0
  %484 = vmatprep.subr.mxu0 0.0
  %485 = vmatpush2.msra.mxu0 0.0
  %486 = vmatprep.subr.mxu0 0.0
  %487 = vmatpush2.msra.mxu0 0.0
  %488 = vmatprep.subr.mxu0 0.0
  %489 = vmatpush2.msra.mxu0 0.0
  %490 = vmatprep.subr.mxu0 0.0
  %491 = vmatpush2.msra.mxu0 0.0
  %492 = vmatprep.subr.mxu0 0.0
  %493 = vmatpush2.msra.mxu0 0.0
  %494 = vmatprep.subr.mxu0 0.0
  %495 = vmatpush2.msra.mxu0 0.0
  %496 = vmatprep.subr.mxu0 0.0
  %497 = vmatpush2.msra.mxu0 0.0
  %498 = vmatprep.subr.mxu0 %v269
  %499 = vmatpush2.msra.mxu0 %v266
  %500 = vmatprep.subr.mxu0 %v216
  %501 = vmatpush2.msra.mxu0 %v215
  %502 = vmatprep.subr.mxu0 %v205
  %503 = vmatpush2.msra.mxu0 %v204
  %504 = vmatprep.mubr.f32.mxu0 %v247
  %505 = vmatmul.mubr.f32.gmra.mxu0 %v20
  %v506 = vpop.f32.mrf.mxu0
  %v507 = vadd.f32 %v238, %v506
  %v508 = vpop.f32.mrf.mxu0
  %v509 = vadd.f32 %v238, %v508
  %510 = vmatprep.mubr.f32.mxu0 %v250
  %511 = vmatmul.mubr.f32.gmra.mxu0 %v22
  %v512 = vpop.f32.mrf.mxu0
  %v513 = vadd.f32 %v243, %v512
  %v514 = vpop.f32.mrf.mxu0
  %v515 = vadd.f32 %v243, %v514
  %516 = vdwg.mxu0
  %517 = vmatprep.subr.mxu0 %v196
  %518 = vmatpush1.msra.mxu0 %v195
  %519 = vmatprep.subr.mxu0 %v185
  %520 = vmatpush1.msra.mxu0 %v184
  %521 = vmatprep.subr.mxu0 %v174
  %522 = vmatpush1.msra.mxu0 %v173
  %523 = vmatprep.subr.mxu0 %v163
  %524 = vmatpush1.msra.mxu0 %v162
  %525 = vmatprep.subr.mxu0 %v152
  %526 = vmatpush1.msra.mxu0 %v151
  %527 = vmatprep.subr.mxu0 %v141
  %528 = vmatpush1.msra.mxu0 %v140
  %529 = vmatprep.subr.mxu0 %v130
  %530 = vmatpush1.msra.mxu0 %v129
  %531 = vmatprep.subr.mxu0 %v119
  %532 = vmatpush1.msra.mxu0 %v118
  %533 = vmatprep.subr.mxu0 %v108
  %534 = vmatpush1.msra.mxu0 %v107
  %535 = vmatprep.subr.mxu0 %v97
  %536 = vmatpush1.msra.mxu0 %v96
  %537 = vmatprep.subr.mxu0 %v86
  %538 = vmatpush1.msra.mxu0 %v85
  %539 = vmatprep.subr.mxu0 %v75
  %540 = vmatpush1.msra.mxu0 %v74
  %541 = vmatprep.subr.mxu0 %v64
  %542 = vmatpush1.msra.mxu0 %v63
  %543 = vmatprep.subr.mxu0 %v53
  %544 = vmatpush1.msra.mxu0 %v52
  %545 = vmatprep.subr.mxu0 %v42
  %546 = vmatpush1.msra.mxu0 %v41
  %547 = vmatprep.subr.mxu0 %v31
  %548 = vmatpush1.msra.mxu0 %v30
  %549 = vmatprep.subr.mxu0 0.0
  %550 = vmatpush2.msra.mxu0 0.0
  %551 = vmatprep.subr.mxu0 0.0
  %552 = vmatpush2.msra.mxu0 0.0
  %553 = vmatprep.subr.mxu0 0.0
  %554 = vmatpush2.msra.mxu0 0.0
  %555 = vmatprep.subr.mxu0 0.0
  %556 = vmatpush2.msra.mxu0 0.0
  %557 = vmatprep.subr.mxu0 0.0
  %558 = vmatpush2.msra.mxu0 0.0
  %559 = vmatprep.subr.mxu0 0.0
  %560 = vmatpush2.msra.mxu0 0.0
  %561 = vmatprep.subr.mxu0 0.0
  %562 = vmatpush2.msra.mxu0 0.0
  %563 = vmatprep.subr.mxu0 0.0
  %564 = vmatpush2.msra.mxu0 0.0
  %565 = vmatprep.subr.mxu0 0.0
  %566 = vmatpush2.msra.mxu0 0.0
  %567 = vmatprep.subr.mxu0 0.0
  %568 = vmatpush2.msra.mxu0 0.0
  %569 = vmatprep.subr.mxu0 0.0
  %570 = vmatpush2.msra.mxu0 0.0
  %571 = vmatprep.subr.mxu0 0.0
  %572 = vmatpush2.msra.mxu0 0.0
  %573 = vmatprep.subr.mxu0 0.0
  %574 = vmatpush2.msra.mxu0 0.0
  %575 = vmatprep.subr.mxu0 %v275
  %576 = vmatpush2.msra.mxu0 %v272
  %577 = vmatprep.subr.mxu0 %v218
  %578 = vmatpush2.msra.mxu0 %v217
  %579 = vmatprep.subr.mxu0 %v207
  %580 = vmatpush2.msra.mxu0 %v206
  %581 = vmatprep.mubr.f32.mxu0 %v247
  %582 = vmatmul.mubr.f32.gmra.mxu0 %v20
  %v583 = vpop.f32.mrf.mxu0
  %v584 = vadd.f32 %v238, %v583
  %v585 = vpop.f32.mrf.mxu0
  %v586 = vadd.f32 %v238, %v585
  %587 = vmatprep.mubr.f32.mxu0 %v250
  %588 = vmatmul.mubr.f32.gmra.mxu0 %v22
  %v589 = vpop.f32.mrf.mxu0
  %v590 = vadd.f32 %v243, %v589
  %v591 = vpop.f32.mrf.mxu0
  %v592 = vadd.f32 %v243, %v591
  %593 = vdwg.mxu0
  %594 = vmatprep.subr.mxu0 %v198
  %595 = vmatpush1.msra.mxu0 %v197
  %596 = vmatprep.subr.mxu0 %v187
  %597 = vmatpush1.msra.mxu0 %v186
  %598 = vmatprep.subr.mxu0 %v176
  %599 = vmatpush1.msra.mxu0 %v175
  %600 = vmatprep.subr.mxu0 %v165
  %601 = vmatpush1.msra.mxu0 %v164
  %602 = vmatprep.subr.mxu0 %v154
  %603 = vmatpush1.msra.mxu0 %v153
  %604 = vmatprep.subr.mxu0 %v143
  %605 = vmatpush1.msra.mxu0 %v142
  %606 = vmatprep.subr.mxu0 %v132
  %607 = vmatpush1.msra.mxu0 %v131
  %608 = vmatprep.subr.mxu0 %v121
  %609 = vmatpush1.msra.mxu0 %v120
  %610 = vmatprep.subr.mxu0 %v110
  %611 = vmatpush1.msra.mxu0 %v109
  %612 = vmatprep.subr.mxu0 %v99
  %613 = vmatpush1.msra.mxu0 %v98
  %614 = vmatprep.subr.mxu0 %v88
  %615 = vmatpush1.msra.mxu0 %v87
  %616 = vmatprep.subr.mxu0 %v77
  %617 = vmatpush1.msra.mxu0 %v76
  %618 = vmatprep.subr.mxu0 %v66
  %619 = vmatpush1.msra.mxu0 %v65
  %620 = vmatprep.subr.mxu0 %v55
  %621 = vmatpush1.msra.mxu0 %v54
  %622 = vmatprep.subr.mxu0 %v44
  %623 = vmatpush1.msra.mxu0 %v43
  %624 = vmatprep.subr.mxu0 %v33
  %625 = vmatpush1.msra.mxu0 %v32
  %626 = vmatprep.subr.mxu0 0.0
  %627 = vmatpush2.msra.mxu0 0.0
  %628 = vmatprep.subr.mxu0 0.0
  %629 = vmatpush2.msra.mxu0 0.0
  %630 = vmatprep.subr.mxu0 0.0
  %631 = vmatpush2.msra.mxu0 0.0
  %632 = vmatprep.subr.mxu0 0.0
  %633 = vmatpush2.msra.mxu0 0.0
  %634 = vmatprep.subr.mxu0 0.0
  %635 = vmatpush2.msra.mxu0 0.0
  %636 = vmatprep.subr.mxu0 0.0
  %637 = vmatpush2.msra.mxu0 0.0
  %638 = vmatprep.subr.mxu0 0.0
  %639 = vmatpush2.msra.mxu0 0.0
  %640 = vmatprep.subr.mxu0 0.0
  %641 = vmatpush2.msra.mxu0 0.0
  %642 = vmatprep.subr.mxu0 0.0
  %643 = vmatpush2.msra.mxu0 0.0
  %644 = vmatprep.subr.mxu0 0.0
  %645 = vmatpush2.msra.mxu0 0.0
  %646 = vmatprep.subr.mxu0 0.0
  %647 = vmatpush2.msra.mxu0 0.0
  %648 = vmatprep.subr.mxu0 0.0
  %649 = vmatpush2.msra.mxu0 0.0
  %650 = vmatprep.subr.mxu0 0.0
  %651 = vmatpush2.msra.mxu0 0.0
  %652 = vmatprep.subr.mxu0 %v281
  %653 = vmatpush2.msra.mxu0 %v278
  %654 = vmatprep.subr.mxu0 %v220
  %655 = vmatpush2.msra.mxu0 %v219
  %656 = vmatprep.subr.mxu0 %v209
  %657 = vmatpush2.msra.mxu0 %v208
  %658 = vmatprep.mubr.f32.mxu0 %v247
  %659 = vmatmul.mubr.f32.gmra.mxu0 %v20
  %v660 = vpop.f32.mrf.mxu0
  %v661 = vadd.f32 %v238, %v660
  %v662 = vpop.f32.mrf.mxu0
  %v663 = vadd.f32 %v238, %v662
  %664 = vmatprep.mubr.f32.mxu0 %v250
  %665 = vmatmul.mubr.f32.gmra.mxu0 %v22
  %v666 = vpop.f32.mrf.mxu0
  %v667 = vadd.f32 %v243, %v666
  %v668 = vpop.f32.mrf.mxu0
  %v669 = vadd.f32 %v243, %v668
  %670 = vdwg.mxu0
  %671 = vmatprep.subr.mxu0 0.0
  %672 = vmatpush1.msra.mxu0 %v199
  %673 = vmatprep.subr.mxu0 0.0
  %674 = vmatpush1.msra.mxu0 %v188
  %675 = vmatprep.subr.mxu0 0.0
  %676 = vmatpush1.msra.mxu0 %v177
  %677 = vmatprep.subr.mxu0 0.0
  %678 = vmatpush1.msra.mxu0 %v166
  %679 = vmatprep.subr.mxu0 0.0
  %680 = vmatpush1.msra.mxu0 %v155
  %681 = vmatprep.subr.mxu0 0.0
  %682 = vmatpush1.msra.mxu0 %v144
  %683 = vmatprep.subr.mxu0 0.0
  %684 = vmatpush1.msra.mxu0 %v133
  %685 = vmatprep.subr.mxu0 0.0
  %686 = vmatpush1.msra.mxu0 %v122
  %687 = vmatprep.subr.mxu0 0.0
  %688 = vmatpush1.msra.mxu0 %v111
  %689 = vmatprep.subr.mxu0 0.0
  %690 = vmatpush1.msra.mxu0 %v100
  %691 = vmatprep.subr.mxu0 0.0
  %692 = vmatpush1.msra.mxu0 %v89
  %693 = vmatprep.subr.mxu0 0.0
  %694 = vmatpush1.msra.mxu0 %v78
  %695 = vmatprep.subr.mxu0 0.0
  %696 = vmatpush1.msra.mxu0 %v67
  %697 = vmatprep.subr.mxu0 0.0
  %698 = vmatpush1.msra.mxu0 %v56
  %699 = vmatprep.subr.mxu0 0.0
  %700 = vmatpush1.msra.mxu0 %v45
  %701 = vmatprep.subr.mxu0 0.0
  %702 = vmatpush1.msra.mxu0 %v34
  %703 = vmatprep.subr.mxu0 0.0
  %704 = vmatpush2.msra.mxu0 0.0
  %705 = vmatprep.subr.mxu0 0.0
  %706 = vmatpush2.msra.mxu0 0.0
  %707 = vmatprep.subr.mxu0 0.0
  %708 = vmatpush2.msra.mxu0 0.0
  %709 = vmatprep.subr.mxu0 0.0
  %710 = vmatpush2.msra.mxu0 0.0
  %711 = vmatprep.subr.mxu0 0.0
  %712 = vmatpush2.msra.mxu0 0.0
  %713 = vmatprep.subr.mxu0 0.0
  %714 = vmatpush2.msra.mxu0 0.0
  %715 = vmatprep.subr.mxu0 0.0
  %716 = vmatpush2.msra.mxu0 0.0
  %717 = vmatprep.subr.mxu0 0.0
  %718 = vmatpush2.msra.mxu0 0.0
  %719 = vmatprep.subr.mxu0 0.0
  %720 = vmatpush2.msra.mxu0 0.0
  %721 = vmatprep.subr.mxu0 0.0
  %722 = vmatpush2.msra.mxu0 0.0
  %723 = vmatprep.subr.mxu0 0.0
  %724 = vmatpush2.msra.mxu0 0.0
  %725 = vmatprep.subr.mxu0 0.0
  %726 = vmatpush2.msra.mxu0 0.0
  %727 = vmatprep.subr.mxu0 0.0
  %728 = vmatpush2.msra.mxu0 0.0
  %729 = vmatprep.subr.mxu0 0.0
  %730 = vmatpush2.msra.mxu0 %v284
  %731 = vmatprep.subr.mxu0 0.0
  %732 = vmatpush2.msra.mxu0 %v221
  %733 = vmatprep.subr.mxu0 0.0
  %734 = vmatpush2.msra.mxu0 %v210
  %735 = vmatprep.mubr.f32.mxu0 %v247
  %736 = vmatmul.mubr.f32.gmra.mxu0 %v20
  %v737 = vpop.f32.mrf.mxu0
  %v738 = vadd.f32 %v238, %v737
  %v739 = vpop.f32.mrf.mxu0
  %740 = vmatprep.mubr.f32.mxu0 %v250
  %741 = vmatmul.mubr.f32.gmra.mxu0 %v22
  %v742 = vpop.f32.mrf.mxu0
  %v743 = vadd.f32 %v243, %v742
  %v744 = vpop.f32.mrf.mxu0
  %745 = vdwg.mxu0
  %v746 = vadd.f32 %v353, %v355
  %v747 = vadd.f32 %v746, %v430
  %v748 = vadd.f32 %v747, %v432
  %v749 = vadd.f32 %v748, %v507
  %v750 = vadd.f32 %v749, %v509
  %v751 = vadd.f32 %v750, %v584
  %v752 = vadd.f32 %v751, %v586
  %v753 = vadd.f32 %v752, %v661
  %v754 = vadd.f32 %v753, %v663
  %vm755 = vcmask 588800
  %v756 = vsel %vm755, %v738, 0.0
  %v757 = vadd.f32 %v754, %v756
  %758 = vadd.xlane.f32.xlu0 %v757
  %v759 = vpop.xlane.xlu0 %758
  %v760 = vadd.f32 %v359, %v361
  %v761 = vadd.f32 %v760, %v436
  %v762 = vadd.f32 %v761, %v438
  %v763 = vadd.f32 %v762, %v513
  %v764 = vadd.f32 %v763, %v515
  %v765 = vadd.f32 %v764, %v590
  %v766 = vadd.f32 %v765, %v592
  %v767 = vadd.f32 %v766, %v667
  %v768 = vadd.f32 %v767, %v669
  %v769 = vsel %vm755, %v743, 0.0
  %v770 = vadd.f32 %v768, %v769
  %771 = vadd.xlane.f32.xlu0 %v770
  %v772 = vpop.xlane.xlu0 %771
  %v773 = vrcp.pop 1352.0
  %v774 = vmul.f32 %v759, %v773
  %v775 = vmul.f32 %v772, %v773
  %v776 = vsub.f32 %v353, %v774
  %v777 = vsub.f32 %v355, %v774
  %v778 = vsub.f32 %v430, %v774
  %v779 = vsub.f32 %v432, %v774
  %v780 = vsub.f32 %v507, %v774
  %v781 = vsub.f32 %v509, %v774
  %v782 = vsub.f32 %v584, %v774
  %v783 = vsub.f32 %v586, %v774
  %v784 = vsub.f32 %v661, %v774
  %v785 = vsub.f32 %v663, %v774
  %v786 = vsub.f32 %v738, %v774
  %v787 = vsub.f32 %v359, %v775
  %v788 = vsub.f32 %v361, %v775
  %v789 = vsub.f32 %v436, %v775
  %v790 = vsub.f32 %v438, %v775
  %v791 = vsub.f32 %v513, %v775
  %v792 = vsub.f32 %v515, %v775
  %v793 = vsub.f32 %v590, %v775
  %v794 = vsub.f32 %v592, %v775
  %v795 = vsub.f32 %v667, %v775
  %v796 = vsub.f32 %v669, %v775
  %v797 = vsub.f32 %v743, %v775
  %v798 = vmul.f32 %v776, %v776
  %v799 = vmul.f32 %v777, %v777
  %v800 = vmul.f32 %v778, %v778
  %v801 = vmul.f32 %v779, %v779
  %v802 = vmul.f32 %v780, %v780
  %v803 = vmul.f32 %v781, %v781
  %v804 = vmul.f32 %v782, %v782
  %v805 = vmul.f32 %v783, %v783
  %v806 = vmul.f32 %v784, %v784
  %v807 = vmul.f32 %v785, %v785
  %v808 = vmul.f32 %v786, %v786
  %v809 = vmul.f32 %v787, %v787
  %v810 = vmul.f32 %v788, %v788
  %v811 = vmul.f32 %v789, %v789
  %v812 = vmul.f32 %v790, %v790
  %v813 = vmul.f32 %v791, %v791
  %v814 = vmul.f32 %v792, %v792
  %v815 = vmul.f32 %v793, %v793
  %v816 = vmul.f32 %v794, %v794
  %v817 = vmul.f32 %v795, %v795
  %v818 = vmul.f32 %v796, %v796
  %v819 = vmul.f32 %v797, %v797
  %v820 = vadd.f32 %v798, %v799
  %v821 = vadd.f32 %v820, %v800
  %v822 = vadd.f32 %v821, %v801
  %v823 = vadd.f32 %v822, %v802
  %v824 = vadd.f32 %v823, %v803
  %v825 = vadd.f32 %v824, %v804
  %v826 = vadd.f32 %v825, %v805
  %v827 = vadd.f32 %v826, %v806
  %v828 = vadd.f32 %v827, %v807
  %v829 = vsel %vm755, %v808, 0.0
  %v830 = vadd.f32 %v828, %v829
  %831 = vadd.xlane.f32.xlu0 %v830
  %v832 = vpop.xlane.xlu0 %831
  %v833 = vadd.f32 %v809, %v810
  %v834 = vadd.f32 %v833, %v811
  %v835 = vadd.f32 %v834, %v812
  %v836 = vadd.f32 %v835, %v813
  %v837 = vadd.f32 %v836, %v814
  %v838 = vadd.f32 %v837, %v815
  %v839 = vadd.f32 %v838, %v816
  %v840 = vadd.f32 %v839, %v817
  %v841 = vadd.f32 %v840, %v818
  %v842 = vsel %vm755, %v819, 0.0
  %v843 = vadd.f32 %v841, %v842
  %844 = vadd.xlane.f32.xlu0 %v843
  %v845 = vpop.xlane.xlu0 %844
  %v846 = vmul.f32 %v832, %v773
  %v847 = vmul.f32 %v845, %v773
  %v848 = vld [vmem:[%s3] sm:$0xff]
  %v849 = vld [vmem:[%s3 + $0x8] sm:$0xff]
  %v850 = vadd.f32 %v846, 1e-05
  %v851 = vadd.f32 %v847, 1e-05
  %v852 = vrsqrt.pop %v850
  %v853 = vrsqrt.pop %v851
  %v854 = vmul.f32 %v848, %v852
  %v855 = vmul.f32 %v849, %v853
  %857 = vset.pattern.permute.xlu0 0
  %858 = vperm.xlu0 %857, %v854
  %v859 = vpop.permute.xlu0 %858
  %862 = vset.pattern.permute.xlu0 0
  %863 = vperm.xlu0 %862, %v855
  %v864 = vpop.permute.xlu0 %863
  %v866 = vmul.f32 %v776, %v859
  %v867 = vmul.f32 %v777, %v859
  %v868 = vmul.f32 %v778, %v859
  %v869 = vmul.f32 %v779, %v859
  %v870 = vmul.f32 %v780, %v859
  %v871 = vmul.f32 %v781, %v859
  %v872 = vmul.f32 %v782, %v859
  %v873 = vmul.f32 %v783, %v859
  %v874 = vmul.f32 %v784, %v859
  %v875 = vmul.f32 %v785, %v859
  %v876 = vmul.f32 %v786, %v859
  %v877 = vmul.f32 %v787, %v864
  %v878 = vmul.f32 %v788, %v864
  %v879 = vmul.f32 %v789, %v864
  %v880 = vmul.f32 %v790, %v864
  %v881 = vmul.f32 %v791, %v864
  %v882 = vmul.f32 %v792, %v864
  %v883 = vmul.f32 %v793, %v864
  %v884 = vmul.f32 %v794, %v864
  %v885 = vmul.f32 %v795, %v864
  %v886 = vmul.f32 %v796, %v864
  %v887 = vmul.f32 %v797, %v864
  %v888 = vld [vmem:[%s4] sm:$0xff]
  %v889 = vld [vmem:[%s4 + $0x8] sm:$0xff]
  %891 = vset.pattern.permute.xlu0 0
  %892 = vperm.xlu0 %891, %v888
  %v893 = vpop.permute.xlu0 %892
  %896 = vset.pattern.permute.xlu0 0
  %897 = vperm.xlu0 %896, %v889
  %v898 = vpop.permute.xlu0 %897
  %v900 = vadd.f32 %v866, %v893
  %v901 = vadd.f32 %v867, %v893
  %v902 = vadd.f32 %v868, %v893
  %v903 = vadd.f32 %v869, %v893
  %v904 = vadd.f32 %v870, %v893
  %v905 = vadd.f32 %v871, %v893
  %v906 = vadd.f32 %v872, %v893
  %v907 = vadd.f32 %v873, %v893
  %v908 = vadd.f32 %v874, %v893
  %v909 = vadd.f32 %v875, %v893
  %v910 = vadd.f32 %v876, %v893
  %v911 = vadd.f32 %v877, %v898
  %v912 = vadd.f32 %v878, %v898
  %v913 = vadd.f32 %v879, %v898
  %v914 = vadd.f32 %v880, %v898
  %v915 = vadd.f32 %v881, %v898
  %v916 = vadd.f32 %v882, %v898
  %v917 = vadd.f32 %v883, %v898
  %v918 = vadd.f32 %v884, %v898
  %v919 = vadd.f32 %v885, %v898
  %v920 = vadd.f32 %v886, %v898
  %v921 = vadd.f32 %v887, %v898
  %vm922 = vcmp.ge.f32.partialorder %v900, 0.0
  %vm923 = vcmp.ge.f32.partialorder %v901, 0.0
  %vm924 = vcmp.ge.f32.partialorder %v902, 0.0
  %vm925 = vcmp.ge.f32.partialorder %v903, 0.0
  %vm926 = vcmp.ge.f32.partialorder %v904, 0.0
  %vm927 = vcmp.ge.f32.partialorder %v905, 0.0
  %vm928 = vcmp.ge.f32.partialorder %v906, 0.0
  %vm929 = vcmp.ge.f32.partialorder %v907, 0.0
  %vm930 = vcmp.ge.f32.partialorder %v908, 0.0
  %vm931 = vcmp.ge.f32.partialorder %v909, 0.0
  %vm932 = vcmp.ge.f32.partialorder %v910, 0.0
  %vm933 = vcmp.ge.f32.partialorder %v911, 0.0
  %vm934 = vcmp.ge.f32.partialorder %v912, 0.0
  %vm935 = vcmp.ge.f32.partialorder %v913, 0.0
  %vm936 = vcmp.ge.f32.partialorder %v914, 0.0
  %vm937 = vcmp.ge.f32.partialorder %v915, 0.0
  %vm938 = vcmp.ge.f32.partialorder %v916, 0.0
  %vm939 = vcmp.ge.f32.partialorder %v917, 0.0
  %vm940 = vcmp.ge.f32.partialorder %v918, 0.0
  %vm941 = vcmp.ge.f32.partialorder %v919, 0.0
  %vm942 = vcmp.ge.f32.partialorder %v920, 0.0
  %vm943 = vcmp.ge.f32.partialorder %v921, 0.0
  %v944 = vmul.f32 %v900, 0.01
  %v945 = vmul.f32 %v901, 0.01
  %v946 = vmul.f32 %v902, 0.01
  %v947 = vmul.f32 %v903, 0.01
  %v948 = vmul.f32 %v904, 0.01
  %v949 = vmul.f32 %v905, 0.01
  %v950 = vmul.f32 %v906, 0.01
  %v951 = vmul.f32 %v907, 0.01
  %v952 = vmul.f32 %v908, 0.01
  %v953 = vmul.f32 %v909, 0.01
  %v954 = vmul.f32 %v910, 0.01
  %v955 = vmul.f32 %v911, 0.01
  %v956 = vmul.f32 %v912, 0.01
  %v957 = vmul.f32 %v913, 0.01
  %v958 = vmul.f32 %v914, 0.01
  %v959 = vmul.f32 %v915, 0.01
  %v960 = vmul.f32 %v916, 0.01
  %v961 = vmul.f32 %v917, 0.01
  %v962 = vmul.f32 %v918, 0.01
  %v963 = vmul.f32 %v919, 0.01
  %v964 = vmul.f32 %v920, 0.01
  %v965 = vmul.f32 %v921, 0.01
  %v966 = vsel %vm922, %v900, %v944
  %v967 = vsel %vm923, %v901, %v945
  %v968 = vsel %vm924, %v902, %v946
  %v969 = vsel %vm925, %v903, %v947
  %v970 = vsel %vm926, %v904, %v948
  %v971 = vsel %vm927, %v905, %v949
  %v972 = vsel %vm928, %v906, %v950
  %v973 = vsel %vm929, %v907, %v951
  %v974 = vsel %vm930, %v908, %v952
  %v975 = vsel %vm931, %v909, %v953
  %v976 = vsel %vm932, %v910, %v954
  %v977 = vsel %vm933, %v911, %v955
  %v978 = vsel %vm934, %v912, %v956
  %v979 = vsel %vm935, %v913, %v957
  %v980 = vsel %vm936, %v914, %v958
  %v981 = vsel %vm937, %v915, %v959
  %v982 = vsel %vm938, %v916, %v960
  %v983 = vsel %vm939, %v917, %v961
  %v984 = vsel %vm940, %v918, %v962
  %v985 = vsel %vm941, %v919, %v963
  %v986 = vsel %vm942, %v920, %v964
  %v987 = vsel %vm943, %v921, %v965
  %988 = vst [vmem:[%s5] sm:$0xff] %v966
  %989 = vst [vmem:[%s5 + $0x8] sm:$0xff] %v967
  %990 = vst [vmem:[%s5 + $0x10] sm:$0xff] %v968
  %991 = vst [vmem:[%s5 + $0x18] sm:$0xff] %v969
  %992 = vst [vmem:[%s5 + $0x20] sm:$0xff] %v970
  %993 = vst [vmem:[%s5 + $0x28] sm:$0xff] %v971
  %994 = vst [vmem:[%s5 + $0x30] sm:$0xff] %v972
  %995 = vst [vmem:[%s5 + $0x38] sm:$0xff] %v973
  %996 = vst [vmem:[%s5 + $0x40] sm:$0xff] %v974
  %997 = vst [vmem:[%s5 + $0x48] sm:$0xff] %v975
  %998 = vst.msk [vmem:[%s5 + $0x50] sm:$0xff] %vm755, %v976
  %999 = vst [vmem:[%s5 + $0x58] sm:$0xff] %v977
  %1000 = vst [vmem:[%s5 + $0x60] sm:$0xff] %v978
  %1001 = vst [vmem:[%s5 + $0x68] sm:$0xff] %v979
  %1002 = vst [vmem:[%s5 + $0x70] sm:$0xff] %v980
  %1003 = vst [vmem:[%s5 + $0x78] sm:$0xff] %v981
  %1004 = vst [vmem:[%s5 + $0x80] sm:$0xff] %v982
  %1005 = vst [vmem:[%s5 + $0x88] sm:$0xff] %v983
  %1006 = vst [vmem:[%s5 + $0x90] sm:$0xff] %v984
  %1007 = vst [vmem:[%s5 + $0x98] sm:$0xff] %v985
  %1008 = vst [vmem:[%s5 + $0xa0] sm:$0xff] %v986
  %1009 = vst.msk [vmem:[%s5 + $0xa8] sm:$0xff] %vm755, %v987
  // Predicated region
  $region22: #{net_forward.4} parent=0 // pred_check
    _
  $region23: #{net_forward.4} parent=0 // pred_check_branch
    %1011 = sbr.rel (0) target = $region25
  $region24: #{net_forward.4} parent=0 // pred_region
    _
  $region25: #{net_forward.4} parent=0 // pred_fallthru
    _
  // Predicated region
  $region26: #{net_forward.4} parent=0 // pred_check
    _
  $region27: #{net_forward.4} parent=0 // pred_check_branch
    %1013 = sbr.rel (0) target = $region29
  $region28: #{net_forward.4} parent=0 // pred_region
    _
  $region29: #{net_forward.4} parent=0 // pred_fallthru
    _

// kernel: net_forward.5
$region0: #{net_forward.5}
  #allocation0 [shape = 'u32[]', space=smem, size = 0x4, offset = 0x4, fixed_abs, tag = 'smem constant byte address 0x4 - core index']
  #allocation1 [shape = 'u32[144,128]{1,0:T(1,128)}', space=vmem, size = 0x12000, scoped, tag = 'internal scratch']
  %s0 = inlined_call_operand.vmem [shape: f32[2,2704], index: 0, kind: input, shape index: {}]
  %s1 = inlined_call_operand.vmem [shape: f32[2704,120], index: 1, kind: input, shape index: {}]
  %s2 = inlined_call_operand.vmem [shape: f32[1,120], index: 2, kind: input, shape index: {}]
  %s3 = inlined_call_operand.vmem [shape: f32[1,120], index: 3, kind: input, shape index: {}]
  %s4 = inlined_call_operand.vmem [shape: f32[1,120], index: 4, kind: input, shape index: {}]
  %s5 = inlined_call_operand.vmem [shape: f32[120,84], index: 5, kind: input, shape index: {}]
  %s6 = inlined_call_operand.vmem [shape: f32[1,84], index: 6, kind: input, shape index: {}]
  %s7 = inlined_call_operand.vmem [shape: f32[1,84], index: 7, kind: input, shape index: {}]
  %s8 = inlined_call_operand.vmem [shape: f32[1,84], index: 8, kind: input, shape index: {}]
  %s9 = inlined_call_operand.vmem [shape: f32[84,40], index: 9, kind: input, shape index: {}]
  %s10 = inlined_call_operand.vmem [shape: f32[1,40], index: 10, kind: input, shape index: {}]
  %s11 = inlined_call_operand.hbm [shape: f32[2,40], index: 11, kind: output, shape index: {}]
  %s12 = sld [smem:[#allocation0]]
  $region54: #{net_forward.5} parent=0
    _
  %s14 = ssub.s32 1, %s12
  %s15 = scalar_select 0, %s14, %s12
  $region1: #{net_forward.5} parent=0
    #allocation2 [shape = 'u8[1024]{0}', space=vmem, size = 0x400, scoped, tag = 'output window, operand 0, single buffered']
    #allocation3 [shape = 's32[1]{0}', space=sflag, size = 0x4, scoped, tag = 'scoped memory for net_forward.5']
    %16 = vsyncpa [#allocation3], 0
    // Predicated region
    $region2: #{net_forward.5} parent=1 // pred_check
      _
    $region3: #{net_forward.5} parent=1 // pred_check_branch
      %18 = sbr.rel (0) target = $region5
    $region4: #{net_forward.5} parent=1 // pred_region
      _
    $region5: #{net_forward.5} parent=1 // pred_fallthru
      _
    // Predicated region
    $region6: #{net_forward.5} parent=1 // pred_check
      _
    $region7: #{net_forward.5} parent=1 // pred_check_branch
      %20 = sbr.rel (0) target = $region9
    $region8: #{net_forward.5} parent=1 // pred_region
      _
    $region9: #{net_forward.5} parent=1 // pred_fallthru
      _
    // Predicated region
    $region10: #{net_forward.5} parent=1 // pred_check
      _
    $region11: #{net_forward.5} parent=1 // pred_check_branch
      %22 = sbr.rel (0) target = $region13
    $region12: #{net_forward.5} parent=1 // pred_region
      _
    $region13: #{net_forward.5} parent=1 // pred_fallthru
      _
    // Predicated region
    $region14: #{net_forward.5} parent=1 // pred_check
      _
    $region15: #{net_forward.5} parent=1 // pred_check_branch
      %24 = sbr.rel (0) target = $region17
    $region16: #{net_forward.5} parent=1 // pred_region
      _
    $region17: #{net_forward.5} parent=1 // pred_fallthru
      _
    // Predicated region
    $region18: #{net_forward.5} parent=1 // pred_check
      _
    $region19: #{net_forward.5} parent=1 // pred_check_branch
      %26 = sbr.rel (0) target = $region21
    $region20: #{net_forward.5} parent=1 // pred_region
      _
    $region21: #{net_forward.5} parent=1 // pred_fallthru
      _
    // Predicated region
    $region22: #{net_forward.5} parent=1 // pred_check
      _
    $region23: #{net_forward.5} parent=1 // pred_check_branch
      %28 = sbr.rel (0) target = $region25
    $region24: #{net_forward.5} parent=1 // pred_region
      _
    $region25: #{net_forward.5} parent=1 // pred_fallthru
      _
    // Predicated region
    $region26: #{net_forward.5} parent=1 // pred_check
      _
    $region27: #{net_forward.5} parent=1 // pred_check_branch
      %30 = sbr.rel (0) target = $region29
    $region28: #{net_forward.5} parent=1 // pred_region
      _
    $region29: #{net_forward.5} parent=1 // pred_fallthru
      _
    // Predicated region
    $region30: #{net_forward.5} parent=1 // pred_check
      _
    $region31: #{net_forward.5} parent=1 // pred_check_branch
      %32 = sbr.rel (0) target = $region33
    $region32: #{net_forward.5} parent=1 // pred_region
      _
    $region33: #{net_forward.5} parent=1 // pred_fallthru
      _
    // Predicated region
    $region34: #{net_forward.5} parent=1 // pred_check
      _
    $region35: #{net_forward.5} parent=1 // pred_check_branch
      %34 = sbr.rel (0) target = $region37
    $region36: #{net_forward.5} parent=1 // pred_region
      _
    $region37: #{net_forward.5} parent=1 // pred_fallthru
      _
    // Predicated region
    $region38: #{net_forward.5} parent=1 // pred_check
      _
    $region39: #{net_forward.5} parent=1 // pred_check_branch
      %36 = sbr.rel (0) target = $region41
    $region40: #{net_forward.5} parent=1 // pred_region
      _
    $region41: #{net_forward.5} parent=1 // pred_fallthru
      _
    // Predicated region
    $region42: #{net_forward.5} parent=1 // pred_check
      _
    $region43: #{net_forward.5} parent=1 // pred_check_branch
      %38 = sbr.rel (0) target = $region45
    $region44: #{net_forward.5} parent=1 // pred_region
      _
    $region45: #{net_forward.5} parent=1 // pred_fallthru
      _
    %v39 = vld [vmem:[%s0] sm:$0xff]
    %v40 = vld [vmem:[%s0 + $0x8] sm:$0xff]
    %v41 = vld [vmem:[%s0 + $0x10] sm:$0xff]
    %v42 = vld [vmem:[%s0 + $0x18] sm:$0xff]
    %v43 = vld [vmem:[%s0 + $0x20] sm:$0xff]
    %v44 = vld [vmem:[%s0 + $0x28] sm:$0xf]
    %v45 = vld [vmem:[%s1] sm:$0xff]
    %v46 = vld [vmem:[%s1 + $0x8] sm:$0xff]
    %v47 = vld [vmem:[%s1 + $0x10] sm:$0xff]
    %v48 = vld [vmem:[%s1 + $0x18] sm:$0xff]
    %v49 = vld [vmem:[%s1 + $0x20] sm:$0xff]
    %v50 = vld [vmem:[%s1 + $0x28] sm:$0xff]
    %v51 = vld [vmem:[%s1 + $0x30] sm:$0xff]
    %v52 = vld [vmem:[%s1 + $0x38] sm:$0xff]
    %v53 = vld [vmem:[%s1 + $0x40] sm:$0xff]
    %v54 = vld [vmem:[%s1 + $0x48] sm:$0xff]
    %v55 = vld [vmem:[%s1 + $0x50] sm:$0xff]
    %v56 = vld [vmem:[%s1 + $0x58] sm:$0xff]
    %v57 = vld [vmem:[%s1 + $0x60] sm:$0xff]
    %v58 = vld [vmem:[%s1 + $0x68] sm:$0xff]
    %v59 = vld [vmem:[%s1 + $0x70] sm:$0xff]
    %v60 = vld [vmem:[%s1 + $0x78] sm:$0xff]
    %v61 = vld [vmem:[%s1 + $0x80] sm:$0xff]
    %v62 = vld [vmem:[%s1 + $0x88] sm:$0xff]
    %v63 = vld [vmem:[%s1 + $0x90] sm:$0xff]
    %v64 = vld [vmem:[%s1 + $0x98] sm:$0xff]
    %v65 = vld [vmem:[%s1 + $0xa0] sm:$0xff]
    %v66 = vld [vmem:[%s1 + $0xa8] sm:$0xff]
    %v67 = vld [vmem:[%s1 + $0xb0] sm:$0xff]
    %v68 = vld [vmem:[%s1 + $0xb8] sm:$0xff]
    %v69 = vld [vmem:[%s1 + $0xc0] sm:$0xff]
    %v70 = vld [vmem:[%s1 + $0xc8] sm:$0xff]
    %v71 = vld [vmem:[%s1 + $0xd0] sm:$0xff]
    %v72 = vld [vmem:[%s1 + $0xd8] sm:$0xff]
    %v73 = vld [vmem:[%s1 + $0xe0] sm:$0xff]
    %v74 = vld [vmem:[%s1 + $0xe8] sm:$0xff]
    %v75 = vld [vmem:[%s1 + $0xf0] sm:$0xff]
    %v76 = vld [vmem:[%s1 + $0xf8] sm:$0xff]
    %v77 = vld [vmem:[%s1 + $0x100] sm:$0xff]
    %v78 = vld [vmem:[%s1 + $0x108] sm:$0xff]
    %v79 = vld [vmem:[%s1 + $0x110] sm:$0xff]
    %v80 = vld [vmem:[%s1 + $0x118] sm:$0xff]
    %v81 = vld [vmem:[%s1 + $0x120] sm:$0xff]
    %v82 = vld [vmem:[%s1 + $0x128] sm:$0xff]
    %v83 = vld [vmem:[%s1 + $0x130] sm:$0xff]
    %v84 = vld [vmem:[%s1 + $0x138] sm:$0xff]
    %v85 = vld [vmem:[%s1 + $0x140] sm:$0xff]
    %v86 = vld [vmem:[%s1 + $0x148] sm:$0xff]
    %v87 = vld [vmem:[%s1 + $0x150] sm:$0xff]
    %v88 = vld [vmem:[%s1 + $0x158] sm:$0xff]
    %v89 = vld [vmem:[%s1 + $0x160] sm:$0xff]
    %v90 = vld [vmem:[%s1 + $0x168] sm:$0xff]
    %v91 = vld [vmem:[%s1 + $0x170] sm:$0xff]
    %v92 = vld [vmem:[%s1 + $0x178] sm:$0xff]
    %v93 = vld [vmem:[%s1 + $0x180] sm:$0xff]
    %v94 = vld [vmem:[%s1 + $0x188] sm:$0xff]
    %v95 = vld [vmem:[%s1 + $0x190] sm:$0xff]
    %v96 = vld [vmem:[%s1 + $0x198] sm:$0xff]
    %v97 = vld [vmem:[%s1 + $0x1a0] sm:$0xff]
    %v98 = vld [vmem:[%s1 + $0x1a8] sm:$0xff]
    %v99 = vld [vmem:[%s1 + $0x1b0] sm:$0xff]
    %v100 = vld [vmem:[%s1 + $0x1b8] sm:$0xff]
    %v101 = vld [vmem:[%s1 + $0x1c0] sm:$0xff]
    %v102 = vld [vmem:[%s1 + $0x1c8] sm:$0xff]
    %v103 = vld [vmem:[%s1 + $0x1d0] sm:$0xff]
    %v104 = vld [vmem:[%s1 + $0x1d8] sm:$0xff]
    %v105 = vld [vmem:[%s1 + $0x1e0] sm:$0xff]
    %v106 = vld [vmem:[%s1 + $0x1e8] sm:$0xff]
    %v107 = vld [vmem:[%s1 + $0x1f0] sm:$0xff]
    %v108 = vld [vmem:[%s1 + $0x1f8] sm:$0xff]
    %v109 = vld [vmem:[%s1 + $0x200] sm:$0xff]
    %v110 = vld [vmem:[%s1 + $0x208] sm:$0xff]
    %v111 = vld [vmem:[%s1 + $0x210] sm:$0xff]
    %v112 = vld [vmem:[%s1 + $0x218] sm:$0xff]
    %v113 = vld [vmem:[%s1 + $0x220] sm:$0xff]
    %v114 = vld [vmem:[%s1 + $0x228] sm:$0xff]
    %v115 = vld [vmem:[%s1 + $0x230] sm:$0xff]
    %v116 = vld [vmem:[%s1 + $0x238] sm:$0xff]
    %v117 = vld [vmem:[%s1 + $0x240] sm:$0xff]
    %v118 = vld [vmem:[%s1 + $0x248] sm:$0xff]
    %v119 = vld [vmem:[%s1 + $0x250] sm:$0xff]
    %v120 = vld [vmem:[%s1 + $0x258] sm:$0xff]
    %v121 = vld [vmem:[%s1 + $0x260] sm:$0xff]
    %v122 = vld [vmem:[%s1 + $0x268] sm:$0xff]
    %v123 = vld [vmem:[%s1 + $0x270] sm:$0xff]
    %v124 = vld [vmem:[%s1 + $0x278] sm:$0xff]
    %v125 = vld [vmem:[%s1 + $0x280] sm:$0xff]
    %v126 = vld [vmem:[%s1 + $0x288] sm:$0xff]
    %v127 = vld [vmem:[%s1 + $0x290] sm:$0xff]
    %v128 = vld [vmem:[%s1 + $0x298] sm:$0xff]
    %v129 = vld [vmem:[%s1 + $0x2a0] sm:$0xff]
    %v130 = vld [vmem:[%s1 + $0x2a8] sm:$0xff]
    %v131 = vld [vmem:[%s1 + $0x2b0] sm:$0xff]
    %v132 = vld [vmem:[%s1 + $0x2b8] sm:$0xff]
    %v133 = vld [vmem:[%s1 + $0x2c0] sm:$0xff]
    %v134 = vld [vmem:[%s1 + $0x2c8] sm:$0xff]
    %v135 = vld [vmem:[%s1 + $0x2d0] sm:$0xff]
    %v136 = vld [vmem:[%s1 + $0x2d8] sm:$0xff]
    %v137 = vld [vmem:[%s1 + $0x2e0] sm:$0xff]
    %v138 = vld [vmem:[%s1 + $0x2e8] sm:$0xff]
    %v139 = vld [vmem:[%s1 + $0x2f0] sm:$0xff]
    %v140 = vld [vmem:[%s1 + $0x2f8] sm:$0xff]
    %v141 = vld [vmem:[%s1 + $0x300] sm:$0xff]
    %v142 = vld [vmem:[%s1 + $0x308] sm:$0xff]
    %v143 = vld [vmem:[%s1 + $0x310] sm:$0xff]
    %v144 = vld [vmem:[%s1 + $0x318] sm:$0xff]
    %v145 = vld [vmem:[%s1 + $0x320] sm:$0xff]
    %v146 = vld [vmem:[%s1 + $0x328] sm:$0xff]
    %v147 = vld [vmem:[%s1 + $0x330] sm:$0xff]
    %v148 = vld [vmem:[%s1 + $0x338] sm:$0xff]
    %v149 = vld [vmem:[%s1 + $0x340] sm:$0xff]
    %v150 = vld [vmem:[%s1 + $0x348] sm:$0xff]
    %v151 = vld [vmem:[%s1 + $0x350] sm:$0xff]
    %v152 = vld [vmem:[%s1 + $0x358] sm:$0xff]
    %v153 = vld [vmem:[%s1 + $0x360] sm:$0xff]
    %v154 = vld [vmem:[%s1 + $0x368] sm:$0xff]
    %v155 = vld [vmem:[%s1 + $0x370] sm:$0xff]
    %v156 = vld [vmem:[%s1 + $0x378] sm:$0xff]
    %v157 = vld [vmem:[%s1 + $0x380] sm:$0xff]
    %v158 = vld [vmem:[%s1 + $0x388] sm:$0xff]
    %v159 = vld [vmem:[%s1 + $0x390] sm:$0xff]
    %v160 = vld [vmem:[%s1 + $0x398] sm:$0xff]
    %v161 = vld [vmem:[%s1 + $0x3a0] sm:$0xff]
    %v162 = vld [vmem:[%s1 + $0x3a8] sm:$0xff]
    %v163 = vld [vmem:[%s1 + $0x3b0] sm:$0xff]
    %v164 = vld [vmem:[%s1 + $0x3b8] sm:$0xff]
    %v165 = vld [vmem:[%s1 + $0x3c0] sm:$0xff]
    %v166 = vld [vmem:[%s1 + $0x3c8] sm:$0xff]
    %v167 = vld [vmem:[%s1 + $0x3d0] sm:$0xff]
    %v168 = vld [vmem:[%s1 + $0x3d8] sm:$0xff]
    %v169 = vld [vmem:[%s1 + $0x3e0] sm:$0xff]
    %v170 = vld [vmem:[%s1 + $0x3e8] sm:$0xff]
    %v171 = vld [vmem:[%s1 + $0x3f0] sm:$0xff]
    %v172 = vld [vmem:[%s1 + $0x3f8] sm:$0xff]
    %v173 = vld [vmem:[%s1 + $0x400] sm:$0xff]
    %v174 = vld [vmem:[%s1 + $0x408] sm:$0xff]
    %v175 = vld [vmem:[%s1 + $0x410] sm:$0xff]
    %v176 = vld [vmem:[%s1 + $0x418] sm:$0xff]
    %v177 = vld [vmem:[%s1 + $0x420] sm:$0xff]
    %v178 = vld [vmem:[%s1 + $0x428] sm:$0xff]
    %v179 = vld [vmem:[%s1 + $0x430] sm:$0xff]
    %v180 = vld [vmem:[%s1 + $0x438] sm:$0xff]
    %v181 = vld [vmem:[%s1 + $0x440] sm:$0xff]
    %v182 = vld [vmem:[%s1 + $0x448] sm:$0xff]
    %v183 = vld [vmem:[%s1 + $0x450] sm:$0xff]
    %v184 = vld [vmem:[%s1 + $0x458] sm:$0xff]
    %v185 = vld [vmem:[%s1 + $0x460] sm:$0xff]
    %v186 = vld [vmem:[%s1 + $0x468] sm:$0xff]
    %v187 = vld [vmem:[%s1 + $0x470] sm:$0xff]
    %v188 = vld [vmem:[%s1 + $0x478] sm:$0xff]
    %v189 = vld [vmem:[%s1 + $0x480] sm:$0xff]
    %v190 = vld [vmem:[%s1 + $0x488] sm:$0xff]
    %v191 = vld [vmem:[%s1 + $0x490] sm:$0xff]
    %v192 = vld [vmem:[%s1 + $0x498] sm:$0xff]
    %v193 = vld [vmem:[%s1 + $0x4a0] sm:$0xff]
    %v194 = vld [vmem:[%s1 + $0x4a8] sm:$0xff]
    %v195 = vld [vmem:[%s1 + $0x4b0] sm:$0xff]
    %v196 = vld [vmem:[%s1 + $0x4b8] sm:$0xff]
    %v197 = vld [vmem:[%s1 + $0x4c0] sm:$0xff]
    %v198 = vld [vmem:[%s1 + $0x4c8] sm:$0xff]
    %v199 = vld [vmem:[%s1 + $0x4d0] sm:$0xff]
    %v200 = vld [vmem:[%s1 + $0x4d8] sm:$0xff]
    %v201 = vld [vmem:[%s1 + $0x4e0] sm:$0xff]
    %v202 = vld [vmem:[%s1 + $0x4e8] sm:$0xff]
    %v203 = vld [vmem:[%s1 + $0x4f0] sm:$0xff]
    %v204 = vld [vmem:[%s1 + $0x4f8] sm:$0xff]
    %v205 = vld [vmem:[%s1 + $0x500] sm:$0xff]
    %v206 = vld [vmem:[%s1 + $0x508] sm:$0xff]
    %v207 = vld [vmem:[%s1 + $0x510] sm:$0xff]
    %v208 = vld [vmem:[%s1 + $0x518] sm:$0xff]
    %v209 = vld [vmem:[%s1 + $0x520] sm:$0xff]
    %v210 = vld [vmem:[%s1 + $0x528] sm:$0xff]
    %v211 = vld [vmem:[%s1 + $0x530] sm:$0xff]
    %v212 = vld [vmem:[%s1 + $0x538] sm:$0xff]
    %v213 = vld [vmem:[%s1 + $0x540] sm:$0xff]
    %v214 = vld [vmem:[%s1 + $0x548] sm:$0xff]
    %v215 = vld [vmem:[%s1 + $0x550] sm:$0xff]
    %v216 = vld [vmem:[%s1 + $0x558] sm:$0xff]
    %v217 = vld [vmem:[%s1 + $0x560] sm:$0xff]
    %v218 = vld [vmem:[%s1 + $0x568] sm:$0xff]
    %v219 = vld [vmem:[%s1 + $0x570] sm:$0xff]
    %v220 = vld [vmem:[%s1 + $0x578] sm:$0xff]
    %v221 = vld [vmem:[%s1 + $0x580] sm:$0xff]
    %v222 = vld [vmem:[%s1 + $0x588] sm:$0xff]
    %v223 = vld [vmem:[%s1 + $0x590] sm:$0xff]
    %v224 = vld [vmem:[%s1 + $0x598] sm:$0xff]
    %v225 = vld [vmem:[%s1 + $0x5a0] sm:$0xff]
    %v226 = vld [vmem:[%s1 + $0x5a8] sm:$0xff]
    %v227 = vld [vmem:[%s1 + $0x5b0] sm:$0xff]
    %v228 = vld [vmem:[%s1 + $0x5b8] sm:$0xff]
    %v229 = vld [vmem:[%s1 + $0x5c0] sm:$0xff]
    %v230 = vld [vmem:[%s1 + $0x5c8] sm:$0xff]
    %v231 = vld [vmem:[%s1 + $0x5d0] sm:$0xff]
    %v232 = vld [vmem:[%s1 + $0x5d8] sm:$0xff]
    %v233 = vld [vmem:[%s1 + $0x5e0] sm:$0xff]
    %v234 = vld [vmem:[%s1 + $0x5e8] sm:$0xff]
    %v235 = vld [vmem:[%s1 + $0x5f0] sm:$0xff]
    %v236 = vld [vmem:[%s1 + $0x5f8] sm:$0xff]
    %v237 = vld [vmem:[%s1 + $0x600] sm:$0xff]
    %v238 = vld [vmem:[%s1 + $0x608] sm:$0xff]
    %v239 = vld [vmem:[%s1 + $0x610] sm:$0xff]
    %v240 = vld [vmem:[%s1 + $0x618] sm:$0xff]
    %v241 = vld [vmem:[%s1 + $0x620] sm:$0xff]
    %v242 = vld [vmem:[%s1 + $0x628] sm:$0xff]
    %v243 = vld [vmem:[%s1 + $0x630] sm:$0xff]
    %v244 = vld [vmem:[%s1 + $0x638] sm:$0xff]
    %v245 = vld [vmem:[%s1 + $0x640] sm:$0xff]
    %v246 = vld [vmem:[%s1 + $0x648] sm:$0xff]
    %v247 = vld [vmem:[%s1 + $0x650] sm:$0xff]
    %v248 = vld [vmem:[%s1 + $0x658] sm:$0xff]
    %v249 = vld [vmem:[%s1 + $0x660] sm:$0xff]
    %v250 = vld [vmem:[%s1 + $0x668] sm:$0xff]
    %v251 = vld [vmem:[%s1 + $0x670] sm:$0xff]
    %v252 = vld [vmem:[%s1 + $0x678] sm:$0xff]
    %v253 = vld [vmem:[%s1 + $0x680] sm:$0xff]
    %v254 = vld [vmem:[%s1 + $0x688] sm:$0xff]
    %v255 = vld [vmem:[%s1 + $0x690] sm:$0xff]
    %v256 = vld [vmem:[%s1 + $0x698] sm:$0xff]
    %v257 = vld [vmem:[%s1 + $0x6a0] sm:$0xff]
    %v258 = vld [vmem:[%s1 + $0x6a8] sm:$0xff]
    %v259 = vld [vmem:[%s1 + $0x6b0] sm:$0xff]
    %v260 = vld [vmem:[%s1 + $0x6b8] sm:$0xff]
    %v261 = vld [vmem:[%s1 + $0x6c0] sm:$0xff]
    %v262 = vld [vmem:[%s1 + $0x6c8] sm:$0xff]
    %v263 = vld [vmem:[%s1 + $0x6d0] sm:$0xff]
    %v264 = vld [vmem:[%s1 + $0x6d8] sm:$0xff]
    %v265 = vld [vmem:[%s1 + $0x6e0] sm:$0xff]
    %v266 = vld [vmem:[%s1 + $0x6e8] sm:$0xff]
    %v267 = vld [vmem:[%s1 + $0x6f0] sm:$0xff]
    %v268 = vld [vmem:[%s1 + $0x6f8] sm:$0xff]
    %v269 = vld [vmem:[%s1 + $0x700] sm:$0xff]
    %v270 = vld [vmem:[%s1 + $0x708] sm:$0xff]
    %v271 = vld [vmem:[%s1 + $0x710] sm:$0xff]
    %v272 = vld [vmem:[%s1 + $0x718] sm:$0xff]
    %v273 = vld [vmem:[%s1 + $0x720] sm:$0xff]
    %v274 = vld [vmem:[%s1 + $0x728] sm:$0xff]
    %v275 = vld [vmem:[%s1 + $0x730] sm:$0xff]
    %v276 = vld [vmem:[%s1 + $0x738] sm:$0xff]
    %v277 = vld [vmem:[%s1 + $0x740] sm:$0xff]
    %v278 = vld [vmem:[%s1 + $0x748] sm:$0xff]
    %v279 = vld [vmem:[%s1 + $0x750] sm:$0xff]
    %v280 = vld [vmem:[%s1 + $0x758] sm:$0xff]
    %v281 = vld [vmem:[%s1 + $0x760] sm:$0xff]
    %v282 = vld [vmem:[%s1 + $0x768] sm:$0xff]
    %v283 = vld [vmem:[%s1 + $0x770] sm:$0xff]
    %v284 = vld [vmem:[%s1 + $0x778] sm:$0xff]
    %v285 = vld [vmem:[%s1 + $0x780] sm:$0xff]
    %v286 = vld [vmem:[%s1 + $0x788] sm:$0xff]
    %v287 = vld [vmem:[%s1 + $0x790] sm:$0xff]
    %v288 = vld [vmem:[%s1 + $0x798] sm:$0xff]
    %v289 = vld [vmem:[%s1 + $0x7a0] sm:$0xff]
    %v290 = vld [vmem:[%s1 + $0x7a8] sm:$0xff]
    %v291 = vld [vmem:[%s1 + $0x7b0] sm:$0xff]
    %v292 = vld [vmem:[%s1 + $0x7b8] sm:$0xff]
    %v293 = vld [vmem:[%s1 + $0x7c0] sm:$0xff]
    %v294 = vld [vmem:[%s1 + $0x7c8] sm:$0xff]
    %v295 = vld [vmem:[%s1 + $0x7d0] sm:$0xff]
    %v296 = vld [vmem:[%s1 + $0x7d8] sm:$0xff]
    %v297 = vld [vmem:[%s1 + $0x7e0] sm:$0xff]
    %v298 = vld [vmem:[%s1 + $0x7e8] sm:$0xff]
    %v299 = vld [vmem:[%s1 + $0x7f0] sm:$0xff]
    %v300 = vld [vmem:[%s1 + $0x7f8] sm:$0xff]
    %v301 = vld [vmem:[%s1 + $0x800] sm:$0xff]
    %v302 = vld [vmem:[%s1 + $0x808] sm:$0xff]
    %v303 = vld [vmem:[%s1 + $0x810] sm:$0xff]
    %v304 = vld [vmem:[%s1 + $0x818] sm:$0xff]
    %v305 = vld [vmem:[%s1 + $0x820] sm:$0xff]
    %v306 = vld [vmem:[%s1 + $0x828] sm:$0xff]
    %v307 = vld [vmem:[%s1 + $0x830] sm:$0xff]
    %v308 = vld [vmem:[%s1 + $0x838] sm:$0xff]
    %v309 = vld [vmem:[%s1 + $0x840] sm:$0xff]
    %v310 = vld [vmem:[%s1 + $0x848] sm:$0xff]
    %v311 = vld [vmem:[%s1 + $0x850] sm:$0xff]
    %v312 = vld [vmem:[%s1 + $0x858] sm:$0xff]
    %v313 = vld [vmem:[%s1 + $0x860] sm:$0xff]
    %v314 = vld [vmem:[%s1 + $0x868] sm:$0xff]
    %v315 = vld [vmem:[%s1 + $0x870] sm:$0xff]
    %v316 = vld [vmem:[%s1 + $0x878] sm:$0xff]
    %v317 = vld [vmem:[%s1 + $0x880] sm:$0xff]
    %v318 = vld [vmem:[%s1 + $0x888] sm:$0xff]
    %v319 = vld [vmem:[%s1 + $0x890] sm:$0xff]
    %v320 = vld [vmem:[%s1 + $0x898] sm:$0xff]
    %v321 = vld [vmem:[%s1 + $0x8a0] sm:$0xff]
    %v322 = vld [vmem:[%s1 + $0x8a8] sm:$0xff]
    %v323 = vld [vmem:[%s1 + $0x8b0] sm:$0xff]
    %v324 = vld [vmem:[%s1 + $0x8b8] sm:$0xff]
    %v325 = vld [vmem:[%s1 + $0x8c0] sm:$0xff]
    %v326 = vld [vmem:[%s1 + $0x8c8] sm:$0xff]
    %v327 = vld [vmem:[%s1 + $0x8d0] sm:$0xff]
    %v328 = vld [vmem:[%s1 + $0x8d8] sm:$0xff]
    %v329 = vld [vmem:[%s1 + $0x8e0] sm:$0xff]
    %v330 = vld [vmem:[%s1 + $0x8e8] sm:$0xff]
    %v331 = vld [vmem:[%s1 + $0x8f0] sm:$0xff]
    %v332 = vld [vmem:[%s1 + $0x8f8] sm:$0xff]
    %v333 = vld [vmem:[%s1 + $0x900] sm:$0xff]
    %v334 = vld [vmem:[%s1 + $0x908] sm:$0xff]
    %v335 = vld [vmem:[%s1 + $0x910] sm:$0xff]
    %v336 = vld [vmem:[%s1 + $0x918] sm:$0xff]
    %v337 = vld [vmem:[%s1 + $0x920] sm:$0xff]
    %v338 = vld [vmem:[%s1 + $0x928] sm:$0xff]
    %v339 = vld [vmem:[%s1 + $0x930] sm:$0xff]
    %v340 = vld [vmem:[%s1 + $0x938] sm:$0xff]
    %v341 = vld [vmem:[%s1 + $0x940] sm:$0xff]
    %v342 = vld [vmem:[%s1 + $0x948] sm:$0xff]
    %v343 = vld [vmem:[%s1 + $0x950] sm:$0xff]
    %v344 = vld [vmem:[%s1 + $0x958] sm:$0xff]
    %v345 = vld [vmem:[%s1 + $0x960] sm:$0xff]
    %v346 = vld [vmem:[%s1 + $0x968] sm:$0xff]
    %v347 = vld [vmem:[%s1 + $0x970] sm:$0xff]
    %v348 = vld [vmem:[%s1 + $0x978] sm:$0xff]
    %v349 = vld [vmem:[%s1 + $0x980] sm:$0xff]
    %v350 = vld [vmem:[%s1 + $0x988] sm:$0xff]
    %v351 = vld [vmem:[%s1 + $0x990] sm:$0xff]
    %v352 = vld [vmem:[%s1 + $0x998] sm:$0xff]
    %v353 = vld [vmem:[%s1 + $0x9a0] sm:$0xff]
    %v354 = vld [vmem:[%s1 + $0x9a8] sm:$0xff]
    %v355 = vld [vmem:[%s1 + $0x9b0] sm:$0xff]
    %v356 = vld [vmem:[%s1 + $0x9b8] sm:$0xff]
    %v357 = vld [vmem:[%s1 + $0x9c0] sm:$0xff]
    %v358 = vld [vmem:[%s1 + $0x9c8] sm:$0xff]
    %v359 = vld [vmem:[%s1 + $0x9d0] sm:$0xff]
    %v360 = vld [vmem:[%s1 + $0x9d8] sm:$0xff]
    %v361 = vld [vmem:[%s1 + $0x9e0] sm:$0xff]
    %v362 = vld [vmem:[%s1 + $0x9e8] sm:$0xff]
    %v363 = vld [vmem:[%s1 + $0x9f0] sm:$0xff]
    %v364 = vld [vmem:[%s1 + $0x9f8] sm:$0xff]
    %v365 = vld [vmem:[%s1 + $0xa00] sm:$0xff]
    %v366 = vld [vmem:[%s1 + $0xa08] sm:$0xff]
    %v367 = vld [vmem:[%s1 + $0xa10] sm:$0xff]
    %v368 = vld [vmem:[%s1 + $0xa18] sm:$0xff]
    %v369 = vld [vmem:[%s1 + $0xa20] sm:$0xff]
    %v370 = vld [vmem:[%s1 + $0xa28] sm:$0xff]
    %v371 = vld [vmem:[%s1 + $0xa30] sm:$0xff]
    %v372 = vld [vmem:[%s1 + $0xa38] sm:$0xff]
    %v373 = vld [vmem:[%s1 + $0xa40] sm:$0xff]
    %v374 = vld [vmem:[%s1 + $0xa48] sm:$0xff]
    %v375 = vld [vmem:[%s1 + $0xa50] sm:$0xff]
    %v376 = vld [vmem:[%s1 + $0xa58] sm:$0xff]
    %v377 = vld [vmem:[%s1 + $0xa60] sm:$0xff]
    %v378 = vld [vmem:[%s1 + $0xa68] sm:$0xff]
    %v379 = vld [vmem:[%s1 + $0xa70] sm:$0xff]
    %v380 = vld [vmem:[%s1 + $0xa78] sm:$0xff]
    %v381 = vld [vmem:[%s1 + $0xa80] sm:$0xff]
    %v382 = vld [vmem:[%s1 + $0xa88] sm:$0xff]
    %v383 = vld [vmem:[%s2] sm:$0x1]
    %v385 = vlaneseq
    %v386 = vshrl.u32 %v385, 7
    %v387 = vsub.s32 0, %v386
    %v388 = vrot.slane %v383, %v387
    %v396 = vcombine.high %v39, %v39
    %v398 = vunpack.c.l.s4 1983009808
    %v399 = vunpack.c.0.s8 %v398
    %v400 = vlaneseq
    %v401 = vshrl.u32 %v400, 7
    %v402 = vsub.s32 %v399, %v401
    %v403 = vrot.slane %v39, %v402
    %v405 = vunpack.c.l.s4 1983009808
    %v406 = vunpack.c.0.s8 %v405
    %v407 = vlaneseq
    %v408 = vshrl.u32 %v407, 7
    %v409 = vsub.s32 %v406, %v408
    %v410 = vrot.slane %v396, %v409
    %v411 = vcombine.high %v403, %v403
    %v412 = vcombine.high %v410, %v410
    %v413 = vcombine.high %v40, %v40
    %v415 = vunpack.c.l.s4 1983009808
    %v416 = vunpack.c.0.s8 %v415
    %v417 = vlaneseq
    %v418 = vshrl.u32 %v417, 7
    %v419 = vsub.s32 %v416, %v418
    %v420 = vrot.slane %v40, %v419
    %v422 = vunpack.c.l.s4 1983009808
    %v423 = vunpack.c.0.s8 %v422
    %v424 = vlaneseq
    %v425 = vshrl.u32 %v424, 7
    %v426 = vsub.s32 %v423, %v425
    %v427 = vrot.slane %v413, %v426
    %v428 = vcombine.high %v420, %v420
    %v429 = vcombine.high %v427, %v427
    %v430 = vcombine.high %v41, %v41
    %v432 = vunpack.c.l.s4 1983009808
    %v433 = vunpack.c.0.s8 %v432
    %v434 = vlaneseq
    %v435 = vshrl.u32 %v434, 7
    %v436 = vsub.s32 %v433, %v435
    %v437 = vrot.slane %v41, %v436
    %v439 = vunpack.c.l.s4 1983009808
    %v440 = vunpack.c.0.s8 %v439
    %v441 = vlaneseq
    %v442 = vshrl.u32 %v441, 7
    %v443 = vsub.s32 %v440, %v442
    %v444 = vrot.slane %v430, %v443
    %v445 = vcombine.high %v437, %v437
    %v446 = vcombine.high %v444, %v444
    %v447 = vcombine.high %v42, %v42
    %v449 = vunpack.c.l.s4 1983009808
    %v450 = vunpack.c.0.s8 %v449
    %v451 = vlaneseq
    %v452 = vshrl.u32 %v451, 7
    %v453 = vsub.s32 %v450, %v452
    %v454 = vrot.slane %v42, %v453
    %v456 = vunpack.c.l.s4 1983009808
    %v457 = vunpack.c.0.s8 %v456
    %v458 = vlaneseq
    %v459 = vshrl.u32 %v458, 7
    %v460 = vsub.s32 %v457, %v459
    %v461 = vrot.slane %v447, %v460
    %v462 = vcombine.high %v454, %v454
    %v463 = vcombine.high %v461, %v461
    %v464 = vcombine.high %v43, %v43
    %v466 = vunpack.c.l.s4 1983009808
    %v467 = vunpack.c.0.s8 %v466
    %v468 = vlaneseq
    %v469 = vshrl.u32 %v468, 7
    %v470 = vsub.s32 %v467, %v469
    %v471 = vrot.slane %v43, %v470
    %v473 = vunpack.c.l.s4 1983009808
    %v474 = vunpack.c.0.s8 %v473
    %v475 = vlaneseq
    %v476 = vshrl.u32 %v475, 7
    %v477 = vsub.s32 %v474, %v476
    %v478 = vrot.slane %v464, %v477
    %v479 = vcombine.high %v471, %v471
    %v480 = vcombine.high %v478, %v478
    %v482 = vunpack.c.l.s4 1983009808
    %v483 = vunpack.c.0.s8 %v482
    %v484 = vlaneseq
    %v485 = vshrl.u32 %v484, 7
    %v486 = vsub.s32 %v483, %v485
    %v487 = vrot.slane %v44, %v486
    %v488 = vcombine.high %v487, %v487
    %vm510 = vcmask 130048
    %v511 = vsel %vm510, %v488, 0
    %513 = vmatprep.subr.mxu0 0.0
    %514 = vmatpush1.msra.mxu0 %v60
    %515 = vmatprep.subr.mxu0 0.0
    %516 = vmatpush1.msra.mxu0 %v59
    %517 = vmatprep.subr.mxu0 0.0
    %518 = vmatpush1.msra.mxu0 %v58
    %519 = vmatprep.subr.mxu0 0.0
    %520 = vmatpush1.msra.mxu0 %v57
    %521 = vmatprep.subr.mxu0 0.0
    %522 = vmatpush1.msra.mxu0 %v56
    %523 = vmatprep.subr.mxu0 0.0
    %524 = vmatpush1.msra.mxu0 %v55
    %525 = vmatprep.subr.mxu0 0.0
    %526 = vmatpush1.msra.mxu0 %v54
    %527 = vmatprep.subr.mxu0 0.0
    %528 = vmatpush1.msra.mxu0 %v53
    %529 = vmatprep.subr.mxu0 0.0
    %530 = vmatpush1.msra.mxu0 %v52
    %531 = vmatprep.subr.mxu0 0.0
    %532 = vmatpush1.msra.mxu0 %v51
    %533 = vmatprep.subr.mxu0 0.0
    %534 = vmatpush1.msra.mxu0 %v50
    %535 = vmatprep.subr.mxu0 0.0
    %536 = vmatpush1.msra.mxu0 %v49
    %537 = vmatprep.subr.mxu0 0.0
    %538 = vmatpush1.msra.mxu0 %v48
    %539 = vmatprep.subr.mxu0 0.0
    %540 = vmatpush1.msra.mxu0 %v47
    %541 = vmatprep.subr.mxu0 0.0
    %542 = vmatpush1.msra.mxu0 %v46
    %543 = vmatprep.subr.mxu0 0.0
    %544 = vmatpush1.msra.mxu0 %v45
    %545 = vmatprep.subr.mxu0 0.0
    %546 = vmatpush2.msra.mxu0 %v76
    %547 = vmatprep.subr.mxu0 0.0
    %548 = vmatpush2.msra.mxu0 %v75
    %549 = vmatprep.subr.mxu0 0.0
    %550 = vmatpush2.msra.mxu0 %v74
    %551 = vmatprep.subr.mxu0 0.0
    %552 = vmatpush2.msra.mxu0 %v73
    %553 = vmatprep.subr.mxu0 0.0
    %554 = vmatpush2.msra.mxu0 %v72
    %555 = vmatprep.subr.mxu0 0.0
    %556 = vmatpush2.msra.mxu0 %v71
    %557 = vmatprep.subr.mxu0 0.0
    %558 = vmatpush2.msra.mxu0 %v70
    %559 = vmatprep.subr.mxu0 0.0
    %560 = vmatpush2.msra.mxu0 %v69
    %561 = vmatprep.subr.mxu0 0.0
    %562 = vmatpush2.msra.mxu0 %v68
    %563 = vmatprep.subr.mxu0 0.0
    %564 = vmatpush2.msra.mxu0 %v67
    %565 = vmatprep.subr.mxu0 0.0
    %566 = vmatpush2.msra.mxu0 %v66
    %567 = vmatprep.subr.mxu0 0.0
    %568 = vmatpush2.msra.mxu0 %v65
    %569 = vmatprep.subr.mxu0 0.0
    %570 = vmatpush2.msra.mxu0 %v64
    %571 = vmatprep.subr.mxu0 0.0
    %572 = vmatpush2.msra.mxu0 %v63
    %573 = vmatprep.subr.mxu0 0.0
    %574 = vmatpush2.msra.mxu0 %v62
    %575 = vmatprep.subr.mxu0 0.0
    %576 = vmatpush2.msra.mxu0 %v61
    %577 = vmatprep.mubr.f32.mxu0 %v411
    %578 = vmatmul.mubr.f32.gmra.mxu0 %v403
    %v579 = vpop.f32.mrf.mxu0
    %v580 = vadd.f32 %v388, %v579
    %v581 = vpop.f32.mrf.mxu0
    %582 = vdwg.mxu0
    %583 = vmatprep.subr.mxu0 0.0
    %584 = vmatpush1.msra.mxu0 %v92
    %585 = vmatprep.subr.mxu0 0.0
    %586 = vmatpush1.msra.mxu0 %v91
    %587 = vmatprep.subr.mxu0 0.0
    %588 = vmatpush1.msra.mxu0 %v90
    %589 = vmatprep.subr.mxu0 0.0
    %590 = vmatpush1.msra.mxu0 %v89
    %591 = vmatprep.subr.mxu0 0.0
    %592 = vmatpush1.msra.mxu0 %v88
    %593 = vmatprep.subr.mxu0 0.0
    %594 = vmatpush1.msra.mxu0 %v87
    %595 = vmatprep.subr.mxu0 0.0
    %596 = vmatpush1.msra.mxu0 %v86
    %597 = vmatprep.subr.mxu0 0.0
    %598 = vmatpush1.msra.mxu0 %v85
    %599 = vmatprep.subr.mxu0 0.0
    %600 = vmatpush1.msra.mxu0 %v84
    %601 = vmatprep.subr.mxu0 0.0
    %602 = vmatpush1.msra.mxu0 %v83
    %603 = vmatprep.subr.mxu0 0.0
    %604 = vmatpush1.msra.mxu0 %v82
    %605 = vmatprep.subr.mxu0 0.0
    %606 = vmatpush1.msra.mxu0 %v81
    %607 = vmatprep.subr.mxu0 0.0
    %608 = vmatpush1.msra.mxu0 %v80
    %609 = vmatprep.subr.mxu0 0.0
    %610 = vmatpush1.msra.mxu0 %v79
    %611 = vmatprep.subr.mxu0 0.0
    %612 = vmatpush1.msra.mxu0 %v78
    %613 = vmatprep.subr.mxu0 0.0
    %614 = vmatpush1.msra.mxu0 %v77
    %615 = vmatprep.subr.mxu0 0.0
    %616 = vmatpush2.msra.mxu0 %v108
    %617 = vmatprep.subr.mxu0 0.0
    %618 = vmatpush2.msra.mxu0 %v107
    %619 = vmatprep.subr.mxu0 0.0
    %620 = vmatpush2.msra.mxu0 %v106
    %621 = vmatprep.subr.mxu0 0.0
    %622 = vmatpush2.msra.mxu0 %v105
    %623 = vmatprep.subr.mxu0 0.0
    %624 = vmatpush2.msra.mxu0 %v104
    %625 = vmatprep.subr.mxu0 0.0
    %626 = vmatpush2.msra.mxu0 %v103
    %627 = vmatprep.subr.mxu0 0.0
    %628 = vmatpush2.msra.mxu0 %v102
    %629 = vmatprep.subr.mxu0 0.0
    %630 = vmatpush2.msra.mxu0 %v101
    %631 = vmatprep.subr.mxu0 0.0
    %632 = vmatpush2.msra.mxu0 %v100
    %633 = vmatprep.subr.mxu0 0.0
    %634 = vmatpush2.msra.mxu0 %v99
    %635 = vmatprep.subr.mxu0 0.0
    %636 = vmatpush2.msra.mxu0 %v98
    %637 = vmatprep.subr.mxu0 0.0
    %638 = vmatpush2.msra.mxu0 %v97
    %639 = vmatprep.subr.mxu0 0.0
    %640 = vmatpush2.msra.mxu0 %v96
    %641 = vmatprep.subr.mxu0 0.0
    %642 = vmatpush2.msra.mxu0 %v95
    %643 = vmatprep.subr.mxu0 0.0
    %644 = vmatpush2.msra.mxu0 %v94
    %645 = vmatprep.subr.mxu0 0.0
    %646 = vmatpush2.msra.mxu0 %v93
    %647 = vmatprep.mubr.f32.mxu0 %v412
    %648 = vmatmul.mubr.f32.gmra.mxu0 %v410
    %v649 = vpop.f32.mrf.mxu0
    %v650 = vadd.f32 %v580, %v649
    %v651 = vpop.f32.mrf.mxu0
    %652 = vdwg.mxu0
    %653 = vmatprep.subr.mxu0 0.0
    %654 = vmatpush1.msra.mxu0 %v124
    %655 = vmatprep.subr.mxu0 0.0
    %656 = vmatpush1.msra.mxu0 %v123
    %657 = vmatprep.subr.mxu0 0.0
    %658 = vmatpush1.msra.mxu0 %v122
    %659 = vmatprep.subr.mxu0 0.0
    %660 = vmatpush1.msra.mxu0 %v121
    %661 = vmatprep.subr.mxu0 0.0
    %662 = vmatpush1.msra.mxu0 %v120
    %663 = vmatprep.subr.mxu0 0.0
    %664 = vmatpush1.msra.mxu0 %v119
    %665 = vmatprep.subr.mxu0 0.0
    %666 = vmatpush1.msra.mxu0 %v118
    %667 = vmatprep.subr.mxu0 0.0
    %668 = vmatpush1.msra.mxu0 %v117
    %669 = vmatprep.subr.mxu0 0.0
    %670 = vmatpush1.msra.mxu0 %v116
    %671 = vmatprep.subr.mxu0 0.0
    %672 = vmatpush1.msra.mxu0 %v115
    %673 = vmatprep.subr.mxu0 0.0
    %674 = vmatpush1.msra.mxu0 %v114
    %675 = vmatprep.subr.mxu0 0.0
    %676 = vmatpush1.msra.mxu0 %v113
    %677 = vmatprep.subr.mxu0 0.0
    %678 = vmatpush1.msra.mxu0 %v112
    %679 = vmatprep.subr.mxu0 0.0
    %680 = vmatpush1.msra.mxu0 %v111
    %681 = vmatprep.subr.mxu0 0.0
    %682 = vmatpush1.msra.mxu0 %v110
    %683 = vmatprep.subr.mxu0 0.0
    %684 = vmatpush1.msra.mxu0 %v109
    %685 = vmatprep.subr.mxu0 0.0
    %686 = vmatpush2.msra.mxu0 %v140
    %687 = vmatprep.subr.mxu0 0.0
    %688 = vmatpush2.msra.mxu0 %v139
    %689 = vmatprep.subr.mxu0 0.0
    %690 = vmatpush2.msra.mxu0 %v138
    %691 = vmatprep.subr.mxu0 0.0
    %692 = vmatpush2.msra.mxu0 %v137
    %693 = vmatprep.subr.mxu0 0.0
    %694 = vmatpush2.msra.mxu0 %v136
    %695 = vmatprep.subr.mxu0 0.0
    %696 = vmatpush2.msra.mxu0 %v135
    %697 = vmatprep.subr.mxu0 0.0
    %698 = vmatpush2.msra.mxu0 %v134
    %699 = vmatprep.subr.mxu0 0.0
    %700 = vmatpush2.msra.mxu0 %v133
    %701 = vmatprep.subr.mxu0 0.0
    %702 = vmatpush2.msra.mxu0 %v132
    %703 = vmatprep.subr.mxu0 0.0
    %704 = vmatpush2.msra.mxu0 %v131
    %705 = vmatprep.subr.mxu0 0.0
    %706 = vmatpush2.msra.mxu0 %v130
    %707 = vmatprep.subr.mxu0 0.0
    %708 = vmatpush2.msra.mxu0 %v129
    %709 = vmatprep.subr.mxu0 0.0
    %710 = vmatpush2.msra.mxu0 %v128
    %711 = vmatprep.subr.mxu0 0.0
    %712 = vmatpush2.msra.mxu0 %v127
    %713 = vmatprep.subr.mxu0 0.0
    %714 = vmatpush2.msra.mxu0 %v126
    %715 = vmatprep.subr.mxu0 0.0
    %716 = vmatpush2.msra.mxu0 %v125
    %717 = vmatprep.mubr.f32.mxu0 %v428
    %718 = vmatmul.mubr.f32.gmra.mxu0 %v420
    %v719 = vpop.f32.mrf.mxu0
    %v720 = vadd.f32 %v650, %v719
    %v721 = vpop.f32.mrf.mxu0
    %722 = vdwg.mxu0
    %723 = vmatprep.subr.mxu0 0.0
    %724 = vmatpush1.msra.mxu0 %v156
    %725 = vmatprep.subr.mxu0 0.0
    %726 = vmatpush1.msra.mxu0 %v155
    %727 = vmatprep.subr.mxu0 0.0
    %728 = vmatpush1.msra.mxu0 %v154
    %729 = vmatprep.subr.mxu0 0.0
    %730 = vmatpush1.msra.mxu0 %v153
    %731 = vmatprep.subr.mxu0 0.0
    %732 = vmatpush1.msra.mxu0 %v152
    %733 = vmatprep.subr.mxu0 0.0
    %734 = vmatpush1.msra.mxu0 %v151
    %735 = vmatprep.subr.mxu0 0.0
    %736 = vmatpush1.msra.mxu0 %v150
    %737 = vmatprep.subr.mxu0 0.0
    %738 = vmatpush1.msra.mxu0 %v149
    %739 = vmatprep.subr.mxu0 0.0
    %740 = vmatpush1.msra.mxu0 %v148
    %741 = vmatprep.subr.mxu0 0.0
    %742 = vmatpush1.msra.mxu0 %v147
    %743 = vmatprep.subr.mxu0 0.0
    %744 = vmatpush1.msra.mxu0 %v146
    %745 = vmatprep.subr.mxu0 0.0
    %746 = vmatpush1.msra.mxu0 %v145
    %747 = vmatprep.subr.mxu0 0.0
    %748 = vmatpush1.msra.mxu0 %v144
    %749 = vmatprep.subr.mxu0 0.0
    %750 = vmatpush1.msra.mxu0 %v143
    %751 = vmatprep.subr.mxu0 0.0
    %752 = vmatpush1.msra.mxu0 %v142
    %753 = vmatprep.subr.mxu0 0.0
    %754 = vmatpush1.msra.mxu0 %v141
    %755 = vmatprep.subr.mxu0 0.0
    %756 = vmatpush2.msra.mxu0 %v172
    %757 = vmatprep.subr.mxu0 0.0
    %758 = vmatpush2.msra.mxu0 %v171
    %759 = vmatprep.subr.mxu0 0.0
    %760 = vmatpush2.msra.mxu0 %v170
    %761 = vmatprep.subr.mxu0 0.0
    %762 = vmatpush2.msra.mxu0 %v169
    %763 = vmatprep.subr.mxu0 0.0
    %764 = vmatpush2.msra.mxu0 %v168
    %765 = vmatprep.subr.mxu0 0.0
    %766 = vmatpush2.msra.mxu0 %v167
    %767 = vmatprep.subr.mxu0 0.0
    %768 = vmatpush2.msra.mxu0 %v166
    %769 = vmatprep.subr.mxu0 0.0
    %770 = vmatpush2.msra.mxu0 %v165
    %771 = vmatprep.subr.mxu0 0.0
    %772 = vmatpush2.msra.mxu0 %v164
    %773 = vmatprep.subr.mxu0 0.0
    %774 = vmatpush2.msra.mxu0 %v163
    %775 = vmatprep.subr.mxu0 0.0
    %776 = vmatpush2.msra.mxu0 %v162
    %777 = vmatprep.subr.mxu0 0.0
    %778 = vmatpush2.msra.mxu0 %v161
    %779 = vmatprep.subr.mxu0 0.0
    %780 = vmatpush2.msra.mxu0 %v160
    %781 = vmatprep.subr.mxu0 0.0
    %782 = vmatpush2.msra.mxu0 %v159
    %783 = vmatprep.subr.mxu0 0.0
    %784 = vmatpush2.msra.mxu0 %v158
    %785 = vmatprep.subr.mxu0 0.0
    %786 = vmatpush2.msra.mxu0 %v157
    %787 = vmatprep.mubr.f32.mxu0 %v429
    %788 = vmatmul.mubr.f32.gmra.mxu0 %v427
    %v789 = vpop.f32.mrf.mxu0
    %v790 = vadd.f32 %v720, %v789
    %v791 = vpop.f32.mrf.mxu0
    %792 = vdwg.mxu0
    %793 = vmatprep.subr.mxu0 0.0
    %794 = vmatpush1.msra.mxu0 %v188
    %795 = vmatprep.subr.mxu0 0.0
    %796 = vmatpush1.msra.mxu0 %v187
    %797 = vmatprep.subr.mxu0 0.0
    %798 = vmatpush1.msra.mxu0 %v186
    %799 = vmatprep.subr.mxu0 0.0
    %800 = vmatpush1.msra.mxu0 %v185
    %801 = vmatprep.subr.mxu0 0.0
    %802 = vmatpush1.msra.mxu0 %v184
    %803 = vmatprep.subr.mxu0 0.0
    %804 = vmatpush1.msra.mxu0 %v183
    %805 = vmatprep.subr.mxu0 0.0
    %806 = vmatpush1.msra.mxu0 %v182
    %807 = vmatprep.subr.mxu0 0.0
    %808 = vmatpush1.msra.mxu0 %v181
    %809 = vmatprep.subr.mxu0 0.0
    %810 = vmatpush1.msra.mxu0 %v180
    %811 = vmatprep.subr.mxu0 0.0
    %812 = vmatpush1.msra.mxu0 %v179
    %813 = vmatprep.subr.mxu0 0.0
    %814 = vmatpush1.msra.mxu0 %v178
    %815 = vmatprep.subr.mxu0 0.0
    %816 = vmatpush1.msra.mxu0 %v177
    %817 = vmatprep.subr.mxu0 0.0
    %818 = vmatpush1.msra.mxu0 %v176
    %819 = vmatprep.subr.mxu0 0.0
    %820 = vmatpush1.msra.mxu0 %v175
    %821 = vmatprep.subr.mxu0 0.0
    %822 = vmatpush1.msra.mxu0 %v174
    %823 = vmatprep.subr.mxu0 0.0
    %824 = vmatpush1.msra.mxu0 %v173
    %825 = vmatprep.subr.mxu0 0.0
    %826 = vmatpush2.msra.mxu0 %v204
    %827 = vmatprep.subr.mxu0 0.0
    %828 = vmatpush2.msra.mxu0 %v203
    %829 = vmatprep.subr.mxu0 0.0
    %830 = vmatpush2.msra.mxu0 %v202
    %831 = vmatprep.subr.mxu0 0.0
    %832 = vmatpush2.msra.mxu0 %v201
    %833 = vmatprep.subr.mxu0 0.0
    %834 = vmatpush2.msra.mxu0 %v200
    %835 = vmatprep.subr.mxu0 0.0
    %836 = vmatpush2.msra.mxu0 %v199
    %837 = vmatprep.subr.mxu0 0.0
    %838 = vmatpush2.msra.mxu0 %v198
    %839 = vmatprep.subr.mxu0 0.0
    %840 = vmatpush2.msra.mxu0 %v197
    %841 = vmatprep.subr.mxu0 0.0
    %842 = vmatpush2.msra.mxu0 %v196
    %843 = vmatprep.subr.mxu0 0.0
    %844 = vmatpush2.msra.mxu0 %v195
    %845 = vmatprep.subr.mxu0 0.0
    %846 = vmatpush2.msra.mxu0 %v194
    %847 = vmatprep.subr.mxu0 0.0
    %848 = vmatpush2.msra.mxu0 %v193
    %849 = vmatprep.subr.mxu0 0.0
    %850 = vmatpush2.msra.mxu0 %v192
    %851 = vmatprep.subr.mxu0 0.0
    %852 = vmatpush2.msra.mxu0 %v191
    %853 = vmatprep.subr.mxu0 0.0
    %854 = vmatpush2.msra.mxu0 %v190
    %855 = vmatprep.subr.mxu0 0.0
    %856 = vmatpush2.msra.mxu0 %v189
    %857 = vmatprep.mubr.f32.mxu0 %v445
    %858 = vmatmul.mubr.f32.gmra.mxu0 %v437
    %v859 = vpop.f32.mrf.mxu0
    %v860 = vadd.f32 %v790, %v859
    %v861 = vpop.f32.mrf.mxu0
    %862 = vdwg.mxu0
    %863 = vmatprep.subr.mxu0 0.0
    %864 = vmatpush1.msra.mxu0 %v220
    %865 = vmatprep.subr.mxu0 0.0
    %866 = vmatpush1.msra.mxu0 %v219
    %867 = vmatprep.subr.mxu0 0.0
    %868 = vmatpush1.msra.mxu0 %v218
    %869 = vmatprep.subr.mxu0 0.0
    %870 = vmatpush1.msra.mxu0 %v217
    %871 = vmatprep.subr.mxu0 0.0
    %872 = vmatpush1.msra.mxu0 %v216
    %873 = vmatprep.subr.mxu0 0.0
    %874 = vmatpush1.msra.mxu0 %v215
    %875 = vmatprep.subr.mxu0 0.0
    %876 = vmatpush1.msra.mxu0 %v214
    %877 = vmatprep.subr.mxu0 0.0
    %878 = vmatpush1.msra.mxu0 %v213
    %879 = vmatprep.subr.mxu0 0.0
    %880 = vmatpush1.msra.mxu0 %v212
    %881 = vmatprep.subr.mxu0 0.0
    %882 = vmatpush1.msra.mxu0 %v211
    %883 = vmatprep.subr.mxu0 0.0
    %884 = vmatpush1.msra.mxu0 %v210
    %885 = vmatprep.subr.mxu0 0.0
    %886 = vmatpush1.msra.mxu0 %v209
    %887 = vmatprep.subr.mxu0 0.0
    %888 = vmatpush1.msra.mxu0 %v208
    %889 = vmatprep.subr.mxu0 0.0
    %890 = vmatpush1.msra.mxu0 %v207
    %891 = vmatprep.subr.mxu0 0.0
    %892 = vmatpush1.msra.mxu0 %v206
    %893 = vmatprep.subr.mxu0 0.0
    %894 = vmatpush1.msra.mxu0 %v205
    %895 = vmatprep.subr.mxu0 0.0
    %896 = vmatpush2.msra.mxu0 %v236
    %897 = vmatprep.subr.mxu0 0.0
    %898 = vmatpush2.msra.mxu0 %v235
    %899 = vmatprep.subr.mxu0 0.0
    %900 = vmatpush2.msra.mxu0 %v234
    %901 = vmatprep.subr.mxu0 0.0
    %902 = vmatpush2.msra.mxu0 %v233
    %903 = vmatprep.subr.mxu0 0.0
    %904 = vmatpush2.msra.mxu0 %v232
    %905 = vmatprep.subr.mxu0 0.0
    %906 = vmatpush2.msra.mxu0 %v231
    %907 = vmatprep.subr.mxu0 0.0
    %908 = vmatpush2.msra.mxu0 %v230
    %909 = vmatprep.subr.mxu0 0.0
    %910 = vmatpush2.msra.mxu0 %v229
    %911 = vmatprep.subr.mxu0 0.0
    %912 = vmatpush2.msra.mxu0 %v228
    %913 = vmatprep.subr.mxu0 0.0
    %914 = vmatpush2.msra.mxu0 %v227
    %915 = vmatprep.subr.mxu0 0.0
    %916 = vmatpush2.msra.mxu0 %v226
    %917 = vmatprep.subr.mxu0 0.0
    %918 = vmatpush2.msra.mxu0 %v225
    %919 = vmatprep.subr.mxu0 0.0
    %920 = vmatpush2.msra.mxu0 %v224
    %921 = vmatprep.subr.mxu0 0.0
    %922 = vmatpush2.msra.mxu0 %v223
    %923 = vmatprep.subr.mxu0 0.0
    %924 = vmatpush2.msra.mxu0 %v222
    %925 = vmatprep.subr.mxu0 0.0
    %926 = vmatpush2.msra.mxu0 %v221
    %927 = vmatprep.mubr.f32.mxu0 %v446
    %928 = vmatmul.mubr.f32.gmra.mxu0 %v444
    %v929 = vpop.f32.mrf.mxu0
    %v930 = vadd.f32 %v860, %v929
    %v931 = vpop.f32.mrf.mxu0
    %932 = vdwg.mxu0
    %933 = vmatprep.subr.mxu0 0.0
    %934 = vmatpush1.msra.mxu0 %v252
    %935 = vmatprep.subr.mxu0 0.0
    %936 = vmatpush1.msra.mxu0 %v251
    %937 = vmatprep.subr.mxu0 0.0
    %938 = vmatpush1.msra.mxu0 %v250
    %939 = vmatprep.subr.mxu0 0.0
    %940 = vmatpush1.msra.mxu0 %v249
    %941 = vmatprep.subr.mxu0 0.0
    %942 = vmatpush1.msra.mxu0 %v248
    %943 = vmatprep.subr.mxu0 0.0
    %944 = vmatpush1.msra.mxu0 %v247
    %945 = vmatprep.subr.mxu0 0.0
    %946 = vmatpush1.msra.mxu0 %v246
    %947 = vmatprep.subr.mxu0 0.0
    %948 = vmatpush1.msra.mxu0 %v245
    %949 = vmatprep.subr.mxu0 0.0
    %950 = vmatpush1.msra.mxu0 %v244
    %951 = vmatprep.subr.mxu0 0.0
    %952 = vmatpush1.msra.mxu0 %v243
    %953 = vmatprep.subr.mxu0 0.0
    %954 = vmatpush1.msra.mxu0 %v242
    %955 = vmatprep.subr.mxu0 0.0
    %956 = vmatpush1.msra.mxu0 %v241
    %957 = vmatprep.subr.mxu0 0.0
    %958 = vmatpush1.msra.mxu0 %v240
    %959 = vmatprep.subr.mxu0 0.0
    %960 = vmatpush1.msra.mxu0 %v239
    %961 = vmatprep.subr.mxu0 0.0
    %962 = vmatpush1.msra.mxu0 %v238
    %963 = vmatprep.subr.mxu0 0.0
    %964 = vmatpush1.msra.mxu0 %v237
    %965 = vmatprep.subr.mxu0 0.0
    %966 = vmatpush2.msra.mxu0 %v268
    %967 = vmatprep.subr.mxu0 0.0
    %968 = vmatpush2.msra.mxu0 %v267
    %969 = vmatprep.subr.mxu0 0.0
    %970 = vmatpush2.msra.mxu0 %v266
    %971 = vmatprep.subr.mxu0 0.0
    %972 = vmatpush2.msra.mxu0 %v265
    %973 = vmatprep.subr.mxu0 0.0
    %974 = vmatpush2.msra.mxu0 %v264
    %975 = vmatprep.subr.mxu0 0.0
    %976 = vmatpush2.msra.mxu0 %v263
    %977 = vmatprep.subr.mxu0 0.0
    %978 = vmatpush2.msra.mxu0 %v262
    %979 = vmatprep.subr.mxu0 0.0
    %980 = vmatpush2.msra.mxu0 %v261
    %981 = vmatprep.subr.mxu0 0.0
    %982 = vmatpush2.msra.mxu0 %v260
    %983 = vmatprep.subr.mxu0 0.0
    %984 = vmatpush2.msra.mxu0 %v259
    %985 = vmatprep.subr.mxu0 0.0
    %986 = vmatpush2.msra.mxu0 %v258
    %987 = vmatprep.subr.mxu0 0.0
    %988 = vmatpush2.msra.mxu0 %v257
    %989 = vmatprep.subr.mxu0 0.0
    %990 = vmatpush2.msra.mxu0 %v256
    %991 = vmatprep.subr.mxu0 0.0
    %992 = vmatpush2.msra.mxu0 %v255
    %993 = vmatprep.subr.mxu0 0.0
    %994 = vmatpush2.msra.mxu0 %v254
    %995 = vmatprep.subr.mxu0 0.0
    %996 = vmatpush2.msra.mxu0 %v253
    %997 = vmatprep.mubr.f32.mxu0 %v462
    %998 = vmatmul.mubr.f32.gmra.mxu0 %v454
    %v999 = vpop.f32.mrf.mxu0
    %v1000 = vadd.f32 %v930, %v999
    %v1001 = vpop.f32.mrf.mxu0
    %1002 = vdwg.mxu0
    %1003 = vmatprep.subr.mxu0 0.0
    %1004 = vmatpush1.msra.mxu0 %v284
    %1005 = vmatprep.subr.mxu0 0.0
    %1006 = vmatpush1.msra.mxu0 %v283
    %1007 = vmatprep.subr.mxu0 0.0
    %1008 = vmatpush1.msra.mxu0 %v282
    %1009 = vmatprep.subr.mxu0 0.0
    %1010 = vmatpush1.msra.mxu0 %v281
    %1011 = vmatprep.subr.mxu0 0.0
    %1012 = vmatpush1.msra.mxu0 %v280
    %1013 = vmatprep.subr.mxu0 0.0
    %1014 = vmatpush1.msra.mxu0 %v279
    %1015 = vmatprep.subr.mxu0 0.0
    %1016 = vmatpush1.msra.mxu0 %v278
    %1017 = vmatprep.subr.mxu0 0.0
    %1018 = vmatpush1.msra.mxu0 %v277
    %1019 = vmatprep.subr.mxu0 0.0
    %1020 = vmatpush1.msra.mxu0 %v276
    %1021 = vmatprep.subr.mxu0 0.0
    %1022 = vmatpush1.msra.mxu0 %v275
    %1023 = vmatprep.subr.mxu0 0.0
    %1024 = vmatpush1.msra.mxu0 %v274
    %1025 = vmatprep.subr.mxu0 0.0
    %1026 = vmatpush1.msra.mxu0 %v273
    %1027 = vmatprep.subr.mxu0 0.0
    %1028 = vmatpush1.msra.mxu0 %v272
    %1029 = vmatprep.subr.mxu0 0.0
    %1030 = vmatpush1.msra.mxu0 %v271
    %1031 = vmatprep.subr.mxu0 0.0
    %1032 = vmatpush1.msra.mxu0 %v270
    %1033 = vmatprep.subr.mxu0 0.0
    %1034 = vmatpush1.msra.mxu0 %v269
    %1035 = vmatprep.subr.mxu0 0.0
    %1036 = vmatpush2.msra.mxu0 %v300
    %1037 = vmatprep.subr.mxu0 0.0
    %1038 = vmatpush2.msra.mxu0 %v299
    %1039 = vmatprep.subr.mxu0 0.0
    %1040 = vmatpush2.msra.mxu0 %v298
    %1041 = vmatprep.subr.mxu0 0.0
    %1042 = vmatpush2.msra.mxu0 %v297
    %1043 = vmatprep.subr.mxu0 0.0
    %1044 = vmatpush2.msra.mxu0 %v296
    %1045 = vmatprep.subr.mxu0 0.0
    %1046 = vmatpush2.msra.mxu0 %v295
    %1047 = vmatprep.subr.mxu0 0.0
    %1048 = vmatpush2.msra.mxu0 %v294
    %1049 = vmatprep.subr.mxu0 0.0
    %1050 = vmatpush2.msra.mxu0 %v293
    %1051 = vmatprep.subr.mxu0 0.0
    %1052 = vmatpush2.msra.mxu0 %v292
    %1053 = vmatprep.subr.mxu0 0.0
    %1054 = vmatpush2.msra.mxu0 %v291
    %1055 = vmatprep.subr.mxu0 0.0
    %1056 = vmatpush2.msra.mxu0 %v290
    %1057 = vmatprep.subr.mxu0 0.0
    %1058 = vmatpush2.msra.mxu0 %v289
    %1059 = vmatprep.subr.mxu0 0.0
    %1060 = vmatpush2.msra.mxu0 %v288
    %1061 = vmatprep.subr.mxu0 0.0
    %1062 = vmatpush2.msra.mxu0 %v287
    %1063 = vmatprep.subr.mxu0 0.0
    %1064 = vmatpush2.msra.mxu0 %v286
    %1065 = vmatprep.subr.mxu0 0.0
    %1066 = vmatpush2.msra.mxu0 %v285
    %1067 = vmatprep.mubr.f32.mxu0 %v463
    %1068 = vmatmul.mubr.f32.gmra.mxu0 %v461
    %v1069 = vpop.f32.mrf.mxu0
    %v1070 = vadd.f32 %v1000, %v1069
    %v1071 = vpop.f32.mrf.mxu0
    %1072 = vdwg.mxu0
    %1073 = vmatprep.subr.mxu0 0.0
    %1074 = vmatpush1.msra.mxu0 %v316
    %1075 = vmatprep.subr.mxu0 0.0
    %1076 = vmatpush1.msra.mxu0 %v315
    %1077 = vmatprep.subr.mxu0 0.0
    %1078 = vmatpush1.msra.mxu0 %v314
    %1079 = vmatprep.subr.mxu0 0.0
    %1080 = vmatpush1.msra.mxu0 %v313
    %1081 = vmatprep.subr.mxu0 0.0
    %1082 = vmatpush1.msra.mxu0 %v312
    %1083 = vmatprep.subr.mxu0 0.0
    %1084 = vmatpush1.msra.mxu0 %v311
    %1085 = vmatprep.subr.mxu0 0.0
    %1086 = vmatpush1.msra.mxu0 %v310
    %1087 = vmatprep.subr.mxu0 0.0
    %1088 = vmatpush1.msra.mxu0 %v309
    %1089 = vmatprep.subr.mxu0 0.0
    %1090 = vmatpush1.msra.mxu0 %v308
    %1091 = vmatprep.subr.mxu0 0.0
    %1092 = vmatpush1.msra.mxu0 %v307
    %1093 = vmatprep.subr.mxu0 0.0
    %1094 = vmatpush1.msra.mxu0 %v306
    %1095 = vmatprep.subr.mxu0 0.0
    %1096 = vmatpush1.msra.mxu0 %v305
    %1097 = vmatprep.subr.mxu0 0.0
    %1098 = vmatpush1.msra.mxu0 %v304
    %1099 = vmatprep.subr.mxu0 0.0
    %1100 = vmatpush1.msra.mxu0 %v303
    %1101 = vmatprep.subr.mxu0 0.0
    %1102 = vmatpush1.msra.mxu0 %v302
    %1103 = vmatprep.subr.mxu0 0.0
    %1104 = vmatpush1.msra.mxu0 %v301
    %1105 = vmatprep.subr.mxu0 0.0
    %1106 = vmatpush2.msra.mxu0 %v332
    %1107 = vmatprep.subr.mxu0 0.0
    %1108 = vmatpush2.msra.mxu0 %v331
    %1109 = vmatprep.subr.mxu0 0.0
    %1110 = vmatpush2.msra.mxu0 %v330
    %1111 = vmatprep.subr.mxu0 0.0
    %1112 = vmatpush2.msra.mxu0 %v329
    %1113 = vmatprep.subr.mxu0 0.0
    %1114 = vmatpush2.msra.mxu0 %v328
    %1115 = vmatprep.subr.mxu0 0.0
    %1116 = vmatpush2.msra.mxu0 %v327
    %1117 = vmatprep.subr.mxu0 0.0
    %1118 = vmatpush2.msra.mxu0 %v326
    %1119 = vmatprep.subr.mxu0 0.0
    %1120 = vmatpush2.msra.mxu0 %v325
    %1121 = vmatprep.subr.mxu0 0.0
    %1122 = vmatpush2.msra.mxu0 %v324
    %1123 = vmatprep.subr.mxu0 0.0
    %1124 = vmatpush2.msra.mxu0 %v323
    %1125 = vmatprep.subr.mxu0 0.0
    %1126 = vmatpush2.msra.mxu0 %v322
    %1127 = vmatprep.subr.mxu0 0.0
    %1128 = vmatpush2.msra.mxu0 %v321
    %1129 = vmatprep.subr.mxu0 0.0
    %1130 = vmatpush2.msra.mxu0 %v320
    %1131 = vmatprep.subr.mxu0 0.0
    %1132 = vmatpush2.msra.mxu0 %v319
    %1133 = vmatprep.subr.mxu0 0.0
    %1134 = vmatpush2.msra.mxu0 %v318
    %1135 = vmatprep.subr.mxu0 0.0
    %1136 = vmatpush2.msra.mxu0 %v317
    %1137 = vmatprep.mubr.f32.mxu0 %v479
    %1138 = vmatmul.mubr.f32.gmra.mxu0 %v471
    %v1139 = vpop.f32.mrf.mxu0
    %v1140 = vadd.f32 %v1070, %v1139
    %v1141 = vpop.f32.mrf.mxu0
    %1142 = vdwg.mxu0
    %1143 = vmatprep.subr.mxu0 0.0
    %1144 = vmatpush1.msra.mxu0 %v348
    %1145 = vmatprep.subr.mxu0 0.0
    %1146 = vmatpush1.msra.mxu0 %v347
    %1147 = vmatprep.subr.mxu0 0.0
    %1148 = vmatpush1.msra.mxu0 %v346
    %1149 = vmatprep.subr.mxu0 0.0
    %1150 = vmatpush1.msra.mxu0 %v345
    %1151 = vmatprep.subr.mxu0 0.0
    %1152 = vmatpush1.msra.mxu0 %v344
    %1153 = vmatprep.subr.mxu0 0.0
    %1154 = vmatpush1.msra.mxu0 %v343
    %1155 = vmatprep.subr.mxu0 0.0
    %1156 = vmatpush1.msra.mxu0 %v342
    %1157 = vmatprep.subr.mxu0 0.0
    %1158 = vmatpush1.msra.mxu0 %v341
    %1159 = vmatprep.subr.mxu0 0.0
    %1160 = vmatpush1.msra.mxu0 %v340
    %1161 = vmatprep.subr.mxu0 0.0
    %1162 = vmatpush1.msra.mxu0 %v339
    %1163 = vmatprep.subr.mxu0 0.0
    %1164 = vmatpush1.msra.mxu0 %v338
    %1165 = vmatprep.subr.mxu0 0.0
    %1166 = vmatpush1.msra.mxu0 %v337
    %1167 = vmatprep.subr.mxu0 0.0
    %1168 = vmatpush1.msra.mxu0 %v336
    %1169 = vmatprep.subr.mxu0 0.0
    %1170 = vmatpush1.msra.mxu0 %v335
    %1171 = vmatprep.subr.mxu0 0.0
    %1172 = vmatpush1.msra.mxu0 %v334
    %1173 = vmatprep.subr.mxu0 0.0
    %1174 = vmatpush1.msra.mxu0 %v333
    %1175 = vmatprep.subr.mxu0 0.0
    %1176 = vmatpush2.msra.mxu0 %v364
    %1177 = vmatprep.subr.mxu0 0.0
    %1178 = vmatpush2.msra.mxu0 %v363
    %1179 = vmatprep.subr.mxu0 0.0
    %1180 = vmatpush2.msra.mxu0 %v362
    %1181 = vmatprep.subr.mxu0 0.0
    %1182 = vmatpush2.msra.mxu0 %v361
    %1183 = vmatprep.subr.mxu0 0.0
    %1184 = vmatpush2.msra.mxu0 %v360
    %1185 = vmatprep.subr.mxu0 0.0
    %1186 = vmatpush2.msra.mxu0 %v359
    %1187 = vmatprep.subr.mxu0 0.0
    %1188 = vmatpush2.msra.mxu0 %v358
    %1189 = vmatprep.subr.mxu0 0.0
    %1190 = vmatpush2.msra.mxu0 %v357
    %1191 = vmatprep.subr.mxu0 0.0
    %1192 = vmatpush2.msra.mxu0 %v356
    %1193 = vmatprep.subr.mxu0 0.0
    %1194 = vmatpush2.msra.mxu0 %v355
    %1195 = vmatprep.subr.mxu0 0.0
    %1196 = vmatpush2.msra.mxu0 %v354
    %1197 = vmatprep.subr.mxu0 0.0
    %1198 = vmatpush2.msra.mxu0 %v353
    %1199 = vmatprep.subr.mxu0 0.0
    %1200 = vmatpush2.msra.mxu0 %v352
    %1201 = vmatprep.subr.mxu0 0.0
    %1202 = vmatpush2.msra.mxu0 %v351
    %1203 = vmatprep.subr.mxu0 0.0
    %1204 = vmatpush2.msra.mxu0 %v350
    %1205 = vmatprep.subr.mxu0 0.0
    %1206 = vmatpush2.msra.mxu0 %v349
    %1207 = vmatprep.mubr.f32.mxu0 %v480
    %1208 = vmatmul.mubr.f32.gmra.mxu0 %v478
    %v1209 = vpop.f32.mrf.mxu0
    %v1210 = vadd.f32 %v1140, %v1209
    %v1211 = vpop.f32.mrf.mxu0
    %1212 = vdwg.mxu0
    %1213 = vmatprep.subr.mxu0 0.0
    %1214 = vmatpush1.msra.mxu0 %v380
    %1215 = vmatprep.subr.mxu0 0.0
    %1216 = vmatpush1.msra.mxu0 %v379
    %1217 = vmatprep.subr.mxu0 0.0
    %1218 = vmatpush1.msra.mxu0 %v378
    %1219 = vmatprep.subr.mxu0 0.0
    %1220 = vmatpush1.msra.mxu0 %v377
    %1221 = vmatprep.subr.mxu0 0.0
    %1222 = vmatpush1.msra.mxu0 %v376
    %1223 = vmatprep.subr.mxu0 0.0
    %1224 = vmatpush1.msra.mxu0 %v375
    %1225 = vmatprep.subr.mxu0 0.0
    %1226 = vmatpush1.msra.mxu0 %v374
    %1227 = vmatprep.subr.mxu0 0.0
    %1228 = vmatpush1.msra.mxu0 %v373
    %1229 = vmatprep.subr.mxu0 0.0
    %1230 = vmatpush1.msra.mxu0 %v372
    %1231 = vmatprep.subr.mxu0 0.0
    %1232 = vmatpush1.msra.mxu0 %v371
    %1233 = vmatprep.subr.mxu0 0.0
    %1234 = vmatpush1.msra.mxu0 %v370
    %1235 = vmatprep.subr.mxu0 0.0
    %1236 = vmatpush1.msra.mxu0 %v369
    %1237 = vmatprep.subr.mxu0 0.0
    %1238 = vmatpush1.msra.mxu0 %v368
    %1239 = vmatprep.subr.mxu0 0.0
    %1240 = vmatpush1.msra.mxu0 %v367
    %1241 = vmatprep.subr.mxu0 0.0
    %1242 = vmatpush1.msra.mxu0 %v366
    %1243 = vmatprep.subr.mxu0 0.0
    %1244 = vmatpush1.msra.mxu0 %v365
    %1245 = vmatprep.subr.mxu0 0.0
    %1246 = vmatpush2.msra.mxu0 0.0
    %1247 = vmatprep.subr.mxu0 0.0
    %1248 = vmatpush2.msra.mxu0 0.0
    %1249 = vmatprep.subr.mxu0 0.0
    %1250 = vmatpush2.msra.mxu0 0.0
    %1251 = vmatprep.subr.mxu0 0.0
    %1252 = vmatpush2.msra.mxu0 0.0
    %1253 = vmatprep.subr.mxu0 0.0
    %1254 = vmatpush2.msra.mxu0 0.0
    %1255 = vmatprep.subr.mxu0 0.0
    %1256 = vmatpush2.msra.mxu0 0.0
    %1257 = vmatprep.subr.mxu0 0.0
    %1258 = vmatpush2.msra.mxu0 0.0
    %1259 = vmatprep.subr.mxu0 0.0
    %1260 = vmatpush2.msra.mxu0 0.0
    %1261 = vmatprep.subr.mxu0 0.0
    %1262 = vmatpush2.msra.mxu0 0.0
    %1263 = vmatprep.subr.mxu0 0.0
    %1264 = vmatpush2.msra.mxu0 0.0
    %1265 = vmatprep.subr.mxu0 0.0
    %1266 = vmatpush2.msra.mxu0 0.0
    %1267 = vmatprep.subr.mxu0 0.0
    %1268 = vmatpush2.msra.mxu0 0.0
    %1269 = vmatprep.subr.mxu0 0.0
    %1270 = vmatpush2.msra.mxu0 0.0
    %1271 = vmatprep.subr.mxu0 0.0
    %1272 = vmatpush2.msra.mxu0 0.0
    %1273 = vmatprep.subr.mxu0 0.0
    %1274 = vmatpush2.msra.mxu0 %v382
    %1275 = vmatprep.subr.mxu0 0.0
    %1276 = vmatpush2.msra.mxu0 %v381
    %1277 = vmatprep.mubr.f32.mxu0 %v511
    %1278 = vmatmul.mubr.f32.gmra.mxu0 %v487
    %v1279 = vpop.f32.mrf.mxu0
    %v1280 = vadd.f32 %v1210, %v1279
    %v1281 = vpop.f32.mrf.mxu0
    %1282 = vdwg.mxu0
    %vm1283 = vcmask 975872
    %v1284 = vsel %vm1283, %v1280, 0.0
    %v1285 = vrot.slane %v1284, 4
    %v1286 = vadd.f32 %v1284, %v1285
    %v1287 = vrot.slane %v1286, 2
    %v1288 = vadd.f32 %v1286, %v1287
    %v1289 = vrot.slane %v1288, 1
    %v1290 = vadd.f32 %v1288, %v1289
    %v1291 = vrcp.pop 2.0
    %v1292 = vmul.f32 %v1290, %v1291
    %v1293 = vsub.f32 %v1280, %v1292
    %v1294 = vmul.f32 %v1293, %v1293
    %v1295 = vsel %vm1283, %v1294, 0.0
    %v1296 = vrot.slane %v1295, 4
    %v1297 = vadd.f32 %v1295, %v1296
    %v1298 = vrot.slane %v1297, 2
    %v1299 = vadd.f32 %v1297, %v1298
    %v1300 = vrot.slane %v1299, 1
    %v1301 = vadd.f32 %v1299, %v1300
    %v1302 = vmul.f32 %v1301, %v1291
    %v1303 = vld [vmem:[%s3] sm:$0x1]
    %v1304 = vadd.f32 %v1302, 1e-05
    %v1305 = vrsqrt.pop %v1304
    %v1306 = vmul.f32 %v1303, %v1305
    %v1308 = vlaneseq
    %v1309 = vshrl.u32 %v1308, 7
    %v1310 = vsub.s32 0, %v1309
    %v1311 = vrot.slane %v1306, %v1310
    %v1313 = vmul.f32 %v1293, %v1311
    %v1314 = vld [vmem:[%s4] sm:$0x1]
    %v1316 = vlaneseq
    %v1317 = vshrl.u32 %v1316, 7
    %v1318 = vsub.s32 0, %v1317
    %v1319 = vrot.slane %v1314, %v1318
    %v1321 = vadd.f32 %v1313, %v1319
    %vm1322 = vcmp.ge.f32.partialorder %v1321, 0.0
    %v1323 = vmul.f32 %v1321, 0.01
    %v1324 = vsel %vm1322, %v1321, %v1323
    %v1325 = vld [vmem:[%s5] sm:$0xff]
    %v1326 = vld [vmem:[%s5 + $0x8] sm:$0xff]
    %v1327 = vld [vmem:[%s5 + $0x10] sm:$0xff]
    %v1328 = vld [vmem:[%s5 + $0x18] sm:$0xff]
    %v1329 = vld [vmem:[%s5 + $0x20] sm:$0xff]
    %v1330 = vld [vmem:[%s5 + $0x28] sm:$0xff]
    %v1331 = vld [vmem:[%s5 + $0x30] sm:$0xff]
    %v1332 = vld [vmem:[%s5 + $0x38] sm:$0xff]
    %v1333 = vld [vmem:[%s5 + $0x40] sm:$0xff]
    %v1334 = vld [vmem:[%s5 + $0x48] sm:$0xff]
    %v1335 = vld [vmem:[%s5 + $0x50] sm:$0xff]
    %v1336 = vld [vmem:[%s5 + $0x58] sm:$0xff]
    %v1337 = vld [vmem:[%s5 + $0x60] sm:$0xff]
    %v1338 = vld [vmem:[%s5 + $0x68] sm:$0xff]
    %v1339 = vld [vmem:[%s5 + $0x70] sm:$0xff]
    %v1340 = vld [vmem:[%s6] sm:$0x1]
    %v1342 = vlaneseq
    %v1343 = vshrl.u32 %v1342, 7
    %v1344 = vsub.s32 0, %v1343
    %v1345 = vrot.slane %v1340, %v1344
    %vm1347 = vcmask 982016
    %v1349 = vsel %vm1347, %v1324, 0
    %1351 = vmatprep.subr.mxu0 0.0
    %1352 = vmatpush1.msra.mxu0 0.0
    %1353 = vmatprep.subr.mxu0 0.0
    %1354 = vmatpush1.msra.mxu0 %v1339
    %1355 = vmatprep.subr.mxu0 0.0
    %1356 = vmatpush1.msra.mxu0 %v1338
    %1357 = vmatprep.subr.mxu0 0.0
    %1358 = vmatpush1.msra.mxu0 %v1337
    %1359 = vmatprep.subr.mxu0 0.0
    %1360 = vmatpush1.msra.mxu0 %v1336
    %1361 = vmatprep.subr.mxu0 0.0
    %1362 = vmatpush1.msra.mxu0 %v1335
    %1363 = vmatprep.subr.mxu0 0.0
    %1364 = vmatpush1.msra.mxu0 %v1334
    %1365 = vmatprep.subr.mxu0 0.0
    %1366 = vmatpush1.msra.mxu0 %v1333
    %1367 = vmatprep.subr.mxu0 0.0
    %1368 = vmatpush1.msra.mxu0 %v1332
    %1369 = vmatprep.subr.mxu0 0.0
    %1370 = vmatpush1.msra.mxu0 %v1331
    %1371 = vmatprep.subr.mxu0 0.0
    %1372 = vmatpush1.msra.mxu0 %v1330
    %1373 = vmatprep.subr.mxu0 0.0
    %1374 = vmatpush1.msra.mxu0 %v1329
    %1375 = vmatprep.subr.mxu0 0.0
    %1376 = vmatpush1.msra.mxu0 %v1328
    %1377 = vmatprep.subr.mxu0 0.0
    %1378 = vmatpush1.msra.mxu0 %v1327
    %1379 = vmatprep.subr.mxu0 0.0
    %1380 = vmatpush1.msra.mxu0 %v1326
    %1381 = vmatprep.subr.mxu0 0.0
    %1382 = vmatpush1.msra.mxu0 %v1325
    %1383 = vmatprep.subr.mxu0 0.0
    %1384 = vmatpush2.msra.mxu0 0.0
    %1385 = vmatprep.subr.mxu0 0.0
    %1386 = vmatpush2.msra.mxu0 0.0
    %1387 = vmatprep.subr.mxu0 0.0
    %1388 = vmatpush2.msra.mxu0 0.0
    %1389 = vmatprep.subr.mxu0 0.0
    %1390 = vmatpush2.msra.mxu0 0.0
    %1391 = vmatprep.subr.mxu0 0.0
    %1392 = vmatpush2.msra.mxu0 0.0
    %1393 = vmatprep.subr.mxu0 0.0
    %1394 = vmatpush2.msra.mxu0 0.0
    %1395 = vmatprep.subr.mxu0 0.0
    %1396 = vmatpush2.msra.mxu0 0.0
    %1397 = vmatprep.subr.mxu0 0.0
    %1398 = vmatpush2.msra.mxu0 0.0
    %1399 = vmatprep.subr.mxu0 0.0
    %1400 = vmatpush2.msra.mxu0 0.0
    %1401 = vmatprep.subr.mxu0 0.0
    %1402 = vmatpush2.msra.mxu0 0.0
    %1403 = vmatprep.subr.mxu0 0.0
    %1404 = vmatpush2.msra.mxu0 0.0
    %1405 = vmatprep.subr.mxu0 0.0
    %1406 = vmatpush2.msra.mxu0 0.0
    %1407 = vmatprep.subr.mxu0 0.0
    %1408 = vmatpush2.msra.mxu0 0.0
    %1409 = vmatprep.subr.mxu0 0.0
    %1410 = vmatpush2.msra.mxu0 0.0
    %1411 = vmatprep.subr.mxu0 0.0
    %1412 = vmatpush2.msra.mxu0 0.0
    %1413 = vmatprep.subr.mxu0 0.0
    %1414 = vmatpush2.msra.mxu0 0.0
    %1415 = vmatprep.mubr.f32.mxu0 0.0
    %1416 = vmatmul.mubr.f32.gmra.mxu0 %v1349
    %v1417 = vpop.f32.mrf.mxu0
    %v1418 = vadd.f32 %v1345, %v1417
    %v1419 = vpop.f32.mrf.mxu0
    %1420 = vdwg.mxu0
    %vm1421 = vcmask 680960
    %v1422 = vsel %vm1421, %v1418, 0.0
    %v1423 = vrot.slane %v1422, 4
    %v1424 = vadd.f32 %v1422, %v1423
    %v1425 = vrot.slane %v1424, 2
    %v1426 = vadd.f32 %v1424, %v1425
    %v1427 = vrot.slane %v1426, 1
    %v1428 = vadd.f32 %v1426, %v1427
    %v1429 = vmul.f32 %v1428, %v1291
    %v1430 = vsub.f32 %v1418, %v1429
    %v1431 = vmul.f32 %v1430, %v1430
    %v1432 = vsel %vm1421, %v1431, 0.0
    %v1433 = vrot.slane %v1432, 4
    %v1434 = vadd.f32 %v1432, %v1433
    %v1435 = vrot.slane %v1434, 2
    %v1436 = vadd.f32 %v1434, %v1435
    %v1437 = vrot.slane %v1436, 1
    %v1438 = vadd.f32 %v1436, %v1437
    %v1439 = vmul.f32 %v1438, %v1291
    %v1440 = vld [vmem:[%s7] sm:$0x1]
    %v1441 = vadd.f32 %v1439, 1e-05
    %v1442 = vrsqrt.pop %v1441
    %v1443 = vmul.f32 %v1440, %v1442
    %v1445 = vlaneseq
    %v1446 = vshrl.u32 %v1445, 7
    %v1447 = vsub.s32 0, %v1446
    %v1448 = vrot.slane %v1443, %v1447
    %v1450 = vmul.f32 %v1430, %v1448
    %v1451 = vld [vmem:[%s8] sm:$0x1]
    %v1453 = vlaneseq
    %v1454 = vshrl.u32 %v1453, 7
    %v1455 = vsub.s32 0, %v1454
    %v1456 = vrot.slane %v1451, %v1455
    %v1458 = vadd.f32 %v1450, %v1456
    %vm1459 = vcmp.ge.f32.partialorder %v1458, 0.0
    %v1460 = vmul.f32 %v1458, 0.01
    %v1461 = vsel %vm1459, %v1458, %v1460
    %v1462 = vld [vmem:[%s9] sm:$0xff]
    %v1463 = vld [vmem:[%s9 + $0x8] sm:$0xff]
    %v1464 = vld [vmem:[%s9 + $0x10] sm:$0xff]
    %v1465 = vld [vmem:[%s9 + $0x18] sm:$0xff]
    %v1466 = vld [vmem:[%s9 + $0x20] sm:$0xff]
    %v1467 = vld [vmem:[%s9 + $0x28] sm:$0xff]
    %v1468 = vld [vmem:[%s9 + $0x30] sm:$0xff]
    %v1469 = vld [vmem:[%s9 + $0x38] sm:$0xff]
    %v1470 = vld [vmem:[%s9 + $0x40] sm:$0xff]
    %v1471 = vld [vmem:[%s9 + $0x48] sm:$0xff]
    %v1472 = vld [vmem:[%s9 + $0x50] sm:$0xf]
    %v1473 = vld [vmem:[%s10] sm:$0x1]
    %v1475 = vlaneseq
    %v1476 = vshrl.u32 %v1475, 7
    %v1477 = vsub.s32 0, %v1476
    %v1478 = vrot.slane %v1473, %v1477
    %vm1480 = vcmask 687104
    %v1482 = vsel %vm1480, %v1461, 0
    %vm1484 = vcmask 1043456
    %v1486 = vsel %vm1484, %v1472, 0
    %1488 = vmatprep.subr.mxu0 0.0
    %1489 = vmatpush1.msra.mxu0 0.0
    %1490 = vmatprep.subr.mxu0 0.0
    %1491 = vmatpush1.msra.mxu0 0.0
    %1492 = vmatprep.subr.mxu0 0.0
    %1493 = vmatpush1.msra.mxu0 0.0
    %1494 = vmatprep.subr.mxu0 0.0
    %1495 = vmatpush1.msra.mxu0 0.0
    %1496 = vmatprep.subr.mxu0 0.0
    %1497 = vmatpush1.msra.mxu0 0.0
    %1498 = vmatprep.subr.mxu0 0.0
    %1499 = vmatpush1.msra.mxu0 %v1486
    %1500 = vmatprep.subr.mxu0 0.0
    %1501 = vmatpush1.msra.mxu0 %v1471
    %1502 = vmatprep.subr.mxu0 0.0
    %1503 = vmatpush1.msra.mxu0 %v1470
    %1504 = vmatprep.subr.mxu0 0.0
    %1505 = vmatpush1.msra.mxu0 %v1469
    %1506 = vmatprep.subr.mxu0 0.0
    %1507 = vmatpush1.msra.mxu0 %v1468
    %1508 = vmatprep.subr.mxu0 0.0
    %1509 = vmatpush1.msra.mxu0 %v1467
    %1510 = vmatprep.subr.mxu0 0.0
    %1511 = vmatpush1.msra.mxu0 %v1466
    %1512 = vmatprep.subr.mxu0 0.0
    %1513 = vmatpush1.msra.mxu0 %v1465
    %1514 = vmatprep.subr.mxu0 0.0
    %1515 = vmatpush1.msra.mxu0 %v1464
    %1516 = vmatprep.subr.mxu0 0.0
    %1517 = vmatpush1.msra.mxu0 %v1463
    %1518 = vmatprep.subr.mxu0 0.0
    %1519 = vmatpush1.msra.mxu0 %v1462
    %1520 = vmatprep.subr.mxu0 0.0
    %1521 = vmatpush2.msra.mxu0 0.0
    %1522 = vmatprep.subr.mxu0 0.0
    %1523 = vmatpush2.msra.mxu0 0.0
    %1524 = vmatprep.subr.mxu0 0.0
    %1525 = vmatpush2.msra.mxu0 0.0
    %1526 = vmatprep.subr.mxu0 0.0
    %1527 = vmatpush2.msra.mxu0 0.0
    %1528 = vmatprep.subr.mxu0 0.0
    %1529 = vmatpush2.msra.mxu0 0.0
    %1530 = vmatprep.subr.mxu0 0.0
    %1531 = vmatpush2.msra.mxu0 0.0
    %1532 = vmatprep.subr.mxu0 0.0
    %1533 = vmatpush2.msra.mxu0 0.0
    %1534 = vmatprep.subr.mxu0 0.0
    %1535 = vmatpush2.msra.mxu0 0.0
    %1536 = vmatprep.subr.mxu0 0.0
    %1537 = vmatpush2.msra.mxu0 0.0
    %1538 = vmatprep.subr.mxu0 0.0
    %1539 = vmatpush2.msra.mxu0 0.0
    %1540 = vmatprep.subr.mxu0 0.0
    %1541 = vmatpush2.msra.mxu0 0.0
    %1542 = vmatprep.subr.mxu0 0.0
    %1543 = vmatpush2.msra.mxu0 0.0
    %1544 = vmatprep.subr.mxu0 0.0
    %1545 = vmatpush2.msra.mxu0 0.0
    %1546 = vmatprep.subr.mxu0 0.0
    %1547 = vmatpush2.msra.mxu0 0.0
    %1548 = vmatprep.subr.mxu0 0.0
    %1549 = vmatpush2.msra.mxu0 0.0
    %1550 = vmatprep.subr.mxu0 0.0
    %1551 = vmatpush2.msra.mxu0 0.0
    %1552 = vmatprep.mubr.f32.mxu0 0.0
    %1553 = vmatmul.mubr.f32.gmra.mxu0 %v1482
    %v1554 = vpop.f32.mrf.mxu0
    %v1555 = vadd.f32 %v1478, %v1554
    %v1556 = vpop.f32.mrf.mxu0
    %1557 = vdwg.mxu0
    %v1558 = vsub.f32 0.0, %v1555
    %v1559 = vmul.f32 %v1558, 1.442695
    %v1560 = vpow.pop %v1559
    %v1561 = vadd.f32 %v1560, 1.0
    %v1562 = vrcp.pop %v1561
    %v1563 = vmul.f32 1.0, %v1562
    %vm1564 = vcmask 320512
    %1565 = vst.msk [vmem:[#allocation2] sm:$0x3] %vm1564, %v1563
    // Predicated region
    $region46: #{net_forward.5} parent=1 // pred_check
      _
    $region47: #{net_forward.5} parent=1 // pred_check_branch
      %1567 = sbr.rel (0) target = $region49
    $region48: #{net_forward.5} parent=1 // pred_region
      %s1569 = ssub.s32 32, 32
      %1570 = vsyncadd [#allocation3], %s1569
      %s1572 = sshll.u32 [#allocation2], 4
      %s1573 = int_to_ptr.vmem [resolvable:$true] %s1572
      %1575 = dma.vmem_to_hbm [thread:$0]  %s1573, 32, %s11, [#allocation3]
    $region49: #{net_forward.5} parent=1 // pred_fallthru
      _
    // Predicated region
    $region50: #{net_forward.5} parent=1 // pred_check
      _
    $region51: #{net_forward.5} parent=1 // pred_check_branch
      %1577 = sbr.rel (0) target = $region53
    $region52: #{net_forward.5} parent=1 // pred_region
      %1578 = dma.done [#allocation3], 32
    $region53: #{net_forward.5} parent=1 // pred_fallthru
      _
    %1579 = vsyncpa [#allocation3], 1

</llo_original>
